<compile_context>
chip_gen: v7x
topology: tpu7x:2x2x1
jax: 0.10.0
libtpu: 0.0.40
codegen_flags: <defaults>
</compile_context>

<pallas_src>
import functools

import jax
import jax.numpy as jnp
from jax import lax
from jax.experimental import pallas as pl
from jax.experimental.pallas import tpu as pltpu

LANE = 128
SUBLANE = 8


def _round_up(x, m):
    return (x + m - 1) // m * m


@functools.lru_cache(maxsize=None)
def _vmem_budgets():
    """(vmem_limit_bytes, per-layer tile budget) sized per TPU generation."""
    try:
        cap = int(pltpu.get_tpu_info().vmem_capacity_bytes)
    except Exception:  # query unavailable -> conservative 64 MiB (v7x per-TC)
        cap = 64 * 1024 * 1024
    limit = max(32 * 1024 * 1024, min(cap * 3 // 4, 96 * 1024 * 1024))
    return limit, int(limit * 0.7)


def _choose_chunk(t_tile):
    """Largest divisor of t_tile that is <= 16 (projection chunk length)."""
    for c in range(min(t_tile, 16), 0, -1):
        if t_tile % c == 0:
            return c
    return 1


def _choose_t_tile(T, bb, e_pad, h_pad, budget):
    """Largest divisor of T (capped at 128) whose footprint fits `budget`.

    Models double-buffered bf16 x/y tiles, the 2-slot f32 projection scratch,
    double-buffered resident bf16 weights and f32 state.
    """
    g = 4 * h_pad
    weights = 2 * ((e_pad + h_pad) * g * 2 + g * 4)   # double-buffered bf16
    state = 2 * bb * h_pad * 4
    best = 1
    for tt in range(1, min(T, 128) + 1):
        if T % tt:
            continue
        chunk = _choose_chunk(tt)
        xp_rows = chunk * (2 if tt // chunk > 1 else 1)
        tile = (2 * tt * bb * e_pad * 2      # x, double-buffered, bf16
                + 2 * tt * bb * h_pad * 2    # y, double-buffered, bf16
                + xp_rows * bb * g * 4)      # projection scratch, f32
        if weights + state + tile <= budget:
            best = tt
    return best


# ----------------------------------------------------------------------------
# Pallas kernels
# ----------------------------------------------------------------------------
def _lstm_recurrence(x_ref, wih_ref, whh_ref, b_ref, h_sc, c_sc, xp_sc, y_ref,
                     *, t_tile, h_pad, chunk):
    """Run t_tile LSTM steps on the current (time, batch-block) tile.

    x_ref:   (t_tile, bb, e_pad)       bf16 inputs (time-major)
    wih_ref: (e_pad, 4*h_pad)          bf16, resident across the grid
    whh_ref: (h_pad, 4*h_pad)          bf16, resident across the grid
    b_ref:   (1, 4*h_pad)              f32  (b_ih + b_hh, gate-padded)
    h_sc/c_sc: (bb, h_pad)             f32  recurrent state (persists over time)
    xp_sc:   (xp_rows, bb, 4*h_pad)    f32  2-slot chunked input projection
    y_ref:   (t_tile, bb, h_pad)       bf16 per-step hidden, or None
    Gate order (PyTorch): i, f, g, o.
    """
    @pl.when(pl.program_id(1) == 0)           # axis 1 = time (sequential)
    def _init():
        h_sc[...] = jnp.zeros_like(h_sc)
        c_sc[...] = jnp.zeros_like(c_sc)

    bb = x_ref.shape[1]
    e_pad = x_ref.shape[2]
    g = 4 * h_pad
    n_chunks = t_tile // chunk

    def project(c):
        """Hoisted input projection for chunk c -> its xp_sc slot (one big
        MXU matmul instead of per-step tiny ones)."""
        base = (c & 1) * chunk if n_chunks > 1 else 0
        x_flat = x_ref[pl.ds(c * chunk, chunk)].reshape(chunk * bb, e_pad)
        xp = jnp.dot(x_flat, wih_ref[...],
                     preferred_element_type=jnp.float32) + b_ref[...]
        xp_sc[pl.ds(base, chunk)] = xp.reshape(chunk, bb, g)

    project(0)
    for c in range(n_chunks):
        base = (c & 1) * chunk if n_chunks > 1 else 0
        if c + 1 < n_chunks:
            # Issue next chunk's projection here so the scheduler can overlap
            # it with this chunk's latency-bound recurrence.
            project(c + 1)

        def step(t, carry, base=base, c=c):
            # Only h @ W_hh is truly sequential.
            gates = xp_sc[base + t] + jnp.dot(
                h_sc[...].astype(jnp.bfloat16), whh_ref[...],
                preferred_element_type=jnp.float32)
            # h_pad is a multiple of 128 => every gate slice is lane-aligned.
            i_g = jax.nn.sigmoid(gates[:, 0 * h_pad:1 * h_pad])
            f_g = jax.nn.sigmoid(gates[:, 1 * h_pad:2 * h_pad])
            g_g = jnp.tanh(gates[:, 2 * h_pad:3 * h_pad])
            o_g = jax.nn.sigmoid(gates[:, 3 * h_pad:4 * h_pad])
            c_new = f_g * c_sc[...] + i_g * g_g      # f32 elementwise
            h_new = o_g * jnp.tanh(c_new)
            c_sc[...] = c_new
            h_sc[...] = h_new
            if y_ref is not None:
                y_ref[c * chunk + t] = h_new.astype(y_ref.dtype)
            return carry

        # Fully unrolled per chunk (chunk <= 16): low vreg pressure, lets the
        # LLO scheduler overlap EUP/VPU of step t with the MXU of step t+1.
        lax.fori_loop(0, chunk, step, 0, unroll=chunk)


def lstm_mid_kernel(x_ref, wih_ref, whh_ref, b_ref, y_ref,
                    h_sc, c_sc, xp_sc, *, t_tile, h_pad, chunk):
    """Non-final LSTM layer: emits per-step hidden states for the next layer."""
    _lstm_recurrence(x_ref, wih_ref, whh_ref, b_ref, h_sc, c_sc, xp_sc, y_ref,
                     t_tile=t_tile, h_pad=h_pad, chunk=chunk)


def lstm_last_kernel(x_ref, wih_ref, whh_ref, b_ref, fcw_ref, fcb_ref,
                     logits_ref, h_sc, c_sc, xp_sc, *, t_tile, h_pad, chunk):
    """Final LSTM layer with the Linear head fused on h_T (no y output)."""
    _lstm_recurrence(x_ref, wih_ref, whh_ref, b_ref, h_sc, c_sc, xp_sc, None,
                     t_tile=t_tile, h_pad=h_pad, chunk=chunk)

    @pl.when(pl.program_id(1) == pl.num_programs(1) - 1)
    def _fc():
        logits_ref[...] = (
            jnp.dot(h_sc[...].astype(jnp.bfloat16), fcw_ref[...],
                    preferred_element_type=jnp.float32)
            + fcb_ref[...]
        )


# ----------------------------------------------------------------------------
# Wrappers around pallas_call
# ----------------------------------------------------------------------------
def _plan(x, layer, t_tile, chunk):
    T, b_pad, e_pad = x.shape
    h_pad = layer["whh_t"].shape[0]
    g = 4 * h_pad
    # Two sublane-aligned batch blocks when possible -> "parallel" axis can be
    # sharded across v7x's two TensorCores (independent recurrences).
    bb = b_pad // 2 if (b_pad % 16 == 0) else b_pad
    vmem_limit, tile_budget = _vmem_budgets()
    if t_tile is None:
        t_tile = _choose_t_tile(T, bb, e_pad, h_pad, tile_budget)
    assert T % t_tile == 0, "t_tile must divide T"
    if chunk is None:
        chunk = _choose_chunk(t_tile)
    assert t_tile % chunk == 0, "chunk must divide t_tile"
    xp_rows = chunk * (2 if t_tile // chunk > 1 else 1)
    scratch = [
        pltpu.VMEM((bb, h_pad), jnp.float32),        # h state
        pltpu.VMEM((bb, h_pad), jnp.float32),        # c state
        pltpu.VMEM((xp_rows, bb, g), jnp.float32),   # chunked x-projection
    ]
    cparams = pltpu.CompilerParams(
        dimension_semantics=("parallel", "arbitrary"),  # (batch block, time)
        vmem_limit_bytes=vmem_limit)
    return T, b_pad, e_pad, h_pad, g, bb, t_tile, chunk, scratch, cparams


def lstm_mid_layer(x, layer, t_tile=None, chunk=None):
    """x: (T, b_pad, e_pad) bf16 -> y: (T, b_pad, h_pad) bf16."""
    (T, b_pad, e_pad, h_pad, g, bb, t_tile, chunk, scratch,
     cparams) = _plan(x, layer, t_tile, chunk)
    kern = functools.partial(lstm_mid_kernel, t_tile=t_tile, h_pad=h_pad,
                             chunk=chunk)
    return pl.pallas_call(
        kern,
        out_shape=jax.ShapeDtypeStruct((T, b_pad, h_pad), jnp.bfloat16),
        grid=(b_pad // bb, T // t_tile),
        in_specs=[
            pl.BlockSpec((t_tile, bb, e_pad), lambda b, t: (t, b, 0)),
            pl.BlockSpec((e_pad, g), lambda b, t: (0, 0)),   # resident weights
            pl.BlockSpec((h_pad, g), lambda b, t: (0, 0)),
            pl.BlockSpec((1, g), lambda b, t: (0, 0)),
        ],
        out_specs=pl.BlockSpec((t_tile, bb, h_pad), lambda b, t: (t, b, 0)),
        scratch_shapes=scratch,
        compiler_params=cparams,
    )(x, layer["wih_t"], layer["whh_t"], layer["b"])


def lstm_last_layer(x, layer, fcw_t, fcb, t_tile=None, chunk=None):
    """x: (T, b_pad, e_pad) bf16 -> logits: (b_pad, o_pad) f32 (FC fused)."""
    (T, b_pad, e_pad, h_pad, g, bb, t_tile, chunk, scratch,
     cparams) = _plan(x, layer, t_tile, chunk)
    o_pad = fcw_t.shape[1]
    kern = functools.partial(lstm_last_kernel, t_tile=t_tile, h_pad=h_pad,
                             chunk=chunk)
    return pl.pallas_call(
        kern,
        out_shape=jax.ShapeDtypeStruct((b_pad, o_pad), jnp.float32),
        grid=(b_pad // bb, T // t_tile),
        in_specs=[
            pl.BlockSpec((t_tile, bb, e_pad), lambda b, t: (t, b, 0)),
            pl.BlockSpec((e_pad, g), lambda b, t: (0, 0)),
            pl.BlockSpec((h_pad, g), lambda b, t: (0, 0)),
            pl.BlockSpec((1, g), lambda b, t: (0, 0)),
            pl.BlockSpec((h_pad, o_pad), lambda b, t: (0, 0)),
            pl.BlockSpec((1, o_pad), lambda b, t: (0, 0)),
        ],
        out_specs=pl.BlockSpec((bb, o_pad), lambda b, t: (b, 0)),
        scratch_shapes=scratch,
        compiler_params=cparams,
    )(x, layer["wih_t"], layer["whh_t"], layer["b"], fcw_t, fcb)


# ----------------------------------------------------------------------------
# One-time parameter preparation (outside the jitted forward)
# ----------------------------------------------------------------------------
def prepare_params(params):
    """Pad to lane/sublane-friendly shapes, pre-transpose, combine biases and
    cast matmul operands to bf16.  Each gate k lives in lane-aligned columns
    [k*h_pad, k*h_pad + H); padded rows/cols are zero so the padded state stays
    exactly zero through the recurrence."""
    prep = {"embedding": params["embedding"].astype(jnp.bfloat16)}
    layers = []
    for layer in params["lstm"]:
        w_ih, w_hh = layer["w_ih"], layer["w_hh"]
        b = layer["b_ih"] + layer["b_hh"]
        H = w_hh.shape[1]
        in_dim = w_ih.shape[1]
        h_pad = _round_up(H, LANE)
        in_pad = _round_up(in_dim, LANE)
        g = 4 * h_pad
        wih_t = jnp.zeros((in_pad, g), jnp.float32)
        whh_t = jnp.zeros((h_pad, g), jnp.float32)
        bb = jnp.zeros((1, g), jnp.float32)
        for k in range(4):
            wih_t = wih_t.at[:in_dim, k * h_pad:k * h_pad + H].set(
                w_ih[k * H:(k + 1) * H, :].T)
            whh_t = whh_t.at[:H, k * h_pad:k * h_pad + H].set(
                w_hh[k * H:(k + 1) * H, :].T)
            bb = bb.at[0, k * h_pad:k * h_pad + H].set(b[k * H:(k + 1) * H])
        layers.append({"wih_t": wih_t.astype(jnp.bfloat16),
                       "whh_t": whh_t.astype(jnp.bfloat16),
                       "b": bb})
    prep["lstm"] = layers

    fc_w, fc_b = params["fc_w"], params["fc_b"]
    O, H = fc_w.shape
    h_pad = _round_up(H, LANE)
    o_pad = _round_up(O, LANE)
    fcw_t = jnp.zeros((h_pad, o_pad), jnp.float32).at[:H, :O].set(fc_w.T)
    fcb = jnp.zeros((1, o_pad), jnp.float32).at[0, :O].set(fc_b)
    prep["fcw_t"] = fcw_t.astype(jnp.bfloat16)
    prep["fcb"] = fcb
    return prep


# ----------------------------------------------------------------------------
# Forward pass
# ----------------------------------------------------------------------------
@functools.partial(jax.jit, static_argnames=("output_dim", "t_tile", "chunk"))
def text_classifier_forward(text, prep, *, output_dim, t_tile=None, chunk=None):
    """text: (B, T) int32 token ids -> (B, output_dim) f32 logits."""
    B, T = text.shape
    emb = prep["embedding"]                       # (V, E) bf16
    E = emb.shape[1]
    # Embedding lookup (gather) stays as XLA glue, done directly time-major
    # in bf16 (no separate f32 transpose round-trip).
    x = jnp.take(emb, text.T, axis=0)             # (T, B, E) bf16
    # dropout (eval / p=0.0) == identity
    b_pad = _round_up(max(B, SUBLANE), SUBLANE)
    e_pad = _round_up(E, LANE)
    x = jnp.pad(x, ((0, 0), (0, b_pad - B), (0, e_pad - E)))

    n = len(prep["lstm"])
    logits = None
    for li, layer in enumerate(prep["lstm"]):
        if li < n - 1:
            x = lstm_mid_layer(x, layer, t_tile=t_tile, chunk=chunk)
            # inter-layer dropout (p=0.0) == identity
        else:
            logits = lstm_last_layer(x, layer, prep["fcw_t"], prep["fcb"],
                                     t_tile=t_tile, chunk=chunk)
    return logits[:B, :output_dim]


# ----------------------------------------------------------------------------
# Pure-JAX reference (same math and same dtype policy: bf16 matmul operands,
# f32 accumulation/elementwise) for correctness checking
# ----------------------------------------------------------------------------
def reference_forward(text, params):
    emb = jnp.take(params["embedding"], text, axis=0)   # (B, T, E)
    x = jnp.transpose(emb, (1, 0, 2)).astype(jnp.bfloat16)
    h_last = None
    for layer in params["lstm"]:
        H = layer["w_hh"].shape[1]
        B = x.shape[1]
        wih_t = layer["w_ih"].T.astype(jnp.bfloat16)
        whh_t = layer["w_hh"].T.astype(jnp.bfloat16)
        b = (layer["b_ih"] + layer["b_hh"]).astype(jnp.float32)

        def step(carry, x_t, wih_t=wih_t, whh_t=whh_t, b=b, H=H):
            h, c = carry
            gates = (jnp.dot(x_t, wih_t, preferred_element_type=jnp.float32)
                     + jnp.dot(h.astype(jnp.bfloat16), whh_t,
                               preferred_element_type=jnp.float32) + b)
            i_g = jax.nn.sigmoid(gates[:, 0 * H:1 * H])
            f_g = jax.nn.sigmoid(gates[:, 1 * H:2 * H])
            g_g = jnp.tanh(gates[:, 2 * H:3 * H])
            o_g = jax.nn.sigmoid(gates[:, 3 * H:4 * H])
            c_new = f_g * c + i_g * g_g
            h_new = o_g * jnp.tanh(c_new)
            return (h_new, c_new), h_new.astype(jnp.bfloat16)

        init = (jnp.zeros((B, H), jnp.float32), jnp.zeros((B, H), jnp.float32))
        (h_last, _), x = lax.scan(step, init, x)
    fcw_t = params["fc_w"].T.astype(jnp.bfloat16)
    return (jnp.dot(h_last.astype(jnp.bfloat16), fcw_t,
                    preferred_element_type=jnp.float32) + params["fc_b"])


# ----------------------------------------------------------------------------
# Deterministic parameter init (PyTorch-style uniform(-1/sqrt(H), 1/sqrt(H)))
# ----------------------------------------------------------------------------
def init_params(key, vocab_size, embedding_dim, hidden_dim, output_dim,
                n_layers):
    keys = jax.random.split(key, 2 + 4 * n_layers + 2)
    k_it = iter(keys)

    params = {}
    params["embedding"] = jax.random.normal(
        next(k_it), (vocab_size, embedding_dim), jnp.float32)

    bound = 1.0 / jnp.sqrt(hidden_dim)
    lstm_layers = []
    for l in range(n_layers):
        in_dim = embedding_dim if l == 0 else hidden_dim
        lstm_layers.append({
            "w_ih": jax.random.uniform(next(k_it), (4 * hidden_dim, in_dim),
                                       jnp.float32, -bound, bound),
            "w_hh": jax.random.uniform(next(k_it), (4 * hidden_dim, hidden_dim),
                                       jnp.float32, -bound, bound),
            "b_ih": jax.random.uniform(next(k_it), (4 * hidden_dim,),
                                       jnp.float32, -bound, bound),
            "b_hh": jax.random.uniform(next(k_it), (4 * hidden_dim,),
                                       jnp.float32, -bound, bound),
        })
    params["lstm"] = lstm_layers

    params["fc_w"] = jax.random.uniform(next(k_it), (output_dim, hidden_dim),
                                        jnp.float32, -bound, bound)
    params["fc_b"] = jax.random.uniform(next(k_it), (output_dim,),
                                        jnp.float32, -bound, bound)
    return params


# ----------------------------------------------------------------------------
if __name__ == "__main__":
    VOCAB, EMB, HID, OUT, N_LAYERS = 50, 32, 32, 4, 2
    B, T = 2, 8

    key = jax.random.PRNGKey(0)
    k_params, k_text = jax.random.split(key)

    params = init_params(k_params, VOCAB, EMB, HID, OUT, N_LAYERS)
    prep = prepare_params(params)
    text = jax.random.randint(k_text, (B, T), 0, VOCAB, dtype=jnp.int32)

    # 1) Auto-chosen time tile (whole sequence resident at this size).
    logits = text_classifier_forward(text, prep, output_dim=OUT)
    jax.block_until_ready(logits)
    # 2) Multi-step time grid (T=8, t_tile=2 -> 4 grid steps) to exercise the
    #    sequential state carry across grid iterations.
    logits_tiled = text_classifier_forward(text, prep, output_dim=OUT, t_tile=2)
    jax.block_until_ready(logits_tiled)
    # 3) Chunked projection path (t_tile=8, chunk=4 -> 2-slot xp scratch and
    #    projection/recurrence interleave).
    logits_chunked = text_classifier_forward(text, prep, output_dim=OUT,
                                             t_tile=8, chunk=4)
    jax.block_until_ready(logits_chunked)

    ref = reference_forward(text, params)
    assert logits.shape == (B, OUT)
    assert jnp.allclose(logits, ref, atol=1e-3, rtol=1e-3), (
        "Pallas kernel output does not match JAX reference")
    assert jnp.allclose(logits_tiled, ref, atol=1e-3, rtol=1e-3), (
        "Time-tiled Pallas kernel output does not match JAX reference")
    assert jnp.allclose(logits_chunked, ref, atol=1e-3, rtol=1e-3), (
        "Chunked Pallas kernel output does not match JAX reference")

    print("KERNEL_OK")
</pallas_src>

<mosaic_0001>
module attributes {stable_mosaic.version = 11 : i64} {
  func.func @lstm_mid_kernel(%arg0: i32, %arg1: i32, %arg2: memref<8x8x128xbf16, #tpu.memory_space<vmem>>, %arg3: memref<128x512xbf16, #tpu.memory_space<vmem>>, %arg4: memref<128x512xbf16, #tpu.memory_space<vmem>>, %arg5: memref<1x512xf32, #tpu.memory_space<vmem>>, %arg6: memref<8x8x128xbf16, #tpu.memory_space<vmem>>, %arg7: memref<8x128xf32, #tpu.memory_space<vmem>>, %arg8: memref<8x128xf32, #tpu.memory_space<vmem>>, %arg9: memref<8x8x512xf32, #tpu.memory_space<vmem>>) attributes {dimension_semantics = [#tpu.dimension_semantics<parallel>, #tpu.dimension_semantics<arbitrary>], iteration_bounds = array<i64: 1, 1>, scalar_prefetch = 0 : i64, scratch_operands = 3 : i64, tpu.core_type = #tpu.core_type<tc>, window_params = [{transform_indices = @transform_0, window_bounds = array<i64: 8, 8, 128>}, {pipeline_mode = #tpu.pipeline_mode<synchronous>, transform_indices = @transform_1, window_bounds = array<i64: 128, 512>}, {pipeline_mode = #tpu.pipeline_mode<synchronous>, transform_indices = @transform_2, window_bounds = array<i64: 128, 512>}, {pipeline_mode = #tpu.pipeline_mode<synchronous>, transform_indices = @transform_3, window_bounds = array<i64: 1, 512>}, {transform_indices = @transform_4, window_bounds = array<i64: 8, 8, 128>}]} {
    %c0_i32 = arith.constant 0 : i32
    %0 = arith.cmpi eq, %arg1, %c0_i32 : i32
    %1 = arith.extui %0 : i1 to i32
    %c0_i32_0 = arith.constant 0 : i32
    %2 = arith.cmpi ne, %1, %c0_i32_0 : i32
    scf.if %2 {
      %cst_171 = arith.constant 0.000000e+00 : f32
      %356 = vector.broadcast %cst_171 : f32 to vector<8x128xf32>
      %c0_172 = arith.constant 0 : index
      %c0_173 = arith.constant 0 : index
      %357 = vector.load %arg7[%c0_172, %c0_173] : memref<8x128xf32, #tpu.memory_space<vmem>>, vector<8x128xf32>
      tpu.vector_store %arg7[%c0_172, %c0_173], %356 {strides = array<i32>} : memref<8x128xf32, #tpu.memory_space<vmem>>, vector<8x128xf32>,
      %cst_174 = arith.constant 0.000000e+00 : f32
      %358 = vector.broadcast %cst_174 : f32 to vector<8x128xf32>
      %c0_175 = arith.constant 0 : index
      %c0_176 = arith.constant 0 : index
      %359 = vector.load %arg8[%c0_175, %c0_176] : memref<8x128xf32, #tpu.memory_space<vmem>>, vector<8x128xf32>
      tpu.vector_store %arg8[%c0_175, %c0_176], %358 {strides = array<i32>} : memref<8x128xf32, #tpu.memory_space<vmem>>, vector<8x128xf32>,
    } else {
    }
    %c0 = arith.constant 0 : index
    %c0_1 = arith.constant 0 : index
    %c0_2 = arith.constant 0 : index
    %3 = vector.load %arg2[%c0, %c0_1, %c0_2] : memref<8x8x128xbf16, #tpu.memory_space<vmem>>, vector<8x8x128xbf16>
    %4 = vector.shape_cast %3 : vector<8x8x128xbf16> to vector<64x128xbf16>
    %c0_3 = arith.constant 0 : index
    %c0_4 = arith.constant 0 : index
    %5 = vector.load %arg3[%c0_3, %c0_4] : memref<128x512xbf16, #tpu.memory_space<vmem>>, vector<128x512xbf16>
    %cst = arith.constant dense<0.000000e+00> : vector<64x512xf32>
    %6 = tpu.matmul %4, %5, %cst {dimension_numbers = #tpu.dot_dimension_numbers<[1], [0], [0], [1], [0, 0, 1, 1], [], []>} : vector<64x128xbf16>, vector<128x512xbf16>, vector<64x512xf32> -> vector<64x512xf32>
    %c0_5 = arith.constant 0 : index
    %c0_6 = arith.constant 0 : index
    %7 = vector.load %arg5[%c0_5, %c0_6] : memref<1x512xf32, #tpu.memory_space<vmem>>, vector<1x512xf32>
    %8 = vector.broadcast %7 : vector<1x512xf32> to vector<64x512xf32>
    %9 = arith.addf %6, %8 : vector<64x512xf32>
    %10 = vector.shape_cast %9 : vector<64x512xf32> to vector<8x8x512xf32>
    %c0_7 = arith.constant 0 : index
    %c0_8 = arith.constant 0 : index
    %c0_9 = arith.constant 0 : index
    %11 = vector.load %arg9[%c0_7, %c0_8, %c0_9] : memref<8x8x512xf32, #tpu.memory_space<vmem>>, vector<8x8x512xf32>
    tpu.vector_store %arg9[%c0_7, %c0_8, %c0_9], %10 {strides = array<i32>} : memref<8x8x512xf32, #tpu.memory_space<vmem>>, vector<8x8x512xf32>,
    %c0_i32_10 = arith.constant 0 : i32
    %c0_i32_11 = arith.constant 0 : i32
    %12 = arith.addi %c0_i32_11, %c0_i32_10 : i32
    %13 = arith.index_cast %12 : i32 to index
    %c0_12 = arith.constant 0 : index
    %c0_13 = arith.constant 0 : index
    %14 = vector.load %arg9[%13, %c0_12, %c0_13] : memref<8x8x512xf32, #tpu.memory_space<vmem>>, vector<1x8x512xf32>
    %15 = vector.shape_cast %14 : vector<1x8x512xf32> to vector<8x512xf32>
    %c0_14 = arith.constant 0 : index
    %c0_15 = arith.constant 0 : index
    %16 = vector.load %arg7[%c0_14, %c0_15] : memref<8x128xf32, #tpu.memory_space<vmem>>, vector<8x128xf32>
    %17 = arith.truncf %16 : vector<8x128xf32> to vector<8x128xbf16>
    %c0_16 = arith.constant 0 : index
    %c0_17 = arith.constant 0 : index
    %18 = vector.load %arg4[%c0_16, %c0_17] : memref<128x512xbf16, #tpu.memory_space<vmem>>, vector<128x512xbf16>
    %cst_18 = arith.constant dense<0.000000e+00> : vector<8x512xf32>
    %19 = tpu.matmul %17, %18, %cst_18 {dimension_numbers = #tpu.dot_dimension_numbers<[1], [0], [0], [1], [0, 0, 1, 1], [], []>} : vector<8x128xbf16>, vector<128x512xbf16>, vector<8x512xf32> -> vector<8x512xf32>
    %20 = arith.addf %15, %19 : vector<8x512xf32>
    %21 = vector.extract_strided_slice %20 {offsets = [0, 0], sizes = [8, 128], strides = [1, 1]} : vector<8x512xf32> to vector<8x128xf32>
    %22 = arith.negf %21 : vector<8x128xf32>
    %23 = math.exp %22 : vector<8x128xf32>
    %cst_19 = arith.constant 1.000000e+00 : f32
    %24 = vector.broadcast %cst_19 : f32 to vector<8x128xf32>
    %25 = arith.addf %24, %23 : vector<8x128xf32>
    %26 = arith.divf %24, %25 : vector<8x128xf32>
    %27 = vector.extract_strided_slice %20 {offsets = [0, 128], sizes = [8, 128], strides = [1, 1]} : vector<8x512xf32> to vector<8x128xf32>
    %28 = arith.negf %27 : vector<8x128xf32>
    %29 = math.exp %28 : vector<8x128xf32>
    %cst_20 = arith.constant 1.000000e+00 : f32
    %30 = vector.broadcast %cst_20 : f32 to vector<8x128xf32>
    %31 = arith.addf %30, %29 : vector<8x128xf32>
    %32 = arith.divf %30, %31 : vector<8x128xf32>
    %33 = vector.extract_strided_slice %20 {offsets = [0, 256], sizes = [8, 128], strides = [1, 1]} : vector<8x512xf32> to vector<8x128xf32>
    %34 = math.tanh %33 : vector<8x128xf32>
    %35 = vector.extract_strided_slice %20 {offsets = [0, 384], sizes = [8, 128], strides = [1, 1]} : vector<8x512xf32> to vector<8x128xf32>
    %36 = arith.negf %35 : vector<8x128xf32>
    %37 = math.exp %36 : vector<8x128xf32>
    %cst_21 = arith.constant 1.000000e+00 : f32
    %38 = vector.broadcast %cst_21 : f32 to vector<8x128xf32>
    %39 = arith.addf %38, %37 : vector<8x128xf32>
    %40 = arith.divf %38, %39 : vector<8x128xf32>
    %c0_22 = arith.constant 0 : index
    %c0_23 = arith.constant 0 : index
    %41 = vector.load %arg8[%c0_22, %c0_23] : memref<8x128xf32, #tpu.memory_space<vmem>>, vector<8x128xf32>
    %42 = arith.mulf %32, %41 : vector<8x128xf32>
    %43 = arith.mulf %26, %34 : vector<8x128xf32>
    %44 = arith.addf %42, %43 : vector<8x128xf32>
    %45 = math.tanh %44 : vector<8x128xf32>
    %46 = arith.mulf %40, %45 : vector<8x128xf32>
    %c0_24 = arith.constant 0 : index
    %c0_25 = arith.constant 0 : index
    %47 = vector.load %arg8[%c0_24, %c0_25] : memref<8x128xf32, #tpu.memory_space<vmem>>, vector<8x128xf32>
    tpu.vector_store %arg8[%c0_24, %c0_25], %44 {strides = array<i32>} : memref<8x128xf32, #tpu.memory_space<vmem>>, vector<8x128xf32>,
    %c0_26 = arith.constant 0 : index
    %c0_27 = arith.constant 0 : index
    %48 = vector.load %arg7[%c0_26, %c0_27] : memref<8x128xf32, #tpu.memory_space<vmem>>, vector<8x128xf32>
    tpu.vector_store %arg7[%c0_26, %c0_27], %46 {strides = array<i32>} : memref<8x128xf32, #tpu.memory_space<vmem>>, vector<8x128xf32>,
    %49 = arith.truncf %46 : vector<8x128xf32> to vector<8x128xbf16>
    %c0_i32_28 = arith.constant 0 : i32
    %50 = arith.addi %c0_i32_28, %c0_i32_10 : i32
    %51 = arith.index_cast %50 : i32 to index
    %c0_29 = arith.constant 0 : index
    %c0_30 = arith.constant 0 : index
    %52 = vector.load %arg6[%51, %c0_29, %c0_30] : memref<8x8x128xbf16, #tpu.memory_space<vmem>>, vector<1x8x128xbf16>
    %53 = vector.shape_cast %52 : vector<1x8x128xbf16> to vector<8x128xbf16>
    %54 = vector.shape_cast %49 : vector<8x128xbf16> to vector<1x8x128xbf16>
    tpu.vector_store %arg6[%51, %c0_29, %c0_30], %54 {strides = array<i32>} : memref<8x8x128xbf16, #tpu.memory_space<vmem>>, vector<1x8x128xbf16>,
    %c1_i32 = arith.constant 1 : i32
    %c0_i32_31 = arith.constant 0 : i32
    %55 = arith.addi %c0_i32_31, %c1_i32 : i32
    %56 = arith.index_cast %55 : i32 to index
    %c0_32 = arith.constant 0 : index
    %c0_33 = arith.constant 0 : index
    %57 = vector.load %arg9[%56, %c0_32, %c0_33] : memref<8x8x512xf32, #tpu.memory_space<vmem>>, vector<1x8x512xf32>
    %58 = vector.shape_cast %57 : vector<1x8x512xf32> to vector<8x512xf32>
    %c0_34 = arith.constant 0 : index
    %c0_35 = arith.constant 0 : index
    %59 = vector.load %arg7[%c0_34, %c0_35] : memref<8x128xf32, #tpu.memory_space<vmem>>, vector<8x128xf32>
    %60 = arith.truncf %59 : vector<8x128xf32> to vector<8x128xbf16>
    %c0_36 = arith.constant 0 : index
    %c0_37 = arith.constant 0 : index
    %61 = vector.load %arg4[%c0_36, %c0_37] : memref<128x512xbf16, #tpu.memory_space<vmem>>, vector<128x512xbf16>
    %cst_38 = arith.constant dense<0.000000e+00> : vector<8x512xf32>
    %62 = tpu.matmul %60, %61, %cst_38 {dimension_numbers = #tpu.dot_dimension_numbers<[1], [0], [0], [1], [0, 0, 1, 1], [], []>} : vector<8x128xbf16>, vector<128x512xbf16>, vector<8x512xf32> -> vector<8x512xf32>
    %63 = arith.addf %58, %62 : vector<8x512xf32>
    %64 = vector.extract_strided_slice %63 {offsets = [0, 0], sizes = [8, 128], strides = [1, 1]} : vector<8x512xf32> to vector<8x128xf32>
    %65 = arith.negf %64 : vector<8x128xf32>
    %66 = math.exp %65 : vector<8x128xf32>
    %cst_39 = arith.constant 1.000000e+00 : f32
    %67 = vector.broadcast %cst_39 : f32 to vector<8x128xf32>
    %68 = arith.addf %67, %66 : vector<8x128xf32>
    %69 = arith.divf %67, %68 : vector<8x128xf32>
    %70 = vector.extract_strided_slice %63 {offsets = [0, 128], sizes = [8, 128], strides = [1, 1]} : vector<8x512xf32> to vector<8x128xf32>
    %71 = arith.negf %70 : vector<8x128xf32>
    %72 = math.exp %71 : vector<8x128xf32>
    %cst_40 = arith.constant 1.000000e+00 : f32
    %73 = vector.broadcast %cst_40 : f32 to vector<8x128xf32>
    %74 = arith.addf %73, %72 : vector<8x128xf32>
    %75 = arith.divf %73, %74 : vector<8x128xf32>
    %76 = vector.extract_strided_slice %63 {offsets = [0, 256], sizes = [8, 128], strides = [1, 1]} : vector<8x512xf32> to vector<8x128xf32>
    %77 = math.tanh %76 : vector<8x128xf32>
    %78 = vector.extract_strided_slice %63 {offsets = [0, 384], sizes = [8, 128], strides = [1, 1]} : vector<8x512xf32> to vector<8x128xf32>
    %79 = arith.negf %78 : vector<8x128xf32>
    %80 = math.exp %79 : vector<8x128xf32>
    %cst_41 = arith.constant 1.000000e+00 : f32
    %81 = vector.broadcast %cst_41 : f32 to vector<8x128xf32>
    %82 = arith.addf %81, %80 : vector<8x128xf32>
    %83 = arith.divf %81, %82 : vector<8x128xf32>
    %c0_42 = arith.constant 0 : index
    %c0_43 = arith.constant 0 : index
    %84 = vector.load %arg8[%c0_42, %c0_43] : memref<8x128xf32, #tpu.memory_space<vmem>>, vector<8x128xf32>
    %85 = arith.mulf %75, %84 : vector<8x128xf32>
    %86 = arith.mulf %69, %77 : vector<8x128xf32>
    %87 = arith.addf %85, %86 : vector<8x128xf32>
    %88 = math.tanh %87 : vector<8x128xf32>
    %89 = arith.mulf %83, %88 : vector<8x128xf32>
    %c0_44 = arith.constant 0 : index
    %c0_45 = arith.constant 0 : index
    %90 = vector.load %arg8[%c0_44, %c0_45] : memref<8x128xf32, #tpu.memory_space<vmem>>, vector<8x128xf32>
    tpu.vector_store %arg8[%c0_44, %c0_45], %87 {strides = array<i32>} : memref<8x128xf32, #tpu.memory_space<vmem>>, vector<8x128xf32>,
    %c0_46 = arith.constant 0 : index
    %c0_47 = arith.constant 0 : index
    %91 = vector.load %arg7[%c0_46, %c0_47] : memref<8x128xf32, #tpu.memory_space<vmem>>, vector<8x128xf32>
    tpu.vector_store %arg7[%c0_46, %c0_47], %89 {strides = array<i32>} : memref<8x128xf32, #tpu.memory_space<vmem>>, vector<8x128xf32>,
    %92 = arith.truncf %89 : vector<8x128xf32> to vector<8x128xbf16>
    %c0_i32_48 = arith.constant 0 : i32
    %93 = arith.addi %c0_i32_48, %c1_i32 : i32
    %94 = arith.index_cast %93 : i32 to index
    %c0_49 = arith.constant 0 : index
    %c0_50 = arith.constant 0 : index
    %95 = vector.load %arg6[%94, %c0_49, %c0_50] : memref<8x8x128xbf16, #tpu.memory_space<vmem>>, vector<1x8x128xbf16>
    %96 = vector.shape_cast %95 : vector<1x8x128xbf16> to vector<8x128xbf16>
    %97 = vector.shape_cast %92 : vector<8x128xbf16> to vector<1x8x128xbf16>
    tpu.vector_store %arg6[%94, %c0_49, %c0_50], %97 {strides = array<i32>} : memref<8x8x128xbf16, #tpu.memory_space<vmem>>, vector<1x8x128xbf16>,
    %c2_i32 = arith.constant 2 : i32
    %c0_i32_51 = arith.constant 0 : i32
    %98 = arith.addi %c0_i32_51, %c2_i32 : i32
    %99 = arith.index_cast %98 : i32 to index
    %c0_52 = arith.constant 0 : index
    %c0_53 = arith.constant 0 : index
    %100 = vector.load %arg9[%99, %c0_52, %c0_53] : memref<8x8x512xf32, #tpu.memory_space<vmem>>, vector<1x8x512xf32>
    %101 = vector.shape_cast %100 : vector<1x8x512xf32> to vector<8x512xf32>
    %c0_54 = arith.constant 0 : index
    %c0_55 = arith.constant 0 : index
    %102 = vector.load %arg7[%c0_54, %c0_55] : memref<8x128xf32, #tpu.memory_space<vmem>>, vector<8x128xf32>
    %103 = arith.truncf %102 : vector<8x128xf32> to vector<8x128xbf16>
    %c0_56 = arith.constant 0 : index
    %c0_57 = arith.constant 0 : index
    %104 = vector.load %arg4[%c0_56, %c0_57] : memref<128x512xbf16, #tpu.memory_space<vmem>>, vector<128x512xbf16>
    %cst_58 = arith.constant dense<0.000000e+00> : vector<8x512xf32>
    %105 = tpu.matmul %103, %104, %cst_58 {dimension_numbers = #tpu.dot_dimension_numbers<[1], [0], [0], [1], [0, 0, 1, 1], [], []>} : vector<8x128xbf16>, vector<128x512xbf16>, vector<8x512xf32> -> vector<8x512xf32>
    %106 = arith.addf %101, %105 : vector<8x512xf32>
    %107 = vector.extract_strided_slice %106 {offsets = [0, 0], sizes = [8, 128], strides = [1, 1]} : vector<8x512xf32> to vector<8x128xf32>
    %108 = arith.negf %107 : vector<8x128xf32>
    %109 = math.exp %108 : vector<8x128xf32>
    %cst_59 = arith.constant 1.000000e+00 : f32
    %110 = vector.broadcast %cst_59 : f32 to vector<8x128xf32>
    %111 = arith.addf %110, %109 : vector<8x128xf32>
    %112 = arith.divf %110, %111 : vector<8x128xf32>
    %113 = vector.extract_strided_slice %106 {offsets = [0, 128], sizes = [8, 128], strides = [1, 1]} : vector<8x512xf32> to vector<8x128xf32>
    %114 = arith.negf %113 : vector<8x128xf32>
    %115 = math.exp %114 : vector<8x128xf32>
    %cst_60 = arith.constant 1.000000e+00 : f32
    %116 = vector.broadcast %cst_60 : f32 to vector<8x128xf32>
    %117 = arith.addf %116, %115 : vector<8x128xf32>
    %118 = arith.divf %116, %117 : vector<8x128xf32>
    %119 = vector.extract_strided_slice %106 {offsets = [0, 256], sizes = [8, 128], strides = [1, 1]} : vector<8x512xf32> to vector<8x128xf32>
    %120 = math.tanh %119 : vector<8x128xf32>
    %121 = vector.extract_strided_slice %106 {offsets = [0, 384], sizes = [8, 128], strides = [1, 1]} : vector<8x512xf32> to vector<8x128xf32>
    %122 = arith.negf %121 : vector<8x128xf32>
    %123 = math.exp %122 : vector<8x128xf32>
    %cst_61 = arith.constant 1.000000e+00 : f32
    %124 = vector.broadcast %cst_61 : f32 to vector<8x128xf32>
    %125 = arith.addf %124, %123 : vector<8x128xf32>
    %126 = arith.divf %124, %125 : vector<8x128xf32>
    %c0_62 = arith.constant 0 : index
    %c0_63 = arith.constant 0 : index
    %127 = vector.load %arg8[%c0_62, %c0_63] : memref<8x128xf32, #tpu.memory_space<vmem>>, vector<8x128xf32>
    %128 = arith.mulf %118, %127 : vector<8x128xf32>
    %129 = arith.mulf %112, %120 : vector<8x128xf32>
    %130 = arith.addf %128, %129 : vector<8x128xf32>
    %131 = math.tanh %130 : vector<8x128xf32>
    %132 = arith.mulf %126, %131 : vector<8x128xf32>
    %c0_64 = arith.constant 0 : index
    %c0_65 = arith.constant 0 : index
    %133 = vector.load %arg8[%c0_64, %c0_65] : memref<8x128xf32, #tpu.memory_space<vmem>>, vector<8x128xf32>
    tpu.vector_store %arg8[%c0_64, %c0_65], %130 {strides = array<i32>} : memref<8x128xf32, #tpu.memory_space<vmem>>, vector<8x128xf32>,
    %c0_66 = arith.constant 0 : index
    %c0_67 = arith.constant 0 : index
    %134 = vector.load %arg7[%c0_66, %c0_67] : memref<8x128xf32, #tpu.memory_space<vmem>>, vector<8x128xf32>
    tpu.vector_store %arg7[%c0_66, %c0_67], %132 {strides = array<i32>} : memref<8x128xf32, #tpu.memory_space<vmem>>, vector<8x128xf32>,
    %135 = arith.truncf %132 : vector<8x128xf32> to vector<8x128xbf16>
    %c0_i32_68 = arith.constant 0 : i32
    %136 = arith.addi %c0_i32_68, %c2_i32 : i32
    %137 = arith.index_cast %136 : i32 to index
    %c0_69 = arith.constant 0 : index
    %c0_70 = arith.constant 0 : index
    %138 = vector.load %arg6[%137, %c0_69, %c0_70] : memref<8x8x128xbf16, #tpu.memory_space<vmem>>, vector<1x8x128xbf16>
    %139 = vector.shape_cast %138 : vector<1x8x128xbf16> to vector<8x128xbf16>
    %140 = vector.shape_cast %135 : vector<8x128xbf16> to vector<1x8x128xbf16>
    tpu.vector_store %arg6[%137, %c0_69, %c0_70], %140 {strides = array<i32>} : memref<8x8x128xbf16, #tpu.memory_space<vmem>>, vector<1x8x128xbf16>,
    %c3_i32 = arith.constant 3 : i32
    %c0_i32_71 = arith.constant 0 : i32
    %141 = arith.addi %c0_i32_71, %c3_i32 : i32
    %142 = arith.index_cast %141 : i32 to index
    %c0_72 = arith.constant 0 : index
    %c0_73 = arith.constant 0 : index
    %143 = vector.load %arg9[%142, %c0_72, %c0_73] : memref<8x8x512xf32, #tpu.memory_space<vmem>>, vector<1x8x512xf32>
    %144 = vector.shape_cast %143 : vector<1x8x512xf32> to vector<8x512xf32>
    %c0_74 = arith.constant 0 : index
    %c0_75 = arith.constant 0 : index
    %145 = vector.load %arg7[%c0_74, %c0_75] : memref<8x128xf32, #tpu.memory_space<vmem>>, vector<8x128xf32>
    %146 = arith.truncf %145 : vector<8x128xf32> to vector<8x128xbf16>
    %c0_76 = arith.constant 0 : index
    %c0_77 = arith.constant 0 : index
    %147 = vector.load %arg4[%c0_76, %c0_77] : memref<128x512xbf16, #tpu.memory_space<vmem>>, vector<128x512xbf16>
    %cst_78 = arith.constant dense<0.000000e+00> : vector<8x512xf32>
    %148 = tpu.matmul %146, %147, %cst_78 {dimension_numbers = #tpu.dot_dimension_numbers<[1], [0], [0], [1], [0, 0, 1, 1], [], []>} : vector<8x128xbf16>, vector<128x512xbf16>, vector<8x512xf32> -> vector<8x512xf32>
    %149 = arith.addf %144, %148 : vector<8x512xf32>
    %150 = vector.extract_strided_slice %149 {offsets = [0, 0], sizes = [8, 128], strides = [1, 1]} : vector<8x512xf32> to vector<8x128xf32>
    %151 = arith.negf %150 : vector<8x128xf32>
    %152 = math.exp %151 : vector<8x128xf32>
    %cst_79 = arith.constant 1.000000e+00 : f32
    %153 = vector.broadcast %cst_79 : f32 to vector<8x128xf32>
    %154 = arith.addf %153, %152 : vector<8x128xf32>
    %155 = arith.divf %153, %154 : vector<8x128xf32>
    %156 = vector.extract_strided_slice %149 {offsets = [0, 128], sizes = [8, 128], strides = [1, 1]} : vector<8x512xf32> to vector<8x128xf32>
    %157 = arith.negf %156 : vector<8x128xf32>
    %158 = math.exp %157 : vector<8x128xf32>
    %cst_80 = arith.constant 1.000000e+00 : f32
    %159 = vector.broadcast %cst_80 : f32 to vector<8x128xf32>
    %160 = arith.addf %159, %158 : vector<8x128xf32>
    %161 = arith.divf %159, %160 : vector<8x128xf32>
    %162 = vector.extract_strided_slice %149 {offsets = [0, 256], sizes = [8, 128], strides = [1, 1]} : vector<8x512xf32> to vector<8x128xf32>
    %163 = math.tanh %162 : vector<8x128xf32>
    %164 = vector.extract_strided_slice %149 {offsets = [0, 384], sizes = [8, 128], strides = [1, 1]} : vector<8x512xf32> to vector<8x128xf32>
    %165 = arith.negf %164 : vector<8x128xf32>
    %166 = math.exp %165 : vector<8x128xf32>
    %cst_81 = arith.constant 1.000000e+00 : f32
    %167 = vector.broadcast %cst_81 : f32 to vector<8x128xf32>
    %168 = arith.addf %167, %166 : vector<8x128xf32>
    %169 = arith.divf %167, %168 : vector<8x128xf32>
    %c0_82 = arith.constant 0 : index
    %c0_83 = arith.constant 0 : index
    %170 = vector.load %arg8[%c0_82, %c0_83] : memref<8x128xf32, #tpu.memory_space<vmem>>, vector<8x128xf32>
    %171 = arith.mulf %161, %170 : vector<8x128xf32>
    %172 = arith.mulf %155, %163 : vector<8x128xf32>
    %173 = arith.addf %171, %172 : vector<8x128xf32>
    %174 = math.tanh %173 : vector<8x128xf32>
    %175 = arith.mulf %169, %174 : vector<8x128xf32>
    %c0_84 = arith.constant 0 : index
    %c0_85 = arith.constant 0 : index
    %176 = vector.load %arg8[%c0_84, %c0_85] : memref<8x128xf32, #tpu.memory_space<vmem>>, vector<8x128xf32>
    tpu.vector_store %arg8[%c0_84, %c0_85], %173 {strides = array<i32>} : memref<8x128xf32, #tpu.memory_space<vmem>>, vector<8x128xf32>,
    %c0_86 = arith.constant 0 : index
    %c0_87 = arith.constant 0 : index
    %177 = vector.load %arg7[%c0_86, %c0_87] : memref<8x128xf32, #tpu.memory_space<vmem>>, vector<8x128xf32>
    tpu.vector_store %arg7[%c0_86, %c0_87], %175 {strides = array<i32>} : memref<8x128xf32, #tpu.memory_space<vmem>>, vector<8x128xf32>,
    %178 = arith.truncf %175 : vector<8x128xf32> to vector<8x128xbf16>
    %c0_i32_88 = arith.constant 0 : i32
    %179 = arith.addi %c0_i32_88, %c3_i32 : i32
    %180 = arith.index_cast %179 : i32 to index
    %c0_89 = arith.constant 0 : index
    %c0_90 = arith.constant 0 : index
    %181 = vector.load %arg6[%180, %c0_89, %c0_90] : memref<8x8x128xbf16, #tpu.memory_space<vmem>>, vector<1x8x128xbf16>
    %182 = vector.shape_cast %181 : vector<1x8x128xbf16> to vector<8x128xbf16>
    %183 = vector.shape_cast %178 : vector<8x128xbf16> to vector<1x8x128xbf16>
    tpu.vector_store %arg6[%180, %c0_89, %c0_90], %183 {strides = array<i32>} : memref<8x8x128xbf16, #tpu.memory_space<vmem>>, vector<1x8x128xbf16>,
    %c4_i32 = arith.constant 4 : i32
    %c0_i32_91 = arith.constant 0 : i32
    %184 = arith.addi %c0_i32_91, %c4_i32 : i32
    %185 = arith.index_cast %184 : i32 to index
    %c0_92 = arith.constant 0 : index
    %c0_93 = arith.constant 0 : index
    %186 = vector.load %arg9[%185, %c0_92, %c0_93] : memref<8x8x512xf32, #tpu.memory_space<vmem>>, vector<1x8x512xf32>
    %187 = vector.shape_cast %186 : vector<1x8x512xf32> to vector<8x512xf32>
    %c0_94 = arith.constant 0 : index
    %c0_95 = arith.constant 0 : index
    %188 = vector.load %arg7[%c0_94, %c0_95] : memref<8x128xf32, #tpu.memory_space<vmem>>, vector<8x128xf32>
    %189 = arith.truncf %188 : vector<8x128xf32> to vector<8x128xbf16>
    %c0_96 = arith.constant 0 : index
    %c0_97 = arith.constant 0 : index
    %190 = vector.load %arg4[%c0_96, %c0_97] : memref<128x512xbf16, #tpu.memory_space<vmem>>, vector<128x512xbf16>
    %cst_98 = arith.constant dense<0.000000e+00> : vector<8x512xf32>
    %191 = tpu.matmul %189, %190, %cst_98 {dimension_numbers = #tpu.dot_dimension_numbers<[1], [0], [0], [1], [0, 0, 1, 1], [], []>} : vector<8x128xbf16>, vector<128x512xbf16>, vector<8x512xf32> -> vector<8x512xf32>
    %192 = arith.addf %187, %191 : vector<8x512xf32>
    %193 = vector.extract_strided_slice %192 {offsets = [0, 0], sizes = [8, 128], strides = [1, 1]} : vector<8x512xf32> to vector<8x128xf32>
    %194 = arith.negf %193 : vector<8x128xf32>
    %195 = math.exp %194 : vector<8x128xf32>
    %cst_99 = arith.constant 1.000000e+00 : f32
    %196 = vector.broadcast %cst_99 : f32 to vector<8x128xf32>
    %197 = arith.addf %196, %195 : vector<8x128xf32>
    %198 = arith.divf %196, %197 : vector<8x128xf32>
    %199 = vector.extract_strided_slice %192 {offsets = [0, 128], sizes = [8, 128], strides = [1, 1]} : vector<8x512xf32> to vector<8x128xf32>
    %200 = arith.negf %199 : vector<8x128xf32>
    %201 = math.exp %200 : vector<8x128xf32>
    %cst_100 = arith.constant 1.000000e+00 : f32
    %202 = vector.broadcast %cst_100 : f32 to vector<8x128xf32>
    %203 = arith.addf %202, %201 : vector<8x128xf32>
    %204 = arith.divf %202, %203 : vector<8x128xf32>
    %205 = vector.extract_strided_slice %192 {offsets = [0, 256], sizes = [8, 128], strides = [1, 1]} : vector<8x512xf32> to vector<8x128xf32>
    %206 = math.tanh %205 : vector<8x128xf32>
    %207 = vector.extract_strided_slice %192 {offsets = [0, 384], sizes = [8, 128], strides = [1, 1]} : vector<8x512xf32> to vector<8x128xf32>
    %208 = arith.negf %207 : vector<8x128xf32>
    %209 = math.exp %208 : vector<8x128xf32>
    %cst_101 = arith.constant 1.000000e+00 : f32
    %210 = vector.broadcast %cst_101 : f32 to vector<8x128xf32>
    %211 = arith.addf %210, %209 : vector<8x128xf32>
    %212 = arith.divf %210, %211 : vector<8x128xf32>
    %c0_102 = arith.constant 0 : index
    %c0_103 = arith.constant 0 : index
    %213 = vector.load %arg8[%c0_102, %c0_103] : memref<8x128xf32, #tpu.memory_space<vmem>>, vector<8x128xf32>
    %214 = arith.mulf %204, %213 : vector<8x128xf32>
    %215 = arith.mulf %198, %206 : vector<8x128xf32>
    %216 = arith.addf %214, %215 : vector<8x128xf32>
    %217 = math.tanh %216 : vector<8x128xf32>
    %218 = arith.mulf %212, %217 : vector<8x128xf32>
    %c0_104 = arith.constant 0 : index
    %c0_105 = arith.constant 0 : index
    %219 = vector.load %arg8[%c0_104, %c0_105] : memref<8x128xf32, #tpu.memory_space<vmem>>, vector<8x128xf32>
    tpu.vector_store %arg8[%c0_104, %c0_105], %216 {strides = array<i32>} : memref<8x128xf32, #tpu.memory_space<vmem>>, vector<8x128xf32>,
    %c0_106 = arith.constant 0 : index
    %c0_107 = arith.constant 0 : index
    %220 = vector.load %arg7[%c0_106, %c0_107] : memref<8x128xf32, #tpu.memory_space<vmem>>, vector<8x128xf32>
    tpu.vector_store %arg7[%c0_106, %c0_107], %218 {strides = array<i32>} : memref<8x128xf32, #tpu.memory_space<vmem>>, vector<8x128xf32>,
    %221 = arith.truncf %218 : vector<8x128xf32> to vector<8x128xbf16>
    %c0_i32_108 = arith.constant 0 : i32
    %222 = arith.addi %c0_i32_108, %c4_i32 : i32
    %223 = arith.index_cast %222 : i32 to index
    %c0_109 = arith.constant 0 : index
    %c0_110 = arith.constant 0 : index
    %224 = vector.load %arg6[%223, %c0_109, %c0_110] : memref<8x8x128xbf16, #tpu.memory_space<vmem>>, vector<1x8x128xbf16>
    %225 = vector.shape_cast %224 : vector<1x8x128xbf16> to vector<8x128xbf16>
    %226 = vector.shape_cast %221 : vector<8x128xbf16> to vector<1x8x128xbf16>
    tpu.vector_store %arg6[%223, %c0_109, %c0_110], %226 {strides = array<i32>} : memref<8x8x128xbf16, #tpu.memory_space<vmem>>, vector<1x8x128xbf16>,
    %c5_i32 = arith.constant 5 : i32
    %c0_i32_111 = arith.constant 0 : i32
    %227 = arith.addi %c0_i32_111, %c5_i32 : i32
    %228 = arith.index_cast %227 : i32 to index
    %c0_112 = arith.constant 0 : index
    %c0_113 = arith.constant 0 : index
    %229 = vector.load %arg9[%228, %c0_112, %c0_113] : memref<8x8x512xf32, #tpu.memory_space<vmem>>, vector<1x8x512xf32>
    %230 = vector.shape_cast %229 : vector<1x8x512xf32> to vector<8x512xf32>
    %c0_114 = arith.constant 0 : index
    %c0_115 = arith.constant 0 : index
    %231 = vector.load %arg7[%c0_114, %c0_115] : memref<8x128xf32, #tpu.memory_space<vmem>>, vector<8x128xf32>
    %232 = arith.truncf %231 : vector<8x128xf32> to vector<8x128xbf16>
    %c0_116 = arith.constant 0 : index
    %c0_117 = arith.constant 0 : index
    %233 = vector.load %arg4[%c0_116, %c0_117] : memref<128x512xbf16, #tpu.memory_space<vmem>>, vector<128x512xbf16>
    %cst_118 = arith.constant dense<0.000000e+00> : vector<8x512xf32>
    %234 = tpu.matmul %232, %233, %cst_118 {dimension_numbers = #tpu.dot_dimension_numbers<[1], [0], [0], [1], [0, 0, 1, 1], [], []>} : vector<8x128xbf16>, vector<128x512xbf16>, vector<8x512xf32> -> vector<8x512xf32>
    %235 = arith.addf %230, %234 : vector<8x512xf32>
    %236 = vector.extract_strided_slice %235 {offsets = [0, 0], sizes = [8, 128], strides = [1, 1]} : vector<8x512xf32> to vector<8x128xf32>
    %237 = arith.negf %236 : vector<8x128xf32>
    %238 = math.exp %237 : vector<8x128xf32>
    %cst_119 = arith.constant 1.000000e+00 : f32
    %239 = vector.broadcast %cst_119 : f32 to vector<8x128xf32>
    %240 = arith.addf %239, %238 : vector<8x128xf32>
    %241 = arith.divf %239, %240 : vector<8x128xf32>
    %242 = vector.extract_strided_slice %235 {offsets = [0, 128], sizes = [8, 128], strides = [1, 1]} : vector<8x512xf32> to vector<8x128xf32>
    %243 = arith.negf %242 : vector<8x128xf32>
    %244 = math.exp %243 : vector<8x128xf32>
    %cst_120 = arith.constant 1.000000e+00 : f32
    %245 = vector.broadcast %cst_120 : f32 to vector<8x128xf32>
    %246 = arith.addf %245, %244 : vector<8x128xf32>
    %247 = arith.divf %245, %246 : vector<8x128xf32>
    %248 = vector.extract_strided_slice %235 {offsets = [0, 256], sizes = [8, 128], strides = [1, 1]} : vector<8x512xf32> to vector<8x128xf32>
    %249 = math.tanh %248 : vector<8x128xf32>
    %250 = vector.extract_strided_slice %235 {offsets = [0, 384], sizes = [8, 128], strides = [1, 1]} : vector<8x512xf32> to vector<8x128xf32>
    %251 = arith.negf %250 : vector<8x128xf32>
    %252 = math.exp %251 : vector<8x128xf32>
    %cst_121 = arith.constant 1.000000e+00 : f32
    %253 = vector.broadcast %cst_121 : f32 to vector<8x128xf32>
    %254 = arith.addf %253, %252 : vector<8x128xf32>
    %255 = arith.divf %253, %254 : vector<8x128xf32>
    %c0_122 = arith.constant 0 : index
    %c0_123 = arith.constant 0 : index
    %256 = vector.load %arg8[%c0_122, %c0_123] : memref<8x128xf32, #tpu.memory_space<vmem>>, vector<8x128xf32>
    %257 = arith.mulf %247, %256 : vector<8x128xf32>
    %258 = arith.mulf %241, %249 : vector<8x128xf32>
    %259 = arith.addf %257, %258 : vector<8x128xf32>
    %260 = math.tanh %259 : vector<8x128xf32>
    %261 = arith.mulf %255, %260 : vector<8x128xf32>
    %c0_124 = arith.constant 0 : index
    %c0_125 = arith.constant 0 : index
    %262 = vector.load %arg8[%c0_124, %c0_125] : memref<8x128xf32, #tpu.memory_space<vmem>>, vector<8x128xf32>
    tpu.vector_store %arg8[%c0_124, %c0_125], %259 {strides = array<i32>} : memref<8x128xf32, #tpu.memory_space<vmem>>, vector<8x128xf32>,
    %c0_126 = arith.constant 0 : index
    %c0_127 = arith.constant 0 : index
    %263 = vector.load %arg7[%c0_126, %c0_127] : memref<8x128xf32, #tpu.memory_space<vmem>>, vector<8x128xf32>
    tpu.vector_store %arg7[%c0_126, %c0_127], %261 {strides = array<i32>} : memref<8x128xf32, #tpu.memory_space<vmem>>, vector<8x128xf32>,
    %264 = arith.truncf %261 : vector<8x128xf32> to vector<8x128xbf16>
    %c0_i32_128 = arith.constant 0 : i32
    %265 = arith.addi %c0_i32_128, %c5_i32 : i32
    %266 = arith.index_cast %265 : i32 to index
    %c0_129 = arith.constant 0 : index
    %c0_130 = arith.constant 0 : index
    %267 = vector.load %arg6[%266, %c0_129, %c0_130] : memref<8x8x128xbf16, #tpu.memory_space<vmem>>, vector<1x8x128xbf16>
    %268 = vector.shape_cast %267 : vector<1x8x128xbf16> to vector<8x128xbf16>
    %269 = vector.shape_cast %264 : vector<8x128xbf16> to vector<1x8x128xbf16>
    tpu.vector_store %arg6[%266, %c0_129, %c0_130], %269 {strides = array<i32>} : memref<8x8x128xbf16, #tpu.memory_space<vmem>>, vector<1x8x128xbf16>,
    %c6_i32 = arith.constant 6 : i32
    %c0_i32_131 = arith.constant 0 : i32
    %270 = arith.addi %c0_i32_131, %c6_i32 : i32
    %271 = arith.index_cast %270 : i32 to index
    %c0_132 = arith.constant 0 : index
    %c0_133 = arith.constant 0 : index
    %272 = vector.load %arg9[%271, %c0_132, %c0_133] : memref<8x8x512xf32, #tpu.memory_space<vmem>>, vector<1x8x512xf32>
    %273 = vector.shape_cast %272 : vector<1x8x512xf32> to vector<8x512xf32>
    %c0_134 = arith.constant 0 : index
    %c0_135 = arith.constant 0 : index
    %274 = vector.load %arg7[%c0_134, %c0_135] : memref<8x128xf32, #tpu.memory_space<vmem>>, vector<8x128xf32>
    %275 = arith.truncf %274 : vector<8x128xf32> to vector<8x128xbf16>
    %c0_136 = arith.constant 0 : index
    %c0_137 = arith.constant 0 : index
    %276 = vector.load %arg4[%c0_136, %c0_137] : memref<128x512xbf16, #tpu.memory_space<vmem>>, vector<128x512xbf16>
    %cst_138 = arith.constant dense<0.000000e+00> : vector<8x512xf32>
    %277 = tpu.matmul %275, %276, %cst_138 {dimension_numbers = #tpu.dot_dimension_numbers<[1], [0], [0], [1], [0, 0, 1, 1], [], []>} : vector<8x128xbf16>, vector<128x512xbf16>, vector<8x512xf32> -> vector<8x512xf32>
    %278 = arith.addf %273, %277 : vector<8x512xf32>
    %279 = vector.extract_strided_slice %278 {offsets = [0, 0], sizes = [8, 128], strides = [1, 1]} : vector<8x512xf32> to vector<8x128xf32>
    %280 = arith.negf %279 : vector<8x128xf32>
    %281 = math.exp %280 : vector<8x128xf32>
    %cst_139 = arith.constant 1.000000e+00 : f32
    %282 = vector.broadcast %cst_139 : f32 to vector<8x128xf32>
    %283 = arith.addf %282, %281 : vector<8x128xf32>
    %284 = arith.divf %282, %283 : vector<8x128xf32>
    %285 = vector.extract_strided_slice %278 {offsets = [0, 128], sizes = [8, 128], strides = [1, 1]} : vector<8x512xf32> to vector<8x128xf32>
    %286 = arith.negf %285 : vector<8x128xf32>
    %287 = math.exp %286 : vector<8x128xf32>
    %cst_140 = arith.constant 1.000000e+00 : f32
    %288 = vector.broadcast %cst_140 : f32 to vector<8x128xf32>
    %289 = arith.addf %288, %287 : vector<8x128xf32>
    %290 = arith.divf %288, %289 : vector<8x128xf32>
    %291 = vector.extract_strided_slice %278 {offsets = [0, 256], sizes = [8, 128], strides = [1, 1]} : vector<8x512xf32> to vector<8x128xf32>
    %292 = math.tanh %291 : vector<8x128xf32>
    %293 = vector.extract_strided_slice %278 {offsets = [0, 384], sizes = [8, 128], strides = [1, 1]} : vector<8x512xf32> to vector<8x128xf32>
    %294 = arith.negf %293 : vector<8x128xf32>
    %295 = math.exp %294 : vector<8x128xf32>
    %cst_141 = arith.constant 1.000000e+00 : f32
    %296 = vector.broadcast %cst_141 : f32 to vector<8x128xf32>
    %297 = arith.addf %296, %295 : vector<8x128xf32>
    %298 = arith.divf %296, %297 : vector<8x128xf32>
    %c0_142 = arith.constant 0 : index
    %c0_143 = arith.constant 0 : index
    %299 = vector.load %arg8[%c0_142, %c0_143] : memref<8x128xf32, #tpu.memory_space<vmem>>, vector<8x128xf32>
    %300 = arith.mulf %290, %299 : vector<8x128xf32>
    %301 = arith.mulf %284, %292 : vector<8x128xf32>
    %302 = arith.addf %300, %301 : vector<8x128xf32>
    %303 = math.tanh %302 : vector<8x128xf32>
    %304 = arith.mulf %298, %303 : vector<8x128xf32>
    %c0_144 = arith.constant 0 : index
    %c0_145 = arith.constant 0 : index
    %305 = vector.load %arg8[%c0_144, %c0_145] : memref<8x128xf32, #tpu.memory_space<vmem>>, vector<8x128xf32>
    tpu.vector_store %arg8[%c0_144, %c0_145], %302 {strides = array<i32>} : memref<8x128xf32, #tpu.memory_space<vmem>>, vector<8x128xf32>,
    %c0_146 = arith.constant 0 : index
    %c0_147 = arith.constant 0 : index
    %306 = vector.load %arg7[%c0_146, %c0_147] : memref<8x128xf32, #tpu.memory_space<vmem>>, vector<8x128xf32>
    tpu.vector_store %arg7[%c0_146, %c0_147], %304 {strides = array<i32>} : memref<8x128xf32, #tpu.memory_space<vmem>>, vector<8x128xf32>,
    %307 = arith.truncf %304 : vector<8x128xf32> to vector<8x128xbf16>
    %c0_i32_148 = arith.constant 0 : i32
    %308 = arith.addi %c0_i32_148, %c6_i32 : i32
    %309 = arith.index_cast %308 : i32 to index
    %c0_149 = arith.constant 0 : index
    %c0_150 = arith.constant 0 : index
    %310 = vector.load %arg6[%309, %c0_149, %c0_150] : memref<8x8x128xbf16, #tpu.memory_space<vmem>>, vector<1x8x128xbf16>
    %311 = vector.shape_cast %310 : vector<1x8x128xbf16> to vector<8x128xbf16>
    %312 = vector.shape_cast %307 : vector<8x128xbf16> to vector<1x8x128xbf16>
    tpu.vector_store %arg6[%309, %c0_149, %c0_150], %312 {strides = array<i32>} : memref<8x8x128xbf16, #tpu.memory_space<vmem>>, vector<1x8x128xbf16>,
    %c7_i32 = arith.constant 7 : i32
    %c0_i32_151 = arith.constant 0 : i32
    %313 = arith.addi %c0_i32_151, %c7_i32 : i32
    %314 = arith.index_cast %313 : i32 to index
    %c0_152 = arith.constant 0 : index
    %c0_153 = arith.constant 0 : index
    %315 = vector.load %arg9[%314, %c0_152, %c0_153] : memref<8x8x512xf32, #tpu.memory_space<vmem>>, vector<1x8x512xf32>
    %316 = vector.shape_cast %315 : vector<1x8x512xf32> to vector<8x512xf32>
    %c0_154 = arith.constant 0 : index
    %c0_155 = arith.constant 0 : index
    %317 = vector.load %arg7[%c0_154, %c0_155] : memref<8x128xf32, #tpu.memory_space<vmem>>, vector<8x128xf32>
    %318 = arith.truncf %317 : vector<8x128xf32> to vector<8x128xbf16>
    %c0_156 = arith.constant 0 : index
    %c0_157 = arith.constant 0 : index
    %319 = vector.load %arg4[%c0_156, %c0_157] : memref<128x512xbf16, #tpu.memory_space<vmem>>, vector<128x512xbf16>
    %cst_158 = arith.constant dense<0.000000e+00> : vector<8x512xf32>
    %320 = tpu.matmul %318, %319, %cst_158 {dimension_numbers = #tpu.dot_dimension_numbers<[1], [0], [0], [1], [0, 0, 1, 1], [], []>} : vector<8x128xbf16>, vector<128x512xbf16>, vector<8x512xf32> -> vector<8x512xf32>
    %321 = arith.addf %316, %320 : vector<8x512xf32>
    %322 = vector.extract_strided_slice %321 {offsets = [0, 0], sizes = [8, 128], strides = [1, 1]} : vector<8x512xf32> to vector<8x128xf32>
    %323 = arith.negf %322 : vector<8x128xf32>
    %324 = math.exp %323 : vector<8x128xf32>
    %cst_159 = arith.constant 1.000000e+00 : f32
    %325 = vector.broadcast %cst_159 : f32 to vector<8x128xf32>
    %326 = arith.addf %325, %324 : vector<8x128xf32>
    %327 = arith.divf %325, %326 : vector<8x128xf32>
    %328 = vector.extract_strided_slice %321 {offsets = [0, 128], sizes = [8, 128], strides = [1, 1]} : vector<8x512xf32> to vector<8x128xf32>
    %329 = arith.negf %328 : vector<8x128xf32>
    %330 = math.exp %329 : vector<8x128xf32>
    %cst_160 = arith.constant 1.000000e+00 : f32
    %331 = vector.broadcast %cst_160 : f32 to vector<8x128xf32>
    %332 = arith.addf %331, %330 : vector<8x128xf32>
    %333 = arith.divf %331, %332 : vector<8x128xf32>
    %334 = vector.extract_strided_slice %321 {offsets = [0, 256], sizes = [8, 128], strides = [1, 1]} : vector<8x512xf32> to vector<8x128xf32>
    %335 = math.tanh %334 : vector<8x128xf32>
    %336 = vector.extract_strided_slice %321 {offsets = [0, 384], sizes = [8, 128], strides = [1, 1]} : vector<8x512xf32> to vector<8x128xf32>
    %337 = arith.negf %336 : vector<8x128xf32>
    %338 = math.exp %337 : vector<8x128xf32>
    %cst_161 = arith.constant 1.000000e+00 : f32
    %339 = vector.broadcast %cst_161 : f32 to vector<8x128xf32>
    %340 = arith.addf %339, %338 : vector<8x128xf32>
    %341 = arith.divf %339, %340 : vector<8x128xf32>
    %c0_162 = arith.constant 0 : index
    %c0_163 = arith.constant 0 : index
    %342 = vector.load %arg8[%c0_162, %c0_163] : memref<8x128xf32, #tpu.memory_space<vmem>>, vector<8x128xf32>
    %343 = arith.mulf %333, %342 : vector<8x128xf32>
    %344 = arith.mulf %327, %335 : vector<8x128xf32>
    %345 = arith.addf %343, %344 : vector<8x128xf32>
    %346 = math.tanh %345 : vector<8x128xf32>
    %347 = arith.mulf %341, %346 : vector<8x128xf32>
    %c0_164 = arith.constant 0 : index
    %c0_165 = arith.constant 0 : index
    %348 = vector.load %arg8[%c0_164, %c0_165] : memref<8x128xf32, #tpu.memory_space<vmem>>, vector<8x128xf32>
    tpu.vector_store %arg8[%c0_164, %c0_165], %345 {strides = array<i32>} : memref<8x128xf32, #tpu.memory_space<vmem>>, vector<8x128xf32>,
    %c0_166 = arith.constant 0 : index
    %c0_167 = arith.constant 0 : index
    %349 = vector.load %arg7[%c0_166, %c0_167] : memref<8x128xf32, #tpu.memory_space<vmem>>, vector<8x128xf32>
    tpu.vector_store %arg7[%c0_166, %c0_167], %347 {strides = array<i32>} : memref<8x128xf32, #tpu.memory_space<vmem>>, vector<8x128xf32>,
    %350 = arith.truncf %347 : vector<8x128xf32> to vector<8x128xbf16>
    %c0_i32_168 = arith.constant 0 : i32
    %351 = arith.addi %c0_i32_168, %c7_i32 : i32
    %352 = arith.index_cast %351 : i32 to index
    %c0_169 = arith.constant 0 : index
    %c0_170 = arith.constant 0 : index
    %353 = vector.load %arg6[%352, %c0_169, %c0_170] : memref<8x8x128xbf16, #tpu.memory_space<vmem>>, vector<1x8x128xbf16>
    %354 = vector.shape_cast %353 : vector<1x8x128xbf16> to vector<8x128xbf16>
    %355 = vector.shape_cast %350 : vector<8x128xbf16> to vector<1x8x128xbf16>
    tpu.vector_store %arg6[%352, %c0_169, %c0_170], %355 {strides = array<i32>} : memref<8x8x128xbf16, #tpu.memory_space<vmem>>, vector<1x8x128xbf16>,
    %c8_i32 = arith.constant 8 : i32
    return
  }
  func.func @transform_0(%arg0: i32, %arg1: i32) -> (i32, i32, i32) {
    %c0_i32 = arith.constant 0 : i32
    %c0_i32_0 = arith.constant 0 : i32
    return %arg1, %arg0, %c0_i32 : i32, i32, i32
  }
  func.func @transform_1(%arg0: i32, %arg1: i32) -> (i32, i32) {
    %c0_i32 = arith.constant 0 : i32
    %c0_i32_0 = arith.constant 0 : i32
    %c0_i32_1 = arith.constant 0 : i32
    return %c0_i32, %c0_i32_0 : i32, i32
  }
  func.func @transform_2(%arg0: i32, %arg1: i32) -> (i32, i32) {
    %c0_i32 = arith.constant 0 : i32
    %c0_i32_0 = arith.constant 0 : i32
    %c0_i32_1 = arith.constant 0 : i32
    return %c0_i32, %c0_i32_0 : i32, i32
  }
  func.func @transform_3(%arg0: i32, %arg1: i32) -> (i32, i32) {
    %c0_i32 = arith.constant 0 : i32
    %c0_i32_0 = arith.constant 0 : i32
    %c0_i32_1 = arith.constant 0 : i32
    return %c0_i32, %c0_i32_0 : i32, i32
  }
  func.func @transform_4(%arg0: i32, %arg1: i32) -> (i32, i32, i32) {
    %c0_i32 = arith.constant 0 : i32
    %c0_i32_0 = arith.constant 0 : i32
    return %arg1, %arg0, %c0_i32 : i32, i32, i32
  }
}

module attributes {stable_mosaic.version = 11 : i64} {
  func.func @lstm_last_kernel(%arg0: i32, %arg1: i32, %arg2: memref<8x8x128xbf16, #tpu.memory_space<vmem>>, %arg3: memref<128x512xbf16, #tpu.memory_space<vmem>>, %arg4: memref<128x512xbf16, #tpu.memory_space<vmem>>, %arg5: memref<1x512xf32, #tpu.memory_space<vmem>>, %arg6: memref<128x128xbf16, #tpu.memory_space<vmem>>, %arg7: memref<1x128xf32, #tpu.memory_space<vmem>>, %arg8: memref<8x128xf32, #tpu.memory_space<vmem>>, %arg9: memref<8x128xf32, #tpu.memory_space<vmem>>, %arg10: memref<8x128xf32, #tpu.memory_space<vmem>>, %arg11: memref<8x8x512xf32, #tpu.memory_space<vmem>>) attributes {dimension_semantics = [#tpu.dimension_semantics<parallel>, #tpu.dimension_semantics<arbitrary>], iteration_bounds = array<i64: 1, 1>, scalar_prefetch = 0 : i64, scratch_operands = 3 : i64, tpu.core_type = #tpu.core_type<tc>, window_params = [{transform_indices = @transform_0, window_bounds = array<i64: 8, 8, 128>}, {pipeline_mode = #tpu.pipeline_mode<synchronous>, transform_indices = @transform_1, window_bounds = array<i64: 128, 512>}, {pipeline_mode = #tpu.pipeline_mode<synchronous>, transform_indices = @transform_2, window_bounds = array<i64: 128, 512>}, {pipeline_mode = #tpu.pipeline_mode<synchronous>, transform_indices = @transform_3, window_bounds = array<i64: 1, 512>}, {pipeline_mode = #tpu.pipeline_mode<synchronous>, transform_indices = @transform_4, window_bounds = array<i64: 128, 128>}, {pipeline_mode = #tpu.pipeline_mode<synchronous>, transform_indices = @transform_5, window_bounds = array<i64: 1, 128>}, {transform_indices = @transform_6, window_bounds = array<i64: 8, 128>}]} {
    %c0_i32 = arith.constant 0 : i32
    %0 = arith.cmpi eq, %arg1, %c0_i32 : i32
    %1 = arith.extui %0 : i1 to i32
    %c0_i32_0 = arith.constant 0 : i32
    %2 = arith.cmpi ne, %1, %c0_i32_0 : i32
    scf.if %2 {
      %cst_149 = arith.constant 0.000000e+00 : f32
      %311 = vector.broadcast %cst_149 : f32 to vector<8x128xf32>
      %c0_150 = arith.constant 0 : index
      %c0_151 = arith.constant 0 : index
      %312 = vector.load %arg9[%c0_150, %c0_151] : memref<8x128xf32, #tpu.memory_space<vmem>>, vector<8x128xf32>
      tpu.vector_store %arg9[%c0_150, %c0_151], %311 {strides = array<i32>} : memref<8x128xf32, #tpu.memory_space<vmem>>, vector<8x128xf32>,
      %cst_152 = arith.constant 0.000000e+00 : f32
      %313 = vector.broadcast %cst_152 : f32 to vector<8x128xf32>
      %c0_153 = arith.constant 0 : index
      %c0_154 = arith.constant 0 : index
      %314 = vector.load %arg10[%c0_153, %c0_154] : memref<8x128xf32, #tpu.memory_space<vmem>>, vector<8x128xf32>
      tpu.vector_store %arg10[%c0_153, %c0_154], %313 {strides = array<i32>} : memref<8x128xf32, #tpu.memory_space<vmem>>, vector<8x128xf32>,
    } else {
    }
    %c0 = arith.constant 0 : index
    %c0_1 = arith.constant 0 : index
    %c0_2 = arith.constant 0 : index
    %3 = vector.load %arg2[%c0, %c0_1, %c0_2] : memref<8x8x128xbf16, #tpu.memory_space<vmem>>, vector<8x8x128xbf16>
    %4 = vector.shape_cast %3 : vector<8x8x128xbf16> to vector<64x128xbf16>
    %c0_3 = arith.constant 0 : index
    %c0_4 = arith.constant 0 : index
    %5 = vector.load %arg3[%c0_3, %c0_4] : memref<128x512xbf16, #tpu.memory_space<vmem>>, vector<128x512xbf16>
    %cst = arith.constant dense<0.000000e+00> : vector<64x512xf32>
    %6 = tpu.matmul %4, %5, %cst {dimension_numbers = #tpu.dot_dimension_numbers<[1], [0], [0], [1], [0, 0, 1, 1], [], []>} : vector<64x128xbf16>, vector<128x512xbf16>, vector<64x512xf32> -> vector<64x512xf32>
    %c0_5 = arith.constant 0 : index
    %c0_6 = arith.constant 0 : index
    %7 = vector.load %arg5[%c0_5, %c0_6] : memref<1x512xf32, #tpu.memory_space<vmem>>, vector<1x512xf32>
    %8 = vector.broadcast %7 : vector<1x512xf32> to vector<64x512xf32>
    %9 = arith.addf %6, %8 : vector<64x512xf32>
    %10 = vector.shape_cast %9 : vector<64x512xf32> to vector<8x8x512xf32>
    %c0_7 = arith.constant 0 : index
    %c0_8 = arith.constant 0 : index
    %c0_9 = arith.constant 0 : index
    %11 = vector.load %arg11[%c0_7, %c0_8, %c0_9] : memref<8x8x512xf32, #tpu.memory_space<vmem>>, vector<8x8x512xf32>
    tpu.vector_store %arg11[%c0_7, %c0_8, %c0_9], %10 {strides = array<i32>} : memref<8x8x512xf32, #tpu.memory_space<vmem>>, vector<8x8x512xf32>,
    %c0_i32_10 = arith.constant 0 : i32
    %c0_i32_11 = arith.constant 0 : i32
    %12 = arith.addi %c0_i32_11, %c0_i32_10 : i32
    %13 = arith.index_cast %12 : i32 to index
    %c0_12 = arith.constant 0 : index
    %c0_13 = arith.constant 0 : index
    %14 = vector.load %arg11[%13, %c0_12, %c0_13] : memref<8x8x512xf32, #tpu.memory_space<vmem>>, vector<1x8x512xf32>
    %15 = vector.shape_cast %14 : vector<1x8x512xf32> to vector<8x512xf32>
    %c0_14 = arith.constant 0 : index
    %c0_15 = arith.constant 0 : index
    %16 = vector.load %arg9[%c0_14, %c0_15] : memref<8x128xf32, #tpu.memory_space<vmem>>, vector<8x128xf32>
    %17 = arith.truncf %16 : vector<8x128xf32> to vector<8x128xbf16>
    %c0_16 = arith.constant 0 : index
    %c0_17 = arith.constant 0 : index
    %18 = vector.load %arg4[%c0_16, %c0_17] : memref<128x512xbf16, #tpu.memory_space<vmem>>, vector<128x512xbf16>
    %cst_18 = arith.constant dense<0.000000e+00> : vector<8x512xf32>
    %19 = tpu.matmul %17, %18, %cst_18 {dimension_numbers = #tpu.dot_dimension_numbers<[1], [0], [0], [1], [0, 0, 1, 1], [], []>} : vector<8x128xbf16>, vector<128x512xbf16>, vector<8x512xf32> -> vector<8x512xf32>
    %20 = arith.addf %15, %19 : vector<8x512xf32>
    %21 = vector.extract_strided_slice %20 {offsets = [0, 0], sizes = [8, 128], strides = [1, 1]} : vector<8x512xf32> to vector<8x128xf32>
    %22 = arith.negf %21 : vector<8x128xf32>
    %23 = math.exp %22 : vector<8x128xf32>
    %cst_19 = arith.constant 1.000000e+00 : f32
    %24 = vector.broadcast %cst_19 : f32 to vector<8x128xf32>
    %25 = arith.addf %24, %23 : vector<8x128xf32>
    %26 = arith.divf %24, %25 : vector<8x128xf32>
    %27 = vector.extract_strided_slice %20 {offsets = [0, 128], sizes = [8, 128], strides = [1, 1]} : vector<8x512xf32> to vector<8x128xf32>
    %28 = arith.negf %27 : vector<8x128xf32>
    %29 = math.exp %28 : vector<8x128xf32>
    %cst_20 = arith.constant 1.000000e+00 : f32
    %30 = vector.broadcast %cst_20 : f32 to vector<8x128xf32>
    %31 = arith.addf %30, %29 : vector<8x128xf32>
    %32 = arith.divf %30, %31 : vector<8x128xf32>
    %33 = vector.extract_strided_slice %20 {offsets = [0, 256], sizes = [8, 128], strides = [1, 1]} : vector<8x512xf32> to vector<8x128xf32>
    %34 = math.tanh %33 : vector<8x128xf32>
    %35 = vector.extract_strided_slice %20 {offsets = [0, 384], sizes = [8, 128], strides = [1, 1]} : vector<8x512xf32> to vector<8x128xf32>
    %36 = arith.negf %35 : vector<8x128xf32>
    %37 = math.exp %36 : vector<8x128xf32>
    %cst_21 = arith.constant 1.000000e+00 : f32
    %38 = vector.broadcast %cst_21 : f32 to vector<8x128xf32>
    %39 = arith.addf %38, %37 : vector<8x128xf32>
    %40 = arith.divf %38, %39 : vector<8x128xf32>
    %c0_22 = arith.constant 0 : index
    %c0_23 = arith.constant 0 : index
    %41 = vector.load %arg10[%c0_22, %c0_23] : memref<8x128xf32, #tpu.memory_space<vmem>>, vector<8x128xf32>
    %42 = arith.mulf %32, %41 : vector<8x128xf32>
    %43 = arith.mulf %26, %34 : vector<8x128xf32>
    %44 = arith.addf %42, %43 : vector<8x128xf32>
    %45 = math.tanh %44 : vector<8x128xf32>
    %46 = arith.mulf %40, %45 : vector<8x128xf32>
    %c0_24 = arith.constant 0 : index
    %c0_25 = arith.constant 0 : index
    %47 = vector.load %arg10[%c0_24, %c0_25] : memref<8x128xf32, #tpu.memory_space<vmem>>, vector<8x128xf32>
    tpu.vector_store %arg10[%c0_24, %c0_25], %44 {strides = array<i32>} : memref<8x128xf32, #tpu.memory_space<vmem>>, vector<8x128xf32>,
    %c0_26 = arith.constant 0 : index
    %c0_27 = arith.constant 0 : index
    %48 = vector.load %arg9[%c0_26, %c0_27] : memref<8x128xf32, #tpu.memory_space<vmem>>, vector<8x128xf32>
    tpu.vector_store %arg9[%c0_26, %c0_27], %46 {strides = array<i32>} : memref<8x128xf32, #tpu.memory_space<vmem>>, vector<8x128xf32>,
    %c1_i32 = arith.constant 1 : i32
    %c0_i32_28 = arith.constant 0 : i32
    %49 = arith.addi %c0_i32_28, %c1_i32 : i32
    %50 = arith.index_cast %49 : i32 to index
    %c0_29 = arith.constant 0 : index
    %c0_30 = arith.constant 0 : index
    %51 = vector.load %arg11[%50, %c0_29, %c0_30] : memref<8x8x512xf32, #tpu.memory_space<vmem>>, vector<1x8x512xf32>
    %52 = vector.shape_cast %51 : vector<1x8x512xf32> to vector<8x512xf32>
    %c0_31 = arith.constant 0 : index
    %c0_32 = arith.constant 0 : index
    %53 = vector.load %arg9[%c0_31, %c0_32] : memref<8x128xf32, #tpu.memory_space<vmem>>, vector<8x128xf32>
    %54 = arith.truncf %53 : vector<8x128xf32> to vector<8x128xbf16>
    %c0_33 = arith.constant 0 : index
    %c0_34 = arith.constant 0 : index
    %55 = vector.load %arg4[%c0_33, %c0_34] : memref<128x512xbf16, #tpu.memory_space<vmem>>, vector<128x512xbf16>
    %cst_35 = arith.constant dense<0.000000e+00> : vector<8x512xf32>
    %56 = tpu.matmul %54, %55, %cst_35 {dimension_numbers = #tpu.dot_dimension_numbers<[1], [0], [0], [1], [0, 0, 1, 1], [], []>} : vector<8x128xbf16>, vector<128x512xbf16>, vector<8x512xf32> -> vector<8x512xf32>
    %57 = arith.addf %52, %56 : vector<8x512xf32>
    %58 = vector.extract_strided_slice %57 {offsets = [0, 0], sizes = [8, 128], strides = [1, 1]} : vector<8x512xf32> to vector<8x128xf32>
    %59 = arith.negf %58 : vector<8x128xf32>
    %60 = math.exp %59 : vector<8x128xf32>
    %cst_36 = arith.constant 1.000000e+00 : f32
    %61 = vector.broadcast %cst_36 : f32 to vector<8x128xf32>
    %62 = arith.addf %61, %60 : vector<8x128xf32>
    %63 = arith.divf %61, %62 : vector<8x128xf32>
    %64 = vector.extract_strided_slice %57 {offsets = [0, 128], sizes = [8, 128], strides = [1, 1]} : vector<8x512xf32> to vector<8x128xf32>
    %65 = arith.negf %64 : vector<8x128xf32>
    %66 = math.exp %65 : vector<8x128xf32>
    %cst_37 = arith.constant 1.000000e+00 : f32
    %67 = vector.broadcast %cst_37 : f32 to vector<8x128xf32>
    %68 = arith.addf %67, %66 : vector<8x128xf32>
    %69 = arith.divf %67, %68 : vector<8x128xf32>
    %70 = vector.extract_strided_slice %57 {offsets = [0, 256], sizes = [8, 128], strides = [1, 1]} : vector<8x512xf32> to vector<8x128xf32>
    %71 = math.tanh %70 : vector<8x128xf32>
    %72 = vector.extract_strided_slice %57 {offsets = [0, 384], sizes = [8, 128], strides = [1, 1]} : vector<8x512xf32> to vector<8x128xf32>
    %73 = arith.negf %72 : vector<8x128xf32>
    %74 = math.exp %73 : vector<8x128xf32>
    %cst_38 = arith.constant 1.000000e+00 : f32
    %75 = vector.broadcast %cst_38 : f32 to vector<8x128xf32>
    %76 = arith.addf %75, %74 : vector<8x128xf32>
    %77 = arith.divf %75, %76 : vector<8x128xf32>
    %c0_39 = arith.constant 0 : index
    %c0_40 = arith.constant 0 : index
    %78 = vector.load %arg10[%c0_39, %c0_40] : memref<8x128xf32, #tpu.memory_space<vmem>>, vector<8x128xf32>
    %79 = arith.mulf %69, %78 : vector<8x128xf32>
    %80 = arith.mulf %63, %71 : vector<8x128xf32>
    %81 = arith.addf %79, %80 : vector<8x128xf32>
    %82 = math.tanh %81 : vector<8x128xf32>
    %83 = arith.mulf %77, %82 : vector<8x128xf32>
    %c0_41 = arith.constant 0 : index
    %c0_42 = arith.constant 0 : index
    %84 = vector.load %arg10[%c0_41, %c0_42] : memref<8x128xf32, #tpu.memory_space<vmem>>, vector<8x128xf32>
    tpu.vector_store %arg10[%c0_41, %c0_42], %81 {strides = array<i32>} : memref<8x128xf32, #tpu.memory_space<vmem>>, vector<8x128xf32>,
    %c0_43 = arith.constant 0 : index
    %c0_44 = arith.constant 0 : index
    %85 = vector.load %arg9[%c0_43, %c0_44] : memref<8x128xf32, #tpu.memory_space<vmem>>, vector<8x128xf32>
    tpu.vector_store %arg9[%c0_43, %c0_44], %83 {strides = array<i32>} : memref<8x128xf32, #tpu.memory_space<vmem>>, vector<8x128xf32>,
    %c2_i32 = arith.constant 2 : i32
    %c0_i32_45 = arith.constant 0 : i32
    %86 = arith.addi %c0_i32_45, %c2_i32 : i32
    %87 = arith.index_cast %86 : i32 to index
    %c0_46 = arith.constant 0 : index
    %c0_47 = arith.constant 0 : index
    %88 = vector.load %arg11[%87, %c0_46, %c0_47] : memref<8x8x512xf32, #tpu.memory_space<vmem>>, vector<1x8x512xf32>
    %89 = vector.shape_cast %88 : vector<1x8x512xf32> to vector<8x512xf32>
    %c0_48 = arith.constant 0 : index
    %c0_49 = arith.constant 0 : index
    %90 = vector.load %arg9[%c0_48, %c0_49] : memref<8x128xf32, #tpu.memory_space<vmem>>, vector<8x128xf32>
    %91 = arith.truncf %90 : vector<8x128xf32> to vector<8x128xbf16>
    %c0_50 = arith.constant 0 : index
    %c0_51 = arith.constant 0 : index
    %92 = vector.load %arg4[%c0_50, %c0_51] : memref<128x512xbf16, #tpu.memory_space<vmem>>, vector<128x512xbf16>
    %cst_52 = arith.constant dense<0.000000e+00> : vector<8x512xf32>
    %93 = tpu.matmul %91, %92, %cst_52 {dimension_numbers = #tpu.dot_dimension_numbers<[1], [0], [0], [1], [0, 0, 1, 1], [], []>} : vector<8x128xbf16>, vector<128x512xbf16>, vector<8x512xf32> -> vector<8x512xf32>
    %94 = arith.addf %89, %93 : vector<8x512xf32>
    %95 = vector.extract_strided_slice %94 {offsets = [0, 0], sizes = [8, 128], strides = [1, 1]} : vector<8x512xf32> to vector<8x128xf32>
    %96 = arith.negf %95 : vector<8x128xf32>
    %97 = math.exp %96 : vector<8x128xf32>
    %cst_53 = arith.constant 1.000000e+00 : f32
    %98 = vector.broadcast %cst_53 : f32 to vector<8x128xf32>
    %99 = arith.addf %98, %97 : vector<8x128xf32>
    %100 = arith.divf %98, %99 : vector<8x128xf32>
    %101 = vector.extract_strided_slice %94 {offsets = [0, 128], sizes = [8, 128], strides = [1, 1]} : vector<8x512xf32> to vector<8x128xf32>
    %102 = arith.negf %101 : vector<8x128xf32>
    %103 = math.exp %102 : vector<8x128xf32>
    %cst_54 = arith.constant 1.000000e+00 : f32
    %104 = vector.broadcast %cst_54 : f32 to vector<8x128xf32>
    %105 = arith.addf %104, %103 : vector<8x128xf32>
    %106 = arith.divf %104, %105 : vector<8x128xf32>
    %107 = vector.extract_strided_slice %94 {offsets = [0, 256], sizes = [8, 128], strides = [1, 1]} : vector<8x512xf32> to vector<8x128xf32>
    %108 = math.tanh %107 : vector<8x128xf32>
    %109 = vector.extract_strided_slice %94 {offsets = [0, 384], sizes = [8, 128], strides = [1, 1]} : vector<8x512xf32> to vector<8x128xf32>
    %110 = arith.negf %109 : vector<8x128xf32>
    %111 = math.exp %110 : vector<8x128xf32>
    %cst_55 = arith.constant 1.000000e+00 : f32
    %112 = vector.broadcast %cst_55 : f32 to vector<8x128xf32>
    %113 = arith.addf %112, %111 : vector<8x128xf32>
    %114 = arith.divf %112, %113 : vector<8x128xf32>
    %c0_56 = arith.constant 0 : index
    %c0_57 = arith.constant 0 : index
    %115 = vector.load %arg10[%c0_56, %c0_57] : memref<8x128xf32, #tpu.memory_space<vmem>>, vector<8x128xf32>
    %116 = arith.mulf %106, %115 : vector<8x128xf32>
    %117 = arith.mulf %100, %108 : vector<8x128xf32>
    %118 = arith.addf %116, %117 : vector<8x128xf32>
    %119 = math.tanh %118 : vector<8x128xf32>
    %120 = arith.mulf %114, %119 : vector<8x128xf32>
    %c0_58 = arith.constant 0 : index
    %c0_59 = arith.constant 0 : index
    %121 = vector.load %arg10[%c0_58, %c0_59] : memref<8x128xf32, #tpu.memory_space<vmem>>, vector<8x128xf32>
    tpu.vector_store %arg10[%c0_58, %c0_59], %118 {strides = array<i32>} : memref<8x128xf32, #tpu.memory_space<vmem>>, vector<8x128xf32>,
    %c0_60 = arith.constant 0 : index
    %c0_61 = arith.constant 0 : index
    %122 = vector.load %arg9[%c0_60, %c0_61] : memref<8x128xf32, #tpu.memory_space<vmem>>, vector<8x128xf32>
    tpu.vector_store %arg9[%c0_60, %c0_61], %120 {strides = array<i32>} : memref<8x128xf32, #tpu.memory_space<vmem>>, vector<8x128xf32>,
    %c3_i32 = arith.constant 3 : i32
    %c0_i32_62 = arith.constant 0 : i32
    %123 = arith.addi %c0_i32_62, %c3_i32 : i32
    %124 = arith.index_cast %123 : i32 to index
    %c0_63 = arith.constant 0 : index
    %c0_64 = arith.constant 0 : index
    %125 = vector.load %arg11[%124, %c0_63, %c0_64] : memref<8x8x512xf32, #tpu.memory_space<vmem>>, vector<1x8x512xf32>
    %126 = vector.shape_cast %125 : vector<1x8x512xf32> to vector<8x512xf32>
    %c0_65 = arith.constant 0 : index
    %c0_66 = arith.constant 0 : index
    %127 = vector.load %arg9[%c0_65, %c0_66] : memref<8x128xf32, #tpu.memory_space<vmem>>, vector<8x128xf32>
    %128 = arith.truncf %127 : vector<8x128xf32> to vector<8x128xbf16>
    %c0_67 = arith.constant 0 : index
    %c0_68 = arith.constant 0 : index
    %129 = vector.load %arg4[%c0_67, %c0_68] : memref<128x512xbf16, #tpu.memory_space<vmem>>, vector<128x512xbf16>
    %cst_69 = arith.constant dense<0.000000e+00> : vector<8x512xf32>
    %130 = tpu.matmul %128, %129, %cst_69 {dimension_numbers = #tpu.dot_dimension_numbers<[1], [0], [0], [1], [0, 0, 1, 1], [], []>} : vector<8x128xbf16>, vector<128x512xbf16>, vector<8x512xf32> -> vector<8x512xf32>
    %131 = arith.addf %126, %130 : vector<8x512xf32>
    %132 = vector.extract_strided_slice %131 {offsets = [0, 0], sizes = [8, 128], strides = [1, 1]} : vector<8x512xf32> to vector<8x128xf32>
    %133 = arith.negf %132 : vector<8x128xf32>
    %134 = math.exp %133 : vector<8x128xf32>
    %cst_70 = arith.constant 1.000000e+00 : f32
    %135 = vector.broadcast %cst_70 : f32 to vector<8x128xf32>
    %136 = arith.addf %135, %134 : vector<8x128xf32>
    %137 = arith.divf %135, %136 : vector<8x128xf32>
    %138 = vector.extract_strided_slice %131 {offsets = [0, 128], sizes = [8, 128], strides = [1, 1]} : vector<8x512xf32> to vector<8x128xf32>
    %139 = arith.negf %138 : vector<8x128xf32>
    %140 = math.exp %139 : vector<8x128xf32>
    %cst_71 = arith.constant 1.000000e+00 : f32
    %141 = vector.broadcast %cst_71 : f32 to vector<8x128xf32>
    %142 = arith.addf %141, %140 : vector<8x128xf32>
    %143 = arith.divf %141, %142 : vector<8x128xf32>
    %144 = vector.extract_strided_slice %131 {offsets = [0, 256], sizes = [8, 128], strides = [1, 1]} : vector<8x512xf32> to vector<8x128xf32>
    %145 = math.tanh %144 : vector<8x128xf32>
    %146 = vector.extract_strided_slice %131 {offsets = [0, 384], sizes = [8, 128], strides = [1, 1]} : vector<8x512xf32> to vector<8x128xf32>
    %147 = arith.negf %146 : vector<8x128xf32>
    %148 = math.exp %147 : vector<8x128xf32>
    %cst_72 = arith.constant 1.000000e+00 : f32
    %149 = vector.broadcast %cst_72 : f32 to vector<8x128xf32>
    %150 = arith.addf %149, %148 : vector<8x128xf32>
    %151 = arith.divf %149, %150 : vector<8x128xf32>
    %c0_73 = arith.constant 0 : index
    %c0_74 = arith.constant 0 : index
    %152 = vector.load %arg10[%c0_73, %c0_74] : memref<8x128xf32, #tpu.memory_space<vmem>>, vector<8x128xf32>
    %153 = arith.mulf %143, %152 : vector<8x128xf32>
    %154 = arith.mulf %137, %145 : vector<8x128xf32>
    %155 = arith.addf %153, %154 : vector<8x128xf32>
    %156 = math.tanh %155 : vector<8x128xf32>
    %157 = arith.mulf %151, %156 : vector<8x128xf32>
    %c0_75 = arith.constant 0 : index
    %c0_76 = arith.constant 0 : index
    %158 = vector.load %arg10[%c0_75, %c0_76] : memref<8x128xf32, #tpu.memory_space<vmem>>, vector<8x128xf32>
    tpu.vector_store %arg10[%c0_75, %c0_76], %155 {strides = array<i32>} : memref<8x128xf32, #tpu.memory_space<vmem>>, vector<8x128xf32>,
    %c0_77 = arith.constant 0 : index
    %c0_78 = arith.constant 0 : index
    %159 = vector.load %arg9[%c0_77, %c0_78] : memref<8x128xf32, #tpu.memory_space<vmem>>, vector<8x128xf32>
    tpu.vector_store %arg9[%c0_77, %c0_78], %157 {strides = array<i32>} : memref<8x128xf32, #tpu.memory_space<vmem>>, vector<8x128xf32>,
    %c4_i32 = arith.constant 4 : i32
    %c0_i32_79 = arith.constant 0 : i32
    %160 = arith.addi %c0_i32_79, %c4_i32 : i32
    %161 = arith.index_cast %160 : i32 to index
    %c0_80 = arith.constant 0 : index
    %c0_81 = arith.constant 0 : index
    %162 = vector.load %arg11[%161, %c0_80, %c0_81] : memref<8x8x512xf32, #tpu.memory_space<vmem>>, vector<1x8x512xf32>
    %163 = vector.shape_cast %162 : vector<1x8x512xf32> to vector<8x512xf32>
    %c0_82 = arith.constant 0 : index
    %c0_83 = arith.constant 0 : index
    %164 = vector.load %arg9[%c0_82, %c0_83] : memref<8x128xf32, #tpu.memory_space<vmem>>, vector<8x128xf32>
    %165 = arith.truncf %164 : vector<8x128xf32> to vector<8x128xbf16>
    %c0_84 = arith.constant 0 : index
    %c0_85 = arith.constant 0 : index
    %166 = vector.load %arg4[%c0_84, %c0_85] : memref<128x512xbf16, #tpu.memory_space<vmem>>, vector<128x512xbf16>
    %cst_86 = arith.constant dense<0.000000e+00> : vector<8x512xf32>
    %167 = tpu.matmul %165, %166, %cst_86 {dimension_numbers = #tpu.dot_dimension_numbers<[1], [0], [0], [1], [0, 0, 1, 1], [], []>} : vector<8x128xbf16>, vector<128x512xbf16>, vector<8x512xf32> -> vector<8x512xf32>
    %168 = arith.addf %163, %167 : vector<8x512xf32>
    %169 = vector.extract_strided_slice %168 {offsets = [0, 0], sizes = [8, 128], strides = [1, 1]} : vector<8x512xf32> to vector<8x128xf32>
    %170 = arith.negf %169 : vector<8x128xf32>
    %171 = math.exp %170 : vector<8x128xf32>
    %cst_87 = arith.constant 1.000000e+00 : f32
    %172 = vector.broadcast %cst_87 : f32 to vector<8x128xf32>
    %173 = arith.addf %172, %171 : vector<8x128xf32>
    %174 = arith.divf %172, %173 : vector<8x128xf32>
    %175 = vector.extract_strided_slice %168 {offsets = [0, 128], sizes = [8, 128], strides = [1, 1]} : vector<8x512xf32> to vector<8x128xf32>
    %176 = arith.negf %175 : vector<8x128xf32>
    %177 = math.exp %176 : vector<8x128xf32>
    %cst_88 = arith.constant 1.000000e+00 : f32
    %178 = vector.broadcast %cst_88 : f32 to vector<8x128xf32>
    %179 = arith.addf %178, %177 : vector<8x128xf32>
    %180 = arith.divf %178, %179 : vector<8x128xf32>
    %181 = vector.extract_strided_slice %168 {offsets = [0, 256], sizes = [8, 128], strides = [1, 1]} : vector<8x512xf32> to vector<8x128xf32>
    %182 = math.tanh %181 : vector<8x128xf32>
    %183 = vector.extract_strided_slice %168 {offsets = [0, 384], sizes = [8, 128], strides = [1, 1]} : vector<8x512xf32> to vector<8x128xf32>
    %184 = arith.negf %183 : vector<8x128xf32>
    %185 = math.exp %184 : vector<8x128xf32>
    %cst_89 = arith.constant 1.000000e+00 : f32
    %186 = vector.broadcast %cst_89 : f32 to vector<8x128xf32>
    %187 = arith.addf %186, %185 : vector<8x128xf32>
    %188 = arith.divf %186, %187 : vector<8x128xf32>
    %c0_90 = arith.constant 0 : index
    %c0_91 = arith.constant 0 : index
    %189 = vector.load %arg10[%c0_90, %c0_91] : memref<8x128xf32, #tpu.memory_space<vmem>>, vector<8x128xf32>
    %190 = arith.mulf %180, %189 : vector<8x128xf32>
    %191 = arith.mulf %174, %182 : vector<8x128xf32>
    %192 = arith.addf %190, %191 : vector<8x128xf32>
    %193 = math.tanh %192 : vector<8x128xf32>
    %194 = arith.mulf %188, %193 : vector<8x128xf32>
    %c0_92 = arith.constant 0 : index
    %c0_93 = arith.constant 0 : index
    %195 = vector.load %arg10[%c0_92, %c0_93] : memref<8x128xf32, #tpu.memory_space<vmem>>, vector<8x128xf32>
    tpu.vector_store %arg10[%c0_92, %c0_93], %192 {strides = array<i32>} : memref<8x128xf32, #tpu.memory_space<vmem>>, vector<8x128xf32>,
    %c0_94 = arith.constant 0 : index
    %c0_95 = arith.constant 0 : index
    %196 = vector.load %arg9[%c0_94, %c0_95] : memref<8x128xf32, #tpu.memory_space<vmem>>, vector<8x128xf32>
    tpu.vector_store %arg9[%c0_94, %c0_95], %194 {strides = array<i32>} : memref<8x128xf32, #tpu.memory_space<vmem>>, vector<8x128xf32>,
    %c5_i32 = arith.constant 5 : i32
    %c0_i32_96 = arith.constant 0 : i32
    %197 = arith.addi %c0_i32_96, %c5_i32 : i32
    %198 = arith.index_cast %197 : i32 to index
    %c0_97 = arith.constant 0 : index
    %c0_98 = arith.constant 0 : index
    %199 = vector.load %arg11[%198, %c0_97, %c0_98] : memref<8x8x512xf32, #tpu.memory_space<vmem>>, vector<1x8x512xf32>
    %200 = vector.shape_cast %199 : vector<1x8x512xf32> to vector<8x512xf32>
    %c0_99 = arith.constant 0 : index
    %c0_100 = arith.constant 0 : index
    %201 = vector.load %arg9[%c0_99, %c0_100] : memref<8x128xf32, #tpu.memory_space<vmem>>, vector<8x128xf32>
    %202 = arith.truncf %201 : vector<8x128xf32> to vector<8x128xbf16>
    %c0_101 = arith.constant 0 : index
    %c0_102 = arith.constant 0 : index
    %203 = vector.load %arg4[%c0_101, %c0_102] : memref<128x512xbf16, #tpu.memory_space<vmem>>, vector<128x512xbf16>
    %cst_103 = arith.constant dense<0.000000e+00> : vector<8x512xf32>
    %204 = tpu.matmul %202, %203, %cst_103 {dimension_numbers = #tpu.dot_dimension_numbers<[1], [0], [0], [1], [0, 0, 1, 1], [], []>} : vector<8x128xbf16>, vector<128x512xbf16>, vector<8x512xf32> -> vector<8x512xf32>
    %205 = arith.addf %200, %204 : vector<8x512xf32>
    %206 = vector.extract_strided_slice %205 {offsets = [0, 0], sizes = [8, 128], strides = [1, 1]} : vector<8x512xf32> to vector<8x128xf32>
    %207 = arith.negf %206 : vector<8x128xf32>
    %208 = math.exp %207 : vector<8x128xf32>
    %cst_104 = arith.constant 1.000000e+00 : f32
    %209 = vector.broadcast %cst_104 : f32 to vector<8x128xf32>
    %210 = arith.addf %209, %208 : vector<8x128xf32>
    %211 = arith.divf %209, %210 : vector<8x128xf32>
    %212 = vector.extract_strided_slice %205 {offsets = [0, 128], sizes = [8, 128], strides = [1, 1]} : vector<8x512xf32> to vector<8x128xf32>
    %213 = arith.negf %212 : vector<8x128xf32>
    %214 = math.exp %213 : vector<8x128xf32>
    %cst_105 = arith.constant 1.000000e+00 : f32
    %215 = vector.broadcast %cst_105 : f32 to vector<8x128xf32>
    %216 = arith.addf %215, %214 : vector<8x128xf32>
    %217 = arith.divf %215, %216 : vector<8x128xf32>
    %218 = vector.extract_strided_slice %205 {offsets = [0, 256], sizes = [8, 128], strides = [1, 1]} : vector<8x512xf32> to vector<8x128xf32>
    %219 = math.tanh %218 : vector<8x128xf32>
    %220 = vector.extract_strided_slice %205 {offsets = [0, 384], sizes = [8, 128], strides = [1, 1]} : vector<8x512xf32> to vector<8x128xf32>
    %221 = arith.negf %220 : vector<8x128xf32>
    %222 = math.exp %221 : vector<8x128xf32>
    %cst_106 = arith.constant 1.000000e+00 : f32
    %223 = vector.broadcast %cst_106 : f32 to vector<8x128xf32>
    %224 = arith.addf %223, %222 : vector<8x128xf32>
    %225 = arith.divf %223, %224 : vector<8x128xf32>
    %c0_107 = arith.constant 0 : index
    %c0_108 = arith.constant 0 : index
    %226 = vector.load %arg10[%c0_107, %c0_108] : memref<8x128xf32, #tpu.memory_space<vmem>>, vector<8x128xf32>
    %227 = arith.mulf %217, %226 : vector<8x128xf32>
    %228 = arith.mulf %211, %219 : vector<8x128xf32>
    %229 = arith.addf %227, %228 : vector<8x128xf32>
    %230 = math.tanh %229 : vector<8x128xf32>
    %231 = arith.mulf %225, %230 : vector<8x128xf32>
    %c0_109 = arith.constant 0 : index
    %c0_110 = arith.constant 0 : index
    %232 = vector.load %arg10[%c0_109, %c0_110] : memref<8x128xf32, #tpu.memory_space<vmem>>, vector<8x128xf32>
    tpu.vector_store %arg10[%c0_109, %c0_110], %229 {strides = array<i32>} : memref<8x128xf32, #tpu.memory_space<vmem>>, vector<8x128xf32>,
    %c0_111 = arith.constant 0 : index
    %c0_112 = arith.constant 0 : index
    %233 = vector.load %arg9[%c0_111, %c0_112] : memref<8x128xf32, #tpu.memory_space<vmem>>, vector<8x128xf32>
    tpu.vector_store %arg9[%c0_111, %c0_112], %231 {strides = array<i32>} : memref<8x128xf32, #tpu.memory_space<vmem>>, vector<8x128xf32>,
    %c6_i32 = arith.constant 6 : i32
    %c0_i32_113 = arith.constant 0 : i32
    %234 = arith.addi %c0_i32_113, %c6_i32 : i32
    %235 = arith.index_cast %234 : i32 to index
    %c0_114 = arith.constant 0 : index
    %c0_115 = arith.constant 0 : index
    %236 = vector.load %arg11[%235, %c0_114, %c0_115] : memref<8x8x512xf32, #tpu.memory_space<vmem>>, vector<1x8x512xf32>
    %237 = vector.shape_cast %236 : vector<1x8x512xf32> to vector<8x512xf32>
    %c0_116 = arith.constant 0 : index
    %c0_117 = arith.constant 0 : index
    %238 = vector.load %arg9[%c0_116, %c0_117] : memref<8x128xf32, #tpu.memory_space<vmem>>, vector<8x128xf32>
    %239 = arith.truncf %238 : vector<8x128xf32> to vector<8x128xbf16>
    %c0_118 = arith.constant 0 : index
    %c0_119 = arith.constant 0 : index
    %240 = vector.load %arg4[%c0_118, %c0_119] : memref<128x512xbf16, #tpu.memory_space<vmem>>, vector<128x512xbf16>
    %cst_120 = arith.constant dense<0.000000e+00> : vector<8x512xf32>
    %241 = tpu.matmul %239, %240, %cst_120 {dimension_numbers = #tpu.dot_dimension_numbers<[1], [0], [0], [1], [0, 0, 1, 1], [], []>} : vector<8x128xbf16>, vector<128x512xbf16>, vector<8x512xf32> -> vector<8x512xf32>
    %242 = arith.addf %237, %241 : vector<8x512xf32>
    %243 = vector.extract_strided_slice %242 {offsets = [0, 0], sizes = [8, 128], strides = [1, 1]} : vector<8x512xf32> to vector<8x128xf32>
    %244 = arith.negf %243 : vector<8x128xf32>
    %245 = math.exp %244 : vector<8x128xf32>
    %cst_121 = arith.constant 1.000000e+00 : f32
    %246 = vector.broadcast %cst_121 : f32 to vector<8x128xf32>
    %247 = arith.addf %246, %245 : vector<8x128xf32>
    %248 = arith.divf %246, %247 : vector<8x128xf32>
    %249 = vector.extract_strided_slice %242 {offsets = [0, 128], sizes = [8, 128], strides = [1, 1]} : vector<8x512xf32> to vector<8x128xf32>
    %250 = arith.negf %249 : vector<8x128xf32>
    %251 = math.exp %250 : vector<8x128xf32>
    %cst_122 = arith.constant 1.000000e+00 : f32
    %252 = vector.broadcast %cst_122 : f32 to vector<8x128xf32>
    %253 = arith.addf %252, %251 : vector<8x128xf32>
    %254 = arith.divf %252, %253 : vector<8x128xf32>
    %255 = vector.extract_strided_slice %242 {offsets = [0, 256], sizes = [8, 128], strides = [1, 1]} : vector<8x512xf32> to vector<8x128xf32>
    %256 = math.tanh %255 : vector<8x128xf32>
    %257 = vector.extract_strided_slice %242 {offsets = [0, 384], sizes = [8, 128], strides = [1, 1]} : vector<8x512xf32> to vector<8x128xf32>
    %258 = arith.negf %257 : vector<8x128xf32>
    %259 = math.exp %258 : vector<8x128xf32>
    %cst_123 = arith.constant 1.000000e+00 : f32
    %260 = vector.broadcast %cst_123 : f32 to vector<8x128xf32>
    %261 = arith.addf %260, %259 : vector<8x128xf32>
    %262 = arith.divf %260, %261 : vector<8x128xf32>
    %c0_124 = arith.constant 0 : index
    %c0_125 = arith.constant 0 : index
    %263 = vector.load %arg10[%c0_124, %c0_125] : memref<8x128xf32, #tpu.memory_space<vmem>>, vector<8x128xf32>
    %264 = arith.mulf %254, %263 : vector<8x128xf32>
    %265 = arith.mulf %248, %256 : vector<8x128xf32>
    %266 = arith.addf %264, %265 : vector<8x128xf32>
    %267 = math.tanh %266 : vector<8x128xf32>
    %268 = arith.mulf %262, %267 : vector<8x128xf32>
    %c0_126 = arith.constant 0 : index
    %c0_127 = arith.constant 0 : index
    %269 = vector.load %arg10[%c0_126, %c0_127] : memref<8x128xf32, #tpu.memory_space<vmem>>, vector<8x128xf32>
    tpu.vector_store %arg10[%c0_126, %c0_127], %266 {strides = array<i32>} : memref<8x128xf32, #tpu.memory_space<vmem>>, vector<8x128xf32>,
    %c0_128 = arith.constant 0 : index
    %c0_129 = arith.constant 0 : index
    %270 = vector.load %arg9[%c0_128, %c0_129] : memref<8x128xf32, #tpu.memory_space<vmem>>, vector<8x128xf32>
    tpu.vector_store %arg9[%c0_128, %c0_129], %268 {strides = array<i32>} : memref<8x128xf32, #tpu.memory_space<vmem>>, vector<8x128xf32>,
    %c7_i32 = arith.constant 7 : i32
    %c0_i32_130 = arith.constant 0 : i32
    %271 = arith.addi %c0_i32_130, %c7_i32 : i32
    %272 = arith.index_cast %271 : i32 to index
    %c0_131 = arith.constant 0 : index
    %c0_132 = arith.constant 0 : index
    %273 = vector.load %arg11[%272, %c0_131, %c0_132] : memref<8x8x512xf32, #tpu.memory_space<vmem>>, vector<1x8x512xf32>
    %274 = vector.shape_cast %273 : vector<1x8x512xf32> to vector<8x512xf32>
    %c0_133 = arith.constant 0 : index
    %c0_134 = arith.constant 0 : index
    %275 = vector.load %arg9[%c0_133, %c0_134] : memref<8x128xf32, #tpu.memory_space<vmem>>, vector<8x128xf32>
    %276 = arith.truncf %275 : vector<8x128xf32> to vector<8x128xbf16>
    %c0_135 = arith.constant 0 : index
    %c0_136 = arith.constant 0 : index
    %277 = vector.load %arg4[%c0_135, %c0_136] : memref<128x512xbf16, #tpu.memory_space<vmem>>, vector<128x512xbf16>
    %cst_137 = arith.constant dense<0.000000e+00> : vector<8x512xf32>
    %278 = tpu.matmul %276, %277, %cst_137 {dimension_numbers = #tpu.dot_dimension_numbers<[1], [0], [0], [1], [0, 0, 1, 1], [], []>} : vector<8x128xbf16>, vector<128x512xbf16>, vector<8x512xf32> -> vector<8x512xf32>
    %279 = arith.addf %274, %278 : vector<8x512xf32>
    %280 = vector.extract_strided_slice %279 {offsets = [0, 0], sizes = [8, 128], strides = [1, 1]} : vector<8x512xf32> to vector<8x128xf32>
    %281 = arith.negf %280 : vector<8x128xf32>
    %282 = math.exp %281 : vector<8x128xf32>
    %cst_138 = arith.constant 1.000000e+00 : f32
    %283 = vector.broadcast %cst_138 : f32 to vector<8x128xf32>
    %284 = arith.addf %283, %282 : vector<8x128xf32>
    %285 = arith.divf %283, %284 : vector<8x128xf32>
    %286 = vector.extract_strided_slice %279 {offsets = [0, 128], sizes = [8, 128], strides = [1, 1]} : vector<8x512xf32> to vector<8x128xf32>
    %287 = arith.negf %286 : vector<8x128xf32>
    %288 = math.exp %287 : vector<8x128xf32>
    %cst_139 = arith.constant 1.000000e+00 : f32
    %289 = vector.broadcast %cst_139 : f32 to vector<8x128xf32>
    %290 = arith.addf %289, %288 : vector<8x128xf32>
    %291 = arith.divf %289, %290 : vector<8x128xf32>
    %292 = vector.extract_strided_slice %279 {offsets = [0, 256], sizes = [8, 128], strides = [1, 1]} : vector<8x512xf32> to vector<8x128xf32>
    %293 = math.tanh %292 : vector<8x128xf32>
    %294 = vector.extract_strided_slice %279 {offsets = [0, 384], sizes = [8, 128], strides = [1, 1]} : vector<8x512xf32> to vector<8x128xf32>
    %295 = arith.negf %294 : vector<8x128xf32>
    %296 = math.exp %295 : vector<8x128xf32>
    %cst_140 = arith.constant 1.000000e+00 : f32
    %297 = vector.broadcast %cst_140 : f32 to vector<8x128xf32>
    %298 = arith.addf %297, %296 : vector<8x128xf32>
    %299 = arith.divf %297, %298 : vector<8x128xf32>
    %c0_141 = arith.constant 0 : index
    %c0_142 = arith.constant 0 : index
    %300 = vector.load %arg10[%c0_141, %c0_142] : memref<8x128xf32, #tpu.memory_space<vmem>>, vector<8x128xf32>
    %301 = arith.mulf %291, %300 : vector<8x128xf32>
    %302 = arith.mulf %285, %293 : vector<8x128xf32>
    %303 = arith.addf %301, %302 : vector<8x128xf32>
    %304 = math.tanh %303 : vector<8x128xf32>
    %305 = arith.mulf %299, %304 : vector<8x128xf32>
    %c0_143 = arith.constant 0 : index
    %c0_144 = arith.constant 0 : index
    %306 = vector.load %arg10[%c0_143, %c0_144] : memref<8x128xf32, #tpu.memory_space<vmem>>, vector<8x128xf32>
    tpu.vector_store %arg10[%c0_143, %c0_144], %303 {strides = array<i32>} : memref<8x128xf32, #tpu.memory_space<vmem>>, vector<8x128xf32>,
    %c0_145 = arith.constant 0 : index
    %c0_146 = arith.constant 0 : index
    %307 = vector.load %arg9[%c0_145, %c0_146] : memref<8x128xf32, #tpu.memory_space<vmem>>, vector<8x128xf32>
    tpu.vector_store %arg9[%c0_145, %c0_146], %305 {strides = array<i32>} : memref<8x128xf32, #tpu.memory_space<vmem>>, vector<8x128xf32>,
    %c8_i32 = arith.constant 8 : i32
    %c0_i32_147 = arith.constant 0 : i32
    %308 = arith.cmpi eq, %arg1, %c0_i32_147 : i32
    %309 = arith.extui %308 : i1 to i32
    %c0_i32_148 = arith.constant 0 : i32
    %310 = arith.cmpi ne, %309, %c0_i32_148 : i32
    scf.if %310 {
      %c0_149 = arith.constant 0 : index
      %c0_150 = arith.constant 0 : index
      %311 = vector.load %arg9[%c0_149, %c0_150] : memref<8x128xf32, #tpu.memory_space<vmem>>, vector<8x128xf32>
      %312 = arith.truncf %311 : vector<8x128xf32> to vector<8x128xbf16>
      %c0_151 = arith.constant 0 : index
      %c0_152 = arith.constant 0 : index
      %313 = vector.load %arg6[%c0_151, %c0_152] : memref<128x128xbf16, #tpu.memory_space<vmem>>, vector<128x128xbf16>
      %cst_153 = arith.constant dense<0.000000e+00> : vector<8x128xf32>
      %314 = tpu.matmul %312, %313, %cst_153 {dimension_numbers = #tpu.dot_dimension_numbers<[1], [0], [0], [1], [0, 0, 1, 1], [], []>} : vector<8x128xbf16>, vector<128x128xbf16>, vector<8x128xf32> -> vector<8x128xf32>
      %c0_154 = arith.constant 0 : index
      %c0_155 = arith.constant 0 : index
      %315 = vector.load %arg7[%c0_154, %c0_155] : memref<1x128xf32, #tpu.memory_space<vmem>>, vector<1x128xf32>
      %316 = vector.broadcast %315 : vector<1x128xf32> to vector<8x128xf32>
      %317 = arith.addf %314, %316 : vector<8x128xf32>
      %c0_156 = arith.constant 0 : index
      %c0_157 = arith.constant 0 : index
      %318 = vector.load %arg8[%c0_156, %c0_157] : memref<8x128xf32, #tpu.memory_space<vmem>>, vector<8x128xf32>
      tpu.vector_store %arg8[%c0_156, %c0_157], %317 {strides = array<i32>} : memref<8x128xf32, #tpu.memory_space<vmem>>, vector<8x128xf32>,
    } else {
    }
    return
  }
  func.func @transform_0(%arg0: i32, %arg1: i32) -> (i32, i32, i32) {
    %c0_i32 = arith.constant 0 : i32
    %c0_i32_0 = arith.constant 0 : i32
    return %arg1, %arg0, %c0_i32 : i32, i32, i32
  }
  func.func @transform_1(%arg0: i32, %arg1: i32) -> (i32, i32) {
    %c0_i32 = arith.constant 0 : i32
    %c0_i32_0 = arith.constant 0 : i32
    %c0_i32_1 = arith.constant 0 : i32
    return %c0_i32, %c0_i32_0 : i32, i32
  }
  func.func @transform_2(%arg0: i32, %arg1: i32) -> (i32, i32) {
    %c0_i32 = arith.constant 0 : i32
    %c0_i32_0 = arith.constant 0 : i32
    %c0_i32_1 = arith.constant 0 : i32
    return %c0_i32, %c0_i32_0 : i32, i32
  }
  func.func @transform_3(%arg0: i32, %arg1: i32) -> (i32, i32) {
    %c0_i32 = arith.constant 0 : i32
    %c0_i32_0 = arith.constant 0 : i32
    %c0_i32_1 = arith.constant 0 : i32
    return %c0_i32, %c0_i32_0 : i32, i32
  }
  func.func @transform_4(%arg0: i32, %arg1: i32) -> (i32, i32) {
    %c0_i32 = arith.constant 0 : i32
    %c0_i32_0 = arith.constant 0 : i32
    %c0_i32_1 = arith.constant 0 : i32
    return %c0_i32, %c0_i32_0 : i32, i32
  }
  func.func @transform_5(%arg0: i32, %arg1: i32) -> (i32, i32) {
    %c0_i32 = arith.constant 0 : i32
    %c0_i32_0 = arith.constant 0 : i32
    %c0_i32_1 = arith.constant 0 : i32
    return %c0_i32, %c0_i32_0 : i32, i32
  }
  func.func @transform_6(%arg0: i32, %arg1: i32) -> (i32, i32) {
    %c0_i32 = arith.constant 0 : i32
    %c0_i32_0 = arith.constant 0 : i32
    return %arg0, %c0_i32 : i32, i32
  }
}

</mosaic_0001>

<llo_original>
// kernel: text_classifier_forward.3
$region0: #{text_classifier_forward.3}
  #allocation0 [shape = 'u32[]', space=smem, size = 0x4, offset = 0x4, fixed_abs, tag = 'smem constant byte address 0x4 - core index']
  #allocation1 [shape = 'u32[144,128]{1,0:T(1,128)}', space=vmem, size = 0x12000, scoped, tag = 'internal scratch']
  #allocation2 [shape = 'f32[8,128]{1,0:T(8,128)}', space=vmem, size = 0x1000, scoped, tag = 'scratch operand']
  #allocation3 [shape = 'f32[8,128]{1,0:T(8,128)}', space=vmem, size = 0x1000, scoped, tag = 'scratch operand']
  #allocation4 [shape = 'f32[8,8,512]{2,1,0:T(8,128)}', space=vmem, size = 0x20000, scoped, tag = 'scratch operand']
  %s0 = inlined_call_operand.vmem [shape: bf16[8,8,128], index: 0, kind: input, shape index: {}]
  %s1 = inlined_call_operand.vmem [shape: bf16[128,512], index: 1, kind: input, shape index: {}]
  %s2 = inlined_call_operand.vmem [shape: bf16[128,512], index: 2, kind: input, shape index: {}]
  %s3 = inlined_call_operand.vmem [shape: f32[1,512], index: 3, kind: input, shape index: {}]
  %s4 = inlined_call_operand.vmem [shape: bf16[128,128], index: 4, kind: input, shape index: {}]
  %s5 = inlined_call_operand.vmem [shape: f32[1,128], index: 5, kind: input, shape index: {}]
  %s6 = inlined_call_operand.vmem [shape: f32[8,128], index: 6, kind: output, shape index: {}]
  %s7 = sld [smem:[#allocation0]]
  $region42: #{text_classifier_forward.3} parent=0
    _
  %s9 = ssub.s32 1, %s7
  %s10 = scalar_select 0, %s9, %s7
  // Predicated region
  $region2: #{text_classifier_forward.3} parent=0 // pred_check
    _
  $region3: #{text_classifier_forward.3} parent=0 // pred_check_branch
    %12 = sbr.rel (0) target = $region5
  $region4: #{text_classifier_forward.3} parent=0 // pred_region
    _
  $region5: #{text_classifier_forward.3} parent=0 // pred_fallthru
    _
  // Predicated region
  $region6: #{text_classifier_forward.3} parent=0 // pred_check
    _
  $region7: #{text_classifier_forward.3} parent=0 // pred_check_branch
    %14 = sbr.rel (0) target = $region9
  $region8: #{text_classifier_forward.3} parent=0 // pred_region
    _
  $region9: #{text_classifier_forward.3} parent=0 // pred_fallthru
    _
  // Predicated region
  $region10: #{text_classifier_forward.3} parent=0 // pred_check
    _
  $region11: #{text_classifier_forward.3} parent=0 // pred_check_branch
    %16 = sbr.rel (0) target = $region13
  $region12: #{text_classifier_forward.3} parent=0 // pred_region
    _
  $region13: #{text_classifier_forward.3} parent=0 // pred_fallthru
    _
  // Predicated region
  $region14: #{text_classifier_forward.3} parent=0 // pred_check
    _
  $region15: #{text_classifier_forward.3} parent=0 // pred_check_branch
    %18 = sbr.rel (0) target = $region17
  $region16: #{text_classifier_forward.3} parent=0 // pred_region
    _
  $region17: #{text_classifier_forward.3} parent=0 // pred_fallthru
    _
  // Predicated region
  $region18: #{text_classifier_forward.3} parent=0 // pred_check
    _
  $region19: #{text_classifier_forward.3} parent=0 // pred_check_branch
    %20 = sbr.rel (0) target = $region21
  $region20: #{text_classifier_forward.3} parent=0 // pred_region
    _
  $region21: #{text_classifier_forward.3} parent=0 // pred_fallthru
    _
  // Predicated region
  $region22: #{text_classifier_forward.3} parent=0 // pred_check
    _
  $region23: #{text_classifier_forward.3} parent=0 // pred_check_branch
    %22 = sbr.rel (0) target = $region25
  $region24: #{text_classifier_forward.3} parent=0 // pred_region
    _
  $region25: #{text_classifier_forward.3} parent=0 // pred_fallthru
    _
  %p24 = scmp.eq.s32.totalorder 0, 0
  // Predicated region
  $region26: #{text_classifier_forward.3} parent=0 // pred_check
    %p25 = pneg %p24
  $region27: #{text_classifier_forward.3} parent=0 // pred_check_branch
    %27 = sbr.rel (%p25) target = $region29
  $region28: #{text_classifier_forward.3} parent=0 // pred_region
    %28 = vst [vmem:[#allocation2] sm:$0xff] 0.0
    %29 = vst [vmem:[#allocation3] sm:$0xff] 0.0
  $region29: #{text_classifier_forward.3} parent=0 // pred_fallthru
    _
  %v30 = vld [vmem:[%s0] sm:$0xf]
  %v31 = vld [vmem:[%s0 + $0x4] sm:$0xf]
  %v32 = vld [vmem:[%s0 + $0x8] sm:$0xf]
  %v33 = vld [vmem:[%s0 + $0xc] sm:$0xf]
  %v34 = vld [vmem:[%s0 + $0x10] sm:$0xf]
  %v35 = vld [vmem:[%s0 + $0x14] sm:$0xf]
  %v36 = vld [vmem:[%s0 + $0x18] sm:$0xf]
  %v37 = vld [vmem:[%s0 + $0x1c] sm:$0xf]
  %v38 = vld [vmem:[%s1] sm:$0xff]
  %v39 = vld [vmem:[%s1 + $0x8] sm:$0xff]
  %v40 = vld [vmem:[%s1 + $0x10] sm:$0xff]
  %v41 = vld [vmem:[%s1 + $0x18] sm:$0xff]
  %v42 = vld [vmem:[%s1 + $0x20] sm:$0xff]
  %v43 = vld [vmem:[%s1 + $0x28] sm:$0xff]
  %v44 = vld [vmem:[%s1 + $0x30] sm:$0xff]
  %v45 = vld [vmem:[%s1 + $0x38] sm:$0xff]
  %v46 = vld [vmem:[%s1 + $0x40] sm:$0xff]
  %v47 = vld [vmem:[%s1 + $0x48] sm:$0xff]
  %v48 = vld [vmem:[%s1 + $0x50] sm:$0xff]
  %v49 = vld [vmem:[%s1 + $0x58] sm:$0xff]
  %v50 = vld [vmem:[%s1 + $0x60] sm:$0xff]
  %v51 = vld [vmem:[%s1 + $0x68] sm:$0xff]
  %v52 = vld [vmem:[%s1 + $0x70] sm:$0xff]
  %v53 = vld [vmem:[%s1 + $0x78] sm:$0xff]
  %v54 = vld [vmem:[%s1 + $0x80] sm:$0xff]
  %v55 = vld [vmem:[%s1 + $0x88] sm:$0xff]
  %v56 = vld [vmem:[%s1 + $0x90] sm:$0xff]
  %v57 = vld [vmem:[%s1 + $0x98] sm:$0xff]
  %v58 = vld [vmem:[%s1 + $0xa0] sm:$0xff]
  %v59 = vld [vmem:[%s1 + $0xa8] sm:$0xff]
  %v60 = vld [vmem:[%s1 + $0xb0] sm:$0xff]
  %v61 = vld [vmem:[%s1 + $0xb8] sm:$0xff]
  %v62 = vld [vmem:[%s1 + $0xc0] sm:$0xff]
  %v63 = vld [vmem:[%s1 + $0xc8] sm:$0xff]
  %v64 = vld [vmem:[%s1 + $0xd0] sm:$0xff]
  %v65 = vld [vmem:[%s1 + $0xd8] sm:$0xff]
  %v66 = vld [vmem:[%s1 + $0xe0] sm:$0xff]
  %v67 = vld [vmem:[%s1 + $0xe8] sm:$0xff]
  %v68 = vld [vmem:[%s1 + $0xf0] sm:$0xff]
  %v69 = vld [vmem:[%s1 + $0xf8] sm:$0xff]
  %v70 = vld [vmem:[%s3] sm:$0xf]
  %v72 = vlaneseq
  %v73 = vshrl.u32 %v72, 7
  %v74 = vsub.s32 0, %v73
  %v75 = vrot.slane %v70, %v74
  %v76 = vlaneseq
  %v77 = vshrl.u32 %v76, 7
  %v78 = vsub.s32 1, %v77
  %v79 = vrot.slane %v70, %v78
  %v80 = vlaneseq
  %v81 = vshrl.u32 %v80, 7
  %v82 = vsub.s32 2, %v81
  %v83 = vrot.slane %v70, %v82
  %v84 = vlaneseq
  %v85 = vshrl.u32 %v84, 7
  %v86 = vsub.s32 3, %v85
  %v87 = vrot.slane %v70, %v86
  %v100 = vunpack.c.l.b16 %v30
  %v101 = vunpack.c.l.b16 %v31
  %v102 = vunpack.c.l.b16 %v32
  %v103 = vunpack.c.l.b16 %v33
  %v104 = vunpack.c.l.b16 %v34
  %v105 = vunpack.c.l.b16 %v35
  %v106 = vunpack.c.l.b16 %v36
  %v107 = vunpack.c.l.b16 %v37
  %v108 = vpack.c.b16 %v101, %v100
  %v109 = vpack.c.b16 %v103, %v102
  %v110 = vpack.c.b16 %v105, %v104
  %v111 = vpack.c.b16 %v107, %v106
  %v148 = vunpack.c.l.b16 %v38
  %v149 = vunpack.c.h.b16 %v38
  %v150 = vunpack.c.l.b16 %v39
  %v151 = vunpack.c.h.b16 %v39
  %v152 = vunpack.c.l.b16 %v40
  %v153 = vunpack.c.h.b16 %v40
  %v154 = vunpack.c.l.b16 %v41
  %v155 = vunpack.c.h.b16 %v41
  %v156 = vunpack.c.l.b16 %v42
  %v157 = vunpack.c.h.b16 %v42
  %v158 = vunpack.c.l.b16 %v43
  %v159 = vunpack.c.h.b16 %v43
  %v160 = vunpack.c.l.b16 %v44
  %v161 = vunpack.c.h.b16 %v44
  %v162 = vunpack.c.l.b16 %v45
  %v163 = vunpack.c.h.b16 %v45
  %v164 = vunpack.c.l.b16 %v46
  %v165 = vunpack.c.h.b16 %v46
  %v166 = vunpack.c.l.b16 %v47
  %v167 = vunpack.c.h.b16 %v47
  %v168 = vunpack.c.l.b16 %v48
  %v169 = vunpack.c.h.b16 %v48
  %v170 = vunpack.c.l.b16 %v49
  %v171 = vunpack.c.h.b16 %v49
  %v172 = vunpack.c.l.b16 %v50
  %v173 = vunpack.c.h.b16 %v50
  %v174 = vunpack.c.l.b16 %v51
  %v175 = vunpack.c.h.b16 %v51
  %v176 = vunpack.c.l.b16 %v52
  %v177 = vunpack.c.h.b16 %v52
  %v178 = vunpack.c.l.b16 %v53
  %v179 = vunpack.c.h.b16 %v53
  %v180 = vunpack.c.l.b16 %v54
  %v181 = vunpack.c.h.b16 %v54
  %v182 = vunpack.c.l.b16 %v55
  %v183 = vunpack.c.h.b16 %v55
  %v184 = vunpack.c.l.b16 %v56
  %v185 = vunpack.c.h.b16 %v56
  %v186 = vunpack.c.l.b16 %v57
  %v187 = vunpack.c.h.b16 %v57
  %v188 = vunpack.c.l.b16 %v58
  %v189 = vunpack.c.h.b16 %v58
  %v190 = vunpack.c.l.b16 %v59
  %v191 = vunpack.c.h.b16 %v59
  %v192 = vunpack.c.l.b16 %v60
  %v193 = vunpack.c.h.b16 %v60
  %v194 = vunpack.c.l.b16 %v61
  %v195 = vunpack.c.h.b16 %v61
  %v196 = vunpack.c.l.b16 %v62
  %v197 = vunpack.c.h.b16 %v62
  %v198 = vunpack.c.l.b16 %v63
  %v199 = vunpack.c.h.b16 %v63
  %v200 = vunpack.c.l.b16 %v64
  %v201 = vunpack.c.h.b16 %v64
  %v202 = vunpack.c.l.b16 %v65
  %v203 = vunpack.c.h.b16 %v65
  %v204 = vunpack.c.l.b16 %v66
  %v205 = vunpack.c.h.b16 %v66
  %v206 = vunpack.c.l.b16 %v67
  %v207 = vunpack.c.h.b16 %v67
  %v208 = vunpack.c.l.b16 %v68
  %v209 = vunpack.c.h.b16 %v68
  %v210 = vunpack.c.l.b16 %v69
  %v211 = vunpack.c.h.b16 %v69
  %v212 = vpack.c.b16 %v152, %v148
  %v213 = vpack.c.b16 %v153, %v149
  %v214 = vpack.c.b16 %v154, %v150
  %v215 = vpack.c.b16 %v155, %v151
  %v216 = vpack.c.b16 %v160, %v156
  %v217 = vpack.c.b16 %v161, %v157
  %v218 = vpack.c.b16 %v162, %v158
  %v219 = vpack.c.b16 %v163, %v159
  %v220 = vpack.c.b16 %v168, %v164
  %v221 = vpack.c.b16 %v169, %v165
  %v222 = vpack.c.b16 %v170, %v166
  %v223 = vpack.c.b16 %v171, %v167
  %v224 = vpack.c.b16 %v176, %v172
  %v225 = vpack.c.b16 %v177, %v173
  %v226 = vpack.c.b16 %v178, %v174
  %v227 = vpack.c.b16 %v179, %v175
  %v228 = vpack.c.b16 %v184, %v180
  %v229 = vpack.c.b16 %v185, %v181
  %v230 = vpack.c.b16 %v186, %v182
  %v231 = vpack.c.b16 %v187, %v183
  %v232 = vpack.c.b16 %v192, %v188
  %v233 = vpack.c.b16 %v193, %v189
  %v234 = vpack.c.b16 %v194, %v190
  %v235 = vpack.c.b16 %v195, %v191
  %v236 = vpack.c.b16 %v200, %v196
  %v237 = vpack.c.b16 %v201, %v197
  %v238 = vpack.c.b16 %v202, %v198
  %v239 = vpack.c.b16 %v203, %v199
  %v240 = vpack.c.b16 %v208, %v204
  %v241 = vpack.c.b16 %v209, %v205
  %v242 = vpack.c.b16 %v210, %v206
  %v243 = vpack.c.b16 %v211, %v207
  %276 = vmatprep.subr.bf16.mxu0 %v213
  %277 = vmatpush1.bf16.msra.mxu0 %v212
  %278 = vmatprep.subr.bf16.mxu0 %v217
  %279 = vmatpush1.bf16.msra.mxu0 %v216
  %280 = vmatprep.subr.bf16.mxu0 %v221
  %281 = vmatpush1.bf16.msra.mxu0 %v220
  %282 = vmatprep.subr.bf16.mxu0 %v225
  %283 = vmatpush1.bf16.msra.mxu0 %v224
  %284 = vmatprep.subr.bf16.mxu0 %v229
  %285 = vmatpush1.bf16.msra.mxu0 %v228
  %286 = vmatprep.subr.bf16.mxu0 %v233
  %287 = vmatpush1.bf16.msra.mxu0 %v232
  %288 = vmatprep.subr.bf16.mxu0 %v237
  %289 = vmatpush1.bf16.msra.mxu0 %v236
  %290 = vmatprep.subr.bf16.mxu0 %v241
  %291 = vmatpush1.bf16.msra.mxu0 %v240
  %292 = vmatprep.subr.bf16.mxu0 0
  %293 = vmatpush1.bf16.msra.mxu0 0
  %294 = vmatprep.subr.bf16.mxu0 0
  %295 = vmatpush1.bf16.msra.mxu0 0
  %296 = vmatprep.subr.bf16.mxu0 0
  %297 = vmatpush1.bf16.msra.mxu0 0
  %298 = vmatprep.subr.bf16.mxu0 0
  %299 = vmatpush1.bf16.msra.mxu0 0
  %300 = vmatprep.subr.bf16.mxu0 0
  %301 = vmatpush1.bf16.msra.mxu0 0
  %302 = vmatprep.subr.bf16.mxu0 0
  %303 = vmatpush1.bf16.msra.mxu0 0
  %304 = vmatprep.subr.bf16.mxu0 0
  %305 = vmatpush1.bf16.msra.mxu0 0
  %306 = vmatprep.subr.bf16.mxu0 0
  %307 = vmatpush1.bf16.msra.mxu0 0
  %308 = vmatprep.mubr.bf16.mxu0 0
  %309 = vmatmul.mubr.bf16.gmra.mrb[0].mxu0 %v108
  %v310 = vpop.f32.mrb[0].mxu0
  %v311 = vadd.f32 %v75, %v310
  %v312 = vpop.f32.mrb[0].mxu0
  %v313 = vadd.f32 %v79, %v312
  %v314 = vpop.f32.mrb[0].mxu0
  %v315 = vadd.f32 %v75, %v314
  %v316 = vpop.f32.mrb[0].mxu0
  %v317 = vadd.f32 %v79, %v316
  %318 = vmatprep.mubr.bf16.mxu0 0
  %319 = vmatmul.mubr.bf16.gmra.mrb[0].mxu0 %v109
  %v320 = vpop.f32.mrb[0].mxu0
  %v321 = vadd.f32 %v75, %v320
  %v322 = vpop.f32.mrb[0].mxu0
  %v323 = vadd.f32 %v79, %v322
  %v324 = vpop.f32.mrb[0].mxu0
  %v325 = vadd.f32 %v75, %v324
  %v326 = vpop.f32.mrb[0].mxu0
  %v327 = vadd.f32 %v79, %v326
  %328 = vmatprep.mubr.bf16.mxu0 0
  %329 = vmatmul.mubr.bf16.gmra.mrb[0].mxu0 %v110
  %v330 = vpop.f32.mrb[0].mxu0
  %v331 = vadd.f32 %v75, %v330
  %v332 = vpop.f32.mrb[0].mxu0
  %v333 = vadd.f32 %v79, %v332
  %v334 = vpop.f32.mrb[0].mxu0
  %v335 = vadd.f32 %v75, %v334
  %v336 = vpop.f32.mrb[0].mxu0
  %v337 = vadd.f32 %v79, %v336
  %338 = vmatprep.mubr.bf16.mxu0 0
  %339 = vmatmul.mubr.bf16.gmra.mrb[0].mxu0 %v111
  %v340 = vpop.f32.mrb[0].mxu0
  %v341 = vadd.f32 %v75, %v340
  %v342 = vpop.f32.mrb[0].mxu0
  %v343 = vadd.f32 %v79, %v342
  %v344 = vpop.f32.mrb[0].mxu0
  %v345 = vadd.f32 %v75, %v344
  %v346 = vpop.f32.mrb[0].mxu0
  %v347 = vadd.f32 %v79, %v346
  %348 = vdwg.mxu0
  %349 = vmatprep.subr.bf16.mxu0 %v215
  %350 = vmatpush1.bf16.msra.mxu0 %v214
  %351 = vmatprep.subr.bf16.mxu0 %v219
  %352 = vmatpush1.bf16.msra.mxu0 %v218
  %353 = vmatprep.subr.bf16.mxu0 %v223
  %354 = vmatpush1.bf16.msra.mxu0 %v222
  %355 = vmatprep.subr.bf16.mxu0 %v227
  %356 = vmatpush1.bf16.msra.mxu0 %v226
  %357 = vmatprep.subr.bf16.mxu0 %v231
  %358 = vmatpush1.bf16.msra.mxu0 %v230
  %359 = vmatprep.subr.bf16.mxu0 %v235
  %360 = vmatpush1.bf16.msra.mxu0 %v234
  %361 = vmatprep.subr.bf16.mxu0 %v239
  %362 = vmatpush1.bf16.msra.mxu0 %v238
  %363 = vmatprep.subr.bf16.mxu0 %v243
  %364 = vmatpush1.bf16.msra.mxu0 %v242
  %365 = vmatprep.subr.bf16.mxu0 0
  %366 = vmatpush1.bf16.msra.mxu0 0
  %367 = vmatprep.subr.bf16.mxu0 0
  %368 = vmatpush1.bf16.msra.mxu0 0
  %369 = vmatprep.subr.bf16.mxu0 0
  %370 = vmatpush1.bf16.msra.mxu0 0
  %371 = vmatprep.subr.bf16.mxu0 0
  %372 = vmatpush1.bf16.msra.mxu0 0
  %373 = vmatprep.subr.bf16.mxu0 0
  %374 = vmatpush1.bf16.msra.mxu0 0
  %375 = vmatprep.subr.bf16.mxu0 0
  %376 = vmatpush1.bf16.msra.mxu0 0
  %377 = vmatprep.subr.bf16.mxu0 0
  %378 = vmatpush1.bf16.msra.mxu0 0
  %379 = vmatprep.subr.bf16.mxu0 0
  %380 = vmatpush1.bf16.msra.mxu0 0
  %381 = vmatprep.mubr.bf16.mxu0 0
  %382 = vmatmul.mubr.bf16.gmra.mrb[0].mxu0 %v108
  %v383 = vpop.f32.mrb[0].mxu0
  %v384 = vadd.f32 %v83, %v383
  %v385 = vpop.f32.mrb[0].mxu0
  %v386 = vadd.f32 %v87, %v385
  %v387 = vpop.f32.mrb[0].mxu0
  %v388 = vadd.f32 %v83, %v387
  %v389 = vpop.f32.mrb[0].mxu0
  %v390 = vadd.f32 %v87, %v389
  %391 = vmatprep.mubr.bf16.mxu0 0
  %392 = vmatmul.mubr.bf16.gmra.mrb[0].mxu0 %v109
  %v393 = vpop.f32.mrb[0].mxu0
  %v394 = vadd.f32 %v83, %v393
  %v395 = vpop.f32.mrb[0].mxu0
  %v396 = vadd.f32 %v87, %v395
  %v397 = vpop.f32.mrb[0].mxu0
  %v398 = vadd.f32 %v83, %v397
  %v399 = vpop.f32.mrb[0].mxu0
  %v400 = vadd.f32 %v87, %v399
  %401 = vmatprep.mubr.bf16.mxu0 0
  %402 = vmatmul.mubr.bf16.gmra.mrb[0].mxu0 %v110
  %v403 = vpop.f32.mrb[0].mxu0
  %v404 = vadd.f32 %v83, %v403
  %v405 = vpop.f32.mrb[0].mxu0
  %v406 = vadd.f32 %v87, %v405
  %v407 = vpop.f32.mrb[0].mxu0
  %v408 = vadd.f32 %v83, %v407
  %v409 = vpop.f32.mrb[0].mxu0
  %v410 = vadd.f32 %v87, %v409
  %411 = vmatprep.mubr.bf16.mxu0 0
  %412 = vmatmul.mubr.bf16.gmra.mrb[0].mxu0 %v111
  %v413 = vpop.f32.mrb[0].mxu0
  %v414 = vadd.f32 %v83, %v413
  %v415 = vpop.f32.mrb[0].mxu0
  %v416 = vadd.f32 %v87, %v415
  %v417 = vpop.f32.mrb[0].mxu0
  %v418 = vadd.f32 %v83, %v417
  %v419 = vpop.f32.mrb[0].mxu0
  %v420 = vadd.f32 %v87, %v419
  %421 = vdwg.mxu0
  %422 = vst [vmem:[#allocation4] sm:$0xff] %v311
  %423 = vst [vmem:[#allocation4 + $0x8] sm:$0xff] %v313
  %424 = vst [vmem:[#allocation4 + $0x10] sm:$0xff] %v384
  %425 = vst [vmem:[#allocation4 + $0x18] sm:$0xff] %v386
  %426 = vst [vmem:[#allocation4 + $0x20] sm:$0xff] %v315
  %427 = vst [vmem:[#allocation4 + $0x28] sm:$0xff] %v317
  %428 = vst [vmem:[#allocation4 + $0x30] sm:$0xff] %v388
  %429 = vst [vmem:[#allocation4 + $0x38] sm:$0xff] %v390
  %430 = vst [vmem:[#allocation4 + $0x40] sm:$0xff] %v321
  %431 = vst [vmem:[#allocation4 + $0x48] sm:$0xff] %v323
  %432 = vst [vmem:[#allocation4 + $0x50] sm:$0xff] %v394
  %433 = vst [vmem:[#allocation4 + $0x58] sm:$0xff] %v396
  %434 = vst [vmem:[#allocation4 + $0x60] sm:$0xff] %v325
  %435 = vst [vmem:[#allocation4 + $0x68] sm:$0xff] %v327
  %436 = vst [vmem:[#allocation4 + $0x70] sm:$0xff] %v398
  %437 = vst [vmem:[#allocation4 + $0x78] sm:$0xff] %v400
  %438 = vst [vmem:[#allocation4 + $0x80] sm:$0xff] %v331
  %439 = vst [vmem:[#allocation4 + $0x88] sm:$0xff] %v333
  %440 = vst [vmem:[#allocation4 + $0x90] sm:$0xff] %v404
  %441 = vst [vmem:[#allocation4 + $0x98] sm:$0xff] %v406
  %442 = vst [vmem:[#allocation4 + $0xa0] sm:$0xff] %v335
  %443 = vst [vmem:[#allocation4 + $0xa8] sm:$0xff] %v337
  %444 = vst [vmem:[#allocation4 + $0xb0] sm:$0xff] %v408
  %445 = vst [vmem:[#allocation4 + $0xb8] sm:$0xff] %v410
  %446 = vst [vmem:[#allocation4 + $0xc0] sm:$0xff] %v341
  %447 = vst [vmem:[#allocation4 + $0xc8] sm:$0xff] %v343
  %448 = vst [vmem:[#allocation4 + $0xd0] sm:$0xff] %v414
  %449 = vst [vmem:[#allocation4 + $0xd8] sm:$0xff] %v416
  %450 = vst [vmem:[#allocation4 + $0xe0] sm:$0xff] %v345
  %451 = vst [vmem:[#allocation4 + $0xe8] sm:$0xff] %v347
  %452 = vst [vmem:[#allocation4 + $0xf0] sm:$0xff] %v418
  %453 = vst [vmem:[#allocation4 + $0xf8] sm:$0xff] %v420
  %v454 = vld [vmem:[#allocation4] sm:$0xff]
  %v455 = vld [vmem:[#allocation4 + $0x8] sm:$0xff]
  %v456 = vld [vmem:[#allocation4 + $0x10] sm:$0xff]
  %v457 = vld [vmem:[#allocation4 + $0x18] sm:$0xff]
  %v458 = vld [vmem:[#allocation2] sm:$0xff]
  %v459 = vpack.c.bf16 %v458, %v458
  %v460 = vld [vmem:[%s2] sm:$0xff]
  %v461 = vld [vmem:[%s2 + $0x8] sm:$0xff]
  %v462 = vld [vmem:[%s2 + $0x10] sm:$0xff]
  %v463 = vld [vmem:[%s2 + $0x18] sm:$0xff]
  %v464 = vld [vmem:[%s2 + $0x20] sm:$0xff]
  %v465 = vld [vmem:[%s2 + $0x28] sm:$0xff]
  %v466 = vld [vmem:[%s2 + $0x30] sm:$0xff]
  %v467 = vld [vmem:[%s2 + $0x38] sm:$0xff]
  %v468 = vld [vmem:[%s2 + $0x40] sm:$0xff]
  %v469 = vld [vmem:[%s2 + $0x48] sm:$0xff]
  %v470 = vld [vmem:[%s2 + $0x50] sm:$0xff]
  %v471 = vld [vmem:[%s2 + $0x58] sm:$0xff]
  %v472 = vld [vmem:[%s2 + $0x60] sm:$0xff]
  %v473 = vld [vmem:[%s2 + $0x68] sm:$0xff]
  %v474 = vld [vmem:[%s2 + $0x70] sm:$0xff]
  %v475 = vld [vmem:[%s2 + $0x78] sm:$0xff]
  %v476 = vld [vmem:[%s2 + $0x80] sm:$0xff]
  %v477 = vld [vmem:[%s2 + $0x88] sm:$0xff]
  %v478 = vld [vmem:[%s2 + $0x90] sm:$0xff]
  %v479 = vld [vmem:[%s2 + $0x98] sm:$0xff]
  %v480 = vld [vmem:[%s2 + $0xa0] sm:$0xff]
  %v481 = vld [vmem:[%s2 + $0xa8] sm:$0xff]
  %v482 = vld [vmem:[%s2 + $0xb0] sm:$0xff]
  %v483 = vld [vmem:[%s2 + $0xb8] sm:$0xff]
  %v484 = vld [vmem:[%s2 + $0xc0] sm:$0xff]
  %v485 = vld [vmem:[%s2 + $0xc8] sm:$0xff]
  %v486 = vld [vmem:[%s2 + $0xd0] sm:$0xff]
  %v487 = vld [vmem:[%s2 + $0xd8] sm:$0xff]
  %v488 = vld [vmem:[%s2 + $0xe0] sm:$0xff]
  %v489 = vld [vmem:[%s2 + $0xe8] sm:$0xff]
  %v490 = vld [vmem:[%s2 + $0xf0] sm:$0xff]
  %v491 = vld [vmem:[%s2 + $0xf8] sm:$0xff]
  %v524 = vunpack.c.l.b16 %v460
  %v525 = vunpack.c.h.b16 %v460
  %v526 = vunpack.c.l.b16 %v461
  %v527 = vunpack.c.h.b16 %v461
  %v528 = vunpack.c.l.b16 %v462
  %v529 = vunpack.c.h.b16 %v462
  %v530 = vunpack.c.l.b16 %v463
  %v531 = vunpack.c.h.b16 %v463
  %v532 = vunpack.c.l.b16 %v464
  %v533 = vunpack.c.h.b16 %v464
  %v534 = vunpack.c.l.b16 %v465
  %v535 = vunpack.c.h.b16 %v465
  %v536 = vunpack.c.l.b16 %v466
  %v537 = vunpack.c.h.b16 %v466
  %v538 = vunpack.c.l.b16 %v467
  %v539 = vunpack.c.h.b16 %v467
  %v540 = vunpack.c.l.b16 %v468
  %v541 = vunpack.c.h.b16 %v468
  %v542 = vunpack.c.l.b16 %v469
  %v543 = vunpack.c.h.b16 %v469
  %v544 = vunpack.c.l.b16 %v470
  %v545 = vunpack.c.h.b16 %v470
  %v546 = vunpack.c.l.b16 %v471
  %v547 = vunpack.c.h.b16 %v471
  %v548 = vunpack.c.l.b16 %v472
  %v549 = vunpack.c.h.b16 %v472
  %v550 = vunpack.c.l.b16 %v473
  %v551 = vunpack.c.h.b16 %v473
  %v552 = vunpack.c.l.b16 %v474
  %v553 = vunpack.c.h.b16 %v474
  %v554 = vunpack.c.l.b16 %v475
  %v555 = vunpack.c.h.b16 %v475
  %v556 = vunpack.c.l.b16 %v476
  %v557 = vunpack.c.h.b16 %v476
  %v558 = vunpack.c.l.b16 %v477
  %v559 = vunpack.c.h.b16 %v477
  %v560 = vunpack.c.l.b16 %v478
  %v561 = vunpack.c.h.b16 %v478
  %v562 = vunpack.c.l.b16 %v479
  %v563 = vunpack.c.h.b16 %v479
  %v564 = vunpack.c.l.b16 %v480
  %v565 = vunpack.c.h.b16 %v480
  %v566 = vunpack.c.l.b16 %v481
  %v567 = vunpack.c.h.b16 %v481
  %v568 = vunpack.c.l.b16 %v482
  %v569 = vunpack.c.h.b16 %v482
  %v570 = vunpack.c.l.b16 %v483
  %v571 = vunpack.c.h.b16 %v483
  %v572 = vunpack.c.l.b16 %v484
  %v573 = vunpack.c.h.b16 %v484
  %v574 = vunpack.c.l.b16 %v485
  %v575 = vunpack.c.h.b16 %v485
  %v576 = vunpack.c.l.b16 %v486
  %v577 = vunpack.c.h.b16 %v486
  %v578 = vunpack.c.l.b16 %v487
  %v579 = vunpack.c.h.b16 %v487
  %v580 = vunpack.c.l.b16 %v488
  %v581 = vunpack.c.h.b16 %v488
  %v582 = vunpack.c.l.b16 %v489
  %v583 = vunpack.c.h.b16 %v489
  %v584 = vunpack.c.l.b16 %v490
  %v585 = vunpack.c.h.b16 %v490
  %v586 = vunpack.c.l.b16 %v491
  %v587 = vunpack.c.h.b16 %v491
  %v588 = vpack.c.b16 %v528, %v524
  %v589 = vpack.c.b16 %v529, %v525
  %v590 = vpack.c.b16 %v530, %v526
  %v591 = vpack.c.b16 %v531, %v527
  %v592 = vpack.c.b16 %v536, %v532
  %v593 = vpack.c.b16 %v537, %v533
  %v594 = vpack.c.b16 %v538, %v534
  %v595 = vpack.c.b16 %v539, %v535
  %v596 = vpack.c.b16 %v544, %v540
  %v597 = vpack.c.b16 %v545, %v541
  %v598 = vpack.c.b16 %v546, %v542
  %v599 = vpack.c.b16 %v547, %v543
  %v600 = vpack.c.b16 %v552, %v548
  %v601 = vpack.c.b16 %v553, %v549
  %v602 = vpack.c.b16 %v554, %v550
  %v603 = vpack.c.b16 %v555, %v551
  %v604 = vpack.c.b16 %v560, %v556
  %v605 = vpack.c.b16 %v561, %v557
  %v606 = vpack.c.b16 %v562, %v558
  %v607 = vpack.c.b16 %v563, %v559
  %v608 = vpack.c.b16 %v568, %v564
  %v609 = vpack.c.b16 %v569, %v565
  %v610 = vpack.c.b16 %v570, %v566
  %v611 = vpack.c.b16 %v571, %v567
  %v612 = vpack.c.b16 %v576, %v572
  %v613 = vpack.c.b16 %v577, %v573
  %v614 = vpack.c.b16 %v578, %v574
  %v615 = vpack.c.b16 %v579, %v575
  %v616 = vpack.c.b16 %v584, %v580
  %v617 = vpack.c.b16 %v585, %v581
  %v618 = vpack.c.b16 %v586, %v582
  %v619 = vpack.c.b16 %v587, %v583
  %652 = vmatprep.subr.bf16.mxu0 %v589
  %653 = vmatpush1.bf16.msra.mxu0 %v588
  %654 = vmatprep.subr.bf16.mxu0 %v593
  %655 = vmatpush1.bf16.msra.mxu0 %v592
  %656 = vmatprep.subr.bf16.mxu0 %v597
  %657 = vmatpush1.bf16.msra.mxu0 %v596
  %658 = vmatprep.subr.bf16.mxu0 %v601
  %659 = vmatpush1.bf16.msra.mxu0 %v600
  %660 = vmatprep.subr.bf16.mxu0 %v605
  %661 = vmatpush1.bf16.msra.mxu0 %v604
  %662 = vmatprep.subr.bf16.mxu0 %v609
  %663 = vmatpush1.bf16.msra.mxu0 %v608
  %664 = vmatprep.subr.bf16.mxu0 %v613
  %665 = vmatpush1.bf16.msra.mxu0 %v612
  %666 = vmatprep.subr.bf16.mxu0 %v617
  %667 = vmatpush1.bf16.msra.mxu0 %v616
  %668 = vmatprep.subr.bf16.mxu0 0
  %669 = vmatpush1.bf16.msra.mxu0 0
  %670 = vmatprep.subr.bf16.mxu0 0
  %671 = vmatpush1.bf16.msra.mxu0 0
  %672 = vmatprep.subr.bf16.mxu0 0
  %673 = vmatpush1.bf16.msra.mxu0 0
  %674 = vmatprep.subr.bf16.mxu0 0
  %675 = vmatpush1.bf16.msra.mxu0 0
  %676 = vmatprep.subr.bf16.mxu0 0
  %677 = vmatpush1.bf16.msra.mxu0 0
  %678 = vmatprep.subr.bf16.mxu0 0
  %679 = vmatpush1.bf16.msra.mxu0 0
  %680 = vmatprep.subr.bf16.mxu0 0
  %681 = vmatpush1.bf16.msra.mxu0 0
  %682 = vmatprep.subr.bf16.mxu0 0
  %683 = vmatpush1.bf16.msra.mxu0 0
  %684 = vmatprep.mubr.bf16.mxu0 0
  %685 = vmatmul.mubr.bf16.gmra.mrb[0].mxu0 %v459
  %v686 = vpop.f32.mrb[0].mxu0
  %v687 = vadd.f32 0.0, %v686
  %v688 = vpop.f32.mrb[0].mxu0
  %v689 = vadd.f32 0.0, %v688
  %v690 = vpop.f32.mrb[0].mxu0
  %v691 = vpop.f32.mrb[0].mxu0
  %692 = vdwg.mxu0
  %693 = vmatprep.subr.bf16.mxu0 %v591
  %694 = vmatpush1.bf16.msra.mxu0 %v590
  %695 = vmatprep.subr.bf16.mxu0 %v595
  %696 = vmatpush1.bf16.msra.mxu0 %v594
  %697 = vmatprep.subr.bf16.mxu0 %v599
  %698 = vmatpush1.bf16.msra.mxu0 %v598
  %699 = vmatprep.subr.bf16.mxu0 %v603
  %700 = vmatpush1.bf16.msra.mxu0 %v602
  %701 = vmatprep.subr.bf16.mxu0 %v607
  %702 = vmatpush1.bf16.msra.mxu0 %v606
  %703 = vmatprep.subr.bf16.mxu0 %v611
  %704 = vmatpush1.bf16.msra.mxu0 %v610
  %705 = vmatprep.subr.bf16.mxu0 %v615
  %706 = vmatpush1.bf16.msra.mxu0 %v614
  %707 = vmatprep.subr.bf16.mxu0 %v619
  %708 = vmatpush1.bf16.msra.mxu0 %v618
  %709 = vmatprep.subr.bf16.mxu0 0
  %710 = vmatpush1.bf16.msra.mxu0 0
  %711 = vmatprep.subr.bf16.mxu0 0
  %712 = vmatpush1.bf16.msra.mxu0 0
  %713 = vmatprep.subr.bf16.mxu0 0
  %714 = vmatpush1.bf16.msra.mxu0 0
  %715 = vmatprep.subr.bf16.mxu0 0
  %716 = vmatpush1.bf16.msra.mxu0 0
  %717 = vmatprep.subr.bf16.mxu0 0
  %718 = vmatpush1.bf16.msra.mxu0 0
  %719 = vmatprep.subr.bf16.mxu0 0
  %720 = vmatpush1.bf16.msra.mxu0 0
  %721 = vmatprep.subr.bf16.mxu0 0
  %722 = vmatpush1.bf16.msra.mxu0 0
  %723 = vmatprep.subr.bf16.mxu0 0
  %724 = vmatpush1.bf16.msra.mxu0 0
  %725 = vmatprep.mubr.bf16.mxu0 0
  %726 = vmatmul.mubr.bf16.gmra.mrb[0].mxu0 %v459
  %v727 = vpop.f32.mrb[0].mxu0
  %v728 = vadd.f32 0.0, %v727
  %v729 = vpop.f32.mrb[0].mxu0
  %v730 = vadd.f32 0.0, %v729
  %v731 = vpop.f32.mrb[0].mxu0
  %v732 = vpop.f32.mrb[0].mxu0
  %733 = vdwg.mxu0
  %v734 = vadd.f32 %v454, %v687
  %v735 = vadd.f32 %v455, %v689
  %v736 = vadd.f32 %v456, %v728
  %v737 = vadd.f32 %v457, %v730
  %v738 = vxor.u32 %v734, 2147483648
  %v739 = vmul.f32 %v738, 1.442695
  %v740 = vpow.pop %v739
  %v741 = vadd.f32 %v740, 1.0
  %v742 = vrcp.pop %v741
  %v743 = vmul.f32 1.0, %v742
  %v744 = vxor.u32 %v735, 2147483648
  %v745 = vmul.f32 %v744, 1.442695
  %v746 = vpow.pop %v745
  %v747 = vadd.f32 %v746, 1.0
  %v748 = vrcp.pop %v747
  %v749 = vmul.f32 1.0, %v748
  %v750 = vtanh.pop %v736
  %v751 = vxor.u32 %v737, 2147483648
  %v752 = vmul.f32 %v751, 1.442695
  %v753 = vpow.pop %v752
  %v754 = vadd.f32 %v753, 1.0
  %v755 = vrcp.pop %v754
  %v756 = vmul.f32 1.0, %v755
  %v757 = vld [vmem:[#allocation3] sm:$0xff]
  %v758 = vmul.f32 %v749, %v757
  %v759 = vmul.f32 %v743, %v750
  %v760 = vadd.f32 %v758, %v759
  %v761 = vtanh.pop %v760
  %v762 = vmul.f32 %v756, %v761
  %763 = vst [vmem:[#allocation3] sm:$0xff] %v760
  %764 = vst [vmem:[#allocation2] sm:$0xff] %v762
  %s765 = scalar_lea.vmem [#allocation4], 32
  %v766 = vld [vmem:[%s765] sm:$0xff]
  %v767 = vld [vmem:[%s765 + $0x8] sm:$0xff]
  %v768 = vld [vmem:[%s765 + $0x10] sm:$0xff]
  %v769 = vld [vmem:[%s765 + $0x18] sm:$0xff]
  %v770 = vld [vmem:[#allocation2] sm:$0xff]
  %v771 = vpack.c.bf16 %v770, %v770
  %v772 = vld [vmem:[%s2] sm:$0xff]
  %v773 = vld [vmem:[%s2 + $0x8] sm:$0xff]
  %v774 = vld [vmem:[%s2 + $0x10] sm:$0xff]
  %v775 = vld [vmem:[%s2 + $0x18] sm:$0xff]
  %v776 = vld [vmem:[%s2 + $0x20] sm:$0xff]
  %v777 = vld [vmem:[%s2 + $0x28] sm:$0xff]
  %v778 = vld [vmem:[%s2 + $0x30] sm:$0xff]
  %v779 = vld [vmem:[%s2 + $0x38] sm:$0xff]
  %v780 = vld [vmem:[%s2 + $0x40] sm:$0xff]
  %v781 = vld [vmem:[%s2 + $0x48] sm:$0xff]
  %v782 = vld [vmem:[%s2 + $0x50] sm:$0xff]
  %v783 = vld [vmem:[%s2 + $0x58] sm:$0xff]
  %v784 = vld [vmem:[%s2 + $0x60] sm:$0xff]
  %v785 = vld [vmem:[%s2 + $0x68] sm:$0xff]
  %v786 = vld [vmem:[%s2 + $0x70] sm:$0xff]
  %v787 = vld [vmem:[%s2 + $0x78] sm:$0xff]
  %v788 = vld [vmem:[%s2 + $0x80] sm:$0xff]
  %v789 = vld [vmem:[%s2 + $0x88] sm:$0xff]
  %v790 = vld [vmem:[%s2 + $0x90] sm:$0xff]
  %v791 = vld [vmem:[%s2 + $0x98] sm:$0xff]
  %v792 = vld [vmem:[%s2 + $0xa0] sm:$0xff]
  %v793 = vld [vmem:[%s2 + $0xa8] sm:$0xff]
  %v794 = vld [vmem:[%s2 + $0xb0] sm:$0xff]
  %v795 = vld [vmem:[%s2 + $0xb8] sm:$0xff]
  %v796 = vld [vmem:[%s2 + $0xc0] sm:$0xff]
  %v797 = vld [vmem:[%s2 + $0xc8] sm:$0xff]
  %v798 = vld [vmem:[%s2 + $0xd0] sm:$0xff]
  %v799 = vld [vmem:[%s2 + $0xd8] sm:$0xff]
  %v800 = vld [vmem:[%s2 + $0xe0] sm:$0xff]
  %v801 = vld [vmem:[%s2 + $0xe8] sm:$0xff]
  %v802 = vld [vmem:[%s2 + $0xf0] sm:$0xff]
  %v803 = vld [vmem:[%s2 + $0xf8] sm:$0xff]
  %v836 = vunpack.c.l.b16 %v772
  %v837 = vunpack.c.h.b16 %v772
  %v838 = vunpack.c.l.b16 %v773
  %v839 = vunpack.c.h.b16 %v773
  %v840 = vunpack.c.l.b16 %v774
  %v841 = vunpack.c.h.b16 %v774
  %v842 = vunpack.c.l.b16 %v775
  %v843 = vunpack.c.h.b16 %v775
  %v844 = vunpack.c.l.b16 %v776
  %v845 = vunpack.c.h.b16 %v776
  %v846 = vunpack.c.l.b16 %v777
  %v847 = vunpack.c.h.b16 %v777
  %v848 = vunpack.c.l.b16 %v778
  %v849 = vunpack.c.h.b16 %v778
  %v850 = vunpack.c.l.b16 %v779
  %v851 = vunpack.c.h.b16 %v779
  %v852 = vunpack.c.l.b16 %v780
  %v853 = vunpack.c.h.b16 %v780
  %v854 = vunpack.c.l.b16 %v781
  %v855 = vunpack.c.h.b16 %v781
  %v856 = vunpack.c.l.b16 %v782
  %v857 = vunpack.c.h.b16 %v782
  %v858 = vunpack.c.l.b16 %v783
  %v859 = vunpack.c.h.b16 %v783
  %v860 = vunpack.c.l.b16 %v784
  %v861 = vunpack.c.h.b16 %v784
  %v862 = vunpack.c.l.b16 %v785
  %v863 = vunpack.c.h.b16 %v785
  %v864 = vunpack.c.l.b16 %v786
  %v865 = vunpack.c.h.b16 %v786
  %v866 = vunpack.c.l.b16 %v787
  %v867 = vunpack.c.h.b16 %v787
  %v868 = vunpack.c.l.b16 %v788
  %v869 = vunpack.c.h.b16 %v788
  %v870 = vunpack.c.l.b16 %v789
  %v871 = vunpack.c.h.b16 %v789
  %v872 = vunpack.c.l.b16 %v790
  %v873 = vunpack.c.h.b16 %v790
  %v874 = vunpack.c.l.b16 %v791
  %v875 = vunpack.c.h.b16 %v791
  %v876 = vunpack.c.l.b16 %v792
  %v877 = vunpack.c.h.b16 %v792
  %v878 = vunpack.c.l.b16 %v793
  %v879 = vunpack.c.h.b16 %v793
  %v880 = vunpack.c.l.b16 %v794
  %v881 = vunpack.c.h.b16 %v794
  %v882 = vunpack.c.l.b16 %v795
  %v883 = vunpack.c.h.b16 %v795
  %v884 = vunpack.c.l.b16 %v796
  %v885 = vunpack.c.h.b16 %v796
  %v886 = vunpack.c.l.b16 %v797
  %v887 = vunpack.c.h.b16 %v797
  %v888 = vunpack.c.l.b16 %v798
  %v889 = vunpack.c.h.b16 %v798
  %v890 = vunpack.c.l.b16 %v799
  %v891 = vunpack.c.h.b16 %v799
  %v892 = vunpack.c.l.b16 %v800
  %v893 = vunpack.c.h.b16 %v800
  %v894 = vunpack.c.l.b16 %v801
  %v895 = vunpack.c.h.b16 %v801
  %v896 = vunpack.c.l.b16 %v802
  %v897 = vunpack.c.h.b16 %v802
  %v898 = vunpack.c.l.b16 %v803
  %v899 = vunpack.c.h.b16 %v803
  %v900 = vpack.c.b16 %v840, %v836
  %v901 = vpack.c.b16 %v841, %v837
  %v902 = vpack.c.b16 %v842, %v838
  %v903 = vpack.c.b16 %v843, %v839
  %v904 = vpack.c.b16 %v848, %v844
  %v905 = vpack.c.b16 %v849, %v845
  %v906 = vpack.c.b16 %v850, %v846
  %v907 = vpack.c.b16 %v851, %v847
  %v908 = vpack.c.b16 %v856, %v852
  %v909 = vpack.c.b16 %v857, %v853
  %v910 = vpack.c.b16 %v858, %v854
  %v911 = vpack.c.b16 %v859, %v855
  %v912 = vpack.c.b16 %v864, %v860
  %v913 = vpack.c.b16 %v865, %v861
  %v914 = vpack.c.b16 %v866, %v862
  %v915 = vpack.c.b16 %v867, %v863
  %v916 = vpack.c.b16 %v872, %v868
  %v917 = vpack.c.b16 %v873, %v869
  %v918 = vpack.c.b16 %v874, %v870
  %v919 = vpack.c.b16 %v875, %v871
  %v920 = vpack.c.b16 %v880, %v876
  %v921 = vpack.c.b16 %v881, %v877
  %v922 = vpack.c.b16 %v882, %v878
  %v923 = vpack.c.b16 %v883, %v879
  %v924 = vpack.c.b16 %v888, %v884
  %v925 = vpack.c.b16 %v889, %v885
  %v926 = vpack.c.b16 %v890, %v886
  %v927 = vpack.c.b16 %v891, %v887
  %v928 = vpack.c.b16 %v896, %v892
  %v929 = vpack.c.b16 %v897, %v893
  %v930 = vpack.c.b16 %v898, %v894
  %v931 = vpack.c.b16 %v899, %v895
  %964 = vmatprep.subr.bf16.mxu0 %v901
  %965 = vmatpush1.bf16.msra.mxu0 %v900
  %966 = vmatprep.subr.bf16.mxu0 %v905
  %967 = vmatpush1.bf16.msra.mxu0 %v904
  %968 = vmatprep.subr.bf16.mxu0 %v909
  %969 = vmatpush1.bf16.msra.mxu0 %v908
  %970 = vmatprep.subr.bf16.mxu0 %v913
  %971 = vmatpush1.bf16.msra.mxu0 %v912
  %972 = vmatprep.subr.bf16.mxu0 %v917
  %973 = vmatpush1.bf16.msra.mxu0 %v916
  %974 = vmatprep.subr.bf16.mxu0 %v921
  %975 = vmatpush1.bf16.msra.mxu0 %v920
  %976 = vmatprep.subr.bf16.mxu0 %v925
  %977 = vmatpush1.bf16.msra.mxu0 %v924
  %978 = vmatprep.subr.bf16.mxu0 %v929
  %979 = vmatpush1.bf16.msra.mxu0 %v928
  %980 = vmatprep.subr.bf16.mxu0 0
  %981 = vmatpush1.bf16.msra.mxu0 0
  %982 = vmatprep.subr.bf16.mxu0 0
  %983 = vmatpush1.bf16.msra.mxu0 0
  %984 = vmatprep.subr.bf16.mxu0 0
  %985 = vmatpush1.bf16.msra.mxu0 0
  %986 = vmatprep.subr.bf16.mxu0 0
  %987 = vmatpush1.bf16.msra.mxu0 0
  %988 = vmatprep.subr.bf16.mxu0 0
  %989 = vmatpush1.bf16.msra.mxu0 0
  %990 = vmatprep.subr.bf16.mxu0 0
  %991 = vmatpush1.bf16.msra.mxu0 0
  %992 = vmatprep.subr.bf16.mxu0 0
  %993 = vmatpush1.bf16.msra.mxu0 0
  %994 = vmatprep.subr.bf16.mxu0 0
  %995 = vmatpush1.bf16.msra.mxu0 0
  %996 = vmatprep.mubr.bf16.mxu0 0
  %997 = vmatmul.mubr.bf16.gmra.mrb[0].mxu0 %v771
  %v998 = vpop.f32.mrb[0].mxu0
  %v999 = vadd.f32 0.0, %v998
  %v1000 = vpop.f32.mrb[0].mxu0
  %v1001 = vadd.f32 0.0, %v1000
  %v1002 = vpop.f32.mrb[0].mxu0
  %v1003 = vpop.f32.mrb[0].mxu0
  %1004 = vdwg.mxu0
  %1005 = vmatprep.subr.bf16.mxu0 %v903
  %1006 = vmatpush1.bf16.msra.mxu0 %v902
  %1007 = vmatprep.subr.bf16.mxu0 %v907
  %1008 = vmatpush1.bf16.msra.mxu0 %v906
  %1009 = vmatprep.subr.bf16.mxu0 %v911
  %1010 = vmatpush1.bf16.msra.mxu0 %v910
  %1011 = vmatprep.subr.bf16.mxu0 %v915
  %1012 = vmatpush1.bf16.msra.mxu0 %v914
  %1013 = vmatprep.subr.bf16.mxu0 %v919
  %1014 = vmatpush1.bf16.msra.mxu0 %v918
  %1015 = vmatprep.subr.bf16.mxu0 %v923
  %1016 = vmatpush1.bf16.msra.mxu0 %v922
  %1017 = vmatprep.subr.bf16.mxu0 %v927
  %1018 = vmatpush1.bf16.msra.mxu0 %v926
  %1019 = vmatprep.subr.bf16.mxu0 %v931
  %1020 = vmatpush1.bf16.msra.mxu0 %v930
  %1021 = vmatprep.subr.bf16.mxu0 0
  %1022 = vmatpush1.bf16.msra.mxu0 0
  %1023 = vmatprep.subr.bf16.mxu0 0
  %1024 = vmatpush1.bf16.msra.mxu0 0
  %1025 = vmatprep.subr.bf16.mxu0 0
  %1026 = vmatpush1.bf16.msra.mxu0 0
  %1027 = vmatprep.subr.bf16.mxu0 0
  %1028 = vmatpush1.bf16.msra.mxu0 0
  %1029 = vmatprep.subr.bf16.mxu0 0
  %1030 = vmatpush1.bf16.msra.mxu0 0
  %1031 = vmatprep.subr.bf16.mxu0 0
  %1032 = vmatpush1.bf16.msra.mxu0 0
  %1033 = vmatprep.subr.bf16.mxu0 0
  %1034 = vmatpush1.bf16.msra.mxu0 0
  %1035 = vmatprep.subr.bf16.mxu0 0
  %1036 = vmatpush1.bf16.msra.mxu0 0
  %1037 = vmatprep.mubr.bf16.mxu0 0
  %1038 = vmatmul.mubr.bf16.gmra.mrb[0].mxu0 %v771
  %v1039 = vpop.f32.mrb[0].mxu0
  %v1040 = vadd.f32 0.0, %v1039
  %v1041 = vpop.f32.mrb[0].mxu0
  %v1042 = vadd.f32 0.0, %v1041
  %v1043 = vpop.f32.mrb[0].mxu0
  %v1044 = vpop.f32.mrb[0].mxu0
  %1045 = vdwg.mxu0
  %v1046 = vadd.f32 %v766, %v999
  %v1047 = vadd.f32 %v767, %v1001
  %v1048 = vadd.f32 %v768, %v1040
  %v1049 = vadd.f32 %v769, %v1042
  %v1050 = vxor.u32 %v1046, 2147483648
  %v1051 = vmul.f32 %v1050, 1.442695
  %v1052 = vpow.pop %v1051
  %v1053 = vadd.f32 %v1052, 1.0
  %v1054 = vrcp.pop %v1053
  %v1055 = vmul.f32 1.0, %v1054
  %v1056 = vxor.u32 %v1047, 2147483648
  %v1057 = vmul.f32 %v1056, 1.442695
  %v1058 = vpow.pop %v1057
  %v1059 = vadd.f32 %v1058, 1.0
  %v1060 = vrcp.pop %v1059
  %v1061 = vmul.f32 1.0, %v1060
  %v1062 = vtanh.pop %v1048
  %v1063 = vxor.u32 %v1049, 2147483648
  %v1064 = vmul.f32 %v1063, 1.442695
  %v1065 = vpow.pop %v1064
  %v1066 = vadd.f32 %v1065, 1.0
  %v1067 = vrcp.pop %v1066
  %v1068 = vmul.f32 1.0, %v1067
  %v1069 = vld [vmem:[#allocation3] sm:$0xff]
  %v1070 = vmul.f32 %v1061, %v1069
  %v1071 = vmul.f32 %v1055, %v1062
  %v1072 = vadd.f32 %v1070, %v1071
  %v1073 = vtanh.pop %v1072
  %v1074 = vmul.f32 %v1068, %v1073
  %1075 = vst [vmem:[#allocation3] sm:$0xff] %v1072
  %1076 = vst [vmem:[#allocation2] sm:$0xff] %v1074
  %s1077 = scalar_lea.vmem [#allocation4], 64
  %v1078 = vld [vmem:[%s1077] sm:$0xff]
  %v1079 = vld [vmem:[%s1077 + $0x8] sm:$0xff]
  %v1080 = vld [vmem:[%s1077 + $0x10] sm:$0xff]
  %v1081 = vld [vmem:[%s1077 + $0x18] sm:$0xff]
  %v1082 = vld [vmem:[#allocation2] sm:$0xff]
  %v1083 = vpack.c.bf16 %v1082, %v1082
  %v1084 = vld [vmem:[%s2] sm:$0xff]
  %v1085 = vld [vmem:[%s2 + $0x8] sm:$0xff]
  %v1086 = vld [vmem:[%s2 + $0x10] sm:$0xff]
  %v1087 = vld [vmem:[%s2 + $0x18] sm:$0xff]
  %v1088 = vld [vmem:[%s2 + $0x20] sm:$0xff]
  %v1089 = vld [vmem:[%s2 + $0x28] sm:$0xff]
  %v1090 = vld [vmem:[%s2 + $0x30] sm:$0xff]
  %v1091 = vld [vmem:[%s2 + $0x38] sm:$0xff]
  %v1092 = vld [vmem:[%s2 + $0x40] sm:$0xff]
  %v1093 = vld [vmem:[%s2 + $0x48] sm:$0xff]
  %v1094 = vld [vmem:[%s2 + $0x50] sm:$0xff]
  %v1095 = vld [vmem:[%s2 + $0x58] sm:$0xff]
  %v1096 = vld [vmem:[%s2 + $0x60] sm:$0xff]
  %v1097 = vld [vmem:[%s2 + $0x68] sm:$0xff]
  %v1098 = vld [vmem:[%s2 + $0x70] sm:$0xff]
  %v1099 = vld [vmem:[%s2 + $0x78] sm:$0xff]
  %v1100 = vld [vmem:[%s2 + $0x80] sm:$0xff]
  %v1101 = vld [vmem:[%s2 + $0x88] sm:$0xff]
  %v1102 = vld [vmem:[%s2 + $0x90] sm:$0xff]
  %v1103 = vld [vmem:[%s2 + $0x98] sm:$0xff]
  %v1104 = vld [vmem:[%s2 + $0xa0] sm:$0xff]
  %v1105 = vld [vmem:[%s2 + $0xa8] sm:$0xff]
  %v1106 = vld [vmem:[%s2 + $0xb0] sm:$0xff]
  %v1107 = vld [vmem:[%s2 + $0xb8] sm:$0xff]
  %v1108 = vld [vmem:[%s2 + $0xc0] sm:$0xff]
  %v1109 = vld [vmem:[%s2 + $0xc8] sm:$0xff]
  %v1110 = vld [vmem:[%s2 + $0xd0] sm:$0xff]
  %v1111 = vld [vmem:[%s2 + $0xd8] sm:$0xff]
  %v1112 = vld [vmem:[%s2 + $0xe0] sm:$0xff]
  %v1113 = vld [vmem:[%s2 + $0xe8] sm:$0xff]
  %v1114 = vld [vmem:[%s2 + $0xf0] sm:$0xff]
  %v1115 = vld [vmem:[%s2 + $0xf8] sm:$0xff]
  %v1148 = vunpack.c.l.b16 %v1084
  %v1149 = vunpack.c.h.b16 %v1084
  %v1150 = vunpack.c.l.b16 %v1085
  %v1151 = vunpack.c.h.b16 %v1085
  %v1152 = vunpack.c.l.b16 %v1086
  %v1153 = vunpack.c.h.b16 %v1086
  %v1154 = vunpack.c.l.b16 %v1087
  %v1155 = vunpack.c.h.b16 %v1087
  %v1156 = vunpack.c.l.b16 %v1088
  %v1157 = vunpack.c.h.b16 %v1088
  %v1158 = vunpack.c.l.b16 %v1089
  %v1159 = vunpack.c.h.b16 %v1089
  %v1160 = vunpack.c.l.b16 %v1090
  %v1161 = vunpack.c.h.b16 %v1090
  %v1162 = vunpack.c.l.b16 %v1091
  %v1163 = vunpack.c.h.b16 %v1091
  %v1164 = vunpack.c.l.b16 %v1092
  %v1165 = vunpack.c.h.b16 %v1092
  %v1166 = vunpack.c.l.b16 %v1093
  %v1167 = vunpack.c.h.b16 %v1093
  %v1168 = vunpack.c.l.b16 %v1094
  %v1169 = vunpack.c.h.b16 %v1094
  %v1170 = vunpack.c.l.b16 %v1095
  %v1171 = vunpack.c.h.b16 %v1095
  %v1172 = vunpack.c.l.b16 %v1096
  %v1173 = vunpack.c.h.b16 %v1096
  %v1174 = vunpack.c.l.b16 %v1097
  %v1175 = vunpack.c.h.b16 %v1097
  %v1176 = vunpack.c.l.b16 %v1098
  %v1177 = vunpack.c.h.b16 %v1098
  %v1178 = vunpack.c.l.b16 %v1099
  %v1179 = vunpack.c.h.b16 %v1099
  %v1180 = vunpack.c.l.b16 %v1100
  %v1181 = vunpack.c.h.b16 %v1100
  %v1182 = vunpack.c.l.b16 %v1101
  %v1183 = vunpack.c.h.b16 %v1101
  %v1184 = vunpack.c.l.b16 %v1102
  %v1185 = vunpack.c.h.b16 %v1102
  %v1186 = vunpack.c.l.b16 %v1103
  %v1187 = vunpack.c.h.b16 %v1103
  %v1188 = vunpack.c.l.b16 %v1104
  %v1189 = vunpack.c.h.b16 %v1104
  %v1190 = vunpack.c.l.b16 %v1105
  %v1191 = vunpack.c.h.b16 %v1105
  %v1192 = vunpack.c.l.b16 %v1106
  %v1193 = vunpack.c.h.b16 %v1106
  %v1194 = vunpack.c.l.b16 %v1107
  %v1195 = vunpack.c.h.b16 %v1107
  %v1196 = vunpack.c.l.b16 %v1108
  %v1197 = vunpack.c.h.b16 %v1108
  %v1198 = vunpack.c.l.b16 %v1109
  %v1199 = vunpack.c.h.b16 %v1109
  %v1200 = vunpack.c.l.b16 %v1110
  %v1201 = vunpack.c.h.b16 %v1110
  %v1202 = vunpack.c.l.b16 %v1111
  %v1203 = vunpack.c.h.b16 %v1111
  %v1204 = vunpack.c.l.b16 %v1112
  %v1205 = vunpack.c.h.b16 %v1112
  %v1206 = vunpack.c.l.b16 %v1113
  %v1207 = vunpack.c.h.b16 %v1113
  %v1208 = vunpack.c.l.b16 %v1114
  %v1209 = vunpack.c.h.b16 %v1114
  %v1210 = vunpack.c.l.b16 %v1115
  %v1211 = vunpack.c.h.b16 %v1115
  %v1212 = vpack.c.b16 %v1152, %v1148
  %v1213 = vpack.c.b16 %v1153, %v1149
  %v1214 = vpack.c.b16 %v1154, %v1150
  %v1215 = vpack.c.b16 %v1155, %v1151
  %v1216 = vpack.c.b16 %v1160, %v1156
  %v1217 = vpack.c.b16 %v1161, %v1157
  %v1218 = vpack.c.b16 %v1162, %v1158
  %v1219 = vpack.c.b16 %v1163, %v1159
  %v1220 = vpack.c.b16 %v1168, %v1164
  %v1221 = vpack.c.b16 %v1169, %v1165
  %v1222 = vpack.c.b16 %v1170, %v1166
  %v1223 = vpack.c.b16 %v1171, %v1167
  %v1224 = vpack.c.b16 %v1176, %v1172
  %v1225 = vpack.c.b16 %v1177, %v1173
  %v1226 = vpack.c.b16 %v1178, %v1174
  %v1227 = vpack.c.b16 %v1179, %v1175
  %v1228 = vpack.c.b16 %v1184, %v1180
  %v1229 = vpack.c.b16 %v1185, %v1181
  %v1230 = vpack.c.b16 %v1186, %v1182
  %v1231 = vpack.c.b16 %v1187, %v1183
  %v1232 = vpack.c.b16 %v1192, %v1188
  %v1233 = vpack.c.b16 %v1193, %v1189
  %v1234 = vpack.c.b16 %v1194, %v1190
  %v1235 = vpack.c.b16 %v1195, %v1191
  %v1236 = vpack.c.b16 %v1200, %v1196
  %v1237 = vpack.c.b16 %v1201, %v1197
  %v1238 = vpack.c.b16 %v1202, %v1198
  %v1239 = vpack.c.b16 %v1203, %v1199
  %v1240 = vpack.c.b16 %v1208, %v1204
  %v1241 = vpack.c.b16 %v1209, %v1205
  %v1242 = vpack.c.b16 %v1210, %v1206
  %v1243 = vpack.c.b16 %v1211, %v1207
  %1276 = vmatprep.subr.bf16.mxu0 %v1213
  %1277 = vmatpush1.bf16.msra.mxu0 %v1212
  %1278 = vmatprep.subr.bf16.mxu0 %v1217
  %1279 = vmatpush1.bf16.msra.mxu0 %v1216
  %1280 = vmatprep.subr.bf16.mxu0 %v1221
  %1281 = vmatpush1.bf16.msra.mxu0 %v1220
  %1282 = vmatprep.subr.bf16.mxu0 %v1225
  %1283 = vmatpush1.bf16.msra.mxu0 %v1224
  %1284 = vmatprep.subr.bf16.mxu0 %v1229
  %1285 = vmatpush1.bf16.msra.mxu0 %v1228
  %1286 = vmatprep.subr.bf16.mxu0 %v1233
  %1287 = vmatpush1.bf16.msra.mxu0 %v1232
  %1288 = vmatprep.subr.bf16.mxu0 %v1237
  %1289 = vmatpush1.bf16.msra.mxu0 %v1236
  %1290 = vmatprep.subr.bf16.mxu0 %v1241
  %1291 = vmatpush1.bf16.msra.mxu0 %v1240
  %1292 = vmatprep.subr.bf16.mxu0 0
  %1293 = vmatpush1.bf16.msra.mxu0 0
  %1294 = vmatprep.subr.bf16.mxu0 0
  %1295 = vmatpush1.bf16.msra.mxu0 0
  %1296 = vmatprep.subr.bf16.mxu0 0
  %1297 = vmatpush1.bf16.msra.mxu0 0
  %1298 = vmatprep.subr.bf16.mxu0 0
  %1299 = vmatpush1.bf16.msra.mxu0 0
  %1300 = vmatprep.subr.bf16.mxu0 0
  %1301 = vmatpush1.bf16.msra.mxu0 0
  %1302 = vmatprep.subr.bf16.mxu0 0
  %1303 = vmatpush1.bf16.msra.mxu0 0
  %1304 = vmatprep.subr.bf16.mxu0 0
  %1305 = vmatpush1.bf16.msra.mxu0 0
  %1306 = vmatprep.subr.bf16.mxu0 0
  %1307 = vmatpush1.bf16.msra.mxu0 0
  %1308 = vmatprep.mubr.bf16.mxu0 0
  %1309 = vmatmul.mubr.bf16.gmra.mrb[0].mxu0 %v1083
  %v1310 = vpop.f32.mrb[0].mxu0
  %v1311 = vadd.f32 0.0, %v1310
  %v1312 = vpop.f32.mrb[0].mxu0
  %v1313 = vadd.f32 0.0, %v1312
  %v1314 = vpop.f32.mrb[0].mxu0
  %v1315 = vpop.f32.mrb[0].mxu0
  %1316 = vdwg.mxu0
  %1317 = vmatprep.subr.bf16.mxu0 %v1215
  %1318 = vmatpush1.bf16.msra.mxu0 %v1214
  %1319 = vmatprep.subr.bf16.mxu0 %v1219
  %1320 = vmatpush1.bf16.msra.mxu0 %v1218
  %1321 = vmatprep.subr.bf16.mxu0 %v1223
  %1322 = vmatpush1.bf16.msra.mxu0 %v1222
  %1323 = vmatprep.subr.bf16.mxu0 %v1227
  %1324 = vmatpush1.bf16.msra.mxu0 %v1226
  %1325 = vmatprep.subr.bf16.mxu0 %v1231
  %1326 = vmatpush1.bf16.msra.mxu0 %v1230
  %1327 = vmatprep.subr.bf16.mxu0 %v1235
  %1328 = vmatpush1.bf16.msra.mxu0 %v1234
  %1329 = vmatprep.subr.bf16.mxu0 %v1239
  %1330 = vmatpush1.bf16.msra.mxu0 %v1238
  %1331 = vmatprep.subr.bf16.mxu0 %v1243
  %1332 = vmatpush1.bf16.msra.mxu0 %v1242
  %1333 = vmatprep.subr.bf16.mxu0 0
  %1334 = vmatpush1.bf16.msra.mxu0 0
  %1335 = vmatprep.subr.bf16.mxu0 0
  %1336 = vmatpush1.bf16.msra.mxu0 0
  %1337 = vmatprep.subr.bf16.mxu0 0
  %1338 = vmatpush1.bf16.msra.mxu0 0
  %1339 = vmatprep.subr.bf16.mxu0 0
  %1340 = vmatpush1.bf16.msra.mxu0 0
  %1341 = vmatprep.subr.bf16.mxu0 0
  %1342 = vmatpush1.bf16.msra.mxu0 0
  %1343 = vmatprep.subr.bf16.mxu0 0
  %1344 = vmatpush1.bf16.msra.mxu0 0
  %1345 = vmatprep.subr.bf16.mxu0 0
  %1346 = vmatpush1.bf16.msra.mxu0 0
  %1347 = vmatprep.subr.bf16.mxu0 0
  %1348 = vmatpush1.bf16.msra.mxu0 0
  %1349 = vmatprep.mubr.bf16.mxu0 0
  %1350 = vmatmul.mubr.bf16.gmra.mrb[0].mxu0 %v1083
  %v1351 = vpop.f32.mrb[0].mxu0
  %v1352 = vadd.f32 0.0, %v1351
  %v1353 = vpop.f32.mrb[0].mxu0
  %v1354 = vadd.f32 0.0, %v1353
  %v1355 = vpop.f32.mrb[0].mxu0
  %v1356 = vpop.f32.mrb[0].mxu0
  %1357 = vdwg.mxu0
  %v1358 = vadd.f32 %v1078, %v1311
  %v1359 = vadd.f32 %v1079, %v1313
  %v1360 = vadd.f32 %v1080, %v1352
  %v1361 = vadd.f32 %v1081, %v1354
  %v1362 = vxor.u32 %v1358, 2147483648
  %v1363 = vmul.f32 %v1362, 1.442695
  %v1364 = vpow.pop %v1363
  %v1365 = vadd.f32 %v1364, 1.0
  %v1366 = vrcp.pop %v1365
  %v1367 = vmul.f32 1.0, %v1366
  %v1368 = vxor.u32 %v1359, 2147483648
  %v1369 = vmul.f32 %v1368, 1.442695
  %v1370 = vpow.pop %v1369
  %v1371 = vadd.f32 %v1370, 1.0
  %v1372 = vrcp.pop %v1371
  %v1373 = vmul.f32 1.0, %v1372
  %v1374 = vtanh.pop %v1360
  %v1375 = vxor.u32 %v1361, 2147483648
  %v1376 = vmul.f32 %v1375, 1.442695
  %v1377 = vpow.pop %v1376
  %v1378 = vadd.f32 %v1377, 1.0
  %v1379 = vrcp.pop %v1378
  %v1380 = vmul.f32 1.0, %v1379
  %v1381 = vld [vmem:[#allocation3] sm:$0xff]
  %v1382 = vmul.f32 %v1373, %v1381
  %v1383 = vmul.f32 %v1367, %v1374
  %v1384 = vadd.f32 %v1382, %v1383
  %v1385 = vtanh.pop %v1384
  %v1386 = vmul.f32 %v1380, %v1385
  %1387 = vst [vmem:[#allocation3] sm:$0xff] %v1384
  %1388 = vst [vmem:[#allocation2] sm:$0xff] %v1386
  %s1389 = scalar_lea.vmem [#allocation4], 96
  %v1390 = vld [vmem:[%s1389] sm:$0xff]
  %v1391 = vld [vmem:[%s1389 + $0x8] sm:$0xff]
  %v1392 = vld [vmem:[%s1389 + $0x10] sm:$0xff]
  %v1393 = vld [vmem:[%s1389 + $0x18] sm:$0xff]
  %v1394 = vld [vmem:[#allocation2] sm:$0xff]
  %v1395 = vpack.c.bf16 %v1394, %v1394
  %v1396 = vld [vmem:[%s2] sm:$0xff]
  %v1397 = vld [vmem:[%s2 + $0x8] sm:$0xff]
  %v1398 = vld [vmem:[%s2 + $0x10] sm:$0xff]
  %v1399 = vld [vmem:[%s2 + $0x18] sm:$0xff]
  %v1400 = vld [vmem:[%s2 + $0x20] sm:$0xff]
  %v1401 = vld [vmem:[%s2 + $0x28] sm:$0xff]
  %v1402 = vld [vmem:[%s2 + $0x30] sm:$0xff]
  %v1403 = vld [vmem:[%s2 + $0x38] sm:$0xff]
  %v1404 = vld [vmem:[%s2 + $0x40] sm:$0xff]
  %v1405 = vld [vmem:[%s2 + $0x48] sm:$0xff]
  %v1406 = vld [vmem:[%s2 + $0x50] sm:$0xff]
  %v1407 = vld [vmem:[%s2 + $0x58] sm:$0xff]
  %v1408 = vld [vmem:[%s2 + $0x60] sm:$0xff]
  %v1409 = vld [vmem:[%s2 + $0x68] sm:$0xff]
  %v1410 = vld [vmem:[%s2 + $0x70] sm:$0xff]
  %v1411 = vld [vmem:[%s2 + $0x78] sm:$0xff]
  %v1412 = vld [vmem:[%s2 + $0x80] sm:$0xff]
  %v1413 = vld [vmem:[%s2 + $0x88] sm:$0xff]
  %v1414 = vld [vmem:[%s2 + $0x90] sm:$0xff]
  %v1415 = vld [vmem:[%s2 + $0x98] sm:$0xff]
  %v1416 = vld [vmem:[%s2 + $0xa0] sm:$0xff]
  %v1417 = vld [vmem:[%s2 + $0xa8] sm:$0xff]
  %v1418 = vld [vmem:[%s2 + $0xb0] sm:$0xff]
  %v1419 = vld [vmem:[%s2 + $0xb8] sm:$0xff]
  %v1420 = vld [vmem:[%s2 + $0xc0] sm:$0xff]
  %v1421 = vld [vmem:[%s2 + $0xc8] sm:$0xff]
  %v1422 = vld [vmem:[%s2 + $0xd0] sm:$0xff]
  %v1423 = vld [vmem:[%s2 + $0xd8] sm:$0xff]
  %v1424 = vld [vmem:[%s2 + $0xe0] sm:$0xff]
  %v1425 = vld [vmem:[%s2 + $0xe8] sm:$0xff]
  %v1426 = vld [vmem:[%s2 + $0xf0] sm:$0xff]
  %v1427 = vld [vmem:[%s2 + $0xf8] sm:$0xff]
  %v1460 = vunpack.c.l.b16 %v1396
  %v1461 = vunpack.c.h.b16 %v1396
  %v1462 = vunpack.c.l.b16 %v1397
  %v1463 = vunpack.c.h.b16 %v1397
  %v1464 = vunpack.c.l.b16 %v1398
  %v1465 = vunpack.c.h.b16 %v1398
  %v1466 = vunpack.c.l.b16 %v1399
  %v1467 = vunpack.c.h.b16 %v1399
  %v1468 = vunpack.c.l.b16 %v1400
  %v1469 = vunpack.c.h.b16 %v1400
  %v1470 = vunpack.c.l.b16 %v1401
  %v1471 = vunpack.c.h.b16 %v1401
  %v1472 = vunpack.c.l.b16 %v1402
  %v1473 = vunpack.c.h.b16 %v1402
  %v1474 = vunpack.c.l.b16 %v1403
  %v1475 = vunpack.c.h.b16 %v1403
  %v1476 = vunpack.c.l.b16 %v1404
  %v1477 = vunpack.c.h.b16 %v1404
  %v1478 = vunpack.c.l.b16 %v1405
  %v1479 = vunpack.c.h.b16 %v1405
  %v1480 = vunpack.c.l.b16 %v1406
  %v1481 = vunpack.c.h.b16 %v1406
  %v1482 = vunpack.c.l.b16 %v1407
  %v1483 = vunpack.c.h.b16 %v1407
  %v1484 = vunpack.c.l.b16 %v1408
  %v1485 = vunpack.c.h.b16 %v1408
  %v1486 = vunpack.c.l.b16 %v1409
  %v1487 = vunpack.c.h.b16 %v1409
  %v1488 = vunpack.c.l.b16 %v1410
  %v1489 = vunpack.c.h.b16 %v1410
  %v1490 = vunpack.c.l.b16 %v1411
  %v1491 = vunpack.c.h.b16 %v1411
  %v1492 = vunpack.c.l.b16 %v1412
  %v1493 = vunpack.c.h.b16 %v1412
  %v1494 = vunpack.c.l.b16 %v1413
  %v1495 = vunpack.c.h.b16 %v1413
  %v1496 = vunpack.c.l.b16 %v1414
  %v1497 = vunpack.c.h.b16 %v1414
  %v1498 = vunpack.c.l.b16 %v1415
  %v1499 = vunpack.c.h.b16 %v1415
  %v1500 = vunpack.c.l.b16 %v1416
  %v1501 = vunpack.c.h.b16 %v1416
  %v1502 = vunpack.c.l.b16 %v1417
  %v1503 = vunpack.c.h.b16 %v1417
  %v1504 = vunpack.c.l.b16 %v1418
  %v1505 = vunpack.c.h.b16 %v1418
  %v1506 = vunpack.c.l.b16 %v1419
  %v1507 = vunpack.c.h.b16 %v1419
  %v1508 = vunpack.c.l.b16 %v1420
  %v1509 = vunpack.c.h.b16 %v1420
  %v1510 = vunpack.c.l.b16 %v1421
  %v1511 = vunpack.c.h.b16 %v1421
  %v1512 = vunpack.c.l.b16 %v1422
  %v1513 = vunpack.c.h.b16 %v1422
  %v1514 = vunpack.c.l.b16 %v1423
  %v1515 = vunpack.c.h.b16 %v1423
  %v1516 = vunpack.c.l.b16 %v1424
  %v1517 = vunpack.c.h.b16 %v1424
  %v1518 = vunpack.c.l.b16 %v1425
  %v1519 = vunpack.c.h.b16 %v1425
  %v1520 = vunpack.c.l.b16 %v1426
  %v1521 = vunpack.c.h.b16 %v1426
  %v1522 = vunpack.c.l.b16 %v1427
  %v1523 = vunpack.c.h.b16 %v1427
  %v1524 = vpack.c.b16 %v1464, %v1460
  %v1525 = vpack.c.b16 %v1465, %v1461
  %v1526 = vpack.c.b16 %v1466, %v1462
  %v1527 = vpack.c.b16 %v1467, %v1463
  %v1528 = vpack.c.b16 %v1472, %v1468
  %v1529 = vpack.c.b16 %v1473, %v1469
  %v1530 = vpack.c.b16 %v1474, %v1470
  %v1531 = vpack.c.b16 %v1475, %v1471
  %v1532 = vpack.c.b16 %v1480, %v1476
  %v1533 = vpack.c.b16 %v1481, %v1477
  %v1534 = vpack.c.b16 %v1482, %v1478
  %v1535 = vpack.c.b16 %v1483, %v1479
  %v1536 = vpack.c.b16 %v1488, %v1484
  %v1537 = vpack.c.b16 %v1489, %v1485
  %v1538 = vpack.c.b16 %v1490, %v1486
  %v1539 = vpack.c.b16 %v1491, %v1487
  %v1540 = vpack.c.b16 %v1496, %v1492
  %v1541 = vpack.c.b16 %v1497, %v1493
  %v1542 = vpack.c.b16 %v1498, %v1494
  %v1543 = vpack.c.b16 %v1499, %v1495
  %v1544 = vpack.c.b16 %v1504, %v1500
  %v1545 = vpack.c.b16 %v1505, %v1501
  %v1546 = vpack.c.b16 %v1506, %v1502
  %v1547 = vpack.c.b16 %v1507, %v1503
  %v1548 = vpack.c.b16 %v1512, %v1508
  %v1549 = vpack.c.b16 %v1513, %v1509
  %v1550 = vpack.c.b16 %v1514, %v1510
  %v1551 = vpack.c.b16 %v1515, %v1511
  %v1552 = vpack.c.b16 %v1520, %v1516
  %v1553 = vpack.c.b16 %v1521, %v1517
  %v1554 = vpack.c.b16 %v1522, %v1518
  %v1555 = vpack.c.b16 %v1523, %v1519
  %1588 = vmatprep.subr.bf16.mxu0 %v1525
  %1589 = vmatpush1.bf16.msra.mxu0 %v1524
  %1590 = vmatprep.subr.bf16.mxu0 %v1529
  %1591 = vmatpush1.bf16.msra.mxu0 %v1528
  %1592 = vmatprep.subr.bf16.mxu0 %v1533
  %1593 = vmatpush1.bf16.msra.mxu0 %v1532
  %1594 = vmatprep.subr.bf16.mxu0 %v1537
  %1595 = vmatpush1.bf16.msra.mxu0 %v1536
  %1596 = vmatprep.subr.bf16.mxu0 %v1541
  %1597 = vmatpush1.bf16.msra.mxu0 %v1540
  %1598 = vmatprep.subr.bf16.mxu0 %v1545
  %1599 = vmatpush1.bf16.msra.mxu0 %v1544
  %1600 = vmatprep.subr.bf16.mxu0 %v1549
  %1601 = vmatpush1.bf16.msra.mxu0 %v1548
  %1602 = vmatprep.subr.bf16.mxu0 %v1553
  %1603 = vmatpush1.bf16.msra.mxu0 %v1552
  %1604 = vmatprep.subr.bf16.mxu0 0
  %1605 = vmatpush1.bf16.msra.mxu0 0
  %1606 = vmatprep.subr.bf16.mxu0 0
  %1607 = vmatpush1.bf16.msra.mxu0 0
  %1608 = vmatprep.subr.bf16.mxu0 0
  %1609 = vmatpush1.bf16.msra.mxu0 0
  %1610 = vmatprep.subr.bf16.mxu0 0
  %1611 = vmatpush1.bf16.msra.mxu0 0
  %1612 = vmatprep.subr.bf16.mxu0 0
  %1613 = vmatpush1.bf16.msra.mxu0 0
  %1614 = vmatprep.subr.bf16.mxu0 0
  %1615 = vmatpush1.bf16.msra.mxu0 0
  %1616 = vmatprep.subr.bf16.mxu0 0
  %1617 = vmatpush1.bf16.msra.mxu0 0
  %1618 = vmatprep.subr.bf16.mxu0 0
  %1619 = vmatpush1.bf16.msra.mxu0 0
  %1620 = vmatprep.mubr.bf16.mxu0 0
  %1621 = vmatmul.mubr.bf16.gmra.mrb[0].mxu0 %v1395
  %v1622 = vpop.f32.mrb[0].mxu0
  %v1623 = vadd.f32 0.0, %v1622
  %v1624 = vpop.f32.mrb[0].mxu0
  %v1625 = vadd.f32 0.0, %v1624
  %v1626 = vpop.f32.mrb[0].mxu0
  %v1627 = vpop.f32.mrb[0].mxu0
  %1628 = vdwg.mxu0
  %1629 = vmatprep.subr.bf16.mxu0 %v1527
  %1630 = vmatpush1.bf16.msra.mxu0 %v1526
  %1631 = vmatprep.subr.bf16.mxu0 %v1531
  %1632 = vmatpush1.bf16.msra.mxu0 %v1530
  %1633 = vmatprep.subr.bf16.mxu0 %v1535
  %1634 = vmatpush1.bf16.msra.mxu0 %v1534
  %1635 = vmatprep.subr.bf16.mxu0 %v1539
  %1636 = vmatpush1.bf16.msra.mxu0 %v1538
  %1637 = vmatprep.subr.bf16.mxu0 %v1543
  %1638 = vmatpush1.bf16.msra.mxu0 %v1542
  %1639 = vmatprep.subr.bf16.mxu0 %v1547
  %1640 = vmatpush1.bf16.msra.mxu0 %v1546
  %1641 = vmatprep.subr.bf16.mxu0 %v1551
  %1642 = vmatpush1.bf16.msra.mxu0 %v1550
  %1643 = vmatprep.subr.bf16.mxu0 %v1555
  %1644 = vmatpush1.bf16.msra.mxu0 %v1554
  %1645 = vmatprep.subr.bf16.mxu0 0
  %1646 = vmatpush1.bf16.msra.mxu0 0
  %1647 = vmatprep.subr.bf16.mxu0 0
  %1648 = vmatpush1.bf16.msra.mxu0 0
  %1649 = vmatprep.subr.bf16.mxu0 0
  %1650 = vmatpush1.bf16.msra.mxu0 0
  %1651 = vmatprep.subr.bf16.mxu0 0
  %1652 = vmatpush1.bf16.msra.mxu0 0
  %1653 = vmatprep.subr.bf16.mxu0 0
  %1654 = vmatpush1.bf16.msra.mxu0 0
  %1655 = vmatprep.subr.bf16.mxu0 0
  %1656 = vmatpush1.bf16.msra.mxu0 0
  %1657 = vmatprep.subr.bf16.mxu0 0
  %1658 = vmatpush1.bf16.msra.mxu0 0
  %1659 = vmatprep.subr.bf16.mxu0 0
  %1660 = vmatpush1.bf16.msra.mxu0 0
  %1661 = vmatprep.mubr.bf16.mxu0 0
  %1662 = vmatmul.mubr.bf16.gmra.mrb[0].mxu0 %v1395
  %v1663 = vpop.f32.mrb[0].mxu0
  %v1664 = vadd.f32 0.0, %v1663
  %v1665 = vpop.f32.mrb[0].mxu0
  %v1666 = vadd.f32 0.0, %v1665
  %v1667 = vpop.f32.mrb[0].mxu0
  %v1668 = vpop.f32.mrb[0].mxu0
  %1669 = vdwg.mxu0
  %v1670 = vadd.f32 %v1390, %v1623
  %v1671 = vadd.f32 %v1391, %v1625
  %v1672 = vadd.f32 %v1392, %v1664
  %v1673 = vadd.f32 %v1393, %v1666
  %v1674 = vxor.u32 %v1670, 2147483648
  %v1675 = vmul.f32 %v1674, 1.442695
  %v1676 = vpow.pop %v1675
  %v1677 = vadd.f32 %v1676, 1.0
  %v1678 = vrcp.pop %v1677
  %v1679 = vmul.f32 1.0, %v1678
  %v1680 = vxor.u32 %v1671, 2147483648
  %v1681 = vmul.f32 %v1680, 1.442695
  %v1682 = vpow.pop %v1681
  %v1683 = vadd.f32 %v1682, 1.0
  %v1684 = vrcp.pop %v1683
  %v1685 = vmul.f32 1.0, %v1684
  %v1686 = vtanh.pop %v1672
  %v1687 = vxor.u32 %v1673, 2147483648
  %v1688 = vmul.f32 %v1687, 1.442695
  %v1689 = vpow.pop %v1688
  %v1690 = vadd.f32 %v1689, 1.0
  %v1691 = vrcp.pop %v1690
  %v1692 = vmul.f32 1.0, %v1691
  %v1693 = vld [vmem:[#allocation3] sm:$0xff]
  %v1694 = vmul.f32 %v1685, %v1693
  %v1695 = vmul.f32 %v1679, %v1686
  %v1696 = vadd.f32 %v1694, %v1695
  %v1697 = vtanh.pop %v1696
  %v1698 = vmul.f32 %v1692, %v1697
  %1699 = vst [vmem:[#allocation3] sm:$0xff] %v1696
  %1700 = vst [vmem:[#allocation2] sm:$0xff] %v1698
  %s1701 = scalar_lea.vmem [#allocation4], 128
  %v1702 = vld [vmem:[%s1701] sm:$0xff]
  %v1703 = vld [vmem:[%s1701 + $0x8] sm:$0xff]
  %v1704 = vld [vmem:[%s1701 + $0x10] sm:$0xff]
  %v1705 = vld [vmem:[%s1701 + $0x18] sm:$0xff]
  %v1706 = vld [vmem:[#allocation2] sm:$0xff]
  %v1707 = vpack.c.bf16 %v1706, %v1706
  %v1708 = vld [vmem:[%s2] sm:$0xff]
  %v1709 = vld [vmem:[%s2 + $0x8] sm:$0xff]
  %v1710 = vld [vmem:[%s2 + $0x10] sm:$0xff]
  %v1711 = vld [vmem:[%s2 + $0x18] sm:$0xff]
  %v1712 = vld [vmem:[%s2 + $0x20] sm:$0xff]
  %v1713 = vld [vmem:[%s2 + $0x28] sm:$0xff]
  %v1714 = vld [vmem:[%s2 + $0x30] sm:$0xff]
  %v1715 = vld [vmem:[%s2 + $0x38] sm:$0xff]
  %v1716 = vld [vmem:[%s2 + $0x40] sm:$0xff]
  %v1717 = vld [vmem:[%s2 + $0x48] sm:$0xff]
  %v1718 = vld [vmem:[%s2 + $0x50] sm:$0xff]
  %v1719 = vld [vmem:[%s2 + $0x58] sm:$0xff]
  %v1720 = vld [vmem:[%s2 + $0x60] sm:$0xff]
  %v1721 = vld [vmem:[%s2 + $0x68] sm:$0xff]
  %v1722 = vld [vmem:[%s2 + $0x70] sm:$0xff]
  %v1723 = vld [vmem:[%s2 + $0x78] sm:$0xff]
  %v1724 = vld [vmem:[%s2 + $0x80] sm:$0xff]
  %v1725 = vld [vmem:[%s2 + $0x88] sm:$0xff]
  %v1726 = vld [vmem:[%s2 + $0x90] sm:$0xff]
  %v1727 = vld [vmem:[%s2 + $0x98] sm:$0xff]
  %v1728 = vld [vmem:[%s2 + $0xa0] sm:$0xff]
  %v1729 = vld [vmem:[%s2 + $0xa8] sm:$0xff]
  %v1730 = vld [vmem:[%s2 + $0xb0] sm:$0xff]
  %v1731 = vld [vmem:[%s2 + $0xb8] sm:$0xff]
  %v1732 = vld [vmem:[%s2 + $0xc0] sm:$0xff]
  %v1733 = vld [vmem:[%s2 + $0xc8] sm:$0xff]
  %v1734 = vld [vmem:[%s2 + $0xd0] sm:$0xff]
  %v1735 = vld [vmem:[%s2 + $0xd8] sm:$0xff]
  %v1736 = vld [vmem:[%s2 + $0xe0] sm:$0xff]
  %v1737 = vld [vmem:[%s2 + $0xe8] sm:$0xff]
  %v1738 = vld [vmem:[%s2 + $0xf0] sm:$0xff]
  %v1739 = vld [vmem:[%s2 + $0xf8] sm:$0xff]
  %v1772 = vunpack.c.l.b16 %v1708
  %v1773 = vunpack.c.h.b16 %v1708
  %v1774 = vunpack.c.l.b16 %v1709
  %v1775 = vunpack.c.h.b16 %v1709
  %v1776 = vunpack.c.l.b16 %v1710
  %v1777 = vunpack.c.h.b16 %v1710
  %v1778 = vunpack.c.l.b16 %v1711
  %v1779 = vunpack.c.h.b16 %v1711
  %v1780 = vunpack.c.l.b16 %v1712
  %v1781 = vunpack.c.h.b16 %v1712
  %v1782 = vunpack.c.l.b16 %v1713
  %v1783 = vunpack.c.h.b16 %v1713
  %v1784 = vunpack.c.l.b16 %v1714
  %v1785 = vunpack.c.h.b16 %v1714
  %v1786 = vunpack.c.l.b16 %v1715
  %v1787 = vunpack.c.h.b16 %v1715
  %v1788 = vunpack.c.l.b16 %v1716
  %v1789 = vunpack.c.h.b16 %v1716
  %v1790 = vunpack.c.l.b16 %v1717
  %v1791 = vunpack.c.h.b16 %v1717
  %v1792 = vunpack.c.l.b16 %v1718
  %v1793 = vunpack.c.h.b16 %v1718
  %v1794 = vunpack.c.l.b16 %v1719
  %v1795 = vunpack.c.h.b16 %v1719
  %v1796 = vunpack.c.l.b16 %v1720
  %v1797 = vunpack.c.h.b16 %v1720
  %v1798 = vunpack.c.l.b16 %v1721
  %v1799 = vunpack.c.h.b16 %v1721
  %v1800 = vunpack.c.l.b16 %v1722
  %v1801 = vunpack.c.h.b16 %v1722
  %v1802 = vunpack.c.l.b16 %v1723
  %v1803 = vunpack.c.h.b16 %v1723
  %v1804 = vunpack.c.l.b16 %v1724
  %v1805 = vunpack.c.h.b16 %v1724
  %v1806 = vunpack.c.l.b16 %v1725
  %v1807 = vunpack.c.h.b16 %v1725
  %v1808 = vunpack.c.l.b16 %v1726
  %v1809 = vunpack.c.h.b16 %v1726
  %v1810 = vunpack.c.l.b16 %v1727
  %v1811 = vunpack.c.h.b16 %v1727
  %v1812 = vunpack.c.l.b16 %v1728
  %v1813 = vunpack.c.h.b16 %v1728
  %v1814 = vunpack.c.l.b16 %v1729
  %v1815 = vunpack.c.h.b16 %v1729
  %v1816 = vunpack.c.l.b16 %v1730
  %v1817 = vunpack.c.h.b16 %v1730
  %v1818 = vunpack.c.l.b16 %v1731
  %v1819 = vunpack.c.h.b16 %v1731
  %v1820 = vunpack.c.l.b16 %v1732
  %v1821 = vunpack.c.h.b16 %v1732
  %v1822 = vunpack.c.l.b16 %v1733
  %v1823 = vunpack.c.h.b16 %v1733
  %v1824 = vunpack.c.l.b16 %v1734
  %v1825 = vunpack.c.h.b16 %v1734
  %v1826 = vunpack.c.l.b16 %v1735
  %v1827 = vunpack.c.h.b16 %v1735
  %v1828 = vunpack.c.l.b16 %v1736
  %v1829 = vunpack.c.h.b16 %v1736
  %v1830 = vunpack.c.l.b16 %v1737
  %v1831 = vunpack.c.h.b16 %v1737
  %v1832 = vunpack.c.l.b16 %v1738
  %v1833 = vunpack.c.h.b16 %v1738
  %v1834 = vunpack.c.l.b16 %v1739
  %v1835 = vunpack.c.h.b16 %v1739
  %v1836 = vpack.c.b16 %v1776, %v1772
  %v1837 = vpack.c.b16 %v1777, %v1773
  %v1838 = vpack.c.b16 %v1778, %v1774
  %v1839 = vpack.c.b16 %v1779, %v1775
  %v1840 = vpack.c.b16 %v1784, %v1780
  %v1841 = vpack.c.b16 %v1785, %v1781
  %v1842 = vpack.c.b16 %v1786, %v1782
  %v1843 = vpack.c.b16 %v1787, %v1783
  %v1844 = vpack.c.b16 %v1792, %v1788
  %v1845 = vpack.c.b16 %v1793, %v1789
  %v1846 = vpack.c.b16 %v1794, %v1790
  %v1847 = vpack.c.b16 %v1795, %v1791
  %v1848 = vpack.c.b16 %v1800, %v1796
  %v1849 = vpack.c.b16 %v1801, %v1797
  %v1850 = vpack.c.b16 %v1802, %v1798
  %v1851 = vpack.c.b16 %v1803, %v1799
  %v1852 = vpack.c.b16 %v1808, %v1804
  %v1853 = vpack.c.b16 %v1809, %v1805
  %v1854 = vpack.c.b16 %v1810, %v1806
  %v1855 = vpack.c.b16 %v1811, %v1807
  %v1856 = vpack.c.b16 %v1816, %v1812
  %v1857 = vpack.c.b16 %v1817, %v1813
  %v1858 = vpack.c.b16 %v1818, %v1814
  %v1859 = vpack.c.b16 %v1819, %v1815
  %v1860 = vpack.c.b16 %v1824, %v1820
  %v1861 = vpack.c.b16 %v1825, %v1821
  %v1862 = vpack.c.b16 %v1826, %v1822
  %v1863 = vpack.c.b16 %v1827, %v1823
  %v1864 = vpack.c.b16 %v1832, %v1828
  %v1865 = vpack.c.b16 %v1833, %v1829
  %v1866 = vpack.c.b16 %v1834, %v1830
  %v1867 = vpack.c.b16 %v1835, %v1831
  %1900 = vmatprep.subr.bf16.mxu0 %v1837
  %1901 = vmatpush1.bf16.msra.mxu0 %v1836
  %1902 = vmatprep.subr.bf16.mxu0 %v1841
  %1903 = vmatpush1.bf16.msra.mxu0 %v1840
  %1904 = vmatprep.subr.bf16.mxu0 %v1845
  %1905 = vmatpush1.bf16.msra.mxu0 %v1844
  %1906 = vmatprep.subr.bf16.mxu0 %v1849
  %1907 = vmatpush1.bf16.msra.mxu0 %v1848
  %1908 = vmatprep.subr.bf16.mxu0 %v1853
  %1909 = vmatpush1.bf16.msra.mxu0 %v1852
  %1910 = vmatprep.subr.bf16.mxu0 %v1857
  %1911 = vmatpush1.bf16.msra.mxu0 %v1856
  %1912 = vmatprep.subr.bf16.mxu0 %v1861
  %1913 = vmatpush1.bf16.msra.mxu0 %v1860
  %1914 = vmatprep.subr.bf16.mxu0 %v1865
  %1915 = vmatpush1.bf16.msra.mxu0 %v1864
  %1916 = vmatprep.subr.bf16.mxu0 0
  %1917 = vmatpush1.bf16.msra.mxu0 0
  %1918 = vmatprep.subr.bf16.mxu0 0
  %1919 = vmatpush1.bf16.msra.mxu0 0
  %1920 = vmatprep.subr.bf16.mxu0 0
  %1921 = vmatpush1.bf16.msra.mxu0 0
  %1922 = vmatprep.subr.bf16.mxu0 0
  %1923 = vmatpush1.bf16.msra.mxu0 0
  %1924 = vmatprep.subr.bf16.mxu0 0
  %1925 = vmatpush1.bf16.msra.mxu0 0
  %1926 = vmatprep.subr.bf16.mxu0 0
  %1927 = vmatpush1.bf16.msra.mxu0 0
  %1928 = vmatprep.subr.bf16.mxu0 0
  %1929 = vmatpush1.bf16.msra.mxu0 0
  %1930 = vmatprep.subr.bf16.mxu0 0
  %1931 = vmatpush1.bf16.msra.mxu0 0
  %1932 = vmatprep.mubr.bf16.mxu0 0
  %1933 = vmatmul.mubr.bf16.gmra.mrb[0].mxu0 %v1707
  %v1934 = vpop.f32.mrb[0].mxu0
  %v1935 = vadd.f32 0.0, %v1934
  %v1936 = vpop.f32.mrb[0].mxu0
  %v1937 = vadd.f32 0.0, %v1936
  %v1938 = vpop.f32.mrb[0].mxu0
  %v1939 = vpop.f32.mrb[0].mxu0
  %1940 = vdwg.mxu0
  %1941 = vmatprep.subr.bf16.mxu0 %v1839
  %1942 = vmatpush1.bf16.msra.mxu0 %v1838
  %1943 = vmatprep.subr.bf16.mxu0 %v1843
  %1944 = vmatpush1.bf16.msra.mxu0 %v1842
  %1945 = vmatprep.subr.bf16.mxu0 %v1847
  %1946 = vmatpush1.bf16.msra.mxu0 %v1846
  %1947 = vmatprep.subr.bf16.mxu0 %v1851
  %1948 = vmatpush1.bf16.msra.mxu0 %v1850
  %1949 = vmatprep.subr.bf16.mxu0 %v1855
  %1950 = vmatpush1.bf16.msra.mxu0 %v1854
  %1951 = vmatprep.subr.bf16.mxu0 %v1859
  %1952 = vmatpush1.bf16.msra.mxu0 %v1858
  %1953 = vmatprep.subr.bf16.mxu0 %v1863
  %1954 = vmatpush1.bf16.msra.mxu0 %v1862
  %1955 = vmatprep.subr.bf16.mxu0 %v1867
  %1956 = vmatpush1.bf16.msra.mxu0 %v1866
  %1957 = vmatprep.subr.bf16.mxu0 0
  %1958 = vmatpush1.bf16.msra.mxu0 0
  %1959 = vmatprep.subr.bf16.mxu0 0
  %1960 = vmatpush1.bf16.msra.mxu0 0
  %1961 = vmatprep.subr.bf16.mxu0 0
  %1962 = vmatpush1.bf16.msra.mxu0 0
  %1963 = vmatprep.subr.bf16.mxu0 0
  %1964 = vmatpush1.bf16.msra.mxu0 0
  %1965 = vmatprep.subr.bf16.mxu0 0
  %1966 = vmatpush1.bf16.msra.mxu0 0
  %1967 = vmatprep.subr.bf16.mxu0 0
  %1968 = vmatpush1.bf16.msra.mxu0 0
  %1969 = vmatprep.subr.bf16.mxu0 0
  %1970 = vmatpush1.bf16.msra.mxu0 0
  %1971 = vmatprep.subr.bf16.mxu0 0
  %1972 = vmatpush1.bf16.msra.mxu0 0
  %1973 = vmatprep.mubr.bf16.mxu0 0
  %1974 = vmatmul.mubr.bf16.gmra.mrb[0].mxu0 %v1707
  %v1975 = vpop.f32.mrb[0].mxu0
  %v1976 = vadd.f32 0.0, %v1975
  %v1977 = vpop.f32.mrb[0].mxu0
  %v1978 = vadd.f32 0.0, %v1977
  %v1979 = vpop.f32.mrb[0].mxu0
  %v1980 = vpop.f32.mrb[0].mxu0
  %1981 = vdwg.mxu0
  %v1982 = vadd.f32 %v1702, %v1935
  %v1983 = vadd.f32 %v1703, %v1937
  %v1984 = vadd.f32 %v1704, %v1976
  %v1985 = vadd.f32 %v1705, %v1978
  %v1986 = vxor.u32 %v1982, 2147483648
  %v1987 = vmul.f32 %v1986, 1.442695
  %v1988 = vpow.pop %v1987
  %v1989 = vadd.f32 %v1988, 1.0
  %v1990 = vrcp.pop %v1989
  %v1991 = vmul.f32 1.0, %v1990
  %v1992 = vxor.u32 %v1983, 2147483648
  %v1993 = vmul.f32 %v1992, 1.442695
  %v1994 = vpow.pop %v1993
  %v1995 = vadd.f32 %v1994, 1.0
  %v1996 = vrcp.pop %v1995
  %v1997 = vmul.f32 1.0, %v1996
  %v1998 = vtanh.pop %v1984
  %v1999 = vxor.u32 %v1985, 2147483648
  %v2000 = vmul.f32 %v1999, 1.442695
  %v2001 = vpow.pop %v2000
  %v2002 = vadd.f32 %v2001, 1.0
  %v2003 = vrcp.pop %v2002
  %v2004 = vmul.f32 1.0, %v2003
  %v2005 = vld [vmem:[#allocation3] sm:$0xff]
  %v2006 = vmul.f32 %v1997, %v2005
  %v2007 = vmul.f32 %v1991, %v1998
  %v2008 = vadd.f32 %v2006, %v2007
  %v2009 = vtanh.pop %v2008
  %v2010 = vmul.f32 %v2004, %v2009
  %2011 = vst [vmem:[#allocation3] sm:$0xff] %v2008
  %2012 = vst [vmem:[#allocation2] sm:$0xff] %v2010
  %s2013 = scalar_lea.vmem [#allocation4], 160
  %v2014 = vld [vmem:[%s2013] sm:$0xff]
  %v2015 = vld [vmem:[%s2013 + $0x8] sm:$0xff]
  %v2016 = vld [vmem:[%s2013 + $0x10] sm:$0xff]
  %v2017 = vld [vmem:[%s2013 + $0x18] sm:$0xff]
  %v2018 = vld [vmem:[#allocation2] sm:$0xff]
  %v2019 = vpack.c.bf16 %v2018, %v2018
  %v2020 = vld [vmem:[%s2] sm:$0xff]
  %v2021 = vld [vmem:[%s2 + $0x8] sm:$0xff]
  %v2022 = vld [vmem:[%s2 + $0x10] sm:$0xff]
  %v2023 = vld [vmem:[%s2 + $0x18] sm:$0xff]
  %v2024 = vld [vmem:[%s2 + $0x20] sm:$0xff]
  %v2025 = vld [vmem:[%s2 + $0x28] sm:$0xff]
  %v2026 = vld [vmem:[%s2 + $0x30] sm:$0xff]
  %v2027 = vld [vmem:[%s2 + $0x38] sm:$0xff]
  %v2028 = vld [vmem:[%s2 + $0x40] sm:$0xff]
  %v2029 = vld [vmem:[%s2 + $0x48] sm:$0xff]
  %v2030 = vld [vmem:[%s2 + $0x50] sm:$0xff]
  %v2031 = vld [vmem:[%s2 + $0x58] sm:$0xff]
  %v2032 = vld [vmem:[%s2 + $0x60] sm:$0xff]
  %v2033 = vld [vmem:[%s2 + $0x68] sm:$0xff]
  %v2034 = vld [vmem:[%s2 + $0x70] sm:$0xff]
  %v2035 = vld [vmem:[%s2 + $0x78] sm:$0xff]
  %v2036 = vld [vmem:[%s2 + $0x80] sm:$0xff]
  %v2037 = vld [vmem:[%s2 + $0x88] sm:$0xff]
  %v2038 = vld [vmem:[%s2 + $0x90] sm:$0xff]
  %v2039 = vld [vmem:[%s2 + $0x98] sm:$0xff]
  %v2040 = vld [vmem:[%s2 + $0xa0] sm:$0xff]
  %v2041 = vld [vmem:[%s2 + $0xa8] sm:$0xff]
  %v2042 = vld [vmem:[%s2 + $0xb0] sm:$0xff]
  %v2043 = vld [vmem:[%s2 + $0xb8] sm:$0xff]
  %v2044 = vld [vmem:[%s2 + $0xc0] sm:$0xff]
  %v2045 = vld [vmem:[%s2 + $0xc8] sm:$0xff]
  %v2046 = vld [vmem:[%s2 + $0xd0] sm:$0xff]
  %v2047 = vld [vmem:[%s2 + $0xd8] sm:$0xff]
  %v2048 = vld [vmem:[%s2 + $0xe0] sm:$0xff]
  %v2049 = vld [vmem:[%s2 + $0xe8] sm:$0xff]
  %v2050 = vld [vmem:[%s2 + $0xf0] sm:$0xff]
  %v2051 = vld [vmem:[%s2 + $0xf8] sm:$0xff]
  %v2084 = vunpack.c.l.b16 %v2020
  %v2085 = vunpack.c.h.b16 %v2020
  %v2086 = vunpack.c.l.b16 %v2021
  %v2087 = vunpack.c.h.b16 %v2021
  %v2088 = vunpack.c.l.b16 %v2022
  %v2089 = vunpack.c.h.b16 %v2022
  %v2090 = vunpack.c.l.b16 %v2023
  %v2091 = vunpack.c.h.b16 %v2023
  %v2092 = vunpack.c.l.b16 %v2024
  %v2093 = vunpack.c.h.b16 %v2024
  %v2094 = vunpack.c.l.b16 %v2025
  %v2095 = vunpack.c.h.b16 %v2025
  %v2096 = vunpack.c.l.b16 %v2026
  %v2097 = vunpack.c.h.b16 %v2026
  %v2098 = vunpack.c.l.b16 %v2027
  %v2099 = vunpack.c.h.b16 %v2027
  %v2100 = vunpack.c.l.b16 %v2028
  %v2101 = vunpack.c.h.b16 %v2028
  %v2102 = vunpack.c.l.b16 %v2029
  %v2103 = vunpack.c.h.b16 %v2029
  %v2104 = vunpack.c.l.b16 %v2030
  %v2105 = vunpack.c.h.b16 %v2030
  %v2106 = vunpack.c.l.b16 %v2031
  %v2107 = vunpack.c.h.b16 %v2031
  %v2108 = vunpack.c.l.b16 %v2032
  %v2109 = vunpack.c.h.b16 %v2032
  %v2110 = vunpack.c.l.b16 %v2033
  %v2111 = vunpack.c.h.b16 %v2033
  %v2112 = vunpack.c.l.b16 %v2034
  %v2113 = vunpack.c.h.b16 %v2034
  %v2114 = vunpack.c.l.b16 %v2035
  %v2115 = vunpack.c.h.b16 %v2035
  %v2116 = vunpack.c.l.b16 %v2036
  %v2117 = vunpack.c.h.b16 %v2036
  %v2118 = vunpack.c.l.b16 %v2037
  %v2119 = vunpack.c.h.b16 %v2037
  %v2120 = vunpack.c.l.b16 %v2038
  %v2121 = vunpack.c.h.b16 %v2038
  %v2122 = vunpack.c.l.b16 %v2039
  %v2123 = vunpack.c.h.b16 %v2039
  %v2124 = vunpack.c.l.b16 %v2040
  %v2125 = vunpack.c.h.b16 %v2040
  %v2126 = vunpack.c.l.b16 %v2041
  %v2127 = vunpack.c.h.b16 %v2041
  %v2128 = vunpack.c.l.b16 %v2042
  %v2129 = vunpack.c.h.b16 %v2042
  %v2130 = vunpack.c.l.b16 %v2043
  %v2131 = vunpack.c.h.b16 %v2043
  %v2132 = vunpack.c.l.b16 %v2044
  %v2133 = vunpack.c.h.b16 %v2044
  %v2134 = vunpack.c.l.b16 %v2045
  %v2135 = vunpack.c.h.b16 %v2045
  %v2136 = vunpack.c.l.b16 %v2046
  %v2137 = vunpack.c.h.b16 %v2046
  %v2138 = vunpack.c.l.b16 %v2047
  %v2139 = vunpack.c.h.b16 %v2047
  %v2140 = vunpack.c.l.b16 %v2048
  %v2141 = vunpack.c.h.b16 %v2048
  %v2142 = vunpack.c.l.b16 %v2049
  %v2143 = vunpack.c.h.b16 %v2049
  %v2144 = vunpack.c.l.b16 %v2050
  %v2145 = vunpack.c.h.b16 %v2050
  %v2146 = vunpack.c.l.b16 %v2051
  %v2147 = vunpack.c.h.b16 %v2051
  %v2148 = vpack.c.b16 %v2088, %v2084
  %v2149 = vpack.c.b16 %v2089, %v2085
  %v2150 = vpack.c.b16 %v2090, %v2086
  %v2151 = vpack.c.b16 %v2091, %v2087
  %v2152 = vpack.c.b16 %v2096, %v2092
  %v2153 = vpack.c.b16 %v2097, %v2093
  %v2154 = vpack.c.b16 %v2098, %v2094
  %v2155 = vpack.c.b16 %v2099, %v2095
  %v2156 = vpack.c.b16 %v2104, %v2100
  %v2157 = vpack.c.b16 %v2105, %v2101
  %v2158 = vpack.c.b16 %v2106, %v2102
  %v2159 = vpack.c.b16 %v2107, %v2103
  %v2160 = vpack.c.b16 %v2112, %v2108
  %v2161 = vpack.c.b16 %v2113, %v2109
  %v2162 = vpack.c.b16 %v2114, %v2110
  %v2163 = vpack.c.b16 %v2115, %v2111
  %v2164 = vpack.c.b16 %v2120, %v2116
  %v2165 = vpack.c.b16 %v2121, %v2117
  %v2166 = vpack.c.b16 %v2122, %v2118
  %v2167 = vpack.c.b16 %v2123, %v2119
  %v2168 = vpack.c.b16 %v2128, %v2124
  %v2169 = vpack.c.b16 %v2129, %v2125
  %v2170 = vpack.c.b16 %v2130, %v2126
  %v2171 = vpack.c.b16 %v2131, %v2127
  %v2172 = vpack.c.b16 %v2136, %v2132
  %v2173 = vpack.c.b16 %v2137, %v2133
  %v2174 = vpack.c.b16 %v2138, %v2134
  %v2175 = vpack.c.b16 %v2139, %v2135
  %v2176 = vpack.c.b16 %v2144, %v2140
  %v2177 = vpack.c.b16 %v2145, %v2141
  %v2178 = vpack.c.b16 %v2146, %v2142
  %v2179 = vpack.c.b16 %v2147, %v2143
  %2212 = vmatprep.subr.bf16.mxu0 %v2149
  %2213 = vmatpush1.bf16.msra.mxu0 %v2148
  %2214 = vmatprep.subr.bf16.mxu0 %v2153
  %2215 = vmatpush1.bf16.msra.mxu0 %v2152
  %2216 = vmatprep.subr.bf16.mxu0 %v2157
  %2217 = vmatpush1.bf16.msra.mxu0 %v2156
  %2218 = vmatprep.subr.bf16.mxu0 %v2161
  %2219 = vmatpush1.bf16.msra.mxu0 %v2160
  %2220 = vmatprep.subr.bf16.mxu0 %v2165
  %2221 = vmatpush1.bf16.msra.mxu0 %v2164
  %2222 = vmatprep.subr.bf16.mxu0 %v2169
  %2223 = vmatpush1.bf16.msra.mxu0 %v2168
  %2224 = vmatprep.subr.bf16.mxu0 %v2173
  %2225 = vmatpush1.bf16.msra.mxu0 %v2172
  %2226 = vmatprep.subr.bf16.mxu0 %v2177
  %2227 = vmatpush1.bf16.msra.mxu0 %v2176
  %2228 = vmatprep.subr.bf16.mxu0 0
  %2229 = vmatpush1.bf16.msra.mxu0 0
  %2230 = vmatprep.subr.bf16.mxu0 0
  %2231 = vmatpush1.bf16.msra.mxu0 0
  %2232 = vmatprep.subr.bf16.mxu0 0
  %2233 = vmatpush1.bf16.msra.mxu0 0
  %2234 = vmatprep.subr.bf16.mxu0 0
  %2235 = vmatpush1.bf16.msra.mxu0 0
  %2236 = vmatprep.subr.bf16.mxu0 0
  %2237 = vmatpush1.bf16.msra.mxu0 0
  %2238 = vmatprep.subr.bf16.mxu0 0
  %2239 = vmatpush1.bf16.msra.mxu0 0
  %2240 = vmatprep.subr.bf16.mxu0 0
  %2241 = vmatpush1.bf16.msra.mxu0 0
  %2242 = vmatprep.subr.bf16.mxu0 0
  %2243 = vmatpush1.bf16.msra.mxu0 0
  %2244 = vmatprep.mubr.bf16.mxu0 0
  %2245 = vmatmul.mubr.bf16.gmra.mrb[0].mxu0 %v2019
  %v2246 = vpop.f32.mrb[0].mxu0
  %v2247 = vadd.f32 0.0, %v2246
  %v2248 = vpop.f32.mrb[0].mxu0
  %v2249 = vadd.f32 0.0, %v2248
  %v2250 = vpop.f32.mrb[0].mxu0
  %v2251 = vpop.f32.mrb[0].mxu0
  %2252 = vdwg.mxu0
  %2253 = vmatprep.subr.bf16.mxu0 %v2151
  %2254 = vmatpush1.bf16.msra.mxu0 %v2150
  %2255 = vmatprep.subr.bf16.mxu0 %v2155
  %2256 = vmatpush1.bf16.msra.mxu0 %v2154
  %2257 = vmatprep.subr.bf16.mxu0 %v2159
  %2258 = vmatpush1.bf16.msra.mxu0 %v2158
  %2259 = vmatprep.subr.bf16.mxu0 %v2163
  %2260 = vmatpush1.bf16.msra.mxu0 %v2162
  %2261 = vmatprep.subr.bf16.mxu0 %v2167
  %2262 = vmatpush1.bf16.msra.mxu0 %v2166
  %2263 = vmatprep.subr.bf16.mxu0 %v2171
  %2264 = vmatpush1.bf16.msra.mxu0 %v2170
  %2265 = vmatprep.subr.bf16.mxu0 %v2175
  %2266 = vmatpush1.bf16.msra.mxu0 %v2174
  %2267 = vmatprep.subr.bf16.mxu0 %v2179
  %2268 = vmatpush1.bf16.msra.mxu0 %v2178
  %2269 = vmatprep.subr.bf16.mxu0 0
  %2270 = vmatpush1.bf16.msra.mxu0 0
  %2271 = vmatprep.subr.bf16.mxu0 0
  %2272 = vmatpush1.bf16.msra.mxu0 0
  %2273 = vmatprep.subr.bf16.mxu0 0
  %2274 = vmatpush1.bf16.msra.mxu0 0
  %2275 = vmatprep.subr.bf16.mxu0 0
  %2276 = vmatpush1.bf16.msra.mxu0 0
  %2277 = vmatprep.subr.bf16.mxu0 0
  %2278 = vmatpush1.bf16.msra.mxu0 0
  %2279 = vmatprep.subr.bf16.mxu0 0
  %2280 = vmatpush1.bf16.msra.mxu0 0
  %2281 = vmatprep.subr.bf16.mxu0 0
  %2282 = vmatpush1.bf16.msra.mxu0 0
  %2283 = vmatprep.subr.bf16.mxu0 0
  %2284 = vmatpush1.bf16.msra.mxu0 0
  %2285 = vmatprep.mubr.bf16.mxu0 0
  %2286 = vmatmul.mubr.bf16.gmra.mrb[0].mxu0 %v2019
  %v2287 = vpop.f32.mrb[0].mxu0
  %v2288 = vadd.f32 0.0, %v2287
  %v2289 = vpop.f32.mrb[0].mxu0
  %v2290 = vadd.f32 0.0, %v2289
  %v2291 = vpop.f32.mrb[0].mxu0
  %v2292 = vpop.f32.mrb[0].mxu0
  %2293 = vdwg.mxu0
  %v2294 = vadd.f32 %v2014, %v2247
  %v2295 = vadd.f32 %v2015, %v2249
  %v2296 = vadd.f32 %v2016, %v2288
  %v2297 = vadd.f32 %v2017, %v2290
  %v2298 = vxor.u32 %v2294, 2147483648
  %v2299 = vmul.f32 %v2298, 1.442695
  %v2300 = vpow.pop %v2299
  %v2301 = vadd.f32 %v2300, 1.0
  %v2302 = vrcp.pop %v2301
  %v2303 = vmul.f32 1.0, %v2302
  %v2304 = vxor.u32 %v2295, 2147483648
  %v2305 = vmul.f32 %v2304, 1.442695
  %v2306 = vpow.pop %v2305
  %v2307 = vadd.f32 %v2306, 1.0
  %v2308 = vrcp.pop %v2307
  %v2309 = vmul.f32 1.0, %v2308
  %v2310 = vtanh.pop %v2296
  %v2311 = vxor.u32 %v2297, 2147483648
  %v2312 = vmul.f32 %v2311, 1.442695
  %v2313 = vpow.pop %v2312
  %v2314 = vadd.f32 %v2313, 1.0
  %v2315 = vrcp.pop %v2314
  %v2316 = vmul.f32 1.0, %v2315
  %v2317 = vld [vmem:[#allocation3] sm:$0xff]
  %v2318 = vmul.f32 %v2309, %v2317
  %v2319 = vmul.f32 %v2303, %v2310
  %v2320 = vadd.f32 %v2318, %v2319
  %v2321 = vtanh.pop %v2320
  %v2322 = vmul.f32 %v2316, %v2321
  %2323 = vst [vmem:[#allocation3] sm:$0xff] %v2320
  %2324 = vst [vmem:[#allocation2] sm:$0xff] %v2322
  %s2325 = scalar_lea.vmem [#allocation4], 192
  %v2326 = vld [vmem:[%s2325] sm:$0xff]
  %v2327 = vld [vmem:[%s2325 + $0x8] sm:$0xff]
  %v2328 = vld [vmem:[%s2325 + $0x10] sm:$0xff]
  %v2329 = vld [vmem:[%s2325 + $0x18] sm:$0xff]
  %v2330 = vld [vmem:[#allocation2] sm:$0xff]
  %v2331 = vpack.c.bf16 %v2330, %v2330
  %v2332 = vld [vmem:[%s2] sm:$0xff]
  %v2333 = vld [vmem:[%s2 + $0x8] sm:$0xff]
  %v2334 = vld [vmem:[%s2 + $0x10] sm:$0xff]
  %v2335 = vld [vmem:[%s2 + $0x18] sm:$0xff]
  %v2336 = vld [vmem:[%s2 + $0x20] sm:$0xff]
  %v2337 = vld [vmem:[%s2 + $0x28] sm:$0xff]
  %v2338 = vld [vmem:[%s2 + $0x30] sm:$0xff]
  %v2339 = vld [vmem:[%s2 + $0x38] sm:$0xff]
  %v2340 = vld [vmem:[%s2 + $0x40] sm:$0xff]
  %v2341 = vld [vmem:[%s2 + $0x48] sm:$0xff]
  %v2342 = vld [vmem:[%s2 + $0x50] sm:$0xff]
  %v2343 = vld [vmem:[%s2 + $0x58] sm:$0xff]
  %v2344 = vld [vmem:[%s2 + $0x60] sm:$0xff]
  %v2345 = vld [vmem:[%s2 + $0x68] sm:$0xff]
  %v2346 = vld [vmem:[%s2 + $0x70] sm:$0xff]
  %v2347 = vld [vmem:[%s2 + $0x78] sm:$0xff]
  %v2348 = vld [vmem:[%s2 + $0x80] sm:$0xff]
  %v2349 = vld [vmem:[%s2 + $0x88] sm:$0xff]
  %v2350 = vld [vmem:[%s2 + $0x90] sm:$0xff]
  %v2351 = vld [vmem:[%s2 + $0x98] sm:$0xff]
  %v2352 = vld [vmem:[%s2 + $0xa0] sm:$0xff]
  %v2353 = vld [vmem:[%s2 + $0xa8] sm:$0xff]
  %v2354 = vld [vmem:[%s2 + $0xb0] sm:$0xff]
  %v2355 = vld [vmem:[%s2 + $0xb8] sm:$0xff]
  %v2356 = vld [vmem:[%s2 + $0xc0] sm:$0xff]
  %v2357 = vld [vmem:[%s2 + $0xc8] sm:$0xff]
  %v2358 = vld [vmem:[%s2 + $0xd0] sm:$0xff]
  %v2359 = vld [vmem:[%s2 + $0xd8] sm:$0xff]
  %v2360 = vld [vmem:[%s2 + $0xe0] sm:$0xff]
  %v2361 = vld [vmem:[%s2 + $0xe8] sm:$0xff]
  %v2362 = vld [vmem:[%s2 + $0xf0] sm:$0xff]
  %v2363 = vld [vmem:[%s2 + $0xf8] sm:$0xff]
  %v2396 = vunpack.c.l.b16 %v2332
  %v2397 = vunpack.c.h.b16 %v2332
  %v2398 = vunpack.c.l.b16 %v2333
  %v2399 = vunpack.c.h.b16 %v2333
  %v2400 = vunpack.c.l.b16 %v2334
  %v2401 = vunpack.c.h.b16 %v2334
  %v2402 = vunpack.c.l.b16 %v2335
  %v2403 = vunpack.c.h.b16 %v2335
  %v2404 = vunpack.c.l.b16 %v2336
  %v2405 = vunpack.c.h.b16 %v2336
  %v2406 = vunpack.c.l.b16 %v2337
  %v2407 = vunpack.c.h.b16 %v2337
  %v2408 = vunpack.c.l.b16 %v2338
  %v2409 = vunpack.c.h.b16 %v2338
  %v2410 = vunpack.c.l.b16 %v2339
  %v2411 = vunpack.c.h.b16 %v2339
  %v2412 = vunpack.c.l.b16 %v2340
  %v2413 = vunpack.c.h.b16 %v2340
  %v2414 = vunpack.c.l.b16 %v2341
  %v2415 = vunpack.c.h.b16 %v2341
  %v2416 = vunpack.c.l.b16 %v2342
  %v2417 = vunpack.c.h.b16 %v2342
  %v2418 = vunpack.c.l.b16 %v2343
  %v2419 = vunpack.c.h.b16 %v2343
  %v2420 = vunpack.c.l.b16 %v2344
  %v2421 = vunpack.c.h.b16 %v2344
  %v2422 = vunpack.c.l.b16 %v2345
  %v2423 = vunpack.c.h.b16 %v2345
  %v2424 = vunpack.c.l.b16 %v2346
  %v2425 = vunpack.c.h.b16 %v2346
  %v2426 = vunpack.c.l.b16 %v2347
  %v2427 = vunpack.c.h.b16 %v2347
  %v2428 = vunpack.c.l.b16 %v2348
  %v2429 = vunpack.c.h.b16 %v2348
  %v2430 = vunpack.c.l.b16 %v2349
  %v2431 = vunpack.c.h.b16 %v2349
  %v2432 = vunpack.c.l.b16 %v2350
  %v2433 = vunpack.c.h.b16 %v2350
  %v2434 = vunpack.c.l.b16 %v2351
  %v2435 = vunpack.c.h.b16 %v2351
  %v2436 = vunpack.c.l.b16 %v2352
  %v2437 = vunpack.c.h.b16 %v2352
  %v2438 = vunpack.c.l.b16 %v2353
  %v2439 = vunpack.c.h.b16 %v2353
  %v2440 = vunpack.c.l.b16 %v2354
  %v2441 = vunpack.c.h.b16 %v2354
  %v2442 = vunpack.c.l.b16 %v2355
  %v2443 = vunpack.c.h.b16 %v2355
  %v2444 = vunpack.c.l.b16 %v2356
  %v2445 = vunpack.c.h.b16 %v2356
  %v2446 = vunpack.c.l.b16 %v2357
  %v2447 = vunpack.c.h.b16 %v2357
  %v2448 = vunpack.c.l.b16 %v2358
  %v2449 = vunpack.c.h.b16 %v2358
  %v2450 = vunpack.c.l.b16 %v2359
  %v2451 = vunpack.c.h.b16 %v2359
  %v2452 = vunpack.c.l.b16 %v2360
  %v2453 = vunpack.c.h.b16 %v2360
  %v2454 = vunpack.c.l.b16 %v2361
  %v2455 = vunpack.c.h.b16 %v2361
  %v2456 = vunpack.c.l.b16 %v2362
  %v2457 = vunpack.c.h.b16 %v2362
  %v2458 = vunpack.c.l.b16 %v2363
  %v2459 = vunpack.c.h.b16 %v2363
  %v2460 = vpack.c.b16 %v2400, %v2396
  %v2461 = vpack.c.b16 %v2401, %v2397
  %v2462 = vpack.c.b16 %v2402, %v2398
  %v2463 = vpack.c.b16 %v2403, %v2399
  %v2464 = vpack.c.b16 %v2408, %v2404
  %v2465 = vpack.c.b16 %v2409, %v2405
  %v2466 = vpack.c.b16 %v2410, %v2406
  %v2467 = vpack.c.b16 %v2411, %v2407
  %v2468 = vpack.c.b16 %v2416, %v2412
  %v2469 = vpack.c.b16 %v2417, %v2413
  %v2470 = vpack.c.b16 %v2418, %v2414
  %v2471 = vpack.c.b16 %v2419, %v2415
  %v2472 = vpack.c.b16 %v2424, %v2420
  %v2473 = vpack.c.b16 %v2425, %v2421
  %v2474 = vpack.c.b16 %v2426, %v2422
  %v2475 = vpack.c.b16 %v2427, %v2423
  %v2476 = vpack.c.b16 %v2432, %v2428
  %v2477 = vpack.c.b16 %v2433, %v2429
  %v2478 = vpack.c.b16 %v2434, %v2430
  %v2479 = vpack.c.b16 %v2435, %v2431
  %v2480 = vpack.c.b16 %v2440, %v2436
  %v2481 = vpack.c.b16 %v2441, %v2437
  %v2482 = vpack.c.b16 %v2442, %v2438
  %v2483 = vpack.c.b16 %v2443, %v2439
  %v2484 = vpack.c.b16 %v2448, %v2444
  %v2485 = vpack.c.b16 %v2449, %v2445
  %v2486 = vpack.c.b16 %v2450, %v2446
  %v2487 = vpack.c.b16 %v2451, %v2447
  %v2488 = vpack.c.b16 %v2456, %v2452
  %v2489 = vpack.c.b16 %v2457, %v2453
  %v2490 = vpack.c.b16 %v2458, %v2454
  %v2491 = vpack.c.b16 %v2459, %v2455
  %2524 = vmatprep.subr.bf16.mxu0 %v2461
  %2525 = vmatpush1.bf16.msra.mxu0 %v2460
  %2526 = vmatprep.subr.bf16.mxu0 %v2465
  %2527 = vmatpush1.bf16.msra.mxu0 %v2464
  %2528 = vmatprep.subr.bf16.mxu0 %v2469
  %2529 = vmatpush1.bf16.msra.mxu0 %v2468
  %2530 = vmatprep.subr.bf16.mxu0 %v2473
  %2531 = vmatpush1.bf16.msra.mxu0 %v2472
  %2532 = vmatprep.subr.bf16.mxu0 %v2477
  %2533 = vmatpush1.bf16.msra.mxu0 %v2476
  %2534 = vmatprep.subr.bf16.mxu0 %v2481
  %2535 = vmatpush1.bf16.msra.mxu0 %v2480
  %2536 = vmatprep.subr.bf16.mxu0 %v2485
  %2537 = vmatpush1.bf16.msra.mxu0 %v2484
  %2538 = vmatprep.subr.bf16.mxu0 %v2489
  %2539 = vmatpush1.bf16.msra.mxu0 %v2488
  %2540 = vmatprep.subr.bf16.mxu0 0
  %2541 = vmatpush1.bf16.msra.mxu0 0
  %2542 = vmatprep.subr.bf16.mxu0 0
  %2543 = vmatpush1.bf16.msra.mxu0 0
  %2544 = vmatprep.subr.bf16.mxu0 0
  %2545 = vmatpush1.bf16.msra.mxu0 0
  %2546 = vmatprep.subr.bf16.mxu0 0
  %2547 = vmatpush1.bf16.msra.mxu0 0
  %2548 = vmatprep.subr.bf16.mxu0 0
  %2549 = vmatpush1.bf16.msra.mxu0 0
  %2550 = vmatprep.subr.bf16.mxu0 0
  %2551 = vmatpush1.bf16.msra.mxu0 0
  %2552 = vmatprep.subr.bf16.mxu0 0
  %2553 = vmatpush1.bf16.msra.mxu0 0
  %2554 = vmatprep.subr.bf16.mxu0 0
  %2555 = vmatpush1.bf16.msra.mxu0 0
  %2556 = vmatprep.mubr.bf16.mxu0 0
  %2557 = vmatmul.mubr.bf16.gmra.mrb[0].mxu0 %v2331
  %v2558 = vpop.f32.mrb[0].mxu0
  %v2559 = vadd.f32 0.0, %v2558
  %v2560 = vpop.f32.mrb[0].mxu0
  %v2561 = vadd.f32 0.0, %v2560
  %v2562 = vpop.f32.mrb[0].mxu0
  %v2563 = vpop.f32.mrb[0].mxu0
  %2564 = vdwg.mxu0
  %2565 = vmatprep.subr.bf16.mxu0 %v2463
  %2566 = vmatpush1.bf16.msra.mxu0 %v2462
  %2567 = vmatprep.subr.bf16.mxu0 %v2467
  %2568 = vmatpush1.bf16.msra.mxu0 %v2466
  %2569 = vmatprep.subr.bf16.mxu0 %v2471
  %2570 = vmatpush1.bf16.msra.mxu0 %v2470
  %2571 = vmatprep.subr.bf16.mxu0 %v2475
  %2572 = vmatpush1.bf16.msra.mxu0 %v2474
  %2573 = vmatprep.subr.bf16.mxu0 %v2479
  %2574 = vmatpush1.bf16.msra.mxu0 %v2478
  %2575 = vmatprep.subr.bf16.mxu0 %v2483
  %2576 = vmatpush1.bf16.msra.mxu0 %v2482
  %2577 = vmatprep.subr.bf16.mxu0 %v2487
  %2578 = vmatpush1.bf16.msra.mxu0 %v2486
  %2579 = vmatprep.subr.bf16.mxu0 %v2491
  %2580 = vmatpush1.bf16.msra.mxu0 %v2490
  %2581 = vmatprep.subr.bf16.mxu0 0
  %2582 = vmatpush1.bf16.msra.mxu0 0
  %2583 = vmatprep.subr.bf16.mxu0 0
  %2584 = vmatpush1.bf16.msra.mxu0 0
  %2585 = vmatprep.subr.bf16.mxu0 0
  %2586 = vmatpush1.bf16.msra.mxu0 0
  %2587 = vmatprep.subr.bf16.mxu0 0
  %2588 = vmatpush1.bf16.msra.mxu0 0
  %2589 = vmatprep.subr.bf16.mxu0 0
  %2590 = vmatpush1.bf16.msra.mxu0 0
  %2591 = vmatprep.subr.bf16.mxu0 0
  %2592 = vmatpush1.bf16.msra.mxu0 0
  %2593 = vmatprep.subr.bf16.mxu0 0
  %2594 = vmatpush1.bf16.msra.mxu0 0
  %2595 = vmatprep.subr.bf16.mxu0 0
  %2596 = vmatpush1.bf16.msra.mxu0 0
  %2597 = vmatprep.mubr.bf16.mxu0 0
  %2598 = vmatmul.mubr.bf16.gmra.mrb[0].mxu0 %v2331
  %v2599 = vpop.f32.mrb[0].mxu0
  %v2600 = vadd.f32 0.0, %v2599
  %v2601 = vpop.f32.mrb[0].mxu0
  %v2602 = vadd.f32 0.0, %v2601
  %v2603 = vpop.f32.mrb[0].mxu0
  %v2604 = vpop.f32.mrb[0].mxu0
  %2605 = vdwg.mxu0
  %v2606 = vadd.f32 %v2326, %v2559
  %v2607 = vadd.f32 %v2327, %v2561
  %v2608 = vadd.f32 %v2328, %v2600
  %v2609 = vadd.f32 %v2329, %v2602
  %v2610 = vxor.u32 %v2606, 2147483648
  %v2611 = vmul.f32 %v2610, 1.442695
  %v2612 = vpow.pop %v2611
  %v2613 = vadd.f32 %v2612, 1.0
  %v2614 = vrcp.pop %v2613
  %v2615 = vmul.f32 1.0, %v2614
  %v2616 = vxor.u32 %v2607, 2147483648
  %v2617 = vmul.f32 %v2616, 1.442695
  %v2618 = vpow.pop %v2617
  %v2619 = vadd.f32 %v2618, 1.0
  %v2620 = vrcp.pop %v2619
  %v2621 = vmul.f32 1.0, %v2620
  %v2622 = vtanh.pop %v2608
  %v2623 = vxor.u32 %v2609, 2147483648
  %v2624 = vmul.f32 %v2623, 1.442695
  %v2625 = vpow.pop %v2624
  %v2626 = vadd.f32 %v2625, 1.0
  %v2627 = vrcp.pop %v2626
  %v2628 = vmul.f32 1.0, %v2627
  %v2629 = vld [vmem:[#allocation3] sm:$0xff]
  %v2630 = vmul.f32 %v2621, %v2629
  %v2631 = vmul.f32 %v2615, %v2622
  %v2632 = vadd.f32 %v2630, %v2631
  %v2633 = vtanh.pop %v2632
  %v2634 = vmul.f32 %v2628, %v2633
  %2635 = vst [vmem:[#allocation3] sm:$0xff] %v2632
  %2636 = vst [vmem:[#allocation2] sm:$0xff] %v2634
  %s2637 = scalar_lea.vmem [#allocation4], 224
  %v2638 = vld [vmem:[%s2637] sm:$0xff]
  %v2639 = vld [vmem:[%s2637 + $0x8] sm:$0xff]
  %v2640 = vld [vmem:[%s2637 + $0x10] sm:$0xff]
  %v2641 = vld [vmem:[%s2637 + $0x18] sm:$0xff]
  %v2642 = vld [vmem:[#allocation2] sm:$0xff]
  %v2643 = vpack.c.bf16 %v2642, %v2642
  %v2644 = vld [vmem:[%s2] sm:$0xff]
  %v2645 = vld [vmem:[%s2 + $0x8] sm:$0xff]
  %v2646 = vld [vmem:[%s2 + $0x10] sm:$0xff]
  %v2647 = vld [vmem:[%s2 + $0x18] sm:$0xff]
  %v2648 = vld [vmem:[%s2 + $0x20] sm:$0xff]
  %v2649 = vld [vmem:[%s2 + $0x28] sm:$0xff]
  %v2650 = vld [vmem:[%s2 + $0x30] sm:$0xff]
  %v2651 = vld [vmem:[%s2 + $0x38] sm:$0xff]
  %v2652 = vld [vmem:[%s2 + $0x40] sm:$0xff]
  %v2653 = vld [vmem:[%s2 + $0x48] sm:$0xff]
  %v2654 = vld [vmem:[%s2 + $0x50] sm:$0xff]
  %v2655 = vld [vmem:[%s2 + $0x58] sm:$0xff]
  %v2656 = vld [vmem:[%s2 + $0x60] sm:$0xff]
  %v2657 = vld [vmem:[%s2 + $0x68] sm:$0xff]
  %v2658 = vld [vmem:[%s2 + $0x70] sm:$0xff]
  %v2659 = vld [vmem:[%s2 + $0x78] sm:$0xff]
  %v2660 = vld [vmem:[%s2 + $0x80] sm:$0xff]
  %v2661 = vld [vmem:[%s2 + $0x88] sm:$0xff]
  %v2662 = vld [vmem:[%s2 + $0x90] sm:$0xff]
  %v2663 = vld [vmem:[%s2 + $0x98] sm:$0xff]
  %v2664 = vld [vmem:[%s2 + $0xa0] sm:$0xff]
  %v2665 = vld [vmem:[%s2 + $0xa8] sm:$0xff]
  %v2666 = vld [vmem:[%s2 + $0xb0] sm:$0xff]
  %v2667 = vld [vmem:[%s2 + $0xb8] sm:$0xff]
  %v2668 = vld [vmem:[%s2 + $0xc0] sm:$0xff]
  %v2669 = vld [vmem:[%s2 + $0xc8] sm:$0xff]
  %v2670 = vld [vmem:[%s2 + $0xd0] sm:$0xff]
  %v2671 = vld [vmem:[%s2 + $0xd8] sm:$0xff]
  %v2672 = vld [vmem:[%s2 + $0xe0] sm:$0xff]
  %v2673 = vld [vmem:[%s2 + $0xe8] sm:$0xff]
  %v2674 = vld [vmem:[%s2 + $0xf0] sm:$0xff]
  %v2675 = vld [vmem:[%s2 + $0xf8] sm:$0xff]
  %v2708 = vunpack.c.l.b16 %v2644
  %v2709 = vunpack.c.h.b16 %v2644
  %v2710 = vunpack.c.l.b16 %v2645
  %v2711 = vunpack.c.h.b16 %v2645
  %v2712 = vunpack.c.l.b16 %v2646
  %v2713 = vunpack.c.h.b16 %v2646
  %v2714 = vunpack.c.l.b16 %v2647
  %v2715 = vunpack.c.h.b16 %v2647
  %v2716 = vunpack.c.l.b16 %v2648
  %v2717 = vunpack.c.h.b16 %v2648
  %v2718 = vunpack.c.l.b16 %v2649
  %v2719 = vunpack.c.h.b16 %v2649
  %v2720 = vunpack.c.l.b16 %v2650
  %v2721 = vunpack.c.h.b16 %v2650
  %v2722 = vunpack.c.l.b16 %v2651
  %v2723 = vunpack.c.h.b16 %v2651
  %v2724 = vunpack.c.l.b16 %v2652
  %v2725 = vunpack.c.h.b16 %v2652
  %v2726 = vunpack.c.l.b16 %v2653
  %v2727 = vunpack.c.h.b16 %v2653
  %v2728 = vunpack.c.l.b16 %v2654
  %v2729 = vunpack.c.h.b16 %v2654
  %v2730 = vunpack.c.l.b16 %v2655
  %v2731 = vunpack.c.h.b16 %v2655
  %v2732 = vunpack.c.l.b16 %v2656
  %v2733 = vunpack.c.h.b16 %v2656
  %v2734 = vunpack.c.l.b16 %v2657
  %v2735 = vunpack.c.h.b16 %v2657
  %v2736 = vunpack.c.l.b16 %v2658
  %v2737 = vunpack.c.h.b16 %v2658
  %v2738 = vunpack.c.l.b16 %v2659
  %v2739 = vunpack.c.h.b16 %v2659
  %v2740 = vunpack.c.l.b16 %v2660
  %v2741 = vunpack.c.h.b16 %v2660
  %v2742 = vunpack.c.l.b16 %v2661
  %v2743 = vunpack.c.h.b16 %v2661
  %v2744 = vunpack.c.l.b16 %v2662
  %v2745 = vunpack.c.h.b16 %v2662
  %v2746 = vunpack.c.l.b16 %v2663
  %v2747 = vunpack.c.h.b16 %v2663
  %v2748 = vunpack.c.l.b16 %v2664
  %v2749 = vunpack.c.h.b16 %v2664
  %v2750 = vunpack.c.l.b16 %v2665
  %v2751 = vunpack.c.h.b16 %v2665
  %v2752 = vunpack.c.l.b16 %v2666
  %v2753 = vunpack.c.h.b16 %v2666
  %v2754 = vunpack.c.l.b16 %v2667
  %v2755 = vunpack.c.h.b16 %v2667
  %v2756 = vunpack.c.l.b16 %v2668
  %v2757 = vunpack.c.h.b16 %v2668
  %v2758 = vunpack.c.l.b16 %v2669
  %v2759 = vunpack.c.h.b16 %v2669
  %v2760 = vunpack.c.l.b16 %v2670
  %v2761 = vunpack.c.h.b16 %v2670
  %v2762 = vunpack.c.l.b16 %v2671
  %v2763 = vunpack.c.h.b16 %v2671
  %v2764 = vunpack.c.l.b16 %v2672
  %v2765 = vunpack.c.h.b16 %v2672
  %v2766 = vunpack.c.l.b16 %v2673
  %v2767 = vunpack.c.h.b16 %v2673
  %v2768 = vunpack.c.l.b16 %v2674
  %v2769 = vunpack.c.h.b16 %v2674
  %v2770 = vunpack.c.l.b16 %v2675
  %v2771 = vunpack.c.h.b16 %v2675
  %v2772 = vpack.c.b16 %v2712, %v2708
  %v2773 = vpack.c.b16 %v2713, %v2709
  %v2774 = vpack.c.b16 %v2714, %v2710
  %v2775 = vpack.c.b16 %v2715, %v2711
  %v2776 = vpack.c.b16 %v2720, %v2716
  %v2777 = vpack.c.b16 %v2721, %v2717
  %v2778 = vpack.c.b16 %v2722, %v2718
  %v2779 = vpack.c.b16 %v2723, %v2719
  %v2780 = vpack.c.b16 %v2728, %v2724
  %v2781 = vpack.c.b16 %v2729, %v2725
  %v2782 = vpack.c.b16 %v2730, %v2726
  %v2783 = vpack.c.b16 %v2731, %v2727
  %v2784 = vpack.c.b16 %v2736, %v2732
  %v2785 = vpack.c.b16 %v2737, %v2733
  %v2786 = vpack.c.b16 %v2738, %v2734
  %v2787 = vpack.c.b16 %v2739, %v2735
  %v2788 = vpack.c.b16 %v2744, %v2740
  %v2789 = vpack.c.b16 %v2745, %v2741
  %v2790 = vpack.c.b16 %v2746, %v2742
  %v2791 = vpack.c.b16 %v2747, %v2743
  %v2792 = vpack.c.b16 %v2752, %v2748
  %v2793 = vpack.c.b16 %v2753, %v2749
  %v2794 = vpack.c.b16 %v2754, %v2750
  %v2795 = vpack.c.b16 %v2755, %v2751
  %v2796 = vpack.c.b16 %v2760, %v2756
  %v2797 = vpack.c.b16 %v2761, %v2757
  %v2798 = vpack.c.b16 %v2762, %v2758
  %v2799 = vpack.c.b16 %v2763, %v2759
  %v2800 = vpack.c.b16 %v2768, %v2764
  %v2801 = vpack.c.b16 %v2769, %v2765
  %v2802 = vpack.c.b16 %v2770, %v2766
  %v2803 = vpack.c.b16 %v2771, %v2767
  %2836 = vmatprep.subr.bf16.mxu0 %v2773
  %2837 = vmatpush1.bf16.msra.mxu0 %v2772
  %2838 = vmatprep.subr.bf16.mxu0 %v2777
  %2839 = vmatpush1.bf16.msra.mxu0 %v2776
  %2840 = vmatprep.subr.bf16.mxu0 %v2781
  %2841 = vmatpush1.bf16.msra.mxu0 %v2780
  %2842 = vmatprep.subr.bf16.mxu0 %v2785
  %2843 = vmatpush1.bf16.msra.mxu0 %v2784
  %2844 = vmatprep.subr.bf16.mxu0 %v2789
  %2845 = vmatpush1.bf16.msra.mxu0 %v2788
  %2846 = vmatprep.subr.bf16.mxu0 %v2793
  %2847 = vmatpush1.bf16.msra.mxu0 %v2792
  %2848 = vmatprep.subr.bf16.mxu0 %v2797
  %2849 = vmatpush1.bf16.msra.mxu0 %v2796
  %2850 = vmatprep.subr.bf16.mxu0 %v2801
  %2851 = vmatpush1.bf16.msra.mxu0 %v2800
  %2852 = vmatprep.subr.bf16.mxu0 0
  %2853 = vmatpush1.bf16.msra.mxu0 0
  %2854 = vmatprep.subr.bf16.mxu0 0
  %2855 = vmatpush1.bf16.msra.mxu0 0
  %2856 = vmatprep.subr.bf16.mxu0 0
  %2857 = vmatpush1.bf16.msra.mxu0 0
  %2858 = vmatprep.subr.bf16.mxu0 0
  %2859 = vmatpush1.bf16.msra.mxu0 0
  %2860 = vmatprep.subr.bf16.mxu0 0
  %2861 = vmatpush1.bf16.msra.mxu0 0
  %2862 = vmatprep.subr.bf16.mxu0 0
  %2863 = vmatpush1.bf16.msra.mxu0 0
  %2864 = vmatprep.subr.bf16.mxu0 0
  %2865 = vmatpush1.bf16.msra.mxu0 0
  %2866 = vmatprep.subr.bf16.mxu0 0
  %2867 = vmatpush1.bf16.msra.mxu0 0
  %2868 = vmatprep.mubr.bf16.mxu0 0
  %2869 = vmatmul.mubr.bf16.gmra.mrb[0].mxu0 %v2643
  %v2870 = vpop.f32.mrb[0].mxu0
  %v2871 = vadd.f32 0.0, %v2870
  %v2872 = vpop.f32.mrb[0].mxu0
  %v2873 = vadd.f32 0.0, %v2872
  %v2874 = vpop.f32.mrb[0].mxu0
  %v2875 = vpop.f32.mrb[0].mxu0
  %2876 = vdwg.mxu0
  %2877 = vmatprep.subr.bf16.mxu0 %v2775
  %2878 = vmatpush1.bf16.msra.mxu0 %v2774
  %2879 = vmatprep.subr.bf16.mxu0 %v2779
  %2880 = vmatpush1.bf16.msra.mxu0 %v2778
  %2881 = vmatprep.subr.bf16.mxu0 %v2783
  %2882 = vmatpush1.bf16.msra.mxu0 %v2782
  %2883 = vmatprep.subr.bf16.mxu0 %v2787
  %2884 = vmatpush1.bf16.msra.mxu0 %v2786
  %2885 = vmatprep.subr.bf16.mxu0 %v2791
  %2886 = vmatpush1.bf16.msra.mxu0 %v2790
  %2887 = vmatprep.subr.bf16.mxu0 %v2795
  %2888 = vmatpush1.bf16.msra.mxu0 %v2794
  %2889 = vmatprep.subr.bf16.mxu0 %v2799
  %2890 = vmatpush1.bf16.msra.mxu0 %v2798
  %2891 = vmatprep.subr.bf16.mxu0 %v2803
  %2892 = vmatpush1.bf16.msra.mxu0 %v2802
  %2893 = vmatprep.subr.bf16.mxu0 0
  %2894 = vmatpush1.bf16.msra.mxu0 0
  %2895 = vmatprep.subr.bf16.mxu0 0
  %2896 = vmatpush1.bf16.msra.mxu0 0
  %2897 = vmatprep.subr.bf16.mxu0 0
  %2898 = vmatpush1.bf16.msra.mxu0 0
  %2899 = vmatprep.subr.bf16.mxu0 0
  %2900 = vmatpush1.bf16.msra.mxu0 0
  %2901 = vmatprep.subr.bf16.mxu0 0
  %2902 = vmatpush1.bf16.msra.mxu0 0
  %2903 = vmatprep.subr.bf16.mxu0 0
  %2904 = vmatpush1.bf16.msra.mxu0 0
  %2905 = vmatprep.subr.bf16.mxu0 0
  %2906 = vmatpush1.bf16.msra.mxu0 0
  %2907 = vmatprep.subr.bf16.mxu0 0
  %2908 = vmatpush1.bf16.msra.mxu0 0
  %2909 = vmatprep.mubr.bf16.mxu0 0
  %2910 = vmatmul.mubr.bf16.gmra.mrb[0].mxu0 %v2643
  %v2911 = vpop.f32.mrb[0].mxu0
  %v2912 = vadd.f32 0.0, %v2911
  %v2913 = vpop.f32.mrb[0].mxu0
  %v2914 = vadd.f32 0.0, %v2913
  %v2915 = vpop.f32.mrb[0].mxu0
  %v2916 = vpop.f32.mrb[0].mxu0
  %2917 = vdwg.mxu0
  %v2918 = vadd.f32 %v2638, %v2871
  %v2919 = vadd.f32 %v2639, %v2873
  %v2920 = vadd.f32 %v2640, %v2912
  %v2921 = vadd.f32 %v2641, %v2914
  %v2922 = vxor.u32 %v2918, 2147483648
  %v2923 = vmul.f32 %v2922, 1.442695
  %v2924 = vpow.pop %v2923
  %v2925 = vadd.f32 %v2924, 1.0
  %v2926 = vrcp.pop %v2925
  %v2927 = vmul.f32 1.0, %v2926
  %v2928 = vxor.u32 %v2919, 2147483648
  %v2929 = vmul.f32 %v2928, 1.442695
  %v2930 = vpow.pop %v2929
  %v2931 = vadd.f32 %v2930, 1.0
  %v2932 = vrcp.pop %v2931
  %v2933 = vmul.f32 1.0, %v2932
  %v2934 = vtanh.pop %v2920
  %v2935 = vxor.u32 %v2921, 2147483648
  %v2936 = vmul.f32 %v2935, 1.442695
  %v2937 = vpow.pop %v2936
  %v2938 = vadd.f32 %v2937, 1.0
  %v2939 = vrcp.pop %v2938
  %v2940 = vmul.f32 1.0, %v2939
  %v2941 = vld [vmem:[#allocation3] sm:$0xff]
  %v2942 = vmul.f32 %v2933, %v2941
  %v2943 = vmul.f32 %v2927, %v2934
  %v2944 = vadd.f32 %v2942, %v2943
  %v2945 = vtanh.pop %v2944
  %v2946 = vmul.f32 %v2940, %v2945
  %2947 = vst [vmem:[#allocation3] sm:$0xff] %v2944
  %2948 = vst [vmem:[#allocation2] sm:$0xff] %v2946
  // Predicated region
  $region30: #{text_classifier_forward.3} parent=0 // pred_check
    %p2949 = pneg %p24
  $region31: #{text_classifier_forward.3} parent=0 // pred_check_branch
    %2951 = sbr.rel (%p2949) target = $region33
  $region32: #{text_classifier_forward.3} parent=0 // pred_region
    %v2952 = vld [vmem:[#allocation2] sm:$0xff]
    %v2953 = vpack.c.bf16 %v2952, %v2952
    %v2954 = vld [vmem:[%s4] sm:$0xf]
    %v2955 = vld [vmem:[%s4 + $0x4] sm:$0xf]
    %v2956 = vld [vmem:[%s4 + $0x8] sm:$0xf]
    %v2957 = vld [vmem:[%s4 + $0xc] sm:$0xf]
    %v2958 = vld [vmem:[%s4 + $0x10] sm:$0xf]
    %v2959 = vld [vmem:[%s4 + $0x14] sm:$0xf]
    %v2960 = vld [vmem:[%s4 + $0x18] sm:$0xf]
    %v2961 = vld [vmem:[%s4 + $0x1c] sm:$0xf]
    %v2962 = vld [vmem:[%s4 + $0x20] sm:$0xf]
    %v2963 = vld [vmem:[%s4 + $0x24] sm:$0xf]
    %v2964 = vld [vmem:[%s4 + $0x28] sm:$0xf]
    %v2965 = vld [vmem:[%s4 + $0x2c] sm:$0xf]
    %v2966 = vld [vmem:[%s4 + $0x30] sm:$0xf]
    %v2967 = vld [vmem:[%s4 + $0x34] sm:$0xf]
    %v2968 = vld [vmem:[%s4 + $0x38] sm:$0xf]
    %v2969 = vld [vmem:[%s4 + $0x3c] sm:$0xf]
    %v2970 = vld [vmem:[%s5] sm:$0x1]
    %v2972 = vlaneseq
    %v2973 = vshrl.u32 %v2972, 7
    %v2974 = vsub.s32 0, %v2973
    %v2975 = vrot.slane %v2970, %v2974
    %v2993 = vunpack.c.l.b16 %v2954
    %v2994 = vunpack.c.l.b16 %v2955
    %v2995 = vunpack.c.l.b16 %v2956
    %v2996 = vunpack.c.l.b16 %v2957
    %v2997 = vunpack.c.l.b16 %v2958
    %v2998 = vunpack.c.l.b16 %v2959
    %v2999 = vunpack.c.l.b16 %v2960
    %v3000 = vunpack.c.l.b16 %v2961
    %v3001 = vunpack.c.l.b16 %v2962
    %v3002 = vunpack.c.l.b16 %v2963
    %v3003 = vunpack.c.l.b16 %v2964
    %v3004 = vunpack.c.l.b16 %v2965
    %v3005 = vunpack.c.l.b16 %v2966
    %v3006 = vunpack.c.l.b16 %v2967
    %v3007 = vunpack.c.l.b16 %v2968
    %v3008 = vunpack.c.l.b16 %v2969
    %v3009 = vpack.c.b16 %v2994, %v2993
    %v3010 = vpack.c.b16 %v2996, %v2995
    %v3011 = vpack.c.b16 %v2998, %v2997
    %v3012 = vpack.c.b16 %v3000, %v2999
    %v3013 = vpack.c.b16 %v3002, %v3001
    %v3014 = vpack.c.b16 %v3004, %v3003
    %v3015 = vpack.c.b16 %v3006, %v3005
    %v3016 = vpack.c.b16 %v3008, %v3007
    %3025 = vmatprep.subr.bf16.mxu0 0
    %3026 = vmatpush1.bf16.msra.mxu0 %v3009
    %3027 = vmatprep.subr.bf16.mxu0 0
    %3028 = vmatpush1.bf16.msra.mxu0 %v3010
    %3029 = vmatprep.subr.bf16.mxu0 0
    %3030 = vmatpush1.bf16.msra.mxu0 %v3011
    %3031 = vmatprep.subr.bf16.mxu0 0
    %3032 = vmatpush1.bf16.msra.mxu0 %v3012
    %3033 = vmatprep.subr.bf16.mxu0 0
    %3034 = vmatpush1.bf16.msra.mxu0 %v3013
    %3035 = vmatprep.subr.bf16.mxu0 0
    %3036 = vmatpush1.bf16.msra.mxu0 %v3014
    %3037 = vmatprep.subr.bf16.mxu0 0
    %3038 = vmatpush1.bf16.msra.mxu0 %v3015
    %3039 = vmatprep.subr.bf16.mxu0 0
    %3040 = vmatpush1.bf16.msra.mxu0 %v3016
    %3041 = vmatprep.subr.bf16.mxu0 0
    %3042 = vmatpush1.bf16.msra.mxu0 0
    %3043 = vmatprep.subr.bf16.mxu0 0
    %3044 = vmatpush1.bf16.msra.mxu0 0
    %3045 = vmatprep.subr.bf16.mxu0 0
    %3046 = vmatpush1.bf16.msra.mxu0 0
    %3047 = vmatprep.subr.bf16.mxu0 0
    %3048 = vmatpush1.bf16.msra.mxu0 0
    %3049 = vmatprep.subr.bf16.mxu0 0
    %3050 = vmatpush1.bf16.msra.mxu0 0
    %3051 = vmatprep.subr.bf16.mxu0 0
    %3052 = vmatpush1.bf16.msra.mxu0 0
    %3053 = vmatprep.subr.bf16.mxu0 0
    %3054 = vmatpush1.bf16.msra.mxu0 0
    %3055 = vmatprep.subr.bf16.mxu0 0
    %3056 = vmatpush1.bf16.msra.mxu0 0
    %3057 = vmatprep.mubr.bf16.mxu0 0
    %3058 = vmatmul.mubr.bf16.gmra.mrb[0].mxu0 %v2953
    %v3059 = vpop.f32.mrb[0].mxu0
    %v3060 = vadd.f32 %v2975, %v3059
    %v3061 = vpop.f32.mrb[0].mxu0
    %v3062 = vpop.f32.mrb[0].mxu0
    %v3063 = vpop.f32.mrb[0].mxu0
    %3064 = vdwg.mxu0
    %3065 = vst [vmem:[%s6] sm:$0xff] %v3060
  $region33: #{text_classifier_forward.3} parent=0 // pred_fallthru
    _
  // Predicated region
  $region34: #{text_classifier_forward.3} parent=0 // pred_check
    _
  $region35: #{text_classifier_forward.3} parent=0 // pred_check_branch
    %3067 = sbr.rel (0) target = $region37
  $region36: #{text_classifier_forward.3} parent=0 // pred_region
    _
  $region37: #{text_classifier_forward.3} parent=0 // pred_fallthru
    _
  // Predicated region
  $region38: #{text_classifier_forward.3} parent=0 // pred_check
    _
  $region39: #{text_classifier_forward.3} parent=0 // pred_check_branch
    %3069 = sbr.rel (0) target = $region41
  $region40: #{text_classifier_forward.3} parent=0 // pred_region
    _
  $region41: #{text_classifier_forward.3} parent=0 // pred_fallthru
    _

// kernel: text_classifier_forward.2
$region0: #{text_classifier_forward.2}
  #allocation0 [shape = 'u32[]', space=smem, size = 0x4, offset = 0x4, fixed_abs, tag = 'smem constant byte address 0x4 - core index']
  #allocation1 [shape = 'u32[144,128]{1,0:T(1,128)}', space=vmem, size = 0x12000, scoped, tag = 'internal scratch']
  #allocation2 [shape = 'f32[8,128]{1,0:T(8,128)}', space=vmem, size = 0x1000, scoped, tag = 'scratch operand']
  #allocation3 [shape = 'f32[8,128]{1,0:T(8,128)}', space=vmem, size = 0x1000, scoped, tag = 'scratch operand']
  #allocation4 [shape = 'f32[8,8,512]{2,1,0:T(8,128)}', space=vmem, size = 0x20000, scoped, tag = 'scratch operand']
  %s0 = inlined_call_operand.vmem [shape: bf16[8,8,128], index: 0, kind: input, shape index: {}]
  %s1 = inlined_call_operand.hbm [shape: bf16[128,512], index: 1, kind: input, shape index: {}]
  %s2 = inlined_call_operand.hbm [shape: bf16[128,512], index: 2, kind: input, shape index: {}]
  %s3 = inlined_call_operand.vmem [shape: f32[1,512], index: 3, kind: input, shape index: {}]
  %s4 = inlined_call_operand.vmem [shape: bf16[8,8,128], index: 4, kind: output, shape index: {}]
  %s5 = sld [smem:[#allocation0]]
  $region38: #{text_classifier_forward.2} parent=0
    _
  %s7 = ssub.s32 1, %s5
  %s8 = scalar_select 0, %s7, %s5
  $region1: #{text_classifier_forward.2} parent=0
    #allocation5 [shape = 'u8[131072]{0}', space=vmem, size = 0x20000, scoped, tag = 'input window, operand 1, single buffered']
    #allocation6 [shape = 's32[1]{0}', space=sflag, size = 0x4, scoped, tag = 'scoped memory for text_classifier_forward.2']
    #allocation7 [shape = 'u8[131072]{0}', space=vmem, size = 0x20000, scoped, tag = 'input window, operand 2, single buffered']
    #allocation8 [shape = 's32[1]{0}', space=sflag, size = 0x4, scoped, tag = 'scoped memory for text_classifier_forward.2']
    %9 = vsyncpa [#allocation6], 0
    %10 = vsyncpa [#allocation8], 0
    // Predicated region
    $region2: #{text_classifier_forward.2} parent=1 // pred_check
      _
    $region3: #{text_classifier_forward.2} parent=1 // pred_check_branch
      %12 = sbr.rel (0) target = $region5
    $region4: #{text_classifier_forward.2} parent=1 // pred_region
      _
    $region5: #{text_classifier_forward.2} parent=1 // pred_fallthru
      _
    // Predicated region
    $region6: #{text_classifier_forward.2} parent=1 // pred_check
      _
    $region7: #{text_classifier_forward.2} parent=1 // pred_check_branch
      %14 = sbr.rel (0) target = $region9
    $region8: #{text_classifier_forward.2} parent=1 // pred_region
      %s16 = ssub.s32 4096, 4096
      %17 = vsyncadd [#allocation6], %s16
      %s18 = sshll.u32 [#allocation5], 4
      %s19 = int_to_ptr.vmem [resolvable:$true] %s18
      %24 = dma.hbm_to_vmem [thread:$0]  %s1, 4096, %s19, [#allocation6], 256, 256, 16
    $region9: #{text_classifier_forward.2} parent=1 // pred_fallthru
      _
    // Predicated region
    $region10: #{text_classifier_forward.2} parent=1 // pred_check
      _
    $region11: #{text_classifier_forward.2} parent=1 // pred_check_branch
      %26 = sbr.rel (0) target = $region13
    $region12: #{text_classifier_forward.2} parent=1 // pred_region
      %s28 = ssub.s32 4096, 4096
      %29 = vsyncadd [#allocation8], %s28
      %s30 = sshll.u32 [#allocation7], 4
      %s31 = int_to_ptr.vmem [resolvable:$true] %s30
      %36 = dma.hbm_to_vmem [thread:$0]  %s2, 4096, %s31, [#allocation8], 256, 256, 16
    $region13: #{text_classifier_forward.2} parent=1 // pred_fallthru
      _
    // Predicated region
    $region14: #{text_classifier_forward.2} parent=1 // pred_check
      _
    $region15: #{text_classifier_forward.2} parent=1 // pred_check_branch
      %38 = sbr.rel (0) target = $region17
    $region16: #{text_classifier_forward.2} parent=1 // pred_region
      _
    $region17: #{text_classifier_forward.2} parent=1 // pred_fallthru
      _
    // Predicated region
    $region18: #{text_classifier_forward.2} parent=1 // pred_check
      _
    $region19: #{text_classifier_forward.2} parent=1 // pred_check_branch
      %40 = sbr.rel (0) target = $region21
    $region20: #{text_classifier_forward.2} parent=1 // pred_region
      %41 = dma.done [#allocation6], 4096
    $region21: #{text_classifier_forward.2} parent=1 // pred_fallthru
      _
    // Predicated region
    $region22: #{text_classifier_forward.2} parent=1 // pred_check
      _
    $region23: #{text_classifier_forward.2} parent=1 // pred_check_branch
      %43 = sbr.rel (0) target = $region25
    $region24: #{text_classifier_forward.2} parent=1 // pred_region
      %44 = dma.done [#allocation8], 4096
    $region25: #{text_classifier_forward.2} parent=1 // pred_fallthru
      _
    %p46 = scmp.eq.s32.totalorder 0, 0
    // Predicated region
    $region26: #{text_classifier_forward.2} parent=1 // pred_check
      %p47 = pneg %p46
    $region27: #{text_classifier_forward.2} parent=1 // pred_check_branch
      %49 = sbr.rel (%p47) target = $region29
    $region28: #{text_classifier_forward.2} parent=1 // pred_region
      %50 = vst [vmem:[#allocation2] sm:$0xff] 0.0
      %51 = vst [vmem:[#allocation3] sm:$0xff] 0.0
    $region29: #{text_classifier_forward.2} parent=1 // pred_fallthru
      _
    %v52 = vld [vmem:[%s0] sm:$0xf]
    %v53 = vld [vmem:[%s0 + $0x4] sm:$0xf]
    %v54 = vld [vmem:[%s0 + $0x8] sm:$0xf]
    %v55 = vld [vmem:[%s0 + $0xc] sm:$0xf]
    %v56 = vld [vmem:[%s0 + $0x10] sm:$0xf]
    %v57 = vld [vmem:[%s0 + $0x14] sm:$0xf]
    %v58 = vld [vmem:[%s0 + $0x18] sm:$0xf]
    %v59 = vld [vmem:[%s0 + $0x1c] sm:$0xf]
    %v60 = vld [vmem:[#allocation5] sm:$0xff]
    %v61 = vld [vmem:[#allocation5 + $0x8] sm:$0xff]
    %v62 = vld [vmem:[#allocation5 + $0x10] sm:$0xff]
    %v63 = vld [vmem:[#allocation5 + $0x18] sm:$0xff]
    %v64 = vld [vmem:[#allocation5 + $0x20] sm:$0xff]
    %v65 = vld [vmem:[#allocation5 + $0x28] sm:$0xff]
    %v66 = vld [vmem:[#allocation5 + $0x30] sm:$0xff]
    %v67 = vld [vmem:[#allocation5 + $0x38] sm:$0xff]
    %v68 = vld [vmem:[#allocation5 + $0x40] sm:$0xff]
    %v69 = vld [vmem:[#allocation5 + $0x48] sm:$0xff]
    %v70 = vld [vmem:[#allocation5 + $0x50] sm:$0xff]
    %v71 = vld [vmem:[#allocation5 + $0x58] sm:$0xff]
    %v72 = vld [vmem:[#allocation5 + $0x60] sm:$0xff]
    %v73 = vld [vmem:[#allocation5 + $0x68] sm:$0xff]
    %v74 = vld [vmem:[#allocation5 + $0x70] sm:$0xff]
    %v75 = vld [vmem:[#allocation5 + $0x78] sm:$0xff]
    %v76 = vld [vmem:[#allocation5 + $0x80] sm:$0xff]
    %v77 = vld [vmem:[#allocation5 + $0x88] sm:$0xff]
    %v78 = vld [vmem:[#allocation5 + $0x90] sm:$0xff]
    %v79 = vld [vmem:[#allocation5 + $0x98] sm:$0xff]
    %v80 = vld [vmem:[#allocation5 + $0xa0] sm:$0xff]
    %v81 = vld [vmem:[#allocation5 + $0xa8] sm:$0xff]
    %v82 = vld [vmem:[#allocation5 + $0xb0] sm:$0xff]
    %v83 = vld [vmem:[#allocation5 + $0xb8] sm:$0xff]
    %v84 = vld [vmem:[#allocation5 + $0xc0] sm:$0xff]
    %v85 = vld [vmem:[#allocation5 + $0xc8] sm:$0xff]
    %v86 = vld [vmem:[#allocation5 + $0xd0] sm:$0xff]
    %v87 = vld [vmem:[#allocation5 + $0xd8] sm:$0xff]
    %v88 = vld [vmem:[#allocation5 + $0xe0] sm:$0xff]
    %v89 = vld [vmem:[#allocation5 + $0xe8] sm:$0xff]
    %v90 = vld [vmem:[#allocation5 + $0xf0] sm:$0xff]
    %v91 = vld [vmem:[#allocation5 + $0xf8] sm:$0xff]
    %v92 = vld [vmem:[%s3] sm:$0xf]
    %v94 = vlaneseq
    %v95 = vshrl.u32 %v94, 7
    %v96 = vsub.s32 0, %v95
    %v97 = vrot.slane %v92, %v96
    %v98 = vlaneseq
    %v99 = vshrl.u32 %v98, 7
    %v100 = vsub.s32 1, %v99
    %v101 = vrot.slane %v92, %v100
    %v102 = vlaneseq
    %v103 = vshrl.u32 %v102, 7
    %v104 = vsub.s32 2, %v103
    %v105 = vrot.slane %v92, %v104
    %v106 = vlaneseq
    %v107 = vshrl.u32 %v106, 7
    %v108 = vsub.s32 3, %v107
    %v109 = vrot.slane %v92, %v108
    %v122 = vunpack.c.l.b16 %v52
    %v123 = vunpack.c.l.b16 %v53
    %v124 = vunpack.c.l.b16 %v54
    %v125 = vunpack.c.l.b16 %v55
    %v126 = vunpack.c.l.b16 %v56
    %v127 = vunpack.c.l.b16 %v57
    %v128 = vunpack.c.l.b16 %v58
    %v129 = vunpack.c.l.b16 %v59
    %v130 = vpack.c.b16 %v123, %v122
    %v131 = vpack.c.b16 %v125, %v124
    %v132 = vpack.c.b16 %v127, %v126
    %v133 = vpack.c.b16 %v129, %v128
    %v170 = vunpack.c.l.b16 %v60
    %v171 = vunpack.c.h.b16 %v60
    %v172 = vunpack.c.l.b16 %v61
    %v173 = vunpack.c.h.b16 %v61
    %v174 = vunpack.c.l.b16 %v62
    %v175 = vunpack.c.h.b16 %v62
    %v176 = vunpack.c.l.b16 %v63
    %v177 = vunpack.c.h.b16 %v63
    %v178 = vunpack.c.l.b16 %v64
    %v179 = vunpack.c.h.b16 %v64
    %v180 = vunpack.c.l.b16 %v65
    %v181 = vunpack.c.h.b16 %v65
    %v182 = vunpack.c.l.b16 %v66
    %v183 = vunpack.c.h.b16 %v66
    %v184 = vunpack.c.l.b16 %v67
    %v185 = vunpack.c.h.b16 %v67
    %v186 = vunpack.c.l.b16 %v68
    %v187 = vunpack.c.h.b16 %v68
    %v188 = vunpack.c.l.b16 %v69
    %v189 = vunpack.c.h.b16 %v69
    %v190 = vunpack.c.l.b16 %v70
    %v191 = vunpack.c.h.b16 %v70
    %v192 = vunpack.c.l.b16 %v71
    %v193 = vunpack.c.h.b16 %v71
    %v194 = vunpack.c.l.b16 %v72
    %v195 = vunpack.c.h.b16 %v72
    %v196 = vunpack.c.l.b16 %v73
    %v197 = vunpack.c.h.b16 %v73
    %v198 = vunpack.c.l.b16 %v74
    %v199 = vunpack.c.h.b16 %v74
    %v200 = vunpack.c.l.b16 %v75
    %v201 = vunpack.c.h.b16 %v75
    %v202 = vunpack.c.l.b16 %v76
    %v203 = vunpack.c.h.b16 %v76
    %v204 = vunpack.c.l.b16 %v77
    %v205 = vunpack.c.h.b16 %v77
    %v206 = vunpack.c.l.b16 %v78
    %v207 = vunpack.c.h.b16 %v78
    %v208 = vunpack.c.l.b16 %v79
    %v209 = vunpack.c.h.b16 %v79
    %v210 = vunpack.c.l.b16 %v80
    %v211 = vunpack.c.h.b16 %v80
    %v212 = vunpack.c.l.b16 %v81
    %v213 = vunpack.c.h.b16 %v81
    %v214 = vunpack.c.l.b16 %v82
    %v215 = vunpack.c.h.b16 %v82
    %v216 = vunpack.c.l.b16 %v83
    %v217 = vunpack.c.h.b16 %v83
    %v218 = vunpack.c.l.b16 %v84
    %v219 = vunpack.c.h.b16 %v84
    %v220 = vunpack.c.l.b16 %v85
    %v221 = vunpack.c.h.b16 %v85
    %v222 = vunpack.c.l.b16 %v86
    %v223 = vunpack.c.h.b16 %v86
    %v224 = vunpack.c.l.b16 %v87
    %v225 = vunpack.c.h.b16 %v87
    %v226 = vunpack.c.l.b16 %v88
    %v227 = vunpack.c.h.b16 %v88
    %v228 = vunpack.c.l.b16 %v89
    %v229 = vunpack.c.h.b16 %v89
    %v230 = vunpack.c.l.b16 %v90
    %v231 = vunpack.c.h.b16 %v90
    %v232 = vunpack.c.l.b16 %v91
    %v233 = vunpack.c.h.b16 %v91
    %v234 = vpack.c.b16 %v174, %v170
    %v235 = vpack.c.b16 %v175, %v171
    %v236 = vpack.c.b16 %v176, %v172
    %v237 = vpack.c.b16 %v177, %v173
    %v238 = vpack.c.b16 %v182, %v178
    %v239 = vpack.c.b16 %v183, %v179
    %v240 = vpack.c.b16 %v184, %v180
    %v241 = vpack.c.b16 %v185, %v181
    %v242 = vpack.c.b16 %v190, %v186
    %v243 = vpack.c.b16 %v191, %v187
    %v244 = vpack.c.b16 %v192, %v188
    %v245 = vpack.c.b16 %v193, %v189
    %v246 = vpack.c.b16 %v198, %v194
    %v247 = vpack.c.b16 %v199, %v195
    %v248 = vpack.c.b16 %v200, %v196
    %v249 = vpack.c.b16 %v201, %v197
    %v250 = vpack.c.b16 %v206, %v202
    %v251 = vpack.c.b16 %v207, %v203
    %v252 = vpack.c.b16 %v208, %v204
    %v253 = vpack.c.b16 %v209, %v205
    %v254 = vpack.c.b16 %v214, %v210
    %v255 = vpack.c.b16 %v215, %v211
    %v256 = vpack.c.b16 %v216, %v212
    %v257 = vpack.c.b16 %v217, %v213
    %v258 = vpack.c.b16 %v222, %v218
    %v259 = vpack.c.b16 %v223, %v219
    %v260 = vpack.c.b16 %v224, %v220
    %v261 = vpack.c.b16 %v225, %v221
    %v262 = vpack.c.b16 %v230, %v226
    %v263 = vpack.c.b16 %v231, %v227
    %v264 = vpack.c.b16 %v232, %v228
    %v265 = vpack.c.b16 %v233, %v229
    %298 = vmatprep.subr.bf16.mxu0 %v235
    %299 = vmatpush1.bf16.msra.mxu0 %v234
    %300 = vmatprep.subr.bf16.mxu0 %v239
    %301 = vmatpush1.bf16.msra.mxu0 %v238
    %302 = vmatprep.subr.bf16.mxu0 %v243
    %303 = vmatpush1.bf16.msra.mxu0 %v242
    %304 = vmatprep.subr.bf16.mxu0 %v247
    %305 = vmatpush1.bf16.msra.mxu0 %v246
    %306 = vmatprep.subr.bf16.mxu0 %v251
    %307 = vmatpush1.bf16.msra.mxu0 %v250
    %308 = vmatprep.subr.bf16.mxu0 %v255
    %309 = vmatpush1.bf16.msra.mxu0 %v254
    %310 = vmatprep.subr.bf16.mxu0 %v259
    %311 = vmatpush1.bf16.msra.mxu0 %v258
    %312 = vmatprep.subr.bf16.mxu0 %v263
    %313 = vmatpush1.bf16.msra.mxu0 %v262
    %314 = vmatprep.subr.bf16.mxu0 0
    %315 = vmatpush1.bf16.msra.mxu0 0
    %316 = vmatprep.subr.bf16.mxu0 0
    %317 = vmatpush1.bf16.msra.mxu0 0
    %318 = vmatprep.subr.bf16.mxu0 0
    %319 = vmatpush1.bf16.msra.mxu0 0
    %320 = vmatprep.subr.bf16.mxu0 0
    %321 = vmatpush1.bf16.msra.mxu0 0
    %322 = vmatprep.subr.bf16.mxu0 0
    %323 = vmatpush1.bf16.msra.mxu0 0
    %324 = vmatprep.subr.bf16.mxu0 0
    %325 = vmatpush1.bf16.msra.mxu0 0
    %326 = vmatprep.subr.bf16.mxu0 0
    %327 = vmatpush1.bf16.msra.mxu0 0
    %328 = vmatprep.subr.bf16.mxu0 0
    %329 = vmatpush1.bf16.msra.mxu0 0
    %330 = vmatprep.mubr.bf16.mxu0 0
    %331 = vmatmul.mubr.bf16.gmra.mrb[0].mxu0 %v130
    %v332 = vpop.f32.mrb[0].mxu0
    %v333 = vadd.f32 %v97, %v332
    %v334 = vpop.f32.mrb[0].mxu0
    %v335 = vadd.f32 %v101, %v334
    %v336 = vpop.f32.mrb[0].mxu0
    %v337 = vadd.f32 %v97, %v336
    %v338 = vpop.f32.mrb[0].mxu0
    %v339 = vadd.f32 %v101, %v338
    %340 = vmatprep.mubr.bf16.mxu0 0
    %341 = vmatmul.mubr.bf16.gmra.mrb[0].mxu0 %v131
    %v342 = vpop.f32.mrb[0].mxu0
    %v343 = vadd.f32 %v97, %v342
    %v344 = vpop.f32.mrb[0].mxu0
    %v345 = vadd.f32 %v101, %v344
    %v346 = vpop.f32.mrb[0].mxu0
    %v347 = vadd.f32 %v97, %v346
    %v348 = vpop.f32.mrb[0].mxu0
    %v349 = vadd.f32 %v101, %v348
    %350 = vmatprep.mubr.bf16.mxu0 0
    %351 = vmatmul.mubr.bf16.gmra.mrb[0].mxu0 %v132
    %v352 = vpop.f32.mrb[0].mxu0
    %v353 = vadd.f32 %v97, %v352
    %v354 = vpop.f32.mrb[0].mxu0
    %v355 = vadd.f32 %v101, %v354
    %v356 = vpop.f32.mrb[0].mxu0
    %v357 = vadd.f32 %v97, %v356
    %v358 = vpop.f32.mrb[0].mxu0
    %v359 = vadd.f32 %v101, %v358
    %360 = vmatprep.mubr.bf16.mxu0 0
    %361 = vmatmul.mubr.bf16.gmra.mrb[0].mxu0 %v133
    %v362 = vpop.f32.mrb[0].mxu0
    %v363 = vadd.f32 %v97, %v362
    %v364 = vpop.f32.mrb[0].mxu0
    %v365 = vadd.f32 %v101, %v364
    %v366 = vpop.f32.mrb[0].mxu0
    %v367 = vadd.f32 %v97, %v366
    %v368 = vpop.f32.mrb[0].mxu0
    %v369 = vadd.f32 %v101, %v368
    %370 = vdwg.mxu0
    %371 = vmatprep.subr.bf16.mxu0 %v237
    %372 = vmatpush1.bf16.msra.mxu0 %v236
    %373 = vmatprep.subr.bf16.mxu0 %v241
    %374 = vmatpush1.bf16.msra.mxu0 %v240
    %375 = vmatprep.subr.bf16.mxu0 %v245
    %376 = vmatpush1.bf16.msra.mxu0 %v244
    %377 = vmatprep.subr.bf16.mxu0 %v249
    %378 = vmatpush1.bf16.msra.mxu0 %v248
    %379 = vmatprep.subr.bf16.mxu0 %v253
    %380 = vmatpush1.bf16.msra.mxu0 %v252
    %381 = vmatprep.subr.bf16.mxu0 %v257
    %382 = vmatpush1.bf16.msra.mxu0 %v256
    %383 = vmatprep.subr.bf16.mxu0 %v261
    %384 = vmatpush1.bf16.msra.mxu0 %v260
    %385 = vmatprep.subr.bf16.mxu0 %v265
    %386 = vmatpush1.bf16.msra.mxu0 %v264
    %387 = vmatprep.subr.bf16.mxu0 0
    %388 = vmatpush1.bf16.msra.mxu0 0
    %389 = vmatprep.subr.bf16.mxu0 0
    %390 = vmatpush1.bf16.msra.mxu0 0
    %391 = vmatprep.subr.bf16.mxu0 0
    %392 = vmatpush1.bf16.msra.mxu0 0
    %393 = vmatprep.subr.bf16.mxu0 0
    %394 = vmatpush1.bf16.msra.mxu0 0
    %395 = vmatprep.subr.bf16.mxu0 0
    %396 = vmatpush1.bf16.msra.mxu0 0
    %397 = vmatprep.subr.bf16.mxu0 0
    %398 = vmatpush1.bf16.msra.mxu0 0
    %399 = vmatprep.subr.bf16.mxu0 0
    %400 = vmatpush1.bf16.msra.mxu0 0
    %401 = vmatprep.subr.bf16.mxu0 0
    %402 = vmatpush1.bf16.msra.mxu0 0
    %403 = vmatprep.mubr.bf16.mxu0 0
    %404 = vmatmul.mubr.bf16.gmra.mrb[0].mxu0 %v130
    %v405 = vpop.f32.mrb[0].mxu0
    %v406 = vadd.f32 %v105, %v405
    %v407 = vpop.f32.mrb[0].mxu0
    %v408 = vadd.f32 %v109, %v407
    %v409 = vpop.f32.mrb[0].mxu0
    %v410 = vadd.f32 %v105, %v409
    %v411 = vpop.f32.mrb[0].mxu0
    %v412 = vadd.f32 %v109, %v411
    %413 = vmatprep.mubr.bf16.mxu0 0
    %414 = vmatmul.mubr.bf16.gmra.mrb[0].mxu0 %v131
    %v415 = vpop.f32.mrb[0].mxu0
    %v416 = vadd.f32 %v105, %v415
    %v417 = vpop.f32.mrb[0].mxu0
    %v418 = vadd.f32 %v109, %v417
    %v419 = vpop.f32.mrb[0].mxu0
    %v420 = vadd.f32 %v105, %v419
    %v421 = vpop.f32.mrb[0].mxu0
    %v422 = vadd.f32 %v109, %v421
    %423 = vmatprep.mubr.bf16.mxu0 0
    %424 = vmatmul.mubr.bf16.gmra.mrb[0].mxu0 %v132
    %v425 = vpop.f32.mrb[0].mxu0
    %v426 = vadd.f32 %v105, %v425
    %v427 = vpop.f32.mrb[0].mxu0
    %v428 = vadd.f32 %v109, %v427
    %v429 = vpop.f32.mrb[0].mxu0
    %v430 = vadd.f32 %v105, %v429
    %v431 = vpop.f32.mrb[0].mxu0
    %v432 = vadd.f32 %v109, %v431
    %433 = vmatprep.mubr.bf16.mxu0 0
    %434 = vmatmul.mubr.bf16.gmra.mrb[0].mxu0 %v133
    %v435 = vpop.f32.mrb[0].mxu0
    %v436 = vadd.f32 %v105, %v435
    %v437 = vpop.f32.mrb[0].mxu0
    %v438 = vadd.f32 %v109, %v437
    %v439 = vpop.f32.mrb[0].mxu0
    %v440 = vadd.f32 %v105, %v439
    %v441 = vpop.f32.mrb[0].mxu0
    %v442 = vadd.f32 %v109, %v441
    %443 = vdwg.mxu0
    %444 = vst [vmem:[#allocation4] sm:$0xff] %v333
    %445 = vst [vmem:[#allocation4 + $0x8] sm:$0xff] %v335
    %446 = vst [vmem:[#allocation4 + $0x10] sm:$0xff] %v406
    %447 = vst [vmem:[#allocation4 + $0x18] sm:$0xff] %v408
    %448 = vst [vmem:[#allocation4 + $0x20] sm:$0xff] %v337
    %449 = vst [vmem:[#allocation4 + $0x28] sm:$0xff] %v339
    %450 = vst [vmem:[#allocation4 + $0x30] sm:$0xff] %v410
    %451 = vst [vmem:[#allocation4 + $0x38] sm:$0xff] %v412
    %452 = vst [vmem:[#allocation4 + $0x40] sm:$0xff] %v343
    %453 = vst [vmem:[#allocation4 + $0x48] sm:$0xff] %v345
    %454 = vst [vmem:[#allocation4 + $0x50] sm:$0xff] %v416
    %455 = vst [vmem:[#allocation4 + $0x58] sm:$0xff] %v418
    %456 = vst [vmem:[#allocation4 + $0x60] sm:$0xff] %v347
    %457 = vst [vmem:[#allocation4 + $0x68] sm:$0xff] %v349
    %458 = vst [vmem:[#allocation4 + $0x70] sm:$0xff] %v420
    %459 = vst [vmem:[#allocation4 + $0x78] sm:$0xff] %v422
    %460 = vst [vmem:[#allocation4 + $0x80] sm:$0xff] %v353
    %461 = vst [vmem:[#allocation4 + $0x88] sm:$0xff] %v355
    %462 = vst [vmem:[#allocation4 + $0x90] sm:$0xff] %v426
    %463 = vst [vmem:[#allocation4 + $0x98] sm:$0xff] %v428
    %464 = vst [vmem:[#allocation4 + $0xa0] sm:$0xff] %v357
    %465 = vst [vmem:[#allocation4 + $0xa8] sm:$0xff] %v359
    %466 = vst [vmem:[#allocation4 + $0xb0] sm:$0xff] %v430
    %467 = vst [vmem:[#allocation4 + $0xb8] sm:$0xff] %v432
    %468 = vst [vmem:[#allocation4 + $0xc0] sm:$0xff] %v363
    %469 = vst [vmem:[#allocation4 + $0xc8] sm:$0xff] %v365
    %470 = vst [vmem:[#allocation4 + $0xd0] sm:$0xff] %v436
    %471 = vst [vmem:[#allocation4 + $0xd8] sm:$0xff] %v438
    %472 = vst [vmem:[#allocation4 + $0xe0] sm:$0xff] %v367
    %473 = vst [vmem:[#allocation4 + $0xe8] sm:$0xff] %v369
    %474 = vst [vmem:[#allocation4 + $0xf0] sm:$0xff] %v440
    %475 = vst [vmem:[#allocation4 + $0xf8] sm:$0xff] %v442
    %v476 = vld [vmem:[#allocation4] sm:$0xff]
    %v477 = vld [vmem:[#allocation4 + $0x8] sm:$0xff]
    %v478 = vld [vmem:[#allocation4 + $0x10] sm:$0xff]
    %v479 = vld [vmem:[#allocation4 + $0x18] sm:$0xff]
    %v480 = vld [vmem:[#allocation2] sm:$0xff]
    %v481 = vpack.c.bf16 %v480, %v480
    %v482 = vld [vmem:[#allocation7] sm:$0xff]
    %v483 = vld [vmem:[#allocation7 + $0x8] sm:$0xff]
    %v484 = vld [vmem:[#allocation7 + $0x10] sm:$0xff]
    %v485 = vld [vmem:[#allocation7 + $0x18] sm:$0xff]
    %v486 = vld [vmem:[#allocation7 + $0x20] sm:$0xff]
    %v487 = vld [vmem:[#allocation7 + $0x28] sm:$0xff]
    %v488 = vld [vmem:[#allocation7 + $0x30] sm:$0xff]
    %v489 = vld [vmem:[#allocation7 + $0x38] sm:$0xff]
    %v490 = vld [vmem:[#allocation7 + $0x40] sm:$0xff]
    %v491 = vld [vmem:[#allocation7 + $0x48] sm:$0xff]
    %v492 = vld [vmem:[#allocation7 + $0x50] sm:$0xff]
    %v493 = vld [vmem:[#allocation7 + $0x58] sm:$0xff]
    %v494 = vld [vmem:[#allocation7 + $0x60] sm:$0xff]
    %v495 = vld [vmem:[#allocation7 + $0x68] sm:$0xff]
    %v496 = vld [vmem:[#allocation7 + $0x70] sm:$0xff]
    %v497 = vld [vmem:[#allocation7 + $0x78] sm:$0xff]
    %v498 = vld [vmem:[#allocation7 + $0x80] sm:$0xff]
    %v499 = vld [vmem:[#allocation7 + $0x88] sm:$0xff]
    %v500 = vld [vmem:[#allocation7 + $0x90] sm:$0xff]
    %v501 = vld [vmem:[#allocation7 + $0x98] sm:$0xff]
    %v502 = vld [vmem:[#allocation7 + $0xa0] sm:$0xff]
    %v503 = vld [vmem:[#allocation7 + $0xa8] sm:$0xff]
    %v504 = vld [vmem:[#allocation7 + $0xb0] sm:$0xff]
    %v505 = vld [vmem:[#allocation7 + $0xb8] sm:$0xff]
    %v506 = vld [vmem:[#allocation7 + $0xc0] sm:$0xff]
    %v507 = vld [vmem:[#allocation7 + $0xc8] sm:$0xff]
    %v508 = vld [vmem:[#allocation7 + $0xd0] sm:$0xff]
    %v509 = vld [vmem:[#allocation7 + $0xd8] sm:$0xff]
    %v510 = vld [vmem:[#allocation7 + $0xe0] sm:$0xff]
    %v511 = vld [vmem:[#allocation7 + $0xe8] sm:$0xff]
    %v512 = vld [vmem:[#allocation7 + $0xf0] sm:$0xff]
    %v513 = vld [vmem:[#allocation7 + $0xf8] sm:$0xff]
    %v546 = vunpack.c.l.b16 %v482
    %v547 = vunpack.c.h.b16 %v482
    %v548 = vunpack.c.l.b16 %v483
    %v549 = vunpack.c.h.b16 %v483
    %v550 = vunpack.c.l.b16 %v484
    %v551 = vunpack.c.h.b16 %v484
    %v552 = vunpack.c.l.b16 %v485
    %v553 = vunpack.c.h.b16 %v485
    %v554 = vunpack.c.l.b16 %v486
    %v555 = vunpack.c.h.b16 %v486
    %v556 = vunpack.c.l.b16 %v487
    %v557 = vunpack.c.h.b16 %v487
    %v558 = vunpack.c.l.b16 %v488
    %v559 = vunpack.c.h.b16 %v488
    %v560 = vunpack.c.l.b16 %v489
    %v561 = vunpack.c.h.b16 %v489
    %v562 = vunpack.c.l.b16 %v490
    %v563 = vunpack.c.h.b16 %v490
    %v564 = vunpack.c.l.b16 %v491
    %v565 = vunpack.c.h.b16 %v491
    %v566 = vunpack.c.l.b16 %v492
    %v567 = vunpack.c.h.b16 %v492
    %v568 = vunpack.c.l.b16 %v493
    %v569 = vunpack.c.h.b16 %v493
    %v570 = vunpack.c.l.b16 %v494
    %v571 = vunpack.c.h.b16 %v494
    %v572 = vunpack.c.l.b16 %v495
    %v573 = vunpack.c.h.b16 %v495
    %v574 = vunpack.c.l.b16 %v496
    %v575 = vunpack.c.h.b16 %v496
    %v576 = vunpack.c.l.b16 %v497
    %v577 = vunpack.c.h.b16 %v497
    %v578 = vunpack.c.l.b16 %v498
    %v579 = vunpack.c.h.b16 %v498
    %v580 = vunpack.c.l.b16 %v499
    %v581 = vunpack.c.h.b16 %v499
    %v582 = vunpack.c.l.b16 %v500
    %v583 = vunpack.c.h.b16 %v500
    %v584 = vunpack.c.l.b16 %v501
    %v585 = vunpack.c.h.b16 %v501
    %v586 = vunpack.c.l.b16 %v502
    %v587 = vunpack.c.h.b16 %v502
    %v588 = vunpack.c.l.b16 %v503
    %v589 = vunpack.c.h.b16 %v503
    %v590 = vunpack.c.l.b16 %v504
    %v591 = vunpack.c.h.b16 %v504
    %v592 = vunpack.c.l.b16 %v505
    %v593 = vunpack.c.h.b16 %v505
    %v594 = vunpack.c.l.b16 %v506
    %v595 = vunpack.c.h.b16 %v506
    %v596 = vunpack.c.l.b16 %v507
    %v597 = vunpack.c.h.b16 %v507
    %v598 = vunpack.c.l.b16 %v508
    %v599 = vunpack.c.h.b16 %v508
    %v600 = vunpack.c.l.b16 %v509
    %v601 = vunpack.c.h.b16 %v509
    %v602 = vunpack.c.l.b16 %v510
    %v603 = vunpack.c.h.b16 %v510
    %v604 = vunpack.c.l.b16 %v511
    %v605 = vunpack.c.h.b16 %v511
    %v606 = vunpack.c.l.b16 %v512
    %v607 = vunpack.c.h.b16 %v512
    %v608 = vunpack.c.l.b16 %v513
    %v609 = vunpack.c.h.b16 %v513
    %v610 = vpack.c.b16 %v550, %v546
    %v611 = vpack.c.b16 %v551, %v547
    %v612 = vpack.c.b16 %v552, %v548
    %v613 = vpack.c.b16 %v553, %v549
    %v614 = vpack.c.b16 %v558, %v554
    %v615 = vpack.c.b16 %v559, %v555
    %v616 = vpack.c.b16 %v560, %v556
    %v617 = vpack.c.b16 %v561, %v557
    %v618 = vpack.c.b16 %v566, %v562
    %v619 = vpack.c.b16 %v567, %v563
    %v620 = vpack.c.b16 %v568, %v564
    %v621 = vpack.c.b16 %v569, %v565
    %v622 = vpack.c.b16 %v574, %v570
    %v623 = vpack.c.b16 %v575, %v571
    %v624 = vpack.c.b16 %v576, %v572
    %v625 = vpack.c.b16 %v577, %v573
    %v626 = vpack.c.b16 %v582, %v578
    %v627 = vpack.c.b16 %v583, %v579
    %v628 = vpack.c.b16 %v584, %v580
    %v629 = vpack.c.b16 %v585, %v581
    %v630 = vpack.c.b16 %v590, %v586
    %v631 = vpack.c.b16 %v591, %v587
    %v632 = vpack.c.b16 %v592, %v588
    %v633 = vpack.c.b16 %v593, %v589
    %v634 = vpack.c.b16 %v598, %v594
    %v635 = vpack.c.b16 %v599, %v595
    %v636 = vpack.c.b16 %v600, %v596
    %v637 = vpack.c.b16 %v601, %v597
    %v638 = vpack.c.b16 %v606, %v602
    %v639 = vpack.c.b16 %v607, %v603
    %v640 = vpack.c.b16 %v608, %v604
    %v641 = vpack.c.b16 %v609, %v605
    %674 = vmatprep.subr.bf16.mxu0 %v611
    %675 = vmatpush1.bf16.msra.mxu0 %v610
    %676 = vmatprep.subr.bf16.mxu0 %v615
    %677 = vmatpush1.bf16.msra.mxu0 %v614
    %678 = vmatprep.subr.bf16.mxu0 %v619
    %679 = vmatpush1.bf16.msra.mxu0 %v618
    %680 = vmatprep.subr.bf16.mxu0 %v623
    %681 = vmatpush1.bf16.msra.mxu0 %v622
    %682 = vmatprep.subr.bf16.mxu0 %v627
    %683 = vmatpush1.bf16.msra.mxu0 %v626
    %684 = vmatprep.subr.bf16.mxu0 %v631
    %685 = vmatpush1.bf16.msra.mxu0 %v630
    %686 = vmatprep.subr.bf16.mxu0 %v635
    %687 = vmatpush1.bf16.msra.mxu0 %v634
    %688 = vmatprep.subr.bf16.mxu0 %v639
    %689 = vmatpush1.bf16.msra.mxu0 %v638
    %690 = vmatprep.subr.bf16.mxu0 0
    %691 = vmatpush1.bf16.msra.mxu0 0
    %692 = vmatprep.subr.bf16.mxu0 0
    %693 = vmatpush1.bf16.msra.mxu0 0
    %694 = vmatprep.subr.bf16.mxu0 0
    %695 = vmatpush1.bf16.msra.mxu0 0
    %696 = vmatprep.subr.bf16.mxu0 0
    %697 = vmatpush1.bf16.msra.mxu0 0
    %698 = vmatprep.subr.bf16.mxu0 0
    %699 = vmatpush1.bf16.msra.mxu0 0
    %700 = vmatprep.subr.bf16.mxu0 0
    %701 = vmatpush1.bf16.msra.mxu0 0
    %702 = vmatprep.subr.bf16.mxu0 0
    %703 = vmatpush1.bf16.msra.mxu0 0
    %704 = vmatprep.subr.bf16.mxu0 0
    %705 = vmatpush1.bf16.msra.mxu0 0
    %706 = vmatprep.mubr.bf16.mxu0 0
    %707 = vmatmul.mubr.bf16.gmra.mrb[0].mxu0 %v481
    %v708 = vpop.f32.mrb[0].mxu0
    %v709 = vadd.f32 0.0, %v708
    %v710 = vpop.f32.mrb[0].mxu0
    %v711 = vadd.f32 0.0, %v710
    %v712 = vpop.f32.mrb[0].mxu0
    %v713 = vpop.f32.mrb[0].mxu0
    %714 = vdwg.mxu0
    %715 = vmatprep.subr.bf16.mxu0 %v613
    %716 = vmatpush1.bf16.msra.mxu0 %v612
    %717 = vmatprep.subr.bf16.mxu0 %v617
    %718 = vmatpush1.bf16.msra.mxu0 %v616
    %719 = vmatprep.subr.bf16.mxu0 %v621
    %720 = vmatpush1.bf16.msra.mxu0 %v620
    %721 = vmatprep.subr.bf16.mxu0 %v625
    %722 = vmatpush1.bf16.msra.mxu0 %v624
    %723 = vmatprep.subr.bf16.mxu0 %v629
    %724 = vmatpush1.bf16.msra.mxu0 %v628
    %725 = vmatprep.subr.bf16.mxu0 %v633
    %726 = vmatpush1.bf16.msra.mxu0 %v632
    %727 = vmatprep.subr.bf16.mxu0 %v637
    %728 = vmatpush1.bf16.msra.mxu0 %v636
    %729 = vmatprep.subr.bf16.mxu0 %v641
    %730 = vmatpush1.bf16.msra.mxu0 %v640
    %731 = vmatprep.subr.bf16.mxu0 0
    %732 = vmatpush1.bf16.msra.mxu0 0
    %733 = vmatprep.subr.bf16.mxu0 0
    %734 = vmatpush1.bf16.msra.mxu0 0
    %735 = vmatprep.subr.bf16.mxu0 0
    %736 = vmatpush1.bf16.msra.mxu0 0
    %737 = vmatprep.subr.bf16.mxu0 0
    %738 = vmatpush1.bf16.msra.mxu0 0
    %739 = vmatprep.subr.bf16.mxu0 0
    %740 = vmatpush1.bf16.msra.mxu0 0
    %741 = vmatprep.subr.bf16.mxu0 0
    %742 = vmatpush1.bf16.msra.mxu0 0
    %743 = vmatprep.subr.bf16.mxu0 0
    %744 = vmatpush1.bf16.msra.mxu0 0
    %745 = vmatprep.subr.bf16.mxu0 0
    %746 = vmatpush1.bf16.msra.mxu0 0
    %747 = vmatprep.mubr.bf16.mxu0 0
    %748 = vmatmul.mubr.bf16.gmra.mrb[0].mxu0 %v481
    %v749 = vpop.f32.mrb[0].mxu0
    %v750 = vadd.f32 0.0, %v749
    %v751 = vpop.f32.mrb[0].mxu0
    %v752 = vadd.f32 0.0, %v751
    %v753 = vpop.f32.mrb[0].mxu0
    %v754 = vpop.f32.mrb[0].mxu0
    %755 = vdwg.mxu0
    %v756 = vadd.f32 %v476, %v709
    %v757 = vadd.f32 %v477, %v711
    %v758 = vadd.f32 %v478, %v750
    %v759 = vadd.f32 %v479, %v752
    %v760 = vxor.u32 %v756, 2147483648
    %v761 = vmul.f32 %v760, 1.442695
    %v762 = vpow.pop %v761
    %v763 = vadd.f32 %v762, 1.0
    %v764 = vrcp.pop %v763
    %v765 = vmul.f32 1.0, %v764
    %v766 = vxor.u32 %v757, 2147483648
    %v767 = vmul.f32 %v766, 1.442695
    %v768 = vpow.pop %v767
    %v769 = vadd.f32 %v768, 1.0
    %v770 = vrcp.pop %v769
    %v771 = vmul.f32 1.0, %v770
    %v772 = vtanh.pop %v758
    %v773 = vxor.u32 %v759, 2147483648
    %v774 = vmul.f32 %v773, 1.442695
    %v775 = vpow.pop %v774
    %v776 = vadd.f32 %v775, 1.0
    %v777 = vrcp.pop %v776
    %v778 = vmul.f32 1.0, %v777
    %v779 = vld [vmem:[#allocation3] sm:$0xff]
    %v780 = vmul.f32 %v771, %v779
    %v781 = vmul.f32 %v765, %v772
    %v782 = vadd.f32 %v780, %v781
    %v783 = vtanh.pop %v782
    %v784 = vmul.f32 %v778, %v783
    %785 = vst [vmem:[#allocation3] sm:$0xff] %v782
    %786 = vst [vmem:[#allocation2] sm:$0xff] %v784
    %v787 = vpack.c.bf16 %v784, %v784
    %788 = vst [vmem:[%s4] sm:$0xf] %v787
    %s789 = scalar_lea.vmem [#allocation4], 32
    %v790 = vld [vmem:[%s789] sm:$0xff]
    %v791 = vld [vmem:[%s789 + $0x8] sm:$0xff]
    %v792 = vld [vmem:[%s789 + $0x10] sm:$0xff]
    %v793 = vld [vmem:[%s789 + $0x18] sm:$0xff]
    %v794 = vld [vmem:[#allocation2] sm:$0xff]
    %v795 = vpack.c.bf16 %v794, %v794
    %v796 = vld [vmem:[#allocation7] sm:$0xff]
    %v797 = vld [vmem:[#allocation7 + $0x8] sm:$0xff]
    %v798 = vld [vmem:[#allocation7 + $0x10] sm:$0xff]
    %v799 = vld [vmem:[#allocation7 + $0x18] sm:$0xff]
    %v800 = vld [vmem:[#allocation7 + $0x20] sm:$0xff]
    %v801 = vld [vmem:[#allocation7 + $0x28] sm:$0xff]
    %v802 = vld [vmem:[#allocation7 + $0x30] sm:$0xff]
    %v803 = vld [vmem:[#allocation7 + $0x38] sm:$0xff]
    %v804 = vld [vmem:[#allocation7 + $0x40] sm:$0xff]
    %v805 = vld [vmem:[#allocation7 + $0x48] sm:$0xff]
    %v806 = vld [vmem:[#allocation7 + $0x50] sm:$0xff]
    %v807 = vld [vmem:[#allocation7 + $0x58] sm:$0xff]
    %v808 = vld [vmem:[#allocation7 + $0x60] sm:$0xff]
    %v809 = vld [vmem:[#allocation7 + $0x68] sm:$0xff]
    %v810 = vld [vmem:[#allocation7 + $0x70] sm:$0xff]
    %v811 = vld [vmem:[#allocation7 + $0x78] sm:$0xff]
    %v812 = vld [vmem:[#allocation7 + $0x80] sm:$0xff]
    %v813 = vld [vmem:[#allocation7 + $0x88] sm:$0xff]
    %v814 = vld [vmem:[#allocation7 + $0x90] sm:$0xff]
    %v815 = vld [vmem:[#allocation7 + $0x98] sm:$0xff]
    %v816 = vld [vmem:[#allocation7 + $0xa0] sm:$0xff]
    %v817 = vld [vmem:[#allocation7 + $0xa8] sm:$0xff]
    %v818 = vld [vmem:[#allocation7 + $0xb0] sm:$0xff]
    %v819 = vld [vmem:[#allocation7 + $0xb8] sm:$0xff]
    %v820 = vld [vmem:[#allocation7 + $0xc0] sm:$0xff]
    %v821 = vld [vmem:[#allocation7 + $0xc8] sm:$0xff]
    %v822 = vld [vmem:[#allocation7 + $0xd0] sm:$0xff]
    %v823 = vld [vmem:[#allocation7 + $0xd8] sm:$0xff]
    %v824 = vld [vmem:[#allocation7 + $0xe0] sm:$0xff]
    %v825 = vld [vmem:[#allocation7 + $0xe8] sm:$0xff]
    %v826 = vld [vmem:[#allocation7 + $0xf0] sm:$0xff]
    %v827 = vld [vmem:[#allocation7 + $0xf8] sm:$0xff]
    %v860 = vunpack.c.l.b16 %v796
    %v861 = vunpack.c.h.b16 %v796
    %v862 = vunpack.c.l.b16 %v797
    %v863 = vunpack.c.h.b16 %v797
    %v864 = vunpack.c.l.b16 %v798
    %v865 = vunpack.c.h.b16 %v798
    %v866 = vunpack.c.l.b16 %v799
    %v867 = vunpack.c.h.b16 %v799
    %v868 = vunpack.c.l.b16 %v800
    %v869 = vunpack.c.h.b16 %v800
    %v870 = vunpack.c.l.b16 %v801
    %v871 = vunpack.c.h.b16 %v801
    %v872 = vunpack.c.l.b16 %v802
    %v873 = vunpack.c.h.b16 %v802
    %v874 = vunpack.c.l.b16 %v803
    %v875 = vunpack.c.h.b16 %v803
    %v876 = vunpack.c.l.b16 %v804
    %v877 = vunpack.c.h.b16 %v804
    %v878 = vunpack.c.l.b16 %v805
    %v879 = vunpack.c.h.b16 %v805
    %v880 = vunpack.c.l.b16 %v806
    %v881 = vunpack.c.h.b16 %v806
    %v882 = vunpack.c.l.b16 %v807
    %v883 = vunpack.c.h.b16 %v807
    %v884 = vunpack.c.l.b16 %v808
    %v885 = vunpack.c.h.b16 %v808
    %v886 = vunpack.c.l.b16 %v809
    %v887 = vunpack.c.h.b16 %v809
    %v888 = vunpack.c.l.b16 %v810
    %v889 = vunpack.c.h.b16 %v810
    %v890 = vunpack.c.l.b16 %v811
    %v891 = vunpack.c.h.b16 %v811
    %v892 = vunpack.c.l.b16 %v812
    %v893 = vunpack.c.h.b16 %v812
    %v894 = vunpack.c.l.b16 %v813
    %v895 = vunpack.c.h.b16 %v813
    %v896 = vunpack.c.l.b16 %v814
    %v897 = vunpack.c.h.b16 %v814
    %v898 = vunpack.c.l.b16 %v815
    %v899 = vunpack.c.h.b16 %v815
    %v900 = vunpack.c.l.b16 %v816
    %v901 = vunpack.c.h.b16 %v816
    %v902 = vunpack.c.l.b16 %v817
    %v903 = vunpack.c.h.b16 %v817
    %v904 = vunpack.c.l.b16 %v818
    %v905 = vunpack.c.h.b16 %v818
    %v906 = vunpack.c.l.b16 %v819
    %v907 = vunpack.c.h.b16 %v819
    %v908 = vunpack.c.l.b16 %v820
    %v909 = vunpack.c.h.b16 %v820
    %v910 = vunpack.c.l.b16 %v821
    %v911 = vunpack.c.h.b16 %v821
    %v912 = vunpack.c.l.b16 %v822
    %v913 = vunpack.c.h.b16 %v822
    %v914 = vunpack.c.l.b16 %v823
    %v915 = vunpack.c.h.b16 %v823
    %v916 = vunpack.c.l.b16 %v824
    %v917 = vunpack.c.h.b16 %v824
    %v918 = vunpack.c.l.b16 %v825
    %v919 = vunpack.c.h.b16 %v825
    %v920 = vunpack.c.l.b16 %v826
    %v921 = vunpack.c.h.b16 %v826
    %v922 = vunpack.c.l.b16 %v827
    %v923 = vunpack.c.h.b16 %v827
    %v924 = vpack.c.b16 %v864, %v860
    %v925 = vpack.c.b16 %v865, %v861
    %v926 = vpack.c.b16 %v866, %v862
    %v927 = vpack.c.b16 %v867, %v863
    %v928 = vpack.c.b16 %v872, %v868
    %v929 = vpack.c.b16 %v873, %v869
    %v930 = vpack.c.b16 %v874, %v870
    %v931 = vpack.c.b16 %v875, %v871
    %v932 = vpack.c.b16 %v880, %v876
    %v933 = vpack.c.b16 %v881, %v877
    %v934 = vpack.c.b16 %v882, %v878
    %v935 = vpack.c.b16 %v883, %v879
    %v936 = vpack.c.b16 %v888, %v884
    %v937 = vpack.c.b16 %v889, %v885
    %v938 = vpack.c.b16 %v890, %v886
    %v939 = vpack.c.b16 %v891, %v887
    %v940 = vpack.c.b16 %v896, %v892
    %v941 = vpack.c.b16 %v897, %v893
    %v942 = vpack.c.b16 %v898, %v894
    %v943 = vpack.c.b16 %v899, %v895
    %v944 = vpack.c.b16 %v904, %v900
    %v945 = vpack.c.b16 %v905, %v901
    %v946 = vpack.c.b16 %v906, %v902
    %v947 = vpack.c.b16 %v907, %v903
    %v948 = vpack.c.b16 %v912, %v908
    %v949 = vpack.c.b16 %v913, %v909
    %v950 = vpack.c.b16 %v914, %v910
    %v951 = vpack.c.b16 %v915, %v911
    %v952 = vpack.c.b16 %v920, %v916
    %v953 = vpack.c.b16 %v921, %v917
    %v954 = vpack.c.b16 %v922, %v918
    %v955 = vpack.c.b16 %v923, %v919
    %988 = vmatprep.subr.bf16.mxu0 %v925
    %989 = vmatpush1.bf16.msra.mxu0 %v924
    %990 = vmatprep.subr.bf16.mxu0 %v929
    %991 = vmatpush1.bf16.msra.mxu0 %v928
    %992 = vmatprep.subr.bf16.mxu0 %v933
    %993 = vmatpush1.bf16.msra.mxu0 %v932
    %994 = vmatprep.subr.bf16.mxu0 %v937
    %995 = vmatpush1.bf16.msra.mxu0 %v936
    %996 = vmatprep.subr.bf16.mxu0 %v941
    %997 = vmatpush1.bf16.msra.mxu0 %v940
    %998 = vmatprep.subr.bf16.mxu0 %v945
    %999 = vmatpush1.bf16.msra.mxu0 %v944
    %1000 = vmatprep.subr.bf16.mxu0 %v949
    %1001 = vmatpush1.bf16.msra.mxu0 %v948
    %1002 = vmatprep.subr.bf16.mxu0 %v953
    %1003 = vmatpush1.bf16.msra.mxu0 %v952
    %1004 = vmatprep.subr.bf16.mxu0 0
    %1005 = vmatpush1.bf16.msra.mxu0 0
    %1006 = vmatprep.subr.bf16.mxu0 0
    %1007 = vmatpush1.bf16.msra.mxu0 0
    %1008 = vmatprep.subr.bf16.mxu0 0
    %1009 = vmatpush1.bf16.msra.mxu0 0
    %1010 = vmatprep.subr.bf16.mxu0 0
    %1011 = vmatpush1.bf16.msra.mxu0 0
    %1012 = vmatprep.subr.bf16.mxu0 0
    %1013 = vmatpush1.bf16.msra.mxu0 0
    %1014 = vmatprep.subr.bf16.mxu0 0
    %1015 = vmatpush1.bf16.msra.mxu0 0
    %1016 = vmatprep.subr.bf16.mxu0 0
    %1017 = vmatpush1.bf16.msra.mxu0 0
    %1018 = vmatprep.subr.bf16.mxu0 0
    %1019 = vmatpush1.bf16.msra.mxu0 0
    %1020 = vmatprep.mubr.bf16.mxu0 0
    %1021 = vmatmul.mubr.bf16.gmra.mrb[0].mxu0 %v795
    %v1022 = vpop.f32.mrb[0].mxu0
    %v1023 = vadd.f32 0.0, %v1022
    %v1024 = vpop.f32.mrb[0].mxu0
    %v1025 = vadd.f32 0.0, %v1024
    %v1026 = vpop.f32.mrb[0].mxu0
    %v1027 = vpop.f32.mrb[0].mxu0
    %1028 = vdwg.mxu0
    %1029 = vmatprep.subr.bf16.mxu0 %v927
    %1030 = vmatpush1.bf16.msra.mxu0 %v926
    %1031 = vmatprep.subr.bf16.mxu0 %v931
    %1032 = vmatpush1.bf16.msra.mxu0 %v930
    %1033 = vmatprep.subr.bf16.mxu0 %v935
    %1034 = vmatpush1.bf16.msra.mxu0 %v934
    %1035 = vmatprep.subr.bf16.mxu0 %v939
    %1036 = vmatpush1.bf16.msra.mxu0 %v938
    %1037 = vmatprep.subr.bf16.mxu0 %v943
    %1038 = vmatpush1.bf16.msra.mxu0 %v942
    %1039 = vmatprep.subr.bf16.mxu0 %v947
    %1040 = vmatpush1.bf16.msra.mxu0 %v946
    %1041 = vmatprep.subr.bf16.mxu0 %v951
    %1042 = vmatpush1.bf16.msra.mxu0 %v950
    %1043 = vmatprep.subr.bf16.mxu0 %v955
    %1044 = vmatpush1.bf16.msra.mxu0 %v954
    %1045 = vmatprep.subr.bf16.mxu0 0
    %1046 = vmatpush1.bf16.msra.mxu0 0
    %1047 = vmatprep.subr.bf16.mxu0 0
    %1048 = vmatpush1.bf16.msra.mxu0 0
    %1049 = vmatprep.subr.bf16.mxu0 0
    %1050 = vmatpush1.bf16.msra.mxu0 0
    %1051 = vmatprep.subr.bf16.mxu0 0
    %1052 = vmatpush1.bf16.msra.mxu0 0
    %1053 = vmatprep.subr.bf16.mxu0 0
    %1054 = vmatpush1.bf16.msra.mxu0 0
    %1055 = vmatprep.subr.bf16.mxu0 0
    %1056 = vmatpush1.bf16.msra.mxu0 0
    %1057 = vmatprep.subr.bf16.mxu0 0
    %1058 = vmatpush1.bf16.msra.mxu0 0
    %1059 = vmatprep.subr.bf16.mxu0 0
    %1060 = vmatpush1.bf16.msra.mxu0 0
    %1061 = vmatprep.mubr.bf16.mxu0 0
    %1062 = vmatmul.mubr.bf16.gmra.mrb[0].mxu0 %v795
    %v1063 = vpop.f32.mrb[0].mxu0
    %v1064 = vadd.f32 0.0, %v1063
    %v1065 = vpop.f32.mrb[0].mxu0
    %v1066 = vadd.f32 0.0, %v1065
    %v1067 = vpop.f32.mrb[0].mxu0
    %v1068 = vpop.f32.mrb[0].mxu0
    %1069 = vdwg.mxu0
    %v1070 = vadd.f32 %v790, %v1023
    %v1071 = vadd.f32 %v791, %v1025
    %v1072 = vadd.f32 %v792, %v1064
    %v1073 = vadd.f32 %v793, %v1066
    %v1074 = vxor.u32 %v1070, 2147483648
    %v1075 = vmul.f32 %v1074, 1.442695
    %v1076 = vpow.pop %v1075
    %v1077 = vadd.f32 %v1076, 1.0
    %v1078 = vrcp.pop %v1077
    %v1079 = vmul.f32 1.0, %v1078
    %v1080 = vxor.u32 %v1071, 2147483648
    %v1081 = vmul.f32 %v1080, 1.442695
    %v1082 = vpow.pop %v1081
    %v1083 = vadd.f32 %v1082, 1.0
    %v1084 = vrcp.pop %v1083
    %v1085 = vmul.f32 1.0, %v1084
    %v1086 = vtanh.pop %v1072
    %v1087 = vxor.u32 %v1073, 2147483648
    %v1088 = vmul.f32 %v1087, 1.442695
    %v1089 = vpow.pop %v1088
    %v1090 = vadd.f32 %v1089, 1.0
    %v1091 = vrcp.pop %v1090
    %v1092 = vmul.f32 1.0, %v1091
    %v1093 = vld [vmem:[#allocation3] sm:$0xff]
    %v1094 = vmul.f32 %v1085, %v1093
    %v1095 = vmul.f32 %v1079, %v1086
    %v1096 = vadd.f32 %v1094, %v1095
    %v1097 = vtanh.pop %v1096
    %v1098 = vmul.f32 %v1092, %v1097
    %1099 = vst [vmem:[#allocation3] sm:$0xff] %v1096
    %1100 = vst [vmem:[#allocation2] sm:$0xff] %v1098
    %v1101 = vpack.c.bf16 %v1098, %v1098
    %s1102 = scalar_lea.vmem %s4, 4
    %1103 = vst [vmem:[%s1102] sm:$0xf] %v1101
    %s1104 = scalar_lea.vmem [#allocation4], 64
    %v1105 = vld [vmem:[%s1104] sm:$0xff]
    %v1106 = vld [vmem:[%s1104 + $0x8] sm:$0xff]
    %v1107 = vld [vmem:[%s1104 + $0x10] sm:$0xff]
    %v1108 = vld [vmem:[%s1104 + $0x18] sm:$0xff]
    %v1109 = vld [vmem:[#allocation2] sm:$0xff]
    %v1110 = vpack.c.bf16 %v1109, %v1109
    %v1111 = vld [vmem:[#allocation7] sm:$0xff]
    %v1112 = vld [vmem:[#allocation7 + $0x8] sm:$0xff]
    %v1113 = vld [vmem:[#allocation7 + $0x10] sm:$0xff]
    %v1114 = vld [vmem:[#allocation7 + $0x18] sm:$0xff]
    %v1115 = vld [vmem:[#allocation7 + $0x20] sm:$0xff]
    %v1116 = vld [vmem:[#allocation7 + $0x28] sm:$0xff]
    %v1117 = vld [vmem:[#allocation7 + $0x30] sm:$0xff]
    %v1118 = vld [vmem:[#allocation7 + $0x38] sm:$0xff]
    %v1119 = vld [vmem:[#allocation7 + $0x40] sm:$0xff]
    %v1120 = vld [vmem:[#allocation7 + $0x48] sm:$0xff]
    %v1121 = vld [vmem:[#allocation7 + $0x50] sm:$0xff]
    %v1122 = vld [vmem:[#allocation7 + $0x58] sm:$0xff]
    %v1123 = vld [vmem:[#allocation7 + $0x60] sm:$0xff]
    %v1124 = vld [vmem:[#allocation7 + $0x68] sm:$0xff]
    %v1125 = vld [vmem:[#allocation7 + $0x70] sm:$0xff]
    %v1126 = vld [vmem:[#allocation7 + $0x78] sm:$0xff]
    %v1127 = vld [vmem:[#allocation7 + $0x80] sm:$0xff]
    %v1128 = vld [vmem:[#allocation7 + $0x88] sm:$0xff]
    %v1129 = vld [vmem:[#allocation7 + $0x90] sm:$0xff]
    %v1130 = vld [vmem:[#allocation7 + $0x98] sm:$0xff]
    %v1131 = vld [vmem:[#allocation7 + $0xa0] sm:$0xff]
    %v1132 = vld [vmem:[#allocation7 + $0xa8] sm:$0xff]
    %v1133 = vld [vmem:[#allocation7 + $0xb0] sm:$0xff]
    %v1134 = vld [vmem:[#allocation7 + $0xb8] sm:$0xff]
    %v1135 = vld [vmem:[#allocation7 + $0xc0] sm:$0xff]
    %v1136 = vld [vmem:[#allocation7 + $0xc8] sm:$0xff]
    %v1137 = vld [vmem:[#allocation7 + $0xd0] sm:$0xff]
    %v1138 = vld [vmem:[#allocation7 + $0xd8] sm:$0xff]
    %v1139 = vld [vmem:[#allocation7 + $0xe0] sm:$0xff]
    %v1140 = vld [vmem:[#allocation7 + $0xe8] sm:$0xff]
    %v1141 = vld [vmem:[#allocation7 + $0xf0] sm:$0xff]
    %v1142 = vld [vmem:[#allocation7 + $0xf8] sm:$0xff]
    %v1175 = vunpack.c.l.b16 %v1111
    %v1176 = vunpack.c.h.b16 %v1111
    %v1177 = vunpack.c.l.b16 %v1112
    %v1178 = vunpack.c.h.b16 %v1112
    %v1179 = vunpack.c.l.b16 %v1113
    %v1180 = vunpack.c.h.b16 %v1113
    %v1181 = vunpack.c.l.b16 %v1114
    %v1182 = vunpack.c.h.b16 %v1114
    %v1183 = vunpack.c.l.b16 %v1115
    %v1184 = vunpack.c.h.b16 %v1115
    %v1185 = vunpack.c.l.b16 %v1116
    %v1186 = vunpack.c.h.b16 %v1116
    %v1187 = vunpack.c.l.b16 %v1117
    %v1188 = vunpack.c.h.b16 %v1117
    %v1189 = vunpack.c.l.b16 %v1118
    %v1190 = vunpack.c.h.b16 %v1118
    %v1191 = vunpack.c.l.b16 %v1119
    %v1192 = vunpack.c.h.b16 %v1119
    %v1193 = vunpack.c.l.b16 %v1120
    %v1194 = vunpack.c.h.b16 %v1120
    %v1195 = vunpack.c.l.b16 %v1121
    %v1196 = vunpack.c.h.b16 %v1121
    %v1197 = vunpack.c.l.b16 %v1122
    %v1198 = vunpack.c.h.b16 %v1122
    %v1199 = vunpack.c.l.b16 %v1123
    %v1200 = vunpack.c.h.b16 %v1123
    %v1201 = vunpack.c.l.b16 %v1124
    %v1202 = vunpack.c.h.b16 %v1124
    %v1203 = vunpack.c.l.b16 %v1125
    %v1204 = vunpack.c.h.b16 %v1125
    %v1205 = vunpack.c.l.b16 %v1126
    %v1206 = vunpack.c.h.b16 %v1126
    %v1207 = vunpack.c.l.b16 %v1127
    %v1208 = vunpack.c.h.b16 %v1127
    %v1209 = vunpack.c.l.b16 %v1128
    %v1210 = vunpack.c.h.b16 %v1128
    %v1211 = vunpack.c.l.b16 %v1129
    %v1212 = vunpack.c.h.b16 %v1129
    %v1213 = vunpack.c.l.b16 %v1130
    %v1214 = vunpack.c.h.b16 %v1130
    %v1215 = vunpack.c.l.b16 %v1131
    %v1216 = vunpack.c.h.b16 %v1131
    %v1217 = vunpack.c.l.b16 %v1132
    %v1218 = vunpack.c.h.b16 %v1132
    %v1219 = vunpack.c.l.b16 %v1133
    %v1220 = vunpack.c.h.b16 %v1133
    %v1221 = vunpack.c.l.b16 %v1134
    %v1222 = vunpack.c.h.b16 %v1134
    %v1223 = vunpack.c.l.b16 %v1135
    %v1224 = vunpack.c.h.b16 %v1135
    %v1225 = vunpack.c.l.b16 %v1136
    %v1226 = vunpack.c.h.b16 %v1136
    %v1227 = vunpack.c.l.b16 %v1137
    %v1228 = vunpack.c.h.b16 %v1137
    %v1229 = vunpack.c.l.b16 %v1138
    %v1230 = vunpack.c.h.b16 %v1138
    %v1231 = vunpack.c.l.b16 %v1139
    %v1232 = vunpack.c.h.b16 %v1139
    %v1233 = vunpack.c.l.b16 %v1140
    %v1234 = vunpack.c.h.b16 %v1140
    %v1235 = vunpack.c.l.b16 %v1141
    %v1236 = vunpack.c.h.b16 %v1141
    %v1237 = vunpack.c.l.b16 %v1142
    %v1238 = vunpack.c.h.b16 %v1142
    %v1239 = vpack.c.b16 %v1179, %v1175
    %v1240 = vpack.c.b16 %v1180, %v1176
    %v1241 = vpack.c.b16 %v1181, %v1177
    %v1242 = vpack.c.b16 %v1182, %v1178
    %v1243 = vpack.c.b16 %v1187, %v1183
    %v1244 = vpack.c.b16 %v1188, %v1184
    %v1245 = vpack.c.b16 %v1189, %v1185
    %v1246 = vpack.c.b16 %v1190, %v1186
    %v1247 = vpack.c.b16 %v1195, %v1191
    %v1248 = vpack.c.b16 %v1196, %v1192
    %v1249 = vpack.c.b16 %v1197, %v1193
    %v1250 = vpack.c.b16 %v1198, %v1194
    %v1251 = vpack.c.b16 %v1203, %v1199
    %v1252 = vpack.c.b16 %v1204, %v1200
    %v1253 = vpack.c.b16 %v1205, %v1201
    %v1254 = vpack.c.b16 %v1206, %v1202
    %v1255 = vpack.c.b16 %v1211, %v1207
    %v1256 = vpack.c.b16 %v1212, %v1208
    %v1257 = vpack.c.b16 %v1213, %v1209
    %v1258 = vpack.c.b16 %v1214, %v1210
    %v1259 = vpack.c.b16 %v1219, %v1215
    %v1260 = vpack.c.b16 %v1220, %v1216
    %v1261 = vpack.c.b16 %v1221, %v1217
    %v1262 = vpack.c.b16 %v1222, %v1218
    %v1263 = vpack.c.b16 %v1227, %v1223
    %v1264 = vpack.c.b16 %v1228, %v1224
    %v1265 = vpack.c.b16 %v1229, %v1225
    %v1266 = vpack.c.b16 %v1230, %v1226
    %v1267 = vpack.c.b16 %v1235, %v1231
    %v1268 = vpack.c.b16 %v1236, %v1232
    %v1269 = vpack.c.b16 %v1237, %v1233
    %v1270 = vpack.c.b16 %v1238, %v1234
    %1303 = vmatprep.subr.bf16.mxu0 %v1240
    %1304 = vmatpush1.bf16.msra.mxu0 %v1239
    %1305 = vmatprep.subr.bf16.mxu0 %v1244
    %1306 = vmatpush1.bf16.msra.mxu0 %v1243
    %1307 = vmatprep.subr.bf16.mxu0 %v1248
    %1308 = vmatpush1.bf16.msra.mxu0 %v1247
    %1309 = vmatprep.subr.bf16.mxu0 %v1252
    %1310 = vmatpush1.bf16.msra.mxu0 %v1251
    %1311 = vmatprep.subr.bf16.mxu0 %v1256
    %1312 = vmatpush1.bf16.msra.mxu0 %v1255
    %1313 = vmatprep.subr.bf16.mxu0 %v1260
    %1314 = vmatpush1.bf16.msra.mxu0 %v1259
    %1315 = vmatprep.subr.bf16.mxu0 %v1264
    %1316 = vmatpush1.bf16.msra.mxu0 %v1263
    %1317 = vmatprep.subr.bf16.mxu0 %v1268
    %1318 = vmatpush1.bf16.msra.mxu0 %v1267
    %1319 = vmatprep.subr.bf16.mxu0 0
    %1320 = vmatpush1.bf16.msra.mxu0 0
    %1321 = vmatprep.subr.bf16.mxu0 0
    %1322 = vmatpush1.bf16.msra.mxu0 0
    %1323 = vmatprep.subr.bf16.mxu0 0
    %1324 = vmatpush1.bf16.msra.mxu0 0
    %1325 = vmatprep.subr.bf16.mxu0 0
    %1326 = vmatpush1.bf16.msra.mxu0 0
    %1327 = vmatprep.subr.bf16.mxu0 0
    %1328 = vmatpush1.bf16.msra.mxu0 0
    %1329 = vmatprep.subr.bf16.mxu0 0
    %1330 = vmatpush1.bf16.msra.mxu0 0
    %1331 = vmatprep.subr.bf16.mxu0 0
    %1332 = vmatpush1.bf16.msra.mxu0 0
    %1333 = vmatprep.subr.bf16.mxu0 0
    %1334 = vmatpush1.bf16.msra.mxu0 0
    %1335 = vmatprep.mubr.bf16.mxu0 0
    %1336 = vmatmul.mubr.bf16.gmra.mrb[0].mxu0 %v1110
    %v1337 = vpop.f32.mrb[0].mxu0
    %v1338 = vadd.f32 0.0, %v1337
    %v1339 = vpop.f32.mrb[0].mxu0
    %v1340 = vadd.f32 0.0, %v1339
    %v1341 = vpop.f32.mrb[0].mxu0
    %v1342 = vpop.f32.mrb[0].mxu0
    %1343 = vdwg.mxu0
    %1344 = vmatprep.subr.bf16.mxu0 %v1242
    %1345 = vmatpush1.bf16.msra.mxu0 %v1241
    %1346 = vmatprep.subr.bf16.mxu0 %v1246
    %1347 = vmatpush1.bf16.msra.mxu0 %v1245
    %1348 = vmatprep.subr.bf16.mxu0 %v1250
    %1349 = vmatpush1.bf16.msra.mxu0 %v1249
    %1350 = vmatprep.subr.bf16.mxu0 %v1254
    %1351 = vmatpush1.bf16.msra.mxu0 %v1253
    %1352 = vmatprep.subr.bf16.mxu0 %v1258
    %1353 = vmatpush1.bf16.msra.mxu0 %v1257
    %1354 = vmatprep.subr.bf16.mxu0 %v1262
    %1355 = vmatpush1.bf16.msra.mxu0 %v1261
    %1356 = vmatprep.subr.bf16.mxu0 %v1266
    %1357 = vmatpush1.bf16.msra.mxu0 %v1265
    %1358 = vmatprep.subr.bf16.mxu0 %v1270
    %1359 = vmatpush1.bf16.msra.mxu0 %v1269
    %1360 = vmatprep.subr.bf16.mxu0 0
    %1361 = vmatpush1.bf16.msra.mxu0 0
    %1362 = vmatprep.subr.bf16.mxu0 0
    %1363 = vmatpush1.bf16.msra.mxu0 0
    %1364 = vmatprep.subr.bf16.mxu0 0
    %1365 = vmatpush1.bf16.msra.mxu0 0
    %1366 = vmatprep.subr.bf16.mxu0 0
    %1367 = vmatpush1.bf16.msra.mxu0 0
    %1368 = vmatprep.subr.bf16.mxu0 0
    %1369 = vmatpush1.bf16.msra.mxu0 0
    %1370 = vmatprep.subr.bf16.mxu0 0
    %1371 = vmatpush1.bf16.msra.mxu0 0
    %1372 = vmatprep.subr.bf16.mxu0 0
    %1373 = vmatpush1.bf16.msra.mxu0 0
    %1374 = vmatprep.subr.bf16.mxu0 0
    %1375 = vmatpush1.bf16.msra.mxu0 0
    %1376 = vmatprep.mubr.bf16.mxu0 0
    %1377 = vmatmul.mubr.bf16.gmra.mrb[0].mxu0 %v1110
    %v1378 = vpop.f32.mrb[0].mxu0
    %v1379 = vadd.f32 0.0, %v1378
    %v1380 = vpop.f32.mrb[0].mxu0
    %v1381 = vadd.f32 0.0, %v1380
    %v1382 = vpop.f32.mrb[0].mxu0
    %v1383 = vpop.f32.mrb[0].mxu0
    %1384 = vdwg.mxu0
    %v1385 = vadd.f32 %v1105, %v1338
    %v1386 = vadd.f32 %v1106, %v1340
    %v1387 = vadd.f32 %v1107, %v1379
    %v1388 = vadd.f32 %v1108, %v1381
    %v1389 = vxor.u32 %v1385, 2147483648
    %v1390 = vmul.f32 %v1389, 1.442695
    %v1391 = vpow.pop %v1390
    %v1392 = vadd.f32 %v1391, 1.0
    %v1393 = vrcp.pop %v1392
    %v1394 = vmul.f32 1.0, %v1393
    %v1395 = vxor.u32 %v1386, 2147483648
    %v1396 = vmul.f32 %v1395, 1.442695
    %v1397 = vpow.pop %v1396
    %v1398 = vadd.f32 %v1397, 1.0
    %v1399 = vrcp.pop %v1398
    %v1400 = vmul.f32 1.0, %v1399
    %v1401 = vtanh.pop %v1387
    %v1402 = vxor.u32 %v1388, 2147483648
    %v1403 = vmul.f32 %v1402, 1.442695
    %v1404 = vpow.pop %v1403
    %v1405 = vadd.f32 %v1404, 1.0
    %v1406 = vrcp.pop %v1405
    %v1407 = vmul.f32 1.0, %v1406
    %v1408 = vld [vmem:[#allocation3] sm:$0xff]
    %v1409 = vmul.f32 %v1400, %v1408
    %v1410 = vmul.f32 %v1394, %v1401
    %v1411 = vadd.f32 %v1409, %v1410
    %v1412 = vtanh.pop %v1411
    %v1413 = vmul.f32 %v1407, %v1412
    %1414 = vst [vmem:[#allocation3] sm:$0xff] %v1411
    %1415 = vst [vmem:[#allocation2] sm:$0xff] %v1413
    %v1416 = vpack.c.bf16 %v1413, %v1413
    %s1417 = scalar_lea.vmem %s4, 8
    %1418 = vst [vmem:[%s1417] sm:$0xf] %v1416
    %s1419 = scalar_lea.vmem [#allocation4], 96
    %v1420 = vld [vmem:[%s1419] sm:$0xff]
    %v1421 = vld [vmem:[%s1419 + $0x8] sm:$0xff]
    %v1422 = vld [vmem:[%s1419 + $0x10] sm:$0xff]
    %v1423 = vld [vmem:[%s1419 + $0x18] sm:$0xff]
    %v1424 = vld [vmem:[#allocation2] sm:$0xff]
    %v1425 = vpack.c.bf16 %v1424, %v1424
    %v1426 = vld [vmem:[#allocation7] sm:$0xff]
    %v1427 = vld [vmem:[#allocation7 + $0x8] sm:$0xff]
    %v1428 = vld [vmem:[#allocation7 + $0x10] sm:$0xff]
    %v1429 = vld [vmem:[#allocation7 + $0x18] sm:$0xff]
    %v1430 = vld [vmem:[#allocation7 + $0x20] sm:$0xff]
    %v1431 = vld [vmem:[#allocation7 + $0x28] sm:$0xff]
    %v1432 = vld [vmem:[#allocation7 + $0x30] sm:$0xff]
    %v1433 = vld [vmem:[#allocation7 + $0x38] sm:$0xff]
    %v1434 = vld [vmem:[#allocation7 + $0x40] sm:$0xff]
    %v1435 = vld [vmem:[#allocation7 + $0x48] sm:$0xff]
    %v1436 = vld [vmem:[#allocation7 + $0x50] sm:$0xff]
    %v1437 = vld [vmem:[#allocation7 + $0x58] sm:$0xff]
    %v1438 = vld [vmem:[#allocation7 + $0x60] sm:$0xff]
    %v1439 = vld [vmem:[#allocation7 + $0x68] sm:$0xff]
    %v1440 = vld [vmem:[#allocation7 + $0x70] sm:$0xff]
    %v1441 = vld [vmem:[#allocation7 + $0x78] sm:$0xff]
    %v1442 = vld [vmem:[#allocation7 + $0x80] sm:$0xff]
    %v1443 = vld [vmem:[#allocation7 + $0x88] sm:$0xff]
    %v1444 = vld [vmem:[#allocation7 + $0x90] sm:$0xff]
    %v1445 = vld [vmem:[#allocation7 + $0x98] sm:$0xff]
    %v1446 = vld [vmem:[#allocation7 + $0xa0] sm:$0xff]
    %v1447 = vld [vmem:[#allocation7 + $0xa8] sm:$0xff]
    %v1448 = vld [vmem:[#allocation7 + $0xb0] sm:$0xff]
    %v1449 = vld [vmem:[#allocation7 + $0xb8] sm:$0xff]
    %v1450 = vld [vmem:[#allocation7 + $0xc0] sm:$0xff]
    %v1451 = vld [vmem:[#allocation7 + $0xc8] sm:$0xff]
    %v1452 = vld [vmem:[#allocation7 + $0xd0] sm:$0xff]
    %v1453 = vld [vmem:[#allocation7 + $0xd8] sm:$0xff]
    %v1454 = vld [vmem:[#allocation7 + $0xe0] sm:$0xff]
    %v1455 = vld [vmem:[#allocation7 + $0xe8] sm:$0xff]
    %v1456 = vld [vmem:[#allocation7 + $0xf0] sm:$0xff]
    %v1457 = vld [vmem:[#allocation7 + $0xf8] sm:$0xff]
    %v1490 = vunpack.c.l.b16 %v1426
    %v1491 = vunpack.c.h.b16 %v1426
    %v1492 = vunpack.c.l.b16 %v1427
    %v1493 = vunpack.c.h.b16 %v1427
    %v1494 = vunpack.c.l.b16 %v1428
    %v1495 = vunpack.c.h.b16 %v1428
    %v1496 = vunpack.c.l.b16 %v1429
    %v1497 = vunpack.c.h.b16 %v1429
    %v1498 = vunpack.c.l.b16 %v1430
    %v1499 = vunpack.c.h.b16 %v1430
    %v1500 = vunpack.c.l.b16 %v1431
    %v1501 = vunpack.c.h.b16 %v1431
    %v1502 = vunpack.c.l.b16 %v1432
    %v1503 = vunpack.c.h.b16 %v1432
    %v1504 = vunpack.c.l.b16 %v1433
    %v1505 = vunpack.c.h.b16 %v1433
    %v1506 = vunpack.c.l.b16 %v1434
    %v1507 = vunpack.c.h.b16 %v1434
    %v1508 = vunpack.c.l.b16 %v1435
    %v1509 = vunpack.c.h.b16 %v1435
    %v1510 = vunpack.c.l.b16 %v1436
    %v1511 = vunpack.c.h.b16 %v1436
    %v1512 = vunpack.c.l.b16 %v1437
    %v1513 = vunpack.c.h.b16 %v1437
    %v1514 = vunpack.c.l.b16 %v1438
    %v1515 = vunpack.c.h.b16 %v1438
    %v1516 = vunpack.c.l.b16 %v1439
    %v1517 = vunpack.c.h.b16 %v1439
    %v1518 = vunpack.c.l.b16 %v1440
    %v1519 = vunpack.c.h.b16 %v1440
    %v1520 = vunpack.c.l.b16 %v1441
    %v1521 = vunpack.c.h.b16 %v1441
    %v1522 = vunpack.c.l.b16 %v1442
    %v1523 = vunpack.c.h.b16 %v1442
    %v1524 = vunpack.c.l.b16 %v1443
    %v1525 = vunpack.c.h.b16 %v1443
    %v1526 = vunpack.c.l.b16 %v1444
    %v1527 = vunpack.c.h.b16 %v1444
    %v1528 = vunpack.c.l.b16 %v1445
    %v1529 = vunpack.c.h.b16 %v1445
    %v1530 = vunpack.c.l.b16 %v1446
    %v1531 = vunpack.c.h.b16 %v1446
    %v1532 = vunpack.c.l.b16 %v1447
    %v1533 = vunpack.c.h.b16 %v1447
    %v1534 = vunpack.c.l.b16 %v1448
    %v1535 = vunpack.c.h.b16 %v1448
    %v1536 = vunpack.c.l.b16 %v1449
    %v1537 = vunpack.c.h.b16 %v1449
    %v1538 = vunpack.c.l.b16 %v1450
    %v1539 = vunpack.c.h.b16 %v1450
    %v1540 = vunpack.c.l.b16 %v1451
    %v1541 = vunpack.c.h.b16 %v1451
    %v1542 = vunpack.c.l.b16 %v1452
    %v1543 = vunpack.c.h.b16 %v1452
    %v1544 = vunpack.c.l.b16 %v1453
    %v1545 = vunpack.c.h.b16 %v1453
    %v1546 = vunpack.c.l.b16 %v1454
    %v1547 = vunpack.c.h.b16 %v1454
    %v1548 = vunpack.c.l.b16 %v1455
    %v1549 = vunpack.c.h.b16 %v1455
    %v1550 = vunpack.c.l.b16 %v1456
    %v1551 = vunpack.c.h.b16 %v1456
    %v1552 = vunpack.c.l.b16 %v1457
    %v1553 = vunpack.c.h.b16 %v1457
    %v1554 = vpack.c.b16 %v1494, %v1490
    %v1555 = vpack.c.b16 %v1495, %v1491
    %v1556 = vpack.c.b16 %v1496, %v1492
    %v1557 = vpack.c.b16 %v1497, %v1493
    %v1558 = vpack.c.b16 %v1502, %v1498
    %v1559 = vpack.c.b16 %v1503, %v1499
    %v1560 = vpack.c.b16 %v1504, %v1500
    %v1561 = vpack.c.b16 %v1505, %v1501
    %v1562 = vpack.c.b16 %v1510, %v1506
    %v1563 = vpack.c.b16 %v1511, %v1507
    %v1564 = vpack.c.b16 %v1512, %v1508
    %v1565 = vpack.c.b16 %v1513, %v1509
    %v1566 = vpack.c.b16 %v1518, %v1514
    %v1567 = vpack.c.b16 %v1519, %v1515
    %v1568 = vpack.c.b16 %v1520, %v1516
    %v1569 = vpack.c.b16 %v1521, %v1517
    %v1570 = vpack.c.b16 %v1526, %v1522
    %v1571 = vpack.c.b16 %v1527, %v1523
    %v1572 = vpack.c.b16 %v1528, %v1524
    %v1573 = vpack.c.b16 %v1529, %v1525
    %v1574 = vpack.c.b16 %v1534, %v1530
    %v1575 = vpack.c.b16 %v1535, %v1531
    %v1576 = vpack.c.b16 %v1536, %v1532
    %v1577 = vpack.c.b16 %v1537, %v1533
    %v1578 = vpack.c.b16 %v1542, %v1538
    %v1579 = vpack.c.b16 %v1543, %v1539
    %v1580 = vpack.c.b16 %v1544, %v1540
    %v1581 = vpack.c.b16 %v1545, %v1541
    %v1582 = vpack.c.b16 %v1550, %v1546
    %v1583 = vpack.c.b16 %v1551, %v1547
    %v1584 = vpack.c.b16 %v1552, %v1548
    %v1585 = vpack.c.b16 %v1553, %v1549
    %1618 = vmatprep.subr.bf16.mxu0 %v1555
    %1619 = vmatpush1.bf16.msra.mxu0 %v1554
    %1620 = vmatprep.subr.bf16.mxu0 %v1559
    %1621 = vmatpush1.bf16.msra.mxu0 %v1558
    %1622 = vmatprep.subr.bf16.mxu0 %v1563
    %1623 = vmatpush1.bf16.msra.mxu0 %v1562
    %1624 = vmatprep.subr.bf16.mxu0 %v1567
    %1625 = vmatpush1.bf16.msra.mxu0 %v1566
    %1626 = vmatprep.subr.bf16.mxu0 %v1571
    %1627 = vmatpush1.bf16.msra.mxu0 %v1570
    %1628 = vmatprep.subr.bf16.mxu0 %v1575
    %1629 = vmatpush1.bf16.msra.mxu0 %v1574
    %1630 = vmatprep.subr.bf16.mxu0 %v1579
    %1631 = vmatpush1.bf16.msra.mxu0 %v1578
    %1632 = vmatprep.subr.bf16.mxu0 %v1583
    %1633 = vmatpush1.bf16.msra.mxu0 %v1582
    %1634 = vmatprep.subr.bf16.mxu0 0
    %1635 = vmatpush1.bf16.msra.mxu0 0
    %1636 = vmatprep.subr.bf16.mxu0 0
    %1637 = vmatpush1.bf16.msra.mxu0 0
    %1638 = vmatprep.subr.bf16.mxu0 0
    %1639 = vmatpush1.bf16.msra.mxu0 0
    %1640 = vmatprep.subr.bf16.mxu0 0
    %1641 = vmatpush1.bf16.msra.mxu0 0
    %1642 = vmatprep.subr.bf16.mxu0 0
    %1643 = vmatpush1.bf16.msra.mxu0 0
    %1644 = vmatprep.subr.bf16.mxu0 0
    %1645 = vmatpush1.bf16.msra.mxu0 0
    %1646 = vmatprep.subr.bf16.mxu0 0
    %1647 = vmatpush1.bf16.msra.mxu0 0
    %1648 = vmatprep.subr.bf16.mxu0 0
    %1649 = vmatpush1.bf16.msra.mxu0 0
    %1650 = vmatprep.mubr.bf16.mxu0 0
    %1651 = vmatmul.mubr.bf16.gmra.mrb[0].mxu0 %v1425
    %v1652 = vpop.f32.mrb[0].mxu0
    %v1653 = vadd.f32 0.0, %v1652
    %v1654 = vpop.f32.mrb[0].mxu0
    %v1655 = vadd.f32 0.0, %v1654
    %v1656 = vpop.f32.mrb[0].mxu0
    %v1657 = vpop.f32.mrb[0].mxu0
    %1658 = vdwg.mxu0
    %1659 = vmatprep.subr.bf16.mxu0 %v1557
    %1660 = vmatpush1.bf16.msra.mxu0 %v1556
    %1661 = vmatprep.subr.bf16.mxu0 %v1561
    %1662 = vmatpush1.bf16.msra.mxu0 %v1560
    %1663 = vmatprep.subr.bf16.mxu0 %v1565
    %1664 = vmatpush1.bf16.msra.mxu0 %v1564
    %1665 = vmatprep.subr.bf16.mxu0 %v1569
    %1666 = vmatpush1.bf16.msra.mxu0 %v1568
    %1667 = vmatprep.subr.bf16.mxu0 %v1573
    %1668 = vmatpush1.bf16.msra.mxu0 %v1572
    %1669 = vmatprep.subr.bf16.mxu0 %v1577
    %1670 = vmatpush1.bf16.msra.mxu0 %v1576
    %1671 = vmatprep.subr.bf16.mxu0 %v1581
    %1672 = vmatpush1.bf16.msra.mxu0 %v1580
    %1673 = vmatprep.subr.bf16.mxu0 %v1585
    %1674 = vmatpush1.bf16.msra.mxu0 %v1584
    %1675 = vmatprep.subr.bf16.mxu0 0
    %1676 = vmatpush1.bf16.msra.mxu0 0
    %1677 = vmatprep.subr.bf16.mxu0 0
    %1678 = vmatpush1.bf16.msra.mxu0 0
    %1679 = vmatprep.subr.bf16.mxu0 0
    %1680 = vmatpush1.bf16.msra.mxu0 0
    %1681 = vmatprep.subr.bf16.mxu0 0
    %1682 = vmatpush1.bf16.msra.mxu0 0
    %1683 = vmatprep.subr.bf16.mxu0 0
    %1684 = vmatpush1.bf16.msra.mxu0 0
    %1685 = vmatprep.subr.bf16.mxu0 0
    %1686 = vmatpush1.bf16.msra.mxu0 0
    %1687 = vmatprep.subr.bf16.mxu0 0
    %1688 = vmatpush1.bf16.msra.mxu0 0
    %1689 = vmatprep.subr.bf16.mxu0 0
    %1690 = vmatpush1.bf16.msra.mxu0 0
    %1691 = vmatprep.mubr.bf16.mxu0 0
    %1692 = vmatmul.mubr.bf16.gmra.mrb[0].mxu0 %v1425
    %v1693 = vpop.f32.mrb[0].mxu0
    %v1694 = vadd.f32 0.0, %v1693
    %v1695 = vpop.f32.mrb[0].mxu0
    %v1696 = vadd.f32 0.0, %v1695
    %v1697 = vpop.f32.mrb[0].mxu0
    %v1698 = vpop.f32.mrb[0].mxu0
    %1699 = vdwg.mxu0
    %v1700 = vadd.f32 %v1420, %v1653
    %v1701 = vadd.f32 %v1421, %v1655
    %v1702 = vadd.f32 %v1422, %v1694
    %v1703 = vadd.f32 %v1423, %v1696
    %v1704 = vxor.u32 %v1700, 2147483648
    %v1705 = vmul.f32 %v1704, 1.442695
    %v1706 = vpow.pop %v1705
    %v1707 = vadd.f32 %v1706, 1.0
    %v1708 = vrcp.pop %v1707
    %v1709 = vmul.f32 1.0, %v1708
    %v1710 = vxor.u32 %v1701, 2147483648
    %v1711 = vmul.f32 %v1710, 1.442695
    %v1712 = vpow.pop %v1711
    %v1713 = vadd.f32 %v1712, 1.0
    %v1714 = vrcp.pop %v1713
    %v1715 = vmul.f32 1.0, %v1714
    %v1716 = vtanh.pop %v1702
    %v1717 = vxor.u32 %v1703, 2147483648
    %v1718 = vmul.f32 %v1717, 1.442695
    %v1719 = vpow.pop %v1718
    %v1720 = vadd.f32 %v1719, 1.0
    %v1721 = vrcp.pop %v1720
    %v1722 = vmul.f32 1.0, %v1721
    %v1723 = vld [vmem:[#allocation3] sm:$0xff]
    %v1724 = vmul.f32 %v1715, %v1723
    %v1725 = vmul.f32 %v1709, %v1716
    %v1726 = vadd.f32 %v1724, %v1725
    %v1727 = vtanh.pop %v1726
    %v1728 = vmul.f32 %v1722, %v1727
    %1729 = vst [vmem:[#allocation3] sm:$0xff] %v1726
    %1730 = vst [vmem:[#allocation2] sm:$0xff] %v1728
    %v1731 = vpack.c.bf16 %v1728, %v1728
    %s1732 = scalar_lea.vmem %s4, 12
    %1733 = vst [vmem:[%s1732] sm:$0xf] %v1731
    %s1734 = scalar_lea.vmem [#allocation4], 128
    %v1735 = vld [vmem:[%s1734] sm:$0xff]
    %v1736 = vld [vmem:[%s1734 + $0x8] sm:$0xff]
    %v1737 = vld [vmem:[%s1734 + $0x10] sm:$0xff]
    %v1738 = vld [vmem:[%s1734 + $0x18] sm:$0xff]
    %v1739 = vld [vmem:[#allocation2] sm:$0xff]
    %v1740 = vpack.c.bf16 %v1739, %v1739
    %v1741 = vld [vmem:[#allocation7] sm:$0xff]
    %v1742 = vld [vmem:[#allocation7 + $0x8] sm:$0xff]
    %v1743 = vld [vmem:[#allocation7 + $0x10] sm:$0xff]
    %v1744 = vld [vmem:[#allocation7 + $0x18] sm:$0xff]
    %v1745 = vld [vmem:[#allocation7 + $0x20] sm:$0xff]
    %v1746 = vld [vmem:[#allocation7 + $0x28] sm:$0xff]
    %v1747 = vld [vmem:[#allocation7 + $0x30] sm:$0xff]
    %v1748 = vld [vmem:[#allocation7 + $0x38] sm:$0xff]
    %v1749 = vld [vmem:[#allocation7 + $0x40] sm:$0xff]
    %v1750 = vld [vmem:[#allocation7 + $0x48] sm:$0xff]
    %v1751 = vld [vmem:[#allocation7 + $0x50] sm:$0xff]
    %v1752 = vld [vmem:[#allocation7 + $0x58] sm:$0xff]
    %v1753 = vld [vmem:[#allocation7 + $0x60] sm:$0xff]
    %v1754 = vld [vmem:[#allocation7 + $0x68] sm:$0xff]
    %v1755 = vld [vmem:[#allocation7 + $0x70] sm:$0xff]
    %v1756 = vld [vmem:[#allocation7 + $0x78] sm:$0xff]
    %v1757 = vld [vmem:[#allocation7 + $0x80] sm:$0xff]
    %v1758 = vld [vmem:[#allocation7 + $0x88] sm:$0xff]
    %v1759 = vld [vmem:[#allocation7 + $0x90] sm:$0xff]
    %v1760 = vld [vmem:[#allocation7 + $0x98] sm:$0xff]
    %v1761 = vld [vmem:[#allocation7 + $0xa0] sm:$0xff]
    %v1762 = vld [vmem:[#allocation7 + $0xa8] sm:$0xff]
    %v1763 = vld [vmem:[#allocation7 + $0xb0] sm:$0xff]
    %v1764 = vld [vmem:[#allocation7 + $0xb8] sm:$0xff]
    %v1765 = vld [vmem:[#allocation7 + $0xc0] sm:$0xff]
    %v1766 = vld [vmem:[#allocation7 + $0xc8] sm:$0xff]
    %v1767 = vld [vmem:[#allocation7 + $0xd0] sm:$0xff]
    %v1768 = vld [vmem:[#allocation7 + $0xd8] sm:$0xff]
    %v1769 = vld [vmem:[#allocation7 + $0xe0] sm:$0xff]
    %v1770 = vld [vmem:[#allocation7 + $0xe8] sm:$0xff]
    %v1771 = vld [vmem:[#allocation7 + $0xf0] sm:$0xff]
    %v1772 = vld [vmem:[#allocation7 + $0xf8] sm:$0xff]
    %v1805 = vunpack.c.l.b16 %v1741
    %v1806 = vunpack.c.h.b16 %v1741
    %v1807 = vunpack.c.l.b16 %v1742
    %v1808 = vunpack.c.h.b16 %v1742
    %v1809 = vunpack.c.l.b16 %v1743
    %v1810 = vunpack.c.h.b16 %v1743
    %v1811 = vunpack.c.l.b16 %v1744
    %v1812 = vunpack.c.h.b16 %v1744
    %v1813 = vunpack.c.l.b16 %v1745
    %v1814 = vunpack.c.h.b16 %v1745
    %v1815 = vunpack.c.l.b16 %v1746
    %v1816 = vunpack.c.h.b16 %v1746
    %v1817 = vunpack.c.l.b16 %v1747
    %v1818 = vunpack.c.h.b16 %v1747
    %v1819 = vunpack.c.l.b16 %v1748
    %v1820 = vunpack.c.h.b16 %v1748
    %v1821 = vunpack.c.l.b16 %v1749
    %v1822 = vunpack.c.h.b16 %v1749
    %v1823 = vunpack.c.l.b16 %v1750
    %v1824 = vunpack.c.h.b16 %v1750
    %v1825 = vunpack.c.l.b16 %v1751
    %v1826 = vunpack.c.h.b16 %v1751
    %v1827 = vunpack.c.l.b16 %v1752
    %v1828 = vunpack.c.h.b16 %v1752
    %v1829 = vunpack.c.l.b16 %v1753
    %v1830 = vunpack.c.h.b16 %v1753
    %v1831 = vunpack.c.l.b16 %v1754
    %v1832 = vunpack.c.h.b16 %v1754
    %v1833 = vunpack.c.l.b16 %v1755
    %v1834 = vunpack.c.h.b16 %v1755
    %v1835 = vunpack.c.l.b16 %v1756
    %v1836 = vunpack.c.h.b16 %v1756
    %v1837 = vunpack.c.l.b16 %v1757
    %v1838 = vunpack.c.h.b16 %v1757
    %v1839 = vunpack.c.l.b16 %v1758
    %v1840 = vunpack.c.h.b16 %v1758
    %v1841 = vunpack.c.l.b16 %v1759
    %v1842 = vunpack.c.h.b16 %v1759
    %v1843 = vunpack.c.l.b16 %v1760
    %v1844 = vunpack.c.h.b16 %v1760
    %v1845 = vunpack.c.l.b16 %v1761
    %v1846 = vunpack.c.h.b16 %v1761
    %v1847 = vunpack.c.l.b16 %v1762
    %v1848 = vunpack.c.h.b16 %v1762
    %v1849 = vunpack.c.l.b16 %v1763
    %v1850 = vunpack.c.h.b16 %v1763
    %v1851 = vunpack.c.l.b16 %v1764
    %v1852 = vunpack.c.h.b16 %v1764
    %v1853 = vunpack.c.l.b16 %v1765
    %v1854 = vunpack.c.h.b16 %v1765
    %v1855 = vunpack.c.l.b16 %v1766
    %v1856 = vunpack.c.h.b16 %v1766
    %v1857 = vunpack.c.l.b16 %v1767
    %v1858 = vunpack.c.h.b16 %v1767
    %v1859 = vunpack.c.l.b16 %v1768
    %v1860 = vunpack.c.h.b16 %v1768
    %v1861 = vunpack.c.l.b16 %v1769
    %v1862 = vunpack.c.h.b16 %v1769
    %v1863 = vunpack.c.l.b16 %v1770
    %v1864 = vunpack.c.h.b16 %v1770
    %v1865 = vunpack.c.l.b16 %v1771
    %v1866 = vunpack.c.h.b16 %v1771
    %v1867 = vunpack.c.l.b16 %v1772
    %v1868 = vunpack.c.h.b16 %v1772
    %v1869 = vpack.c.b16 %v1809, %v1805
    %v1870 = vpack.c.b16 %v1810, %v1806
    %v1871 = vpack.c.b16 %v1811, %v1807
    %v1872 = vpack.c.b16 %v1812, %v1808
    %v1873 = vpack.c.b16 %v1817, %v1813
    %v1874 = vpack.c.b16 %v1818, %v1814
    %v1875 = vpack.c.b16 %v1819, %v1815
    %v1876 = vpack.c.b16 %v1820, %v1816
    %v1877 = vpack.c.b16 %v1825, %v1821
    %v1878 = vpack.c.b16 %v1826, %v1822
    %v1879 = vpack.c.b16 %v1827, %v1823
    %v1880 = vpack.c.b16 %v1828, %v1824
    %v1881 = vpack.c.b16 %v1833, %v1829
    %v1882 = vpack.c.b16 %v1834, %v1830
    %v1883 = vpack.c.b16 %v1835, %v1831
    %v1884 = vpack.c.b16 %v1836, %v1832
    %v1885 = vpack.c.b16 %v1841, %v1837
    %v1886 = vpack.c.b16 %v1842, %v1838
    %v1887 = vpack.c.b16 %v1843, %v1839
    %v1888 = vpack.c.b16 %v1844, %v1840
    %v1889 = vpack.c.b16 %v1849, %v1845
    %v1890 = vpack.c.b16 %v1850, %v1846
    %v1891 = vpack.c.b16 %v1851, %v1847
    %v1892 = vpack.c.b16 %v1852, %v1848
    %v1893 = vpack.c.b16 %v1857, %v1853
    %v1894 = vpack.c.b16 %v1858, %v1854
    %v1895 = vpack.c.b16 %v1859, %v1855
    %v1896 = vpack.c.b16 %v1860, %v1856
    %v1897 = vpack.c.b16 %v1865, %v1861
    %v1898 = vpack.c.b16 %v1866, %v1862
    %v1899 = vpack.c.b16 %v1867, %v1863
    %v1900 = vpack.c.b16 %v1868, %v1864
    %1933 = vmatprep.subr.bf16.mxu0 %v1870
    %1934 = vmatpush1.bf16.msra.mxu0 %v1869
    %1935 = vmatprep.subr.bf16.mxu0 %v1874
    %1936 = vmatpush1.bf16.msra.mxu0 %v1873
    %1937 = vmatprep.subr.bf16.mxu0 %v1878
    %1938 = vmatpush1.bf16.msra.mxu0 %v1877
    %1939 = vmatprep.subr.bf16.mxu0 %v1882
    %1940 = vmatpush1.bf16.msra.mxu0 %v1881
    %1941 = vmatprep.subr.bf16.mxu0 %v1886
    %1942 = vmatpush1.bf16.msra.mxu0 %v1885
    %1943 = vmatprep.subr.bf16.mxu0 %v1890
    %1944 = vmatpush1.bf16.msra.mxu0 %v1889
    %1945 = vmatprep.subr.bf16.mxu0 %v1894
    %1946 = vmatpush1.bf16.msra.mxu0 %v1893
    %1947 = vmatprep.subr.bf16.mxu0 %v1898
    %1948 = vmatpush1.bf16.msra.mxu0 %v1897
    %1949 = vmatprep.subr.bf16.mxu0 0
    %1950 = vmatpush1.bf16.msra.mxu0 0
    %1951 = vmatprep.subr.bf16.mxu0 0
    %1952 = vmatpush1.bf16.msra.mxu0 0
    %1953 = vmatprep.subr.bf16.mxu0 0
    %1954 = vmatpush1.bf16.msra.mxu0 0
    %1955 = vmatprep.subr.bf16.mxu0 0
    %1956 = vmatpush1.bf16.msra.mxu0 0
    %1957 = vmatprep.subr.bf16.mxu0 0
    %1958 = vmatpush1.bf16.msra.mxu0 0
    %1959 = vmatprep.subr.bf16.mxu0 0
    %1960 = vmatpush1.bf16.msra.mxu0 0
    %1961 = vmatprep.subr.bf16.mxu0 0
    %1962 = vmatpush1.bf16.msra.mxu0 0
    %1963 = vmatprep.subr.bf16.mxu0 0
    %1964 = vmatpush1.bf16.msra.mxu0 0
    %1965 = vmatprep.mubr.bf16.mxu0 0
    %1966 = vmatmul.mubr.bf16.gmra.mrb[0].mxu0 %v1740
    %v1967 = vpop.f32.mrb[0].mxu0
    %v1968 = vadd.f32 0.0, %v1967
    %v1969 = vpop.f32.mrb[0].mxu0
    %v1970 = vadd.f32 0.0, %v1969
    %v1971 = vpop.f32.mrb[0].mxu0
    %v1972 = vpop.f32.mrb[0].mxu0
    %1973 = vdwg.mxu0
    %1974 = vmatprep.subr.bf16.mxu0 %v1872
    %1975 = vmatpush1.bf16.msra.mxu0 %v1871
    %1976 = vmatprep.subr.bf16.mxu0 %v1876
    %1977 = vmatpush1.bf16.msra.mxu0 %v1875
    %1978 = vmatprep.subr.bf16.mxu0 %v1880
    %1979 = vmatpush1.bf16.msra.mxu0 %v1879
    %1980 = vmatprep.subr.bf16.mxu0 %v1884
    %1981 = vmatpush1.bf16.msra.mxu0 %v1883
    %1982 = vmatprep.subr.bf16.mxu0 %v1888
    %1983 = vmatpush1.bf16.msra.mxu0 %v1887
    %1984 = vmatprep.subr.bf16.mxu0 %v1892
    %1985 = vmatpush1.bf16.msra.mxu0 %v1891
    %1986 = vmatprep.subr.bf16.mxu0 %v1896
    %1987 = vmatpush1.bf16.msra.mxu0 %v1895
    %1988 = vmatprep.subr.bf16.mxu0 %v1900
    %1989 = vmatpush1.bf16.msra.mxu0 %v1899
    %1990 = vmatprep.subr.bf16.mxu0 0
    %1991 = vmatpush1.bf16.msra.mxu0 0
    %1992 = vmatprep.subr.bf16.mxu0 0
    %1993 = vmatpush1.bf16.msra.mxu0 0
    %1994 = vmatprep.subr.bf16.mxu0 0
    %1995 = vmatpush1.bf16.msra.mxu0 0
    %1996 = vmatprep.subr.bf16.mxu0 0
    %1997 = vmatpush1.bf16.msra.mxu0 0
    %1998 = vmatprep.subr.bf16.mxu0 0
    %1999 = vmatpush1.bf16.msra.mxu0 0
    %2000 = vmatprep.subr.bf16.mxu0 0
    %2001 = vmatpush1.bf16.msra.mxu0 0
    %2002 = vmatprep.subr.bf16.mxu0 0
    %2003 = vmatpush1.bf16.msra.mxu0 0
    %2004 = vmatprep.subr.bf16.mxu0 0
    %2005 = vmatpush1.bf16.msra.mxu0 0
    %2006 = vmatprep.mubr.bf16.mxu0 0
    %2007 = vmatmul.mubr.bf16.gmra.mrb[0].mxu0 %v1740
    %v2008 = vpop.f32.mrb[0].mxu0
    %v2009 = vadd.f32 0.0, %v2008
    %v2010 = vpop.f32.mrb[0].mxu0
    %v2011 = vadd.f32 0.0, %v2010
    %v2012 = vpop.f32.mrb[0].mxu0
    %v2013 = vpop.f32.mrb[0].mxu0
    %2014 = vdwg.mxu0
    %v2015 = vadd.f32 %v1735, %v1968
    %v2016 = vadd.f32 %v1736, %v1970
    %v2017 = vadd.f32 %v1737, %v2009
    %v2018 = vadd.f32 %v1738, %v2011
    %v2019 = vxor.u32 %v2015, 2147483648
    %v2020 = vmul.f32 %v2019, 1.442695
    %v2021 = vpow.pop %v2020
    %v2022 = vadd.f32 %v2021, 1.0
    %v2023 = vrcp.pop %v2022
    %v2024 = vmul.f32 1.0, %v2023
    %v2025 = vxor.u32 %v2016, 2147483648
    %v2026 = vmul.f32 %v2025, 1.442695
    %v2027 = vpow.pop %v2026
    %v2028 = vadd.f32 %v2027, 1.0
    %v2029 = vrcp.pop %v2028
    %v2030 = vmul.f32 1.0, %v2029
    %v2031 = vtanh.pop %v2017
    %v2032 = vxor.u32 %v2018, 2147483648
    %v2033 = vmul.f32 %v2032, 1.442695
    %v2034 = vpow.pop %v2033
    %v2035 = vadd.f32 %v2034, 1.0
    %v2036 = vrcp.pop %v2035
    %v2037 = vmul.f32 1.0, %v2036
    %v2038 = vld [vmem:[#allocation3] sm:$0xff]
    %v2039 = vmul.f32 %v2030, %v2038
    %v2040 = vmul.f32 %v2024, %v2031
    %v2041 = vadd.f32 %v2039, %v2040
    %v2042 = vtanh.pop %v2041
    %v2043 = vmul.f32 %v2037, %v2042
    %2044 = vst [vmem:[#allocation3] sm:$0xff] %v2041
    %2045 = vst [vmem:[#allocation2] sm:$0xff] %v2043
    %v2046 = vpack.c.bf16 %v2043, %v2043
    %s2047 = scalar_lea.vmem %s4, 16
    %2048 = vst [vmem:[%s2047] sm:$0xf] %v2046
    %s2049 = scalar_lea.vmem [#allocation4], 160
    %v2050 = vld [vmem:[%s2049] sm:$0xff]
    %v2051 = vld [vmem:[%s2049 + $0x8] sm:$0xff]
    %v2052 = vld [vmem:[%s2049 + $0x10] sm:$0xff]
    %v2053 = vld [vmem:[%s2049 + $0x18] sm:$0xff]
    %v2054 = vld [vmem:[#allocation2] sm:$0xff]
    %v2055 = vpack.c.bf16 %v2054, %v2054
    %v2056 = vld [vmem:[#allocation7] sm:$0xff]
    %v2057 = vld [vmem:[#allocation7 + $0x8] sm:$0xff]
    %v2058 = vld [vmem:[#allocation7 + $0x10] sm:$0xff]
    %v2059 = vld [vmem:[#allocation7 + $0x18] sm:$0xff]
    %v2060 = vld [vmem:[#allocation7 + $0x20] sm:$0xff]
    %v2061 = vld [vmem:[#allocation7 + $0x28] sm:$0xff]
    %v2062 = vld [vmem:[#allocation7 + $0x30] sm:$0xff]
    %v2063 = vld [vmem:[#allocation7 + $0x38] sm:$0xff]
    %v2064 = vld [vmem:[#allocation7 + $0x40] sm:$0xff]
    %v2065 = vld [vmem:[#allocation7 + $0x48] sm:$0xff]
    %v2066 = vld [vmem:[#allocation7 + $0x50] sm:$0xff]
    %v2067 = vld [vmem:[#allocation7 + $0x58] sm:$0xff]
    %v2068 = vld [vmem:[#allocation7 + $0x60] sm:$0xff]
    %v2069 = vld [vmem:[#allocation7 + $0x68] sm:$0xff]
    %v2070 = vld [vmem:[#allocation7 + $0x70] sm:$0xff]
    %v2071 = vld [vmem:[#allocation7 + $0x78] sm:$0xff]
    %v2072 = vld [vmem:[#allocation7 + $0x80] sm:$0xff]
    %v2073 = vld [vmem:[#allocation7 + $0x88] sm:$0xff]
    %v2074 = vld [vmem:[#allocation7 + $0x90] sm:$0xff]
    %v2075 = vld [vmem:[#allocation7 + $0x98] sm:$0xff]
    %v2076 = vld [vmem:[#allocation7 + $0xa0] sm:$0xff]
    %v2077 = vld [vmem:[#allocation7 + $0xa8] sm:$0xff]
    %v2078 = vld [vmem:[#allocation7 + $0xb0] sm:$0xff]
    %v2079 = vld [vmem:[#allocation7 + $0xb8] sm:$0xff]
    %v2080 = vld [vmem:[#allocation7 + $0xc0] sm:$0xff]
    %v2081 = vld [vmem:[#allocation7 + $0xc8] sm:$0xff]
    %v2082 = vld [vmem:[#allocation7 + $0xd0] sm:$0xff]
    %v2083 = vld [vmem:[#allocation7 + $0xd8] sm:$0xff]
    %v2084 = vld [vmem:[#allocation7 + $0xe0] sm:$0xff]
    %v2085 = vld [vmem:[#allocation7 + $0xe8] sm:$0xff]
    %v2086 = vld [vmem:[#allocation7 + $0xf0] sm:$0xff]
    %v2087 = vld [vmem:[#allocation7 + $0xf8] sm:$0xff]
    %v2120 = vunpack.c.l.b16 %v2056
    %v2121 = vunpack.c.h.b16 %v2056
    %v2122 = vunpack.c.l.b16 %v2057
    %v2123 = vunpack.c.h.b16 %v2057
    %v2124 = vunpack.c.l.b16 %v2058
    %v2125 = vunpack.c.h.b16 %v2058
    %v2126 = vunpack.c.l.b16 %v2059
    %v2127 = vunpack.c.h.b16 %v2059
    %v2128 = vunpack.c.l.b16 %v2060
    %v2129 = vunpack.c.h.b16 %v2060
    %v2130 = vunpack.c.l.b16 %v2061
    %v2131 = vunpack.c.h.b16 %v2061
    %v2132 = vunpack.c.l.b16 %v2062
    %v2133 = vunpack.c.h.b16 %v2062
    %v2134 = vunpack.c.l.b16 %v2063
    %v2135 = vunpack.c.h.b16 %v2063
    %v2136 = vunpack.c.l.b16 %v2064
    %v2137 = vunpack.c.h.b16 %v2064
    %v2138 = vunpack.c.l.b16 %v2065
    %v2139 = vunpack.c.h.b16 %v2065
    %v2140 = vunpack.c.l.b16 %v2066
    %v2141 = vunpack.c.h.b16 %v2066
    %v2142 = vunpack.c.l.b16 %v2067
    %v2143 = vunpack.c.h.b16 %v2067
    %v2144 = vunpack.c.l.b16 %v2068
    %v2145 = vunpack.c.h.b16 %v2068
    %v2146 = vunpack.c.l.b16 %v2069
    %v2147 = vunpack.c.h.b16 %v2069
    %v2148 = vunpack.c.l.b16 %v2070
    %v2149 = vunpack.c.h.b16 %v2070
    %v2150 = vunpack.c.l.b16 %v2071
    %v2151 = vunpack.c.h.b16 %v2071
    %v2152 = vunpack.c.l.b16 %v2072
    %v2153 = vunpack.c.h.b16 %v2072
    %v2154 = vunpack.c.l.b16 %v2073
    %v2155 = vunpack.c.h.b16 %v2073
    %v2156 = vunpack.c.l.b16 %v2074
    %v2157 = vunpack.c.h.b16 %v2074
    %v2158 = vunpack.c.l.b16 %v2075
    %v2159 = vunpack.c.h.b16 %v2075
    %v2160 = vunpack.c.l.b16 %v2076
    %v2161 = vunpack.c.h.b16 %v2076
    %v2162 = vunpack.c.l.b16 %v2077
    %v2163 = vunpack.c.h.b16 %v2077
    %v2164 = vunpack.c.l.b16 %v2078
    %v2165 = vunpack.c.h.b16 %v2078
    %v2166 = vunpack.c.l.b16 %v2079
    %v2167 = vunpack.c.h.b16 %v2079
    %v2168 = vunpack.c.l.b16 %v2080
    %v2169 = vunpack.c.h.b16 %v2080
    %v2170 = vunpack.c.l.b16 %v2081
    %v2171 = vunpack.c.h.b16 %v2081
    %v2172 = vunpack.c.l.b16 %v2082
    %v2173 = vunpack.c.h.b16 %v2082
    %v2174 = vunpack.c.l.b16 %v2083
    %v2175 = vunpack.c.h.b16 %v2083
    %v2176 = vunpack.c.l.b16 %v2084
    %v2177 = vunpack.c.h.b16 %v2084
    %v2178 = vunpack.c.l.b16 %v2085
    %v2179 = vunpack.c.h.b16 %v2085
    %v2180 = vunpack.c.l.b16 %v2086
    %v2181 = vunpack.c.h.b16 %v2086
    %v2182 = vunpack.c.l.b16 %v2087
    %v2183 = vunpack.c.h.b16 %v2087
    %v2184 = vpack.c.b16 %v2124, %v2120
    %v2185 = vpack.c.b16 %v2125, %v2121
    %v2186 = vpack.c.b16 %v2126, %v2122
    %v2187 = vpack.c.b16 %v2127, %v2123
    %v2188 = vpack.c.b16 %v2132, %v2128
    %v2189 = vpack.c.b16 %v2133, %v2129
    %v2190 = vpack.c.b16 %v2134, %v2130
    %v2191 = vpack.c.b16 %v2135, %v2131
    %v2192 = vpack.c.b16 %v2140, %v2136
    %v2193 = vpack.c.b16 %v2141, %v2137
    %v2194 = vpack.c.b16 %v2142, %v2138
    %v2195 = vpack.c.b16 %v2143, %v2139
    %v2196 = vpack.c.b16 %v2148, %v2144
    %v2197 = vpack.c.b16 %v2149, %v2145
    %v2198 = vpack.c.b16 %v2150, %v2146
    %v2199 = vpack.c.b16 %v2151, %v2147
    %v2200 = vpack.c.b16 %v2156, %v2152
    %v2201 = vpack.c.b16 %v2157, %v2153
    %v2202 = vpack.c.b16 %v2158, %v2154
    %v2203 = vpack.c.b16 %v2159, %v2155
    %v2204 = vpack.c.b16 %v2164, %v2160
    %v2205 = vpack.c.b16 %v2165, %v2161
    %v2206 = vpack.c.b16 %v2166, %v2162
    %v2207 = vpack.c.b16 %v2167, %v2163
    %v2208 = vpack.c.b16 %v2172, %v2168
    %v2209 = vpack.c.b16 %v2173, %v2169
    %v2210 = vpack.c.b16 %v2174, %v2170
    %v2211 = vpack.c.b16 %v2175, %v2171
    %v2212 = vpack.c.b16 %v2180, %v2176
    %v2213 = vpack.c.b16 %v2181, %v2177
    %v2214 = vpack.c.b16 %v2182, %v2178
    %v2215 = vpack.c.b16 %v2183, %v2179
    %2248 = vmatprep.subr.bf16.mxu0 %v2185
    %2249 = vmatpush1.bf16.msra.mxu0 %v2184
    %2250 = vmatprep.subr.bf16.mxu0 %v2189
    %2251 = vmatpush1.bf16.msra.mxu0 %v2188
    %2252 = vmatprep.subr.bf16.mxu0 %v2193
    %2253 = vmatpush1.bf16.msra.mxu0 %v2192
    %2254 = vmatprep.subr.bf16.mxu0 %v2197
    %2255 = vmatpush1.bf16.msra.mxu0 %v2196
    %2256 = vmatprep.subr.bf16.mxu0 %v2201
    %2257 = vmatpush1.bf16.msra.mxu0 %v2200
    %2258 = vmatprep.subr.bf16.mxu0 %v2205
    %2259 = vmatpush1.bf16.msra.mxu0 %v2204
    %2260 = vmatprep.subr.bf16.mxu0 %v2209
    %2261 = vmatpush1.bf16.msra.mxu0 %v2208
    %2262 = vmatprep.subr.bf16.mxu0 %v2213
    %2263 = vmatpush1.bf16.msra.mxu0 %v2212
    %2264 = vmatprep.subr.bf16.mxu0 0
    %2265 = vmatpush1.bf16.msra.mxu0 0
    %2266 = vmatprep.subr.bf16.mxu0 0
    %2267 = vmatpush1.bf16.msra.mxu0 0
    %2268 = vmatprep.subr.bf16.mxu0 0
    %2269 = vmatpush1.bf16.msra.mxu0 0
    %2270 = vmatprep.subr.bf16.mxu0 0
    %2271 = vmatpush1.bf16.msra.mxu0 0
    %2272 = vmatprep.subr.bf16.mxu0 0
    %2273 = vmatpush1.bf16.msra.mxu0 0
    %2274 = vmatprep.subr.bf16.mxu0 0
    %2275 = vmatpush1.bf16.msra.mxu0 0
    %2276 = vmatprep.subr.bf16.mxu0 0
    %2277 = vmatpush1.bf16.msra.mxu0 0
    %2278 = vmatprep.subr.bf16.mxu0 0
    %2279 = vmatpush1.bf16.msra.mxu0 0
    %2280 = vmatprep.mubr.bf16.mxu0 0
    %2281 = vmatmul.mubr.bf16.gmra.mrb[0].mxu0 %v2055
    %v2282 = vpop.f32.mrb[0].mxu0
    %v2283 = vadd.f32 0.0, %v2282
    %v2284 = vpop.f32.mrb[0].mxu0
    %v2285 = vadd.f32 0.0, %v2284
    %v2286 = vpop.f32.mrb[0].mxu0
    %v2287 = vpop.f32.mrb[0].mxu0
    %2288 = vdwg.mxu0
    %2289 = vmatprep.subr.bf16.mxu0 %v2187
    %2290 = vmatpush1.bf16.msra.mxu0 %v2186
    %2291 = vmatprep.subr.bf16.mxu0 %v2191
    %2292 = vmatpush1.bf16.msra.mxu0 %v2190
    %2293 = vmatprep.subr.bf16.mxu0 %v2195
    %2294 = vmatpush1.bf16.msra.mxu0 %v2194
    %2295 = vmatprep.subr.bf16.mxu0 %v2199
    %2296 = vmatpush1.bf16.msra.mxu0 %v2198
    %2297 = vmatprep.subr.bf16.mxu0 %v2203
    %2298 = vmatpush1.bf16.msra.mxu0 %v2202
    %2299 = vmatprep.subr.bf16.mxu0 %v2207
    %2300 = vmatpush1.bf16.msra.mxu0 %v2206
    %2301 = vmatprep.subr.bf16.mxu0 %v2211
    %2302 = vmatpush1.bf16.msra.mxu0 %v2210
    %2303 = vmatprep.subr.bf16.mxu0 %v2215
    %2304 = vmatpush1.bf16.msra.mxu0 %v2214
    %2305 = vmatprep.subr.bf16.mxu0 0
    %2306 = vmatpush1.bf16.msra.mxu0 0
    %2307 = vmatprep.subr.bf16.mxu0 0
    %2308 = vmatpush1.bf16.msra.mxu0 0
    %2309 = vmatprep.subr.bf16.mxu0 0
    %2310 = vmatpush1.bf16.msra.mxu0 0
    %2311 = vmatprep.subr.bf16.mxu0 0
    %2312 = vmatpush1.bf16.msra.mxu0 0
    %2313 = vmatprep.subr.bf16.mxu0 0
    %2314 = vmatpush1.bf16.msra.mxu0 0
    %2315 = vmatprep.subr.bf16.mxu0 0
    %2316 = vmatpush1.bf16.msra.mxu0 0
    %2317 = vmatprep.subr.bf16.mxu0 0
    %2318 = vmatpush1.bf16.msra.mxu0 0
    %2319 = vmatprep.subr.bf16.mxu0 0
    %2320 = vmatpush1.bf16.msra.mxu0 0
    %2321 = vmatprep.mubr.bf16.mxu0 0
    %2322 = vmatmul.mubr.bf16.gmra.mrb[0].mxu0 %v2055
    %v2323 = vpop.f32.mrb[0].mxu0
    %v2324 = vadd.f32 0.0, %v2323
    %v2325 = vpop.f32.mrb[0].mxu0
    %v2326 = vadd.f32 0.0, %v2325
    %v2327 = vpop.f32.mrb[0].mxu0
    %v2328 = vpop.f32.mrb[0].mxu0
    %2329 = vdwg.mxu0
    %v2330 = vadd.f32 %v2050, %v2283
    %v2331 = vadd.f32 %v2051, %v2285
    %v2332 = vadd.f32 %v2052, %v2324
    %v2333 = vadd.f32 %v2053, %v2326
    %v2334 = vxor.u32 %v2330, 2147483648
    %v2335 = vmul.f32 %v2334, 1.442695
    %v2336 = vpow.pop %v2335
    %v2337 = vadd.f32 %v2336, 1.0
    %v2338 = vrcp.pop %v2337
    %v2339 = vmul.f32 1.0, %v2338
    %v2340 = vxor.u32 %v2331, 2147483648
    %v2341 = vmul.f32 %v2340, 1.442695
    %v2342 = vpow.pop %v2341
    %v2343 = vadd.f32 %v2342, 1.0
    %v2344 = vrcp.pop %v2343
    %v2345 = vmul.f32 1.0, %v2344
    %v2346 = vtanh.pop %v2332
    %v2347 = vxor.u32 %v2333, 2147483648
    %v2348 = vmul.f32 %v2347, 1.442695
    %v2349 = vpow.pop %v2348
    %v2350 = vadd.f32 %v2349, 1.0
    %v2351 = vrcp.pop %v2350
    %v2352 = vmul.f32 1.0, %v2351
    %v2353 = vld [vmem:[#allocation3] sm:$0xff]
    %v2354 = vmul.f32 %v2345, %v2353
    %v2355 = vmul.f32 %v2339, %v2346
    %v2356 = vadd.f32 %v2354, %v2355
    %v2357 = vtanh.pop %v2356
    %v2358 = vmul.f32 %v2352, %v2357
    %2359 = vst [vmem:[#allocation3] sm:$0xff] %v2356
    %2360 = vst [vmem:[#allocation2] sm:$0xff] %v2358
    %v2361 = vpack.c.bf16 %v2358, %v2358
    %s2362 = scalar_lea.vmem %s4, 20
    %2363 = vst [vmem:[%s2362] sm:$0xf] %v2361
    %s2364 = scalar_lea.vmem [#allocation4], 192
    %v2365 = vld [vmem:[%s2364] sm:$0xff]
    %v2366 = vld [vmem:[%s2364 + $0x8] sm:$0xff]
    %v2367 = vld [vmem:[%s2364 + $0x10] sm:$0xff]
    %v2368 = vld [vmem:[%s2364 + $0x18] sm:$0xff]
    %v2369 = vld [vmem:[#allocation2] sm:$0xff]
    %v2370 = vpack.c.bf16 %v2369, %v2369
    %v2371 = vld [vmem:[#allocation7] sm:$0xff]
    %v2372 = vld [vmem:[#allocation7 + $0x8] sm:$0xff]
    %v2373 = vld [vmem:[#allocation7 + $0x10] sm:$0xff]
    %v2374 = vld [vmem:[#allocation7 + $0x18] sm:$0xff]
    %v2375 = vld [vmem:[#allocation7 + $0x20] sm:$0xff]
    %v2376 = vld [vmem:[#allocation7 + $0x28] sm:$0xff]
    %v2377 = vld [vmem:[#allocation7 + $0x30] sm:$0xff]
    %v2378 = vld [vmem:[#allocation7 + $0x38] sm:$0xff]
    %v2379 = vld [vmem:[#allocation7 + $0x40] sm:$0xff]
    %v2380 = vld [vmem:[#allocation7 + $0x48] sm:$0xff]
    %v2381 = vld [vmem:[#allocation7 + $0x50] sm:$0xff]
    %v2382 = vld [vmem:[#allocation7 + $0x58] sm:$0xff]
    %v2383 = vld [vmem:[#allocation7 + $0x60] sm:$0xff]
    %v2384 = vld [vmem:[#allocation7 + $0x68] sm:$0xff]
    %v2385 = vld [vmem:[#allocation7 + $0x70] sm:$0xff]
    %v2386 = vld [vmem:[#allocation7 + $0x78] sm:$0xff]
    %v2387 = vld [vmem:[#allocation7 + $0x80] sm:$0xff]
    %v2388 = vld [vmem:[#allocation7 + $0x88] sm:$0xff]
    %v2389 = vld [vmem:[#allocation7 + $0x90] sm:$0xff]
    %v2390 = vld [vmem:[#allocation7 + $0x98] sm:$0xff]
    %v2391 = vld [vmem:[#allocation7 + $0xa0] sm:$0xff]
    %v2392 = vld [vmem:[#allocation7 + $0xa8] sm:$0xff]
    %v2393 = vld [vmem:[#allocation7 + $0xb0] sm:$0xff]
    %v2394 = vld [vmem:[#allocation7 + $0xb8] sm:$0xff]
    %v2395 = vld [vmem:[#allocation7 + $0xc0] sm:$0xff]
    %v2396 = vld [vmem:[#allocation7 + $0xc8] sm:$0xff]
    %v2397 = vld [vmem:[#allocation7 + $0xd0] sm:$0xff]
    %v2398 = vld [vmem:[#allocation7 + $0xd8] sm:$0xff]
    %v2399 = vld [vmem:[#allocation7 + $0xe0] sm:$0xff]
    %v2400 = vld [vmem:[#allocation7 + $0xe8] sm:$0xff]
    %v2401 = vld [vmem:[#allocation7 + $0xf0] sm:$0xff]
    %v2402 = vld [vmem:[#allocation7 + $0xf8] sm:$0xff]
    %v2435 = vunpack.c.l.b16 %v2371
    %v2436 = vunpack.c.h.b16 %v2371
    %v2437 = vunpack.c.l.b16 %v2372
    %v2438 = vunpack.c.h.b16 %v2372
    %v2439 = vunpack.c.l.b16 %v2373
    %v2440 = vunpack.c.h.b16 %v2373
    %v2441 = vunpack.c.l.b16 %v2374
    %v2442 = vunpack.c.h.b16 %v2374
    %v2443 = vunpack.c.l.b16 %v2375
    %v2444 = vunpack.c.h.b16 %v2375
    %v2445 = vunpack.c.l.b16 %v2376
    %v2446 = vunpack.c.h.b16 %v2376
    %v2447 = vunpack.c.l.b16 %v2377
    %v2448 = vunpack.c.h.b16 %v2377
    %v2449 = vunpack.c.l.b16 %v2378
    %v2450 = vunpack.c.h.b16 %v2378
    %v2451 = vunpack.c.l.b16 %v2379
    %v2452 = vunpack.c.h.b16 %v2379
    %v2453 = vunpack.c.l.b16 %v2380
    %v2454 = vunpack.c.h.b16 %v2380
    %v2455 = vunpack.c.l.b16 %v2381
    %v2456 = vunpack.c.h.b16 %v2381
    %v2457 = vunpack.c.l.b16 %v2382
    %v2458 = vunpack.c.h.b16 %v2382
    %v2459 = vunpack.c.l.b16 %v2383
    %v2460 = vunpack.c.h.b16 %v2383
    %v2461 = vunpack.c.l.b16 %v2384
    %v2462 = vunpack.c.h.b16 %v2384
    %v2463 = vunpack.c.l.b16 %v2385
    %v2464 = vunpack.c.h.b16 %v2385
    %v2465 = vunpack.c.l.b16 %v2386
    %v2466 = vunpack.c.h.b16 %v2386
    %v2467 = vunpack.c.l.b16 %v2387
    %v2468 = vunpack.c.h.b16 %v2387
    %v2469 = vunpack.c.l.b16 %v2388
    %v2470 = vunpack.c.h.b16 %v2388
    %v2471 = vunpack.c.l.b16 %v2389
    %v2472 = vunpack.c.h.b16 %v2389
    %v2473 = vunpack.c.l.b16 %v2390
    %v2474 = vunpack.c.h.b16 %v2390
    %v2475 = vunpack.c.l.b16 %v2391
    %v2476 = vunpack.c.h.b16 %v2391
    %v2477 = vunpack.c.l.b16 %v2392
    %v2478 = vunpack.c.h.b16 %v2392
    %v2479 = vunpack.c.l.b16 %v2393
    %v2480 = vunpack.c.h.b16 %v2393
    %v2481 = vunpack.c.l.b16 %v2394
    %v2482 = vunpack.c.h.b16 %v2394
    %v2483 = vunpack.c.l.b16 %v2395
    %v2484 = vunpack.c.h.b16 %v2395
    %v2485 = vunpack.c.l.b16 %v2396
    %v2486 = vunpack.c.h.b16 %v2396
    %v2487 = vunpack.c.l.b16 %v2397
    %v2488 = vunpack.c.h.b16 %v2397
    %v2489 = vunpack.c.l.b16 %v2398
    %v2490 = vunpack.c.h.b16 %v2398
    %v2491 = vunpack.c.l.b16 %v2399
    %v2492 = vunpack.c.h.b16 %v2399
    %v2493 = vunpack.c.l.b16 %v2400
    %v2494 = vunpack.c.h.b16 %v2400
    %v2495 = vunpack.c.l.b16 %v2401
    %v2496 = vunpack.c.h.b16 %v2401
    %v2497 = vunpack.c.l.b16 %v2402
    %v2498 = vunpack.c.h.b16 %v2402
    %v2499 = vpack.c.b16 %v2439, %v2435
    %v2500 = vpack.c.b16 %v2440, %v2436
    %v2501 = vpack.c.b16 %v2441, %v2437
    %v2502 = vpack.c.b16 %v2442, %v2438
    %v2503 = vpack.c.b16 %v2447, %v2443
    %v2504 = vpack.c.b16 %v2448, %v2444
    %v2505 = vpack.c.b16 %v2449, %v2445
    %v2506 = vpack.c.b16 %v2450, %v2446
    %v2507 = vpack.c.b16 %v2455, %v2451
    %v2508 = vpack.c.b16 %v2456, %v2452
    %v2509 = vpack.c.b16 %v2457, %v2453
    %v2510 = vpack.c.b16 %v2458, %v2454
    %v2511 = vpack.c.b16 %v2463, %v2459
    %v2512 = vpack.c.b16 %v2464, %v2460
    %v2513 = vpack.c.b16 %v2465, %v2461
    %v2514 = vpack.c.b16 %v2466, %v2462
    %v2515 = vpack.c.b16 %v2471, %v2467
    %v2516 = vpack.c.b16 %v2472, %v2468
    %v2517 = vpack.c.b16 %v2473, %v2469
    %v2518 = vpack.c.b16 %v2474, %v2470
    %v2519 = vpack.c.b16 %v2479, %v2475
    %v2520 = vpack.c.b16 %v2480, %v2476
    %v2521 = vpack.c.b16 %v2481, %v2477
    %v2522 = vpack.c.b16 %v2482, %v2478
    %v2523 = vpack.c.b16 %v2487, %v2483
    %v2524 = vpack.c.b16 %v2488, %v2484
    %v2525 = vpack.c.b16 %v2489, %v2485
    %v2526 = vpack.c.b16 %v2490, %v2486
    %v2527 = vpack.c.b16 %v2495, %v2491
    %v2528 = vpack.c.b16 %v2496, %v2492
    %v2529 = vpack.c.b16 %v2497, %v2493
    %v2530 = vpack.c.b16 %v2498, %v2494
    %2563 = vmatprep.subr.bf16.mxu0 %v2500
    %2564 = vmatpush1.bf16.msra.mxu0 %v2499
    %2565 = vmatprep.subr.bf16.mxu0 %v2504
    %2566 = vmatpush1.bf16.msra.mxu0 %v2503
    %2567 = vmatprep.subr.bf16.mxu0 %v2508
    %2568 = vmatpush1.bf16.msra.mxu0 %v2507
    %2569 = vmatprep.subr.bf16.mxu0 %v2512
    %2570 = vmatpush1.bf16.msra.mxu0 %v2511
    %2571 = vmatprep.subr.bf16.mxu0 %v2516
    %2572 = vmatpush1.bf16.msra.mxu0 %v2515
    %2573 = vmatprep.subr.bf16.mxu0 %v2520
    %2574 = vmatpush1.bf16.msra.mxu0 %v2519
    %2575 = vmatprep.subr.bf16.mxu0 %v2524
    %2576 = vmatpush1.bf16.msra.mxu0 %v2523
    %2577 = vmatprep.subr.bf16.mxu0 %v2528
    %2578 = vmatpush1.bf16.msra.mxu0 %v2527
    %2579 = vmatprep.subr.bf16.mxu0 0
    %2580 = vmatpush1.bf16.msra.mxu0 0
    %2581 = vmatprep.subr.bf16.mxu0 0
    %2582 = vmatpush1.bf16.msra.mxu0 0
    %2583 = vmatprep.subr.bf16.mxu0 0
    %2584 = vmatpush1.bf16.msra.mxu0 0
    %2585 = vmatprep.subr.bf16.mxu0 0
    %2586 = vmatpush1.bf16.msra.mxu0 0
    %2587 = vmatprep.subr.bf16.mxu0 0
    %2588 = vmatpush1.bf16.msra.mxu0 0
    %2589 = vmatprep.subr.bf16.mxu0 0
    %2590 = vmatpush1.bf16.msra.mxu0 0
    %2591 = vmatprep.subr.bf16.mxu0 0
    %2592 = vmatpush1.bf16.msra.mxu0 0
    %2593 = vmatprep.subr.bf16.mxu0 0
    %2594 = vmatpush1.bf16.msra.mxu0 0
    %2595 = vmatprep.mubr.bf16.mxu0 0
    %2596 = vmatmul.mubr.bf16.gmra.mrb[0].mxu0 %v2370
    %v2597 = vpop.f32.mrb[0].mxu0
    %v2598 = vadd.f32 0.0, %v2597
    %v2599 = vpop.f32.mrb[0].mxu0
    %v2600 = vadd.f32 0.0, %v2599
    %v2601 = vpop.f32.mrb[0].mxu0
    %v2602 = vpop.f32.mrb[0].mxu0
    %2603 = vdwg.mxu0
    %2604 = vmatprep.subr.bf16.mxu0 %v2502
    %2605 = vmatpush1.bf16.msra.mxu0 %v2501
    %2606 = vmatprep.subr.bf16.mxu0 %v2506
    %2607 = vmatpush1.bf16.msra.mxu0 %v2505
    %2608 = vmatprep.subr.bf16.mxu0 %v2510
    %2609 = vmatpush1.bf16.msra.mxu0 %v2509
    %2610 = vmatprep.subr.bf16.mxu0 %v2514
    %2611 = vmatpush1.bf16.msra.mxu0 %v2513
    %2612 = vmatprep.subr.bf16.mxu0 %v2518
    %2613 = vmatpush1.bf16.msra.mxu0 %v2517
    %2614 = vmatprep.subr.bf16.mxu0 %v2522
    %2615 = vmatpush1.bf16.msra.mxu0 %v2521
    %2616 = vmatprep.subr.bf16.mxu0 %v2526
    %2617 = vmatpush1.bf16.msra.mxu0 %v2525
    %2618 = vmatprep.subr.bf16.mxu0 %v2530
    %2619 = vmatpush1.bf16.msra.mxu0 %v2529
    %2620 = vmatprep.subr.bf16.mxu0 0
    %2621 = vmatpush1.bf16.msra.mxu0 0
    %2622 = vmatprep.subr.bf16.mxu0 0
    %2623 = vmatpush1.bf16.msra.mxu0 0
    %2624 = vmatprep.subr.bf16.mxu0 0
    %2625 = vmatpush1.bf16.msra.mxu0 0
    %2626 = vmatprep.subr.bf16.mxu0 0
    %2627 = vmatpush1.bf16.msra.mxu0 0
    %2628 = vmatprep.subr.bf16.mxu0 0
    %2629 = vmatpush1.bf16.msra.mxu0 0
    %2630 = vmatprep.subr.bf16.mxu0 0
    %2631 = vmatpush1.bf16.msra.mxu0 0
    %2632 = vmatprep.subr.bf16.mxu0 0
    %2633 = vmatpush1.bf16.msra.mxu0 0
    %2634 = vmatprep.subr.bf16.mxu0 0
    %2635 = vmatpush1.bf16.msra.mxu0 0
    %2636 = vmatprep.mubr.bf16.mxu0 0
    %2637 = vmatmul.mubr.bf16.gmra.mrb[0].mxu0 %v2370
    %v2638 = vpop.f32.mrb[0].mxu0
    %v2639 = vadd.f32 0.0, %v2638
    %v2640 = vpop.f32.mrb[0].mxu0
    %v2641 = vadd.f32 0.0, %v2640
    %v2642 = vpop.f32.mrb[0].mxu0
    %v2643 = vpop.f32.mrb[0].mxu0
    %2644 = vdwg.mxu0
    %v2645 = vadd.f32 %v2365, %v2598
    %v2646 = vadd.f32 %v2366, %v2600
    %v2647 = vadd.f32 %v2367, %v2639
    %v2648 = vadd.f32 %v2368, %v2641
    %v2649 = vxor.u32 %v2645, 2147483648
    %v2650 = vmul.f32 %v2649, 1.442695
    %v2651 = vpow.pop %v2650
    %v2652 = vadd.f32 %v2651, 1.0
    %v2653 = vrcp.pop %v2652
    %v2654 = vmul.f32 1.0, %v2653
    %v2655 = vxor.u32 %v2646, 2147483648
    %v2656 = vmul.f32 %v2655, 1.442695
    %v2657 = vpow.pop %v2656
    %v2658 = vadd.f32 %v2657, 1.0
    %v2659 = vrcp.pop %v2658
    %v2660 = vmul.f32 1.0, %v2659
    %v2661 = vtanh.pop %v2647
    %v2662 = vxor.u32 %v2648, 2147483648
    %v2663 = vmul.f32 %v2662, 1.442695
    %v2664 = vpow.pop %v2663
    %v2665 = vadd.f32 %v2664, 1.0
    %v2666 = vrcp.pop %v2665
    %v2667 = vmul.f32 1.0, %v2666
    %v2668 = vld [vmem:[#allocation3] sm:$0xff]
    %v2669 = vmul.f32 %v2660, %v2668
    %v2670 = vmul.f32 %v2654, %v2661
    %v2671 = vadd.f32 %v2669, %v2670
    %v2672 = vtanh.pop %v2671
    %v2673 = vmul.f32 %v2667, %v2672
    %2674 = vst [vmem:[#allocation3] sm:$0xff] %v2671
    %2675 = vst [vmem:[#allocation2] sm:$0xff] %v2673
    %v2676 = vpack.c.bf16 %v2673, %v2673
    %s2677 = scalar_lea.vmem %s4, 24
    %2678 = vst [vmem:[%s2677] sm:$0xf] %v2676
    %s2679 = scalar_lea.vmem [#allocation4], 224
    %v2680 = vld [vmem:[%s2679] sm:$0xff]
    %v2681 = vld [vmem:[%s2679 + $0x8] sm:$0xff]
    %v2682 = vld [vmem:[%s2679 + $0x10] sm:$0xff]
    %v2683 = vld [vmem:[%s2679 + $0x18] sm:$0xff]
    %v2684 = vld [vmem:[#allocation2] sm:$0xff]
    %v2685 = vpack.c.bf16 %v2684, %v2684
    %v2686 = vld [vmem:[#allocation7] sm:$0xff]
    %v2687 = vld [vmem:[#allocation7 + $0x8] sm:$0xff]
    %v2688 = vld [vmem:[#allocation7 + $0x10] sm:$0xff]
    %v2689 = vld [vmem:[#allocation7 + $0x18] sm:$0xff]
    %v2690 = vld [vmem:[#allocation7 + $0x20] sm:$0xff]
    %v2691 = vld [vmem:[#allocation7 + $0x28] sm:$0xff]
    %v2692 = vld [vmem:[#allocation7 + $0x30] sm:$0xff]
    %v2693 = vld [vmem:[#allocation7 + $0x38] sm:$0xff]
    %v2694 = vld [vmem:[#allocation7 + $0x40] sm:$0xff]
    %v2695 = vld [vmem:[#allocation7 + $0x48] sm:$0xff]
    %v2696 = vld [vmem:[#allocation7 + $0x50] sm:$0xff]
    %v2697 = vld [vmem:[#allocation7 + $0x58] sm:$0xff]
    %v2698 = vld [vmem:[#allocation7 + $0x60] sm:$0xff]
    %v2699 = vld [vmem:[#allocation7 + $0x68] sm:$0xff]
    %v2700 = vld [vmem:[#allocation7 + $0x70] sm:$0xff]
    %v2701 = vld [vmem:[#allocation7 + $0x78] sm:$0xff]
    %v2702 = vld [vmem:[#allocation7 + $0x80] sm:$0xff]
    %v2703 = vld [vmem:[#allocation7 + $0x88] sm:$0xff]
    %v2704 = vld [vmem:[#allocation7 + $0x90] sm:$0xff]
    %v2705 = vld [vmem:[#allocation7 + $0x98] sm:$0xff]
    %v2706 = vld [vmem:[#allocation7 + $0xa0] sm:$0xff]
    %v2707 = vld [vmem:[#allocation7 + $0xa8] sm:$0xff]
    %v2708 = vld [vmem:[#allocation7 + $0xb0] sm:$0xff]
    %v2709 = vld [vmem:[#allocation7 + $0xb8] sm:$0xff]
    %v2710 = vld [vmem:[#allocation7 + $0xc0] sm:$0xff]
    %v2711 = vld [vmem:[#allocation7 + $0xc8] sm:$0xff]
    %v2712 = vld [vmem:[#allocation7 + $0xd0] sm:$0xff]
    %v2713 = vld [vmem:[#allocation7 + $0xd8] sm:$0xff]
    %v2714 = vld [vmem:[#allocation7 + $0xe0] sm:$0xff]
    %v2715 = vld [vmem:[#allocation7 + $0xe8] sm:$0xff]
    %v2716 = vld [vmem:[#allocation7 + $0xf0] sm:$0xff]
    %v2717 = vld [vmem:[#allocation7 + $0xf8] sm:$0xff]
    %v2750 = vunpack.c.l.b16 %v2686
    %v2751 = vunpack.c.h.b16 %v2686
    %v2752 = vunpack.c.l.b16 %v2687
    %v2753 = vunpack.c.h.b16 %v2687
    %v2754 = vunpack.c.l.b16 %v2688
    %v2755 = vunpack.c.h.b16 %v2688
    %v2756 = vunpack.c.l.b16 %v2689
    %v2757 = vunpack.c.h.b16 %v2689
    %v2758 = vunpack.c.l.b16 %v2690
    %v2759 = vunpack.c.h.b16 %v2690
    %v2760 = vunpack.c.l.b16 %v2691
    %v2761 = vunpack.c.h.b16 %v2691
    %v2762 = vunpack.c.l.b16 %v2692
    %v2763 = vunpack.c.h.b16 %v2692
    %v2764 = vunpack.c.l.b16 %v2693
    %v2765 = vunpack.c.h.b16 %v2693
    %v2766 = vunpack.c.l.b16 %v2694
    %v2767 = vunpack.c.h.b16 %v2694
    %v2768 = vunpack.c.l.b16 %v2695
    %v2769 = vunpack.c.h.b16 %v2695
    %v2770 = vunpack.c.l.b16 %v2696
    %v2771 = vunpack.c.h.b16 %v2696
    %v2772 = vunpack.c.l.b16 %v2697
    %v2773 = vunpack.c.h.b16 %v2697
    %v2774 = vunpack.c.l.b16 %v2698
    %v2775 = vunpack.c.h.b16 %v2698
    %v2776 = vunpack.c.l.b16 %v2699
    %v2777 = vunpack.c.h.b16 %v2699
    %v2778 = vunpack.c.l.b16 %v2700
    %v2779 = vunpack.c.h.b16 %v2700
    %v2780 = vunpack.c.l.b16 %v2701
    %v2781 = vunpack.c.h.b16 %v2701
    %v2782 = vunpack.c.l.b16 %v2702
    %v2783 = vunpack.c.h.b16 %v2702
    %v2784 = vunpack.c.l.b16 %v2703
    %v2785 = vunpack.c.h.b16 %v2703
    %v2786 = vunpack.c.l.b16 %v2704
    %v2787 = vunpack.c.h.b16 %v2704
    %v2788 = vunpack.c.l.b16 %v2705
    %v2789 = vunpack.c.h.b16 %v2705
    %v2790 = vunpack.c.l.b16 %v2706
    %v2791 = vunpack.c.h.b16 %v2706
    %v2792 = vunpack.c.l.b16 %v2707
    %v2793 = vunpack.c.h.b16 %v2707
    %v2794 = vunpack.c.l.b16 %v2708
    %v2795 = vunpack.c.h.b16 %v2708
    %v2796 = vunpack.c.l.b16 %v2709
    %v2797 = vunpack.c.h.b16 %v2709
    %v2798 = vunpack.c.l.b16 %v2710
    %v2799 = vunpack.c.h.b16 %v2710
    %v2800 = vunpack.c.l.b16 %v2711
    %v2801 = vunpack.c.h.b16 %v2711
    %v2802 = vunpack.c.l.b16 %v2712
    %v2803 = vunpack.c.h.b16 %v2712
    %v2804 = vunpack.c.l.b16 %v2713
    %v2805 = vunpack.c.h.b16 %v2713
    %v2806 = vunpack.c.l.b16 %v2714
    %v2807 = vunpack.c.h.b16 %v2714
    %v2808 = vunpack.c.l.b16 %v2715
    %v2809 = vunpack.c.h.b16 %v2715
    %v2810 = vunpack.c.l.b16 %v2716
    %v2811 = vunpack.c.h.b16 %v2716
    %v2812 = vunpack.c.l.b16 %v2717
    %v2813 = vunpack.c.h.b16 %v2717
    %v2814 = vpack.c.b16 %v2754, %v2750
    %v2815 = vpack.c.b16 %v2755, %v2751
    %v2816 = vpack.c.b16 %v2756, %v2752
    %v2817 = vpack.c.b16 %v2757, %v2753
    %v2818 = vpack.c.b16 %v2762, %v2758
    %v2819 = vpack.c.b16 %v2763, %v2759
    %v2820 = vpack.c.b16 %v2764, %v2760
    %v2821 = vpack.c.b16 %v2765, %v2761
    %v2822 = vpack.c.b16 %v2770, %v2766
    %v2823 = vpack.c.b16 %v2771, %v2767
    %v2824 = vpack.c.b16 %v2772, %v2768
    %v2825 = vpack.c.b16 %v2773, %v2769
    %v2826 = vpack.c.b16 %v2778, %v2774
    %v2827 = vpack.c.b16 %v2779, %v2775
    %v2828 = vpack.c.b16 %v2780, %v2776
    %v2829 = vpack.c.b16 %v2781, %v2777
    %v2830 = vpack.c.b16 %v2786, %v2782
    %v2831 = vpack.c.b16 %v2787, %v2783
    %v2832 = vpack.c.b16 %v2788, %v2784
    %v2833 = vpack.c.b16 %v2789, %v2785
    %v2834 = vpack.c.b16 %v2794, %v2790
    %v2835 = vpack.c.b16 %v2795, %v2791
    %v2836 = vpack.c.b16 %v2796, %v2792
    %v2837 = vpack.c.b16 %v2797, %v2793
    %v2838 = vpack.c.b16 %v2802, %v2798
    %v2839 = vpack.c.b16 %v2803, %v2799
    %v2840 = vpack.c.b16 %v2804, %v2800
    %v2841 = vpack.c.b16 %v2805, %v2801
    %v2842 = vpack.c.b16 %v2810, %v2806
    %v2843 = vpack.c.b16 %v2811, %v2807
    %v2844 = vpack.c.b16 %v2812, %v2808
    %v2845 = vpack.c.b16 %v2813, %v2809
    %2878 = vmatprep.subr.bf16.mxu0 %v2815
    %2879 = vmatpush1.bf16.msra.mxu0 %v2814
    %2880 = vmatprep.subr.bf16.mxu0 %v2819
    %2881 = vmatpush1.bf16.msra.mxu0 %v2818
    %2882 = vmatprep.subr.bf16.mxu0 %v2823
    %2883 = vmatpush1.bf16.msra.mxu0 %v2822
    %2884 = vmatprep.subr.bf16.mxu0 %v2827
    %2885 = vmatpush1.bf16.msra.mxu0 %v2826
    %2886 = vmatprep.subr.bf16.mxu0 %v2831
    %2887 = vmatpush1.bf16.msra.mxu0 %v2830
    %2888 = vmatprep.subr.bf16.mxu0 %v2835
    %2889 = vmatpush1.bf16.msra.mxu0 %v2834
    %2890 = vmatprep.subr.bf16.mxu0 %v2839
    %2891 = vmatpush1.bf16.msra.mxu0 %v2838
    %2892 = vmatprep.subr.bf16.mxu0 %v2843
    %2893 = vmatpush1.bf16.msra.mxu0 %v2842
    %2894 = vmatprep.subr.bf16.mxu0 0
    %2895 = vmatpush1.bf16.msra.mxu0 0
    %2896 = vmatprep.subr.bf16.mxu0 0
    %2897 = vmatpush1.bf16.msra.mxu0 0
    %2898 = vmatprep.subr.bf16.mxu0 0
    %2899 = vmatpush1.bf16.msra.mxu0 0
    %2900 = vmatprep.subr.bf16.mxu0 0
    %2901 = vmatpush1.bf16.msra.mxu0 0
    %2902 = vmatprep.subr.bf16.mxu0 0
    %2903 = vmatpush1.bf16.msra.mxu0 0
    %2904 = vmatprep.subr.bf16.mxu0 0
    %2905 = vmatpush1.bf16.msra.mxu0 0
    %2906 = vmatprep.subr.bf16.mxu0 0
    %2907 = vmatpush1.bf16.msra.mxu0 0
    %2908 = vmatprep.subr.bf16.mxu0 0
    %2909 = vmatpush1.bf16.msra.mxu0 0
    %2910 = vmatprep.mubr.bf16.mxu0 0
    %2911 = vmatmul.mubr.bf16.gmra.mrb[0].mxu0 %v2685
    %v2912 = vpop.f32.mrb[0].mxu0
    %v2913 = vadd.f32 0.0, %v2912
    %v2914 = vpop.f32.mrb[0].mxu0
    %v2915 = vadd.f32 0.0, %v2914
    %v2916 = vpop.f32.mrb[0].mxu0
    %v2917 = vpop.f32.mrb[0].mxu0
    %2918 = vdwg.mxu0
    %2919 = vmatprep.subr.bf16.mxu0 %v2817
    %2920 = vmatpush1.bf16.msra.mxu0 %v2816
    %2921 = vmatprep.subr.bf16.mxu0 %v2821
    %2922 = vmatpush1.bf16.msra.mxu0 %v2820
    %2923 = vmatprep.subr.bf16.mxu0 %v2825
    %2924 = vmatpush1.bf16.msra.mxu0 %v2824
    %2925 = vmatprep.subr.bf16.mxu0 %v2829
    %2926 = vmatpush1.bf16.msra.mxu0 %v2828
    %2927 = vmatprep.subr.bf16.mxu0 %v2833
    %2928 = vmatpush1.bf16.msra.mxu0 %v2832
    %2929 = vmatprep.subr.bf16.mxu0 %v2837
    %2930 = vmatpush1.bf16.msra.mxu0 %v2836
    %2931 = vmatprep.subr.bf16.mxu0 %v2841
    %2932 = vmatpush1.bf16.msra.mxu0 %v2840
    %2933 = vmatprep.subr.bf16.mxu0 %v2845
    %2934 = vmatpush1.bf16.msra.mxu0 %v2844
    %2935 = vmatprep.subr.bf16.mxu0 0
    %2936 = vmatpush1.bf16.msra.mxu0 0
    %2937 = vmatprep.subr.bf16.mxu0 0
    %2938 = vmatpush1.bf16.msra.mxu0 0
    %2939 = vmatprep.subr.bf16.mxu0 0
    %2940 = vmatpush1.bf16.msra.mxu0 0
    %2941 = vmatprep.subr.bf16.mxu0 0
    %2942 = vmatpush1.bf16.msra.mxu0 0
    %2943 = vmatprep.subr.bf16.mxu0 0
    %2944 = vmatpush1.bf16.msra.mxu0 0
    %2945 = vmatprep.subr.bf16.mxu0 0
    %2946 = vmatpush1.bf16.msra.mxu0 0
    %2947 = vmatprep.subr.bf16.mxu0 0
    %2948 = vmatpush1.bf16.msra.mxu0 0
    %2949 = vmatprep.subr.bf16.mxu0 0
    %2950 = vmatpush1.bf16.msra.mxu0 0
    %2951 = vmatprep.mubr.bf16.mxu0 0
    %2952 = vmatmul.mubr.bf16.gmra.mrb[0].mxu0 %v2685
    %v2953 = vpop.f32.mrb[0].mxu0
    %v2954 = vadd.f32 0.0, %v2953
    %v2955 = vpop.f32.mrb[0].mxu0
    %v2956 = vadd.f32 0.0, %v2955
    %v2957 = vpop.f32.mrb[0].mxu0
    %v2958 = vpop.f32.mrb[0].mxu0
    %2959 = vdwg.mxu0
    %v2960 = vadd.f32 %v2680, %v2913
    %v2961 = vadd.f32 %v2681, %v2915
    %v2962 = vadd.f32 %v2682, %v2954
    %v2963 = vadd.f32 %v2683, %v2956
    %v2964 = vxor.u32 %v2960, 2147483648
    %v2965 = vmul.f32 %v2964, 1.442695
    %v2966 = vpow.pop %v2965
    %v2967 = vadd.f32 %v2966, 1.0
    %v2968 = vrcp.pop %v2967
    %v2969 = vmul.f32 1.0, %v2968
    %v2970 = vxor.u32 %v2961, 2147483648
    %v2971 = vmul.f32 %v2970, 1.442695
    %v2972 = vpow.pop %v2971
    %v2973 = vadd.f32 %v2972, 1.0
    %v2974 = vrcp.pop %v2973
    %v2975 = vmul.f32 1.0, %v2974
    %v2976 = vtanh.pop %v2962
    %v2977 = vxor.u32 %v2963, 2147483648
    %v2978 = vmul.f32 %v2977, 1.442695
    %v2979 = vpow.pop %v2978
    %v2980 = vadd.f32 %v2979, 1.0
    %v2981 = vrcp.pop %v2980
    %v2982 = vmul.f32 1.0, %v2981
    %v2983 = vld [vmem:[#allocation3] sm:$0xff]
    %v2984 = vmul.f32 %v2975, %v2983
    %v2985 = vmul.f32 %v2969, %v2976
    %v2986 = vadd.f32 %v2984, %v2985
    %v2987 = vtanh.pop %v2986
    %v2988 = vmul.f32 %v2982, %v2987
    %2989 = vst [vmem:[#allocation3] sm:$0xff] %v2986
    %2990 = vst [vmem:[#allocation2] sm:$0xff] %v2988
    %v2991 = vpack.c.bf16 %v2988, %v2988
    %s2992 = scalar_lea.vmem %s4, 28
    %2993 = vst [vmem:[%s2992] sm:$0xf] %v2991
    // Predicated region
    $region30: #{text_classifier_forward.2} parent=1 // pred_check
      _
    $region31: #{text_classifier_forward.2} parent=1 // pred_check_branch
      %2995 = sbr.rel (0) target = $region33
    $region32: #{text_classifier_forward.2} parent=1 // pred_region
      _
    $region33: #{text_classifier_forward.2} parent=1 // pred_fallthru
      _
    // Predicated region
    $region34: #{text_classifier_forward.2} parent=1 // pred_check
      _
    $region35: #{text_classifier_forward.2} parent=1 // pred_check_branch
      %2997 = sbr.rel (0) target = $region37
    $region36: #{text_classifier_forward.2} parent=1 // pred_region
      _
    $region37: #{text_classifier_forward.2} parent=1 // pred_fallthru
      _
    %2998 = vsyncpa [#allocation6], 1
    %2999 = vsyncpa [#allocation8], 1

</llo_original>
